<compile_context>
chip_gen: v7x
topology: tpu7x:2x2x1
jax: 0.10.0
libtpu: 0.0.40
codegen_flags: <defaults>
</compile_context>

<pallas_src>
import functools
import numpy as np
import jax
import jax.numpy as jnp
from jax.experimental import pallas as pl
from jax.experimental.pallas import tpu as pltpu

# ----------------------------- model config (small) -----------------------------
CFG = dict(
    img_size=16, patch_size=4, in_chans=3,
    embed_dim=32, depth=2, num_heads=4,
    decoder_embed_dim=32, decoder_depth=1, decoder_num_heads=4,
    mlp_ratio=4.0, norm_pix_loss=False,
)
LN_EPS = 1e-5

# ----------------------------- in-kernel math helpers ----------------------------

def _ln(x, g, b, eps):
    mu = jnp.mean(x, axis=-1, keepdims=True)
    xc = x - mu
    var = jnp.mean(xc * xc, axis=-1, keepdims=True)
    return xc * jax.lax.rsqrt(var + eps) * g + b


def _erf(x):
    # Abramowitz & Stegun 7.1.26 rational approximation, |err| <= 1.5e-7.
    # Keeps nn.GELU() (exact-erf) semantics in-kernel using only VPU ops + one EUP exp.
    p = 0.3275911
    a1, a2, a3, a4, a5 = (0.254829592, -0.284496736, 1.421413741,
                          -1.453152027, 1.061405429)
    sgn = jnp.where(x >= 0.0, 1.0, -1.0)
    ax = jnp.abs(x)
    t = 1.0 / (1.0 + p * ax)
    poly = ((((a5 * t + a4) * t + a3) * t + a2) * t + a1) * t
    return sgn * (1.0 - poly * jnp.exp(-ax * ax))


def _gelu_exact(x):
    return 0.5 * x * (1.0 + _erf(x * 0.7071067811865476))

# ----------------------------- fused transformer-stack kernel --------------------

STACK_KEYS = ("n1g", "n1b", "qkvw", "qkvb", "projw", "projb",
              "n2g", "n2b", "fc1w", "fc1b", "fc2w", "fc2b")


def _vit_stack_kernel(x_ref, n1g_ref, n1b_ref, qkvw_ref, qkvb_ref,
                      projw_ref, projb_ref, n2g_ref, n2b_ref,
                      fc1w_ref, fc1b_ref, fc2w_ref, fc2b_ref,
                      fng_ref, fnb_ref, outw_ref, outb_ref, o_ref,
                      *, num_heads, eps):
    """depth x (pre-norm ViT block) + final LayerNorm + output Linear, one sample."""
    x = x_ref[0]                                   # (S, D) f32
    depth = n1g_ref.shape[0]                       # static
    D = x.shape[-1]
    Dh = D // num_heads
    scale = Dh ** -0.5

    for blk in range(depth):                       # static unroll
        # ---- multi-head self-attention ----
        h = _ln(x, n1g_ref[blk], n1b_ref[blk], eps)
        qkv = (jnp.dot(h, qkvw_ref[blk], preferred_element_type=jnp.float32)
               + qkvb_ref[blk])                    # (S, 3D), one fat MXU matmul
        proj_w = projw_ref[blk]                    # (D, D)
        attn_proj = jnp.zeros_like(x)
        for hh in range(num_heads):                # static unroll over heads
            q = qkv[:, hh * Dh:(hh + 1) * Dh]
            k = qkv[:, D + hh * Dh:D + (hh + 1) * Dh]
            v = qkv[:, 2 * D + hh * Dh:2 * D + (hh + 1) * Dh]
            s = jax.lax.dot_general(q, k, (((1,), (1,)), ((), ())),
                                    preferred_element_type=jnp.float32) * scale
            s = s - jnp.max(s, axis=-1, keepdims=True)
            pexp = jnp.exp(s)
            pexp = pexp * pl.reciprocal(jnp.sum(pexp, axis=-1, keepdims=True),
                                        approx=True)
            o_h = jnp.dot(pexp, v, preferred_element_type=jnp.float32)   # (S, Dh)
            # proj(concat_h(o_h)) == sum_h  o_h @ proj_w[h*Dh:(h+1)*Dh, :]
            attn_proj = attn_proj + jnp.dot(o_h, proj_w[hh * Dh:(hh + 1) * Dh, :],
                                            preferred_element_type=jnp.float32)
        x = x + attn_proj + projb_ref[blk]         # residual (+ proj bias once)

        # ---- MLP (fc1 -> exact GELU -> fc2) + residual ----
        h2 = _ln(x, n2g_ref[blk], n2b_ref[blk], eps)
        h2 = (jnp.dot(h2, fc1w_ref[blk], preferred_element_type=jnp.float32)
              + fc1b_ref[blk])
        h2 = _gelu_exact(h2)
        x = x + (jnp.dot(h2, fc2w_ref[blk], preferred_element_type=jnp.float32)
                 + fc2b_ref[blk])

    # ---- final LayerNorm + fused output Linear ----
    h = _ln(x, fng_ref[...], fnb_ref[...], eps)
    o_ref[0] = (jnp.dot(h, outw_ref[...], preferred_element_type=jnp.float32)
                + outb_ref[...])


def vit_stack(x, stack, final_g, final_b, out_w, out_b, *, num_heads, eps=LN_EPS):
    """Fused stack-of-blocks + final LN + output Linear. Grid over batch (parallel)."""
    N, S, D = x.shape
    Dout = out_w.shape[1]

    operands = [x]
    in_specs = [pl.BlockSpec((1, S, D), lambda b: (b, 0, 0))]

    def _full_spec(arr):
        nd = arr.ndim
        return pl.BlockSpec(arr.shape, lambda b, _nd=nd: (0,) * _nd)

    for key in STACK_KEYS:
        arr = stack[key]
        operands.append(arr)
        in_specs.append(_full_spec(arr))
    for arr in (final_g.reshape(1, D), final_b.reshape(1, D),
                out_w, out_b.reshape(1, Dout)):
        operands.append(arr)
        in_specs.append(_full_spec(arr))

    return pl.pallas_call(
        functools.partial(_vit_stack_kernel, num_heads=num_heads, eps=eps),
        out_shape=jax.ShapeDtypeStruct((N, S, Dout), jnp.float32),
        grid=(N,),
        in_specs=in_specs,
        out_specs=pl.BlockSpec((1, S, Dout), lambda b: (b, 0, 0)),
        compiler_params=pltpu.CompilerParams(dimension_semantics=("parallel",)),
    )(*operands)

# ----------------------------- patch-embed kernel --------------------------------

def _patch_embed_kernel(p_ref, w_ref, b_ref, pos_ref, o_ref):
    o_ref[0] = (jnp.dot(p_ref[0], w_ref[...], preferred_element_type=jnp.float32)
                + b_ref[...] + pos_ref[0])


def patch_embed(patches, w, b, pos):
    """Conv2d(k=p, s=p)-as-matmul + bias + positional embedding, fused. Grid over batch."""
    N, L, Pd = patches.shape
    E = w.shape[1]
    return pl.pallas_call(
        _patch_embed_kernel,
        out_shape=jax.ShapeDtypeStruct((N, L, E), jnp.float32),
        grid=(N,),
        in_specs=[pl.BlockSpec((1, L, Pd), lambda b: (b, 0, 0)),
                  pl.BlockSpec((Pd, E), lambda b: (0, 0)),
                  pl.BlockSpec((1, E), lambda b: (0, 0)),
                  pl.BlockSpec((1, L, E), lambda b: (0, 0, 0))],
        out_specs=pl.BlockSpec((1, L, E), lambda b: (b, 0, 0)),
        compiler_params=pltpu.CompilerParams(dimension_semantics=("parallel",)),
    )(patches, w, b.reshape(1, E), pos)

# ----------------------------- masked MSE loss kernel -----------------------------

def _loss_kernel(p_ref, t_ref, m_ref, o_ref, *, norm_pix):
    t = t_ref[...]
    if norm_pix:  # static config flag (matches torch.var unbiased + eps=1e-6)
        mu = jnp.mean(t, axis=-1, keepdims=True)
        var = jnp.sum((t - mu) ** 2, axis=-1, keepdims=True) / (t.shape[-1] - 1)
        t = (t - mu) * jax.lax.rsqrt(var + 1e-6)
    d = p_ref[...] - t
    per = jnp.mean(d * d, axis=-1, keepdims=True)   # (M, 1) per-patch MSE
    m = m_ref[...]                                  # (M, 1)
    num = jnp.sum(per * m, keepdims=True)           # (1, 1)
    den = jnp.sum(m, keepdims=True)                 # (1, 1)
    o_ref[...] = num / den


def masked_mse_loss(pred, target, mask, norm_pix):
    N, L, P = pred.shape
    M = N * L
    out = pl.pallas_call(
        functools.partial(_loss_kernel, norm_pix=norm_pix),
        out_shape=jax.ShapeDtypeStruct((1, 1), jnp.float32),
        grid=(1,),
        in_specs=[pl.BlockSpec((M, P), lambda i: (0, 0)),
                  pl.BlockSpec((M, P), lambda i: (0, 0)),
                  pl.BlockSpec((M, 1), lambda i: (0, 0))],
        out_specs=pl.BlockSpec((1, 1), lambda i: (0, 0)),
    )(pred.reshape(M, P), target.reshape(M, P), mask.reshape(M, 1))
    return out[0, 0]

# ----------------------------- sincos positional embeddings ---------------------

def _get_1d_sincos(embed_dim, pos):
    omega = np.arange(embed_dim // 2, dtype=np.float64) / (embed_dim / 2.0)
    omega = 1.0 / 10000 ** omega
    out = np.einsum("m,d->md", pos.reshape(-1).astype(np.float64), omega)
    return np.concatenate([np.sin(out), np.cos(out)], axis=1)


def get_2d_sincos_pos_embed(embed_dim, grid_size, cls_token=False):
    grid_h = np.arange(grid_size, dtype=np.float32)
    grid_w = np.arange(grid_size, dtype=np.float32)
    grid = np.meshgrid(grid_w, grid_h)               # w goes first (matches reference)
    grid = np.stack(grid, axis=0).reshape([2, 1, grid_size, grid_size])
    emb_h = _get_1d_sincos(embed_dim // 2, grid[0])
    emb_w = _get_1d_sincos(embed_dim // 2, grid[1])
    emb = np.concatenate([emb_h, emb_w], axis=1)
    if cls_token:
        emb = np.concatenate([np.zeros([1, embed_dim]), emb], axis=0)
    return jnp.asarray(emb, jnp.float32)

# ----------------------------- parameter init -----------------------------------

def _xavier_linear(key, fan_in, fan_out):
    bound = float(np.sqrt(6.0 / (fan_in + fan_out)))
    w = jax.random.uniform(key, (fan_in, fan_out), jnp.float32, -bound, bound)
    b = jnp.zeros((fan_out,), jnp.float32)
    return w, b


def _init_block(key, dim, mlp_hidden):
    ks = jax.random.split(key, 4)
    qkv_w, qkv_b = _xavier_linear(ks[0], dim, 3 * dim)
    proj_w, proj_b = _xavier_linear(ks[1], dim, dim)
    fc1_w, fc1_b = _xavier_linear(ks[2], dim, mlp_hidden)
    fc2_w, fc2_b = _xavier_linear(ks[3], mlp_hidden, dim)
    one = lambda d: jnp.ones((1, d), jnp.float32)
    zero = lambda d: jnp.zeros((1, d), jnp.float32)
    return dict(
        n1g=one(dim), n1b=zero(dim),
        qkvw=qkv_w, qkvb=qkv_b.reshape(1, -1),
        projw=proj_w, projb=proj_b.reshape(1, -1),
        n2g=one(dim), n2b=zero(dim),
        fc1w=fc1_w, fc1b=fc1_b.reshape(1, -1),
        fc2w=fc2_w, fc2b=fc2_b.reshape(1, -1),
    )


def _stack_blocks(blocks):
    return {k: jnp.stack([blk[k] for blk in blocks], axis=0) for k in blocks[0]}


def init_params(key):
    c = CFG
    E, Dd = c["embed_dim"], c["decoder_embed_dim"]
    C, ps = c["in_chans"], c["patch_size"]
    grid = c["img_size"] // ps
    L = grid * grid
    mlp_hidden = int(E * c["mlp_ratio"])
    dec_mlp_hidden = int(Dd * c["mlp_ratio"])
    patch_dim = ps * ps * C

    n_keys = 5 + c["depth"] + c["decoder_depth"]
    keys = jax.random.split(key, n_keys)
    ki = iter(range(n_keys))

    pe_w, pe_b = _xavier_linear(keys[next(ki)], patch_dim, E)
    cls_token = 0.02 * jax.random.normal(keys[next(ki)], (1, 1, E), jnp.float32)
    mask_token = 0.02 * jax.random.normal(keys[next(ki)], (1, 1, Dd), jnp.float32)
    dec_embed_w, dec_embed_b = _xavier_linear(keys[next(ki)], E, Dd)
    dec_pred_w, dec_pred_b = _xavier_linear(keys[next(ki)], Dd, patch_dim)

    enc_blocks = [_init_block(keys[next(ki)], E, mlp_hidden) for _ in range(c["depth"])]
    dec_blocks = [_init_block(keys[next(ki)], Dd, dec_mlp_hidden)
                  for _ in range(c["decoder_depth"])]

    return dict(
        pe_w=pe_w, pe_b=pe_b,
        cls_token=cls_token, mask_token=mask_token,
        pos_embed=get_2d_sincos_pos_embed(E, grid, cls_token=True),           # [L+1, E]
        decoder_pos_embed=get_2d_sincos_pos_embed(Dd, grid, cls_token=True),  # [L+1, Dd]
        enc_stack=_stack_blocks(enc_blocks),
        norm_g=jnp.ones((E,), jnp.float32), norm_b=jnp.zeros((E,), jnp.float32),
        dec_embed_w=dec_embed_w, dec_embed_b=dec_embed_b,
        dec_stack=_stack_blocks(dec_blocks),
        dec_norm_g=jnp.ones((Dd,), jnp.float32), dec_norm_b=jnp.zeros((Dd,), jnp.float32),
        dec_pred_w=dec_pred_w, dec_pred_b=dec_pred_b,
    )

# ----------------------------- model forward ------------------------------------

def _im2patches_conv_order(imgs, p):
    """Patch flattening matching Conv2d(kernel=p, stride=p) weight order (c, i, j)."""
    N, C, H, W = imgs.shape
    h, w = H // p, W // p
    x = imgs.reshape(N, C, h, p, w, p)
    x = jnp.transpose(x, (0, 2, 4, 1, 3, 5))     # n h w c p q
    return x.reshape(N, h * w, C * p * p)


def patchify(imgs, p):
    """MAE patchify: nchpwq -> nhwpqc -> (N, L, p*p*C)."""
    N, C, H, W = imgs.shape
    h = w = H // p
    x = imgs.reshape(N, C, h, p, w, p)
    x = jnp.transpose(x, (0, 2, 4, 3, 5, 1))     # n h w p q c
    return x.reshape(N, h * w, p * p * C)


def random_masking(x, mask_ratio, noise):
    N, L, D = x.shape
    len_keep = int(L * (1 - mask_ratio))
    ids_shuffle = jnp.argsort(noise, axis=1)
    ids_restore = jnp.argsort(ids_shuffle, axis=1)
    ids_keep = ids_shuffle[:, :len_keep]
    x_masked = jnp.take_along_axis(x, ids_keep[:, :, None], axis=1)
    mask = jnp.ones((N, L), jnp.float32).at[:, :len_keep].set(0.0)
    mask = jnp.take_along_axis(mask, ids_restore, axis=1)
    return x_masked, mask, ids_restore


def mae_teacher_forward(params, imgs, mask_rng, mask_ratio=0.75):
    """MAE_Teacher.forward(imgs): returns (loss, pred, mask).
    NOTE: the reference calls forward_encoder without ids_shuffle/ids_restore,
    i.e. random masking is generated internally (here from mask_rng)."""
    c = CFG
    p = c["patch_size"]
    N = imgs.shape[0]
    E, Dd = c["embed_dim"], c["decoder_embed_dim"]
    L = (c["img_size"] // p) ** 2

    # ---- encoder ----
    patches = _im2patches_conv_order(imgs, p)                           # (N, L, p*p*C)
    pos_patches = params["pos_embed"][1:, :][None]                      # (1, L, E)
    x = patch_embed(patches, params["pe_w"], params["pe_b"], pos_patches)

    noise = jax.random.uniform(mask_rng, (N, L), jnp.float32)
    x, mask, ids_restore = random_masking(x, mask_ratio, noise)

    cls_tok = params["cls_token"] + params["pos_embed"][None, :1, :]    # (1, 1, E)
    cls_tokens = jnp.broadcast_to(cls_tok, (N, 1, E))
    x = jnp.concatenate([cls_tokens, x], axis=1)                        # (N, 1+keep, E)

    # Fused: encoder blocks + final LayerNorm + decoder_embed Linear
    x = vit_stack(x, params["enc_stack"], params["norm_g"], params["norm_b"],
                  params["dec_embed_w"], params["dec_embed_b"],
                  num_heads=c["num_heads"])                             # (N, S, Dd)

    # ---- decoder token assembly (data-dependent unshuffle stays as XLA glue) ----
    S = x.shape[1]
    mask_tokens = jnp.broadcast_to(params["mask_token"], (N, L + 1 - S, Dd))
    x_ = jnp.concatenate([x[:, 1:, :], mask_tokens], axis=1)
    x_ = jnp.take_along_axis(x_, ids_restore[:, :, None], axis=1)
    x = jnp.concatenate([x[:, :1, :], x_], axis=1)                      # (N, L+1, Dd)
    x = x + params["decoder_pos_embed"][None]

    # Fused: decoder blocks + decoder norm + decoder_pred Linear
    x = vit_stack(x, params["dec_stack"], params["dec_norm_g"], params["dec_norm_b"],
                  params["dec_pred_w"], params["dec_pred_b"],
                  num_heads=c["decoder_num_heads"])                     # (N, L+1, p*p*C)
    pred = x[:, 1:, :]

    # ---- loss ----
    target = patchify(imgs, p)
    loss = masked_mse_loss(pred, target, mask, c["norm_pix_loss"])
    return loss, pred, mask


# ----------------------------- main ----------------------------------------------
if __name__ == "__main__":
    key = jax.random.PRNGKey(0)
    k_params, k_img, k_mask = jax.random.split(key, 3)
    params = init_params(k_params)
    imgs = jax.random.normal(k_img, (2, CFG["in_chans"], CFG["img_size"], CFG["img_size"]),
                             jnp.float32)
    fwd = jax.jit(functools.partial(mae_teacher_forward, mask_ratio=0.75))
    loss, pred, mask = fwd(params, imgs, k_mask)
    jax.block_until_ready((loss, pred, mask))
    assert pred.shape == (2, 16, CFG["patch_size"] ** 2 * CFG["in_chans"])
    assert mask.shape == (2, 16)
    assert bool(jnp.isfinite(loss))
    print("KERNEL_OK")
</pallas_src>

<mosaic_0001>
module attributes {stable_mosaic.version = 11 : i64} {
  func.func @_patch_embed_kernel(%arg0: i32, %arg1: memref<1x16x48xf32, #tpu.memory_space<vmem>>, %arg2: memref<48x32xf32, #tpu.memory_space<vmem>>, %arg3: memref<1x32xf32, #tpu.memory_space<vmem>>, %arg4: memref<1x16x32xf32, #tpu.memory_space<vmem>>, %arg5: memref<1x16x32xf32, #tpu.memory_space<vmem>>) attributes {dimension_semantics = [#tpu.dimension_semantics<parallel>], iteration_bounds = array<i64: 2>, scalar_prefetch = 0 : i64, scratch_operands = 0 : i64, tpu.core_type = #tpu.core_type<tc>, window_params = [{transform_indices = @transform_0, window_bounds = array<i64: 1, 16, 48>}, {pipeline_mode = #tpu.pipeline_mode<synchronous>, transform_indices = @transform_1, window_bounds = array<i64: 48, 32>}, {pipeline_mode = #tpu.pipeline_mode<synchronous>, transform_indices = @transform_2, window_bounds = array<i64: 1, 32>}, {pipeline_mode = #tpu.pipeline_mode<synchronous>, transform_indices = @transform_3, window_bounds = array<i64: 1, 16, 32>}, {transform_indices = @transform_4, window_bounds = array<i64: 1, 16, 32>}]} {
    %c0 = arith.constant 0 : index
    %c0_0 = arith.constant 0 : index
    %c0_1 = arith.constant 0 : index
    %0 = vector.load %arg1[%c0, %c0_0, %c0_1] : memref<1x16x48xf32, #tpu.memory_space<vmem>>, vector<1x16x48xf32>
    %1 = vector.shape_cast %0 : vector<1x16x48xf32> to vector<16x48xf32>
    %c0_2 = arith.constant 0 : index
    %c0_3 = arith.constant 0 : index
    %2 = vector.load %arg2[%c0_2, %c0_3] : memref<48x32xf32, #tpu.memory_space<vmem>>, vector<48x32xf32>
    %cst = arith.constant dense<0.000000e+00> : vector<16x32xf32>
    %3 = tpu.matmul %1, %2, %cst {dimension_numbers = #tpu.dot_dimension_numbers<[1], [0], [0], [1], [0, 0, 1, 1], [], []>} : vector<16x48xf32>, vector<48x32xf32>, vector<16x32xf32> -> vector<16x32xf32>
    %c0_4 = arith.constant 0 : index
    %c0_5 = arith.constant 0 : index
    %4 = vector.load %arg3[%c0_4, %c0_5] : memref<1x32xf32, #tpu.memory_space<vmem>>, vector<1x32xf32>
    %5 = vector.broadcast %4 : vector<1x32xf32> to vector<16x32xf32>
    %6 = arith.addf %3, %5 : vector<16x32xf32>
    %c0_6 = arith.constant 0 : index
    %c0_7 = arith.constant 0 : index
    %c0_8 = arith.constant 0 : index
    %7 = vector.load %arg4[%c0_6, %c0_7, %c0_8] : memref<1x16x32xf32, #tpu.memory_space<vmem>>, vector<1x16x32xf32>
    %8 = vector.shape_cast %7 : vector<1x16x32xf32> to vector<16x32xf32>
    %9 = arith.addf %6, %8 : vector<16x32xf32>
    %c0_9 = arith.constant 0 : index
    %c0_10 = arith.constant 0 : index
    %c0_11 = arith.constant 0 : index
    %10 = vector.load %arg5[%c0_9, %c0_10, %c0_11] : memref<1x16x32xf32, #tpu.memory_space<vmem>>, vector<1x16x32xf32>
    %11 = vector.shape_cast %10 : vector<1x16x32xf32> to vector<16x32xf32>
    %12 = vector.shape_cast %9 : vector<16x32xf32> to vector<1x16x32xf32>
    tpu.vector_store %arg5[%c0_9, %c0_10, %c0_11], %12 {strides = array<i32>} : memref<1x16x32xf32, #tpu.memory_space<vmem>>, vector<1x16x32xf32>,
    return
  }
  func.func @transform_0(%arg0: i32) -> (i32, i32, i32) {
    %c0_i32 = arith.constant 0 : i32
    %c0_i32_0 = arith.constant 0 : i32
    %c0_i32_1 = arith.constant 0 : i32
    return %arg0, %c0_i32, %c0_i32_0 : i32, i32, i32
  }
  func.func @transform_1(%arg0: i32) -> (i32, i32) {
    %c0_i32 = arith.constant 0 : i32
    %c0_i32_0 = arith.constant 0 : i32
    %c0_i32_1 = arith.constant 0 : i32
    return %c0_i32, %c0_i32_0 : i32, i32
  }
  func.func @transform_2(%arg0: i32) -> (i32, i32) {
    %c0_i32 = arith.constant 0 : i32
    %c0_i32_0 = arith.constant 0 : i32
    %c0_i32_1 = arith.constant 0 : i32
    return %c0_i32, %c0_i32_0 : i32, i32
  }
  func.func @transform_3(%arg0: i32) -> (i32, i32, i32) {
    %c0_i32 = arith.constant 0 : i32
    %c0_i32_0 = arith.constant 0 : i32
    %c0_i32_1 = arith.constant 0 : i32
    %c0_i32_2 = arith.constant 0 : i32
    return %c0_i32, %c0_i32_0, %c0_i32_1 : i32, i32, i32
  }
  func.func @transform_4(%arg0: i32) -> (i32, i32, i32) {
    %c0_i32 = arith.constant 0 : i32
    %c0_i32_0 = arith.constant 0 : i32
    %c0_i32_1 = arith.constant 0 : i32
    return %arg0, %c0_i32, %c0_i32_0 : i32, i32, i32
  }
}

module attributes {stable_mosaic.version = 11 : i64} {
  func.func @_vit_stack_kernel(%arg0: i32, %arg1: memref<1x5x32xf32, #tpu.memory_space<vmem>>, %arg2: memref<2x1x32xf32, #tpu.memory_space<vmem>>, %arg3: memref<2x1x32xf32, #tpu.memory_space<vmem>>, %arg4: memref<2x32x96xf32, #tpu.memory_space<vmem>>, %arg5: memref<2x1x96xf32, #tpu.memory_space<vmem>>, %arg6: memref<2x32x32xf32, #tpu.memory_space<vmem>>, %arg7: memref<2x1x32xf32, #tpu.memory_space<vmem>>, %arg8: memref<2x1x32xf32, #tpu.memory_space<vmem>>, %arg9: memref<2x1x32xf32, #tpu.memory_space<vmem>>, %arg10: memref<2x32x128xf32, #tpu.memory_space<vmem>>, %arg11: memref<2x1x128xf32, #tpu.memory_space<vmem>>, %arg12: memref<2x128x32xf32, #tpu.memory_space<vmem>>, %arg13: memref<2x1x32xf32, #tpu.memory_space<vmem>>, %arg14: memref<1x32xf32, #tpu.memory_space<vmem>>, %arg15: memref<1x32xf32, #tpu.memory_space<vmem>>, %arg16: memref<32x32xf32, #tpu.memory_space<vmem>>, %arg17: memref<1x32xf32, #tpu.memory_space<vmem>>, %arg18: memref<1x5x32xf32, #tpu.memory_space<vmem>>) attributes {dimension_semantics = [#tpu.dimension_semantics<parallel>], iteration_bounds = array<i64: 2>, scalar_prefetch = 0 : i64, scratch_operands = 0 : i64, tpu.core_type = #tpu.core_type<tc>, window_params = [{transform_indices = @transform_0, window_bounds = array<i64: 1, 5, 32>}, {pipeline_mode = #tpu.pipeline_mode<synchronous>, transform_indices = @transform_1, window_bounds = array<i64: 2, 1, 32>}, {pipeline_mode = #tpu.pipeline_mode<synchronous>, transform_indices = @transform_2, window_bounds = array<i64: 2, 1, 32>}, {pipeline_mode = #tpu.pipeline_mode<synchronous>, transform_indices = @transform_3, window_bounds = array<i64: 2, 32, 96>}, {pipeline_mode = #tpu.pipeline_mode<synchronous>, transform_indices = @transform_4, window_bounds = array<i64: 2, 1, 96>}, {pipeline_mode = #tpu.pipeline_mode<synchronous>, transform_indices = @transform_5, window_bounds = array<i64: 2, 32, 32>}, {pipeline_mode = #tpu.pipeline_mode<synchronous>, transform_indices = @transform_6, window_bounds = array<i64: 2, 1, 32>}, {pipeline_mode = #tpu.pipeline_mode<synchronous>, transform_indices = @transform_7, window_bounds = array<i64: 2, 1, 32>}, {pipeline_mode = #tpu.pipeline_mode<synchronous>, transform_indices = @transform_8, window_bounds = array<i64: 2, 1, 32>}, {pipeline_mode = #tpu.pipeline_mode<synchronous>, transform_indices = @transform_9, window_bounds = array<i64: 2, 32, 128>}, {pipeline_mode = #tpu.pipeline_mode<synchronous>, transform_indices = @transform_10, window_bounds = array<i64: 2, 1, 128>}, {pipeline_mode = #tpu.pipeline_mode<synchronous>, transform_indices = @transform_11, window_bounds = array<i64: 2, 128, 32>}, {pipeline_mode = #tpu.pipeline_mode<synchronous>, transform_indices = @transform_12, window_bounds = array<i64: 2, 1, 32>}, {pipeline_mode = #tpu.pipeline_mode<synchronous>, transform_indices = @transform_13, window_bounds = array<i64: 1, 32>}, {pipeline_mode = #tpu.pipeline_mode<synchronous>, transform_indices = @transform_14, window_bounds = array<i64: 1, 32>}, {pipeline_mode = #tpu.pipeline_mode<synchronous>, transform_indices = @transform_15, window_bounds = array<i64: 32, 32>}, {pipeline_mode = #tpu.pipeline_mode<synchronous>, transform_indices = @transform_16, window_bounds = array<i64: 1, 32>}, {transform_indices = @transform_17, window_bounds = array<i64: 1, 5, 32>}]} {
    %c0 = arith.constant 0 : index
    %c0_0 = arith.constant 0 : index
    %c0_1 = arith.constant 0 : index
    %0 = vector.load %arg1[%c0, %c0_0, %c0_1] : memref<1x5x32xf32, #tpu.memory_space<vmem>>, vector<1x5x32xf32>
    %1 = vector.shape_cast %0 : vector<1x5x32xf32> to vector<5x32xf32>
    %c0_2 = arith.constant 0 : index
    %c0_3 = arith.constant 0 : index
    %c0_4 = arith.constant 0 : index
    %2 = vector.load %arg2[%c0_2, %c0_3, %c0_4] : memref<2x1x32xf32, #tpu.memory_space<vmem>>, vector<1x1x32xf32>
    %3 = vector.shape_cast %2 : vector<1x1x32xf32> to vector<1x32xf32>
    %c0_5 = arith.constant 0 : index
    %c0_6 = arith.constant 0 : index
    %c0_7 = arith.constant 0 : index
    %4 = vector.load %arg3[%c0_5, %c0_6, %c0_7] : memref<2x1x32xf32, #tpu.memory_space<vmem>>, vector<1x1x32xf32>
    %5 = vector.shape_cast %4 : vector<1x1x32xf32> to vector<1x32xf32>
    %cst = arith.constant dense<0.000000e+00> : vector<5xf32>
    %6 = vector.multi_reduction <add>, %1, %cst [1] : vector<5x32xf32> to vector<5xf32>
    %7 = vector.shape_cast %6 : vector<5xf32> to vector<5x1xf32>
    %cst_8 = arith.constant 3.200000e+01 : f32
    %8 = vector.broadcast %cst_8 : f32 to vector<5x1xf32>
    %9 = arith.divf %7, %8 : vector<5x1xf32>
    %10 = vector.broadcast %9 : vector<5x1xf32> to vector<5x32xf32>
    %11 = arith.subf %1, %10 : vector<5x32xf32>
    %12 = arith.mulf %11, %11 : vector<5x32xf32>
    %cst_9 = arith.constant dense<0.000000e+00> : vector<5xf32>
    %13 = vector.multi_reduction <add>, %12, %cst_9 [1] : vector<5x32xf32> to vector<5xf32>
    %14 = vector.shape_cast %13 : vector<5xf32> to vector<5x1xf32>
    %cst_10 = arith.constant 3.200000e+01 : f32
    %15 = vector.broadcast %cst_10 : f32 to vector<5x1xf32>
    %16 = arith.divf %14, %15 : vector<5x1xf32>
    %cst_11 = arith.constant 9.99999974E-6 : f32
    %17 = vector.broadcast %cst_11 : f32 to vector<5x1xf32>
    %18 = arith.addf %16, %17 : vector<5x1xf32>
    %19 = math.rsqrt %18 : vector<5x1xf32>
    %20 = vector.broadcast %19 : vector<5x1xf32> to vector<5x32xf32>
    %21 = arith.mulf %11, %20 : vector<5x32xf32>
    %22 = vector.broadcast %3 : vector<1x32xf32> to vector<5x32xf32>
    %23 = arith.mulf %21, %22 : vector<5x32xf32>
    %24 = vector.broadcast %5 : vector<1x32xf32> to vector<5x32xf32>
    %25 = arith.addf %23, %24 : vector<5x32xf32>
    %c0_12 = arith.constant 0 : index
    %c0_13 = arith.constant 0 : index
    %c0_14 = arith.constant 0 : index
    %26 = vector.load %arg4[%c0_12, %c0_13, %c0_14] : memref<2x32x96xf32, #tpu.memory_space<vmem>>, vector<1x32x96xf32>
    %27 = vector.shape_cast %26 : vector<1x32x96xf32> to vector<32x96xf32>
    %cst_15 = arith.constant dense<0.000000e+00> : vector<5x96xf32>
    %28 = tpu.matmul %25, %27, %cst_15 {dimension_numbers = #tpu.dot_dimension_numbers<[1], [0], [0], [1], [0, 0, 1, 1], [], []>} : vector<5x32xf32>, vector<32x96xf32>, vector<5x96xf32> -> vector<5x96xf32>
    %c0_16 = arith.constant 0 : index
    %c0_17 = arith.constant 0 : index
    %c0_18 = arith.constant 0 : index
    %29 = vector.load %arg5[%c0_16, %c0_17, %c0_18] : memref<2x1x96xf32, #tpu.memory_space<vmem>>, vector<1x1x96xf32>
    %30 = vector.shape_cast %29 : vector<1x1x96xf32> to vector<1x96xf32>
    %31 = vector.broadcast %30 : vector<1x96xf32> to vector<5x96xf32>
    %32 = arith.addf %28, %31 : vector<5x96xf32>
    %c0_19 = arith.constant 0 : index
    %c0_20 = arith.constant 0 : index
    %c0_21 = arith.constant 0 : index
    %33 = vector.load %arg6[%c0_19, %c0_20, %c0_21] : memref<2x32x32xf32, #tpu.memory_space<vmem>>, vector<1x32x32xf32>
    %34 = vector.shape_cast %33 : vector<1x32x32xf32> to vector<32x32xf32>
    %cst_22 = arith.constant 0.000000e+00 : f32
    %35 = vector.broadcast %cst_22 : f32 to vector<5x32xf32>
    %36 = vector.extract_strided_slice %32 {offsets = [0, 0], sizes = [5, 8], strides = [1, 1]} : vector<5x96xf32> to vector<5x8xf32>
    %37 = vector.extract_strided_slice %32 {offsets = [0, 32], sizes = [5, 8], strides = [1, 1]} : vector<5x96xf32> to vector<5x8xf32>
    %38 = vector.extract_strided_slice %32 {offsets = [0, 64], sizes = [5, 8], strides = [1, 1]} : vector<5x96xf32> to vector<5x8xf32>
    %cst_23 = arith.constant dense<0.000000e+00> : vector<5x5xf32>
    %39 = tpu.matmul %36, %37, %cst_23 {dimension_numbers = #tpu.dot_dimension_numbers<[1], [1], [0], [0], [0, 0, 1, 0], [], []>} : vector<5x8xf32>, vector<5x8xf32>, vector<5x5xf32> -> vector<5x5xf32>
    %cst_24 = arith.constant 0.353553385 : f32
    %40 = vector.broadcast %cst_24 : f32 to vector<5x5xf32>
    %41 = arith.mulf %39, %40 : vector<5x5xf32>
    %cst_25 = arith.constant dense<0xFF800000> : vector<5xf32>
    %42 = vector.multi_reduction <maximumf>, %41, %cst_25 [1] : vector<5x5xf32> to vector<5xf32>
    %43 = vector.shape_cast %42 : vector<5xf32> to vector<5x1xf32>
    %44 = vector.broadcast %43 : vector<5x1xf32> to vector<5x5xf32>
    %45 = arith.subf %41, %44 : vector<5x5xf32>
    %46 = math.exp %45 : vector<5x5xf32>
    %cst_26 = arith.constant dense<0.000000e+00> : vector<5xf32>
    %47 = vector.multi_reduction <add>, %46, %cst_26 [1] : vector<5x5xf32> to vector<5xf32>
    %48 = vector.shape_cast %47 : vector<5xf32> to vector<5x1xf32>
    %49 = tpu.reciprocal %48 {approx = true} : vector<5x1xf32> -> vector<5x1xf32>
    %50 = vector.broadcast %49 : vector<5x1xf32> to vector<5x5xf32>
    %51 = arith.mulf %46, %50 : vector<5x5xf32>
    %cst_27 = arith.constant dense<0.000000e+00> : vector<5x8xf32>
    %52 = tpu.matmul %51, %38, %cst_27 {dimension_numbers = #tpu.dot_dimension_numbers<[1], [0], [0], [1], [0, 0, 1, 1], [], []>} : vector<5x5xf32>, vector<5x8xf32>, vector<5x8xf32> -> vector<5x8xf32>
    %53 = vector.extract_strided_slice %34 {offsets = [0, 0], sizes = [8, 32], strides = [1, 1]} : vector<32x32xf32> to vector<8x32xf32>
    %cst_28 = arith.constant dense<0.000000e+00> : vector<5x32xf32>
    %54 = tpu.matmul %52, %53, %cst_28 {dimension_numbers = #tpu.dot_dimension_numbers<[1], [0], [0], [1], [0, 0, 1, 1], [], []>} : vector<5x8xf32>, vector<8x32xf32>, vector<5x32xf32> -> vector<5x32xf32>
    %55 = arith.addf %35, %54 : vector<5x32xf32>
    %56 = vector.extract_strided_slice %32 {offsets = [0, 8], sizes = [5, 8], strides = [1, 1]} : vector<5x96xf32> to vector<5x8xf32>
    %57 = vector.extract_strided_slice %32 {offsets = [0, 40], sizes = [5, 8], strides = [1, 1]} : vector<5x96xf32> to vector<5x8xf32>
    %58 = vector.extract_strided_slice %32 {offsets = [0, 72], sizes = [5, 8], strides = [1, 1]} : vector<5x96xf32> to vector<5x8xf32>
    %cst_29 = arith.constant dense<0.000000e+00> : vector<5x5xf32>
    %59 = tpu.matmul %56, %57, %cst_29 {dimension_numbers = #tpu.dot_dimension_numbers<[1], [1], [0], [0], [0, 0, 1, 0], [], []>} : vector<5x8xf32>, vector<5x8xf32>, vector<5x5xf32> -> vector<5x5xf32>
    %cst_30 = arith.constant 0.353553385 : f32
    %60 = vector.broadcast %cst_30 : f32 to vector<5x5xf32>
    %61 = arith.mulf %59, %60 : vector<5x5xf32>
    %cst_31 = arith.constant dense<0xFF800000> : vector<5xf32>
    %62 = vector.multi_reduction <maximumf>, %61, %cst_31 [1] : vector<5x5xf32> to vector<5xf32>
    %63 = vector.shape_cast %62 : vector<5xf32> to vector<5x1xf32>
    %64 = vector.broadcast %63 : vector<5x1xf32> to vector<5x5xf32>
    %65 = arith.subf %61, %64 : vector<5x5xf32>
    %66 = math.exp %65 : vector<5x5xf32>
    %cst_32 = arith.constant dense<0.000000e+00> : vector<5xf32>
    %67 = vector.multi_reduction <add>, %66, %cst_32 [1] : vector<5x5xf32> to vector<5xf32>
    %68 = vector.shape_cast %67 : vector<5xf32> to vector<5x1xf32>
    %69 = tpu.reciprocal %68 {approx = true} : vector<5x1xf32> -> vector<5x1xf32>
    %70 = vector.broadcast %69 : vector<5x1xf32> to vector<5x5xf32>
    %71 = arith.mulf %66, %70 : vector<5x5xf32>
    %cst_33 = arith.constant dense<0.000000e+00> : vector<5x8xf32>
    %72 = tpu.matmul %71, %58, %cst_33 {dimension_numbers = #tpu.dot_dimension_numbers<[1], [0], [0], [1], [0, 0, 1, 1], [], []>} : vector<5x5xf32>, vector<5x8xf32>, vector<5x8xf32> -> vector<5x8xf32>
    %73 = vector.extract_strided_slice %34 {offsets = [8, 0], sizes = [8, 32], strides = [1, 1]} : vector<32x32xf32> to vector<8x32xf32>
    %cst_34 = arith.constant dense<0.000000e+00> : vector<5x32xf32>
    %74 = tpu.matmul %72, %73, %cst_34 {dimension_numbers = #tpu.dot_dimension_numbers<[1], [0], [0], [1], [0, 0, 1, 1], [], []>} : vector<5x8xf32>, vector<8x32xf32>, vector<5x32xf32> -> vector<5x32xf32>
    %75 = arith.addf %55, %74 : vector<5x32xf32>
    %76 = vector.extract_strided_slice %32 {offsets = [0, 16], sizes = [5, 8], strides = [1, 1]} : vector<5x96xf32> to vector<5x8xf32>
    %77 = vector.extract_strided_slice %32 {offsets = [0, 48], sizes = [5, 8], strides = [1, 1]} : vector<5x96xf32> to vector<5x8xf32>
    %78 = vector.extract_strided_slice %32 {offsets = [0, 80], sizes = [5, 8], strides = [1, 1]} : vector<5x96xf32> to vector<5x8xf32>
    %cst_35 = arith.constant dense<0.000000e+00> : vector<5x5xf32>
    %79 = tpu.matmul %76, %77, %cst_35 {dimension_numbers = #tpu.dot_dimension_numbers<[1], [1], [0], [0], [0, 0, 1, 0], [], []>} : vector<5x8xf32>, vector<5x8xf32>, vector<5x5xf32> -> vector<5x5xf32>
    %cst_36 = arith.constant 0.353553385 : f32
    %80 = vector.broadcast %cst_36 : f32 to vector<5x5xf32>
    %81 = arith.mulf %79, %80 : vector<5x5xf32>
    %cst_37 = arith.constant dense<0xFF800000> : vector<5xf32>
    %82 = vector.multi_reduction <maximumf>, %81, %cst_37 [1] : vector<5x5xf32> to vector<5xf32>
    %83 = vector.shape_cast %82 : vector<5xf32> to vector<5x1xf32>
    %84 = vector.broadcast %83 : vector<5x1xf32> to vector<5x5xf32>
    %85 = arith.subf %81, %84 : vector<5x5xf32>
    %86 = math.exp %85 : vector<5x5xf32>
    %cst_38 = arith.constant dense<0.000000e+00> : vector<5xf32>
    %87 = vector.multi_reduction <add>, %86, %cst_38 [1] : vector<5x5xf32> to vector<5xf32>
    %88 = vector.shape_cast %87 : vector<5xf32> to vector<5x1xf32>
    %89 = tpu.reciprocal %88 {approx = true} : vector<5x1xf32> -> vector<5x1xf32>
    %90 = vector.broadcast %89 : vector<5x1xf32> to vector<5x5xf32>
    %91 = arith.mulf %86, %90 : vector<5x5xf32>
    %cst_39 = arith.constant dense<0.000000e+00> : vector<5x8xf32>
    %92 = tpu.matmul %91, %78, %cst_39 {dimension_numbers = #tpu.dot_dimension_numbers<[1], [0], [0], [1], [0, 0, 1, 1], [], []>} : vector<5x5xf32>, vector<5x8xf32>, vector<5x8xf32> -> vector<5x8xf32>
    %93 = vector.extract_strided_slice %34 {offsets = [16, 0], sizes = [8, 32], strides = [1, 1]} : vector<32x32xf32> to vector<8x32xf32>
    %cst_40 = arith.constant dense<0.000000e+00> : vector<5x32xf32>
    %94 = tpu.matmul %92, %93, %cst_40 {dimension_numbers = #tpu.dot_dimension_numbers<[1], [0], [0], [1], [0, 0, 1, 1], [], []>} : vector<5x8xf32>, vector<8x32xf32>, vector<5x32xf32> -> vector<5x32xf32>
    %95 = arith.addf %75, %94 : vector<5x32xf32>
    %96 = vector.extract_strided_slice %32 {offsets = [0, 24], sizes = [5, 8], strides = [1, 1]} : vector<5x96xf32> to vector<5x8xf32>
    %97 = vector.extract_strided_slice %32 {offsets = [0, 56], sizes = [5, 8], strides = [1, 1]} : vector<5x96xf32> to vector<5x8xf32>
    %98 = vector.extract_strided_slice %32 {offsets = [0, 88], sizes = [5, 8], strides = [1, 1]} : vector<5x96xf32> to vector<5x8xf32>
    %cst_41 = arith.constant dense<0.000000e+00> : vector<5x5xf32>
    %99 = tpu.matmul %96, %97, %cst_41 {dimension_numbers = #tpu.dot_dimension_numbers<[1], [1], [0], [0], [0, 0, 1, 0], [], []>} : vector<5x8xf32>, vector<5x8xf32>, vector<5x5xf32> -> vector<5x5xf32>
    %cst_42 = arith.constant 0.353553385 : f32
    %100 = vector.broadcast %cst_42 : f32 to vector<5x5xf32>
    %101 = arith.mulf %99, %100 : vector<5x5xf32>
    %cst_43 = arith.constant dense<0xFF800000> : vector<5xf32>
    %102 = vector.multi_reduction <maximumf>, %101, %cst_43 [1] : vector<5x5xf32> to vector<5xf32>
    %103 = vector.shape_cast %102 : vector<5xf32> to vector<5x1xf32>
    %104 = vector.broadcast %103 : vector<5x1xf32> to vector<5x5xf32>
    %105 = arith.subf %101, %104 : vector<5x5xf32>
    %106 = math.exp %105 : vector<5x5xf32>
    %cst_44 = arith.constant dense<0.000000e+00> : vector<5xf32>
    %107 = vector.multi_reduction <add>, %106, %cst_44 [1] : vector<5x5xf32> to vector<5xf32>
    %108 = vector.shape_cast %107 : vector<5xf32> to vector<5x1xf32>
    %109 = tpu.reciprocal %108 {approx = true} : vector<5x1xf32> -> vector<5x1xf32>
    %110 = vector.broadcast %109 : vector<5x1xf32> to vector<5x5xf32>
    %111 = arith.mulf %106, %110 : vector<5x5xf32>
    %cst_45 = arith.constant dense<0.000000e+00> : vector<5x8xf32>
    %112 = tpu.matmul %111, %98, %cst_45 {dimension_numbers = #tpu.dot_dimension_numbers<[1], [0], [0], [1], [0, 0, 1, 1], [], []>} : vector<5x5xf32>, vector<5x8xf32>, vector<5x8xf32> -> vector<5x8xf32>
    %113 = vector.extract_strided_slice %34 {offsets = [24, 0], sizes = [8, 32], strides = [1, 1]} : vector<32x32xf32> to vector<8x32xf32>
    %cst_46 = arith.constant dense<0.000000e+00> : vector<5x32xf32>
    %114 = tpu.matmul %112, %113, %cst_46 {dimension_numbers = #tpu.dot_dimension_numbers<[1], [0], [0], [1], [0, 0, 1, 1], [], []>} : vector<5x8xf32>, vector<8x32xf32>, vector<5x32xf32> -> vector<5x32xf32>
    %115 = arith.addf %95, %114 : vector<5x32xf32>
    %116 = arith.addf %1, %115 : vector<5x32xf32>
    %c0_47 = arith.constant 0 : index
    %c0_48 = arith.constant 0 : index
    %c0_49 = arith.constant 0 : index
    %117 = vector.load %arg7[%c0_47, %c0_48, %c0_49] : memref<2x1x32xf32, #tpu.memory_space<vmem>>, vector<1x1x32xf32>
    %118 = vector.shape_cast %117 : vector<1x1x32xf32> to vector<1x32xf32>
    %119 = vector.broadcast %118 : vector<1x32xf32> to vector<5x32xf32>
    %120 = arith.addf %116, %119 : vector<5x32xf32>
    %c0_50 = arith.constant 0 : index
    %c0_51 = arith.constant 0 : index
    %c0_52 = arith.constant 0 : index
    %121 = vector.load %arg8[%c0_50, %c0_51, %c0_52] : memref<2x1x32xf32, #tpu.memory_space<vmem>>, vector<1x1x32xf32>
    %122 = vector.shape_cast %121 : vector<1x1x32xf32> to vector<1x32xf32>
    %c0_53 = arith.constant 0 : index
    %c0_54 = arith.constant 0 : index
    %c0_55 = arith.constant 0 : index
    %123 = vector.load %arg9[%c0_53, %c0_54, %c0_55] : memref<2x1x32xf32, #tpu.memory_space<vmem>>, vector<1x1x32xf32>
    %124 = vector.shape_cast %123 : vector<1x1x32xf32> to vector<1x32xf32>
    %cst_56 = arith.constant dense<0.000000e+00> : vector<5xf32>
    %125 = vector.multi_reduction <add>, %120, %cst_56 [1] : vector<5x32xf32> to vector<5xf32>
    %126 = vector.shape_cast %125 : vector<5xf32> to vector<5x1xf32>
    %cst_57 = arith.constant 3.200000e+01 : f32
    %127 = vector.broadcast %cst_57 : f32 to vector<5x1xf32>
    %128 = arith.divf %126, %127 : vector<5x1xf32>
    %129 = vector.broadcast %128 : vector<5x1xf32> to vector<5x32xf32>
    %130 = arith.subf %120, %129 : vector<5x32xf32>
    %131 = arith.mulf %130, %130 : vector<5x32xf32>
    %cst_58 = arith.constant dense<0.000000e+00> : vector<5xf32>
    %132 = vector.multi_reduction <add>, %131, %cst_58 [1] : vector<5x32xf32> to vector<5xf32>
    %133 = vector.shape_cast %132 : vector<5xf32> to vector<5x1xf32>
    %cst_59 = arith.constant 3.200000e+01 : f32
    %134 = vector.broadcast %cst_59 : f32 to vector<5x1xf32>
    %135 = arith.divf %133, %134 : vector<5x1xf32>
    %cst_60 = arith.constant 9.99999974E-6 : f32
    %136 = vector.broadcast %cst_60 : f32 to vector<5x1xf32>
    %137 = arith.addf %135, %136 : vector<5x1xf32>
    %138 = math.rsqrt %137 : vector<5x1xf32>
    %139 = vector.broadcast %138 : vector<5x1xf32> to vector<5x32xf32>
    %140 = arith.mulf %130, %139 : vector<5x32xf32>
    %141 = vector.broadcast %122 : vector<1x32xf32> to vector<5x32xf32>
    %142 = arith.mulf %140, %141 : vector<5x32xf32>
    %143 = vector.broadcast %124 : vector<1x32xf32> to vector<5x32xf32>
    %144 = arith.addf %142, %143 : vector<5x32xf32>
    %c0_61 = arith.constant 0 : index
    %c0_62 = arith.constant 0 : index
    %c0_63 = arith.constant 0 : index
    %145 = vector.load %arg10[%c0_61, %c0_62, %c0_63] : memref<2x32x128xf32, #tpu.memory_space<vmem>>, vector<1x32x128xf32>
    %146 = vector.shape_cast %145 : vector<1x32x128xf32> to vector<32x128xf32>
    %cst_64 = arith.constant dense<0.000000e+00> : vector<5x128xf32>
    %147 = tpu.matmul %144, %146, %cst_64 {dimension_numbers = #tpu.dot_dimension_numbers<[1], [0], [0], [1], [0, 0, 1, 1], [], []>} : vector<5x32xf32>, vector<32x128xf32>, vector<5x128xf32> -> vector<5x128xf32>
    %c0_65 = arith.constant 0 : index
    %c0_66 = arith.constant 0 : index
    %c0_67 = arith.constant 0 : index
    %148 = vector.load %arg11[%c0_65, %c0_66, %c0_67] : memref<2x1x128xf32, #tpu.memory_space<vmem>>, vector<1x1x128xf32>
    %149 = vector.shape_cast %148 : vector<1x1x128xf32> to vector<1x128xf32>
    %150 = vector.broadcast %149 : vector<1x128xf32> to vector<5x128xf32>
    %151 = arith.addf %147, %150 : vector<5x128xf32>
    %cst_68 = arith.constant 5.000000e-01 : f32
    %152 = vector.broadcast %cst_68 : f32 to vector<5x128xf32>
    %153 = arith.mulf %152, %151 : vector<5x128xf32>
    %cst_69 = arith.constant 0.707106769 : f32
    %154 = vector.broadcast %cst_69 : f32 to vector<5x128xf32>
    %155 = arith.mulf %151, %154 : vector<5x128xf32>
    %cst_70 = arith.constant 0.000000e+00 : f32
    %156 = vector.broadcast %cst_70 : f32 to vector<5x128xf32>
    %157 = arith.cmpf oge, %155, %156 : vector<5x128xf32>
    %cst_71 = arith.constant 1.000000e+00 : f32
    %cst_72 = arith.constant -1.000000e+00 : f32
    %158 = vector.broadcast %cst_71 : f32 to vector<5x128xf32>
    %159 = vector.broadcast %cst_72 : f32 to vector<5x128xf32>
    %160 = arith.select %157, %158, %159 : vector<5x128xi1>, vector<5x128xf32>
    %161 = math.absf %155 : vector<5x128xf32>
    %cst_73 = arith.constant 0.327591091 : f32
    %162 = vector.broadcast %cst_73 : f32 to vector<5x128xf32>
    %163 = arith.mulf %162, %161 : vector<5x128xf32>
    %cst_74 = arith.constant 1.000000e+00 : f32
    %164 = vector.broadcast %cst_74 : f32 to vector<5x128xf32>
    %165 = arith.addf %164, %163 : vector<5x128xf32>
    %cst_75 = arith.constant 1.000000e+00 : f32
    %166 = vector.broadcast %cst_75 : f32 to vector<5x128xf32>
    %167 = arith.divf %166, %165 : vector<5x128xf32>
    %cst_76 = arith.constant 1.06140542 : f32
    %168 = vector.broadcast %cst_76 : f32 to vector<5x128xf32>
    %169 = arith.mulf %168, %167 : vector<5x128xf32>
    %cst_77 = arith.constant -1.45315206 : f32
    %170 = vector.broadcast %cst_77 : f32 to vector<5x128xf32>
    %171 = arith.addf %169, %170 : vector<5x128xf32>
    %172 = arith.mulf %171, %167 : vector<5x128xf32>
    %cst_78 = arith.constant 1.42141378 : f32
    %173 = vector.broadcast %cst_78 : f32 to vector<5x128xf32>
    %174 = arith.addf %172, %173 : vector<5x128xf32>
    %175 = arith.mulf %174, %167 : vector<5x128xf32>
    %cst_79 = arith.constant -0.284496725 : f32
    %176 = vector.broadcast %cst_79 : f32 to vector<5x128xf32>
    %177 = arith.addf %175, %176 : vector<5x128xf32>
    %178 = arith.mulf %177, %167 : vector<5x128xf32>
    %cst_80 = arith.constant 0.254829586 : f32
    %179 = vector.broadcast %cst_80 : f32 to vector<5x128xf32>
    %180 = arith.addf %178, %179 : vector<5x128xf32>
    %181 = arith.mulf %180, %167 : vector<5x128xf32>
    %cst_81 = arith.constant 0.000000e+00 : f32
    %182 = vector.broadcast %cst_81 : f32 to vector<5x128xf32>
    %183 = arith.subf %182, %161 : vector<5x128xf32>
    %184 = arith.mulf %183, %161 : vector<5x128xf32>
    %185 = math.exp %184 : vector<5x128xf32>
    %186 = arith.mulf %181, %185 : vector<5x128xf32>
    %cst_82 = arith.constant 1.000000e+00 : f32
    %187 = vector.broadcast %cst_82 : f32 to vector<5x128xf32>
    %188 = arith.subf %187, %186 : vector<5x128xf32>
    %189 = arith.mulf %160, %188 : vector<5x128xf32>
    %cst_83 = arith.constant 1.000000e+00 : f32
    %190 = vector.broadcast %cst_83 : f32 to vector<5x128xf32>
    %191 = arith.addf %190, %189 : vector<5x128xf32>
    %192 = arith.mulf %153, %191 : vector<5x128xf32>
    %c0_84 = arith.constant 0 : index
    %c0_85 = arith.constant 0 : index
    %c0_86 = arith.constant 0 : index
    %193 = vector.load %arg12[%c0_84, %c0_85, %c0_86] : memref<2x128x32xf32, #tpu.memory_space<vmem>>, vector<1x128x32xf32>
    %194 = vector.shape_cast %193 : vector<1x128x32xf32> to vector<128x32xf32>
    %cst_87 = arith.constant dense<0.000000e+00> : vector<5x32xf32>
    %195 = tpu.matmul %192, %194, %cst_87 {dimension_numbers = #tpu.dot_dimension_numbers<[1], [0], [0], [1], [0, 0, 1, 1], [], []>} : vector<5x128xf32>, vector<128x32xf32>, vector<5x32xf32> -> vector<5x32xf32>
    %c0_88 = arith.constant 0 : index
    %c0_89 = arith.constant 0 : index
    %c0_90 = arith.constant 0 : index
    %196 = vector.load %arg13[%c0_88, %c0_89, %c0_90] : memref<2x1x32xf32, #tpu.memory_space<vmem>>, vector<1x1x32xf32>
    %197 = vector.shape_cast %196 : vector<1x1x32xf32> to vector<1x32xf32>
    %198 = vector.broadcast %197 : vector<1x32xf32> to vector<5x32xf32>
    %199 = arith.addf %195, %198 : vector<5x32xf32>
    %200 = arith.addf %120, %199 : vector<5x32xf32>
    %c1 = arith.constant 1 : index
    %c0_91 = arith.constant 0 : index
    %c0_92 = arith.constant 0 : index
    %201 = vector.load %arg2[%c1, %c0_91, %c0_92] : memref<2x1x32xf32, #tpu.memory_space<vmem>>, vector<1x1x32xf32>
    %202 = vector.shape_cast %201 : vector<1x1x32xf32> to vector<1x32xf32>
    %c1_93 = arith.constant 1 : index
    %c0_94 = arith.constant 0 : index
    %c0_95 = arith.constant 0 : index
    %203 = vector.load %arg3[%c1_93, %c0_94, %c0_95] : memref<2x1x32xf32, #tpu.memory_space<vmem>>, vector<1x1x32xf32>
    %204 = vector.shape_cast %203 : vector<1x1x32xf32> to vector<1x32xf32>
    %cst_96 = arith.constant dense<0.000000e+00> : vector<5xf32>
    %205 = vector.multi_reduction <add>, %200, %cst_96 [1] : vector<5x32xf32> to vector<5xf32>
    %206 = vector.shape_cast %205 : vector<5xf32> to vector<5x1xf32>
    %cst_97 = arith.constant 3.200000e+01 : f32
    %207 = vector.broadcast %cst_97 : f32 to vector<5x1xf32>
    %208 = arith.divf %206, %207 : vector<5x1xf32>
    %209 = vector.broadcast %208 : vector<5x1xf32> to vector<5x32xf32>
    %210 = arith.subf %200, %209 : vector<5x32xf32>
    %211 = arith.mulf %210, %210 : vector<5x32xf32>
    %cst_98 = arith.constant dense<0.000000e+00> : vector<5xf32>
    %212 = vector.multi_reduction <add>, %211, %cst_98 [1] : vector<5x32xf32> to vector<5xf32>
    %213 = vector.shape_cast %212 : vector<5xf32> to vector<5x1xf32>
    %cst_99 = arith.constant 3.200000e+01 : f32
    %214 = vector.broadcast %cst_99 : f32 to vector<5x1xf32>
    %215 = arith.divf %213, %214 : vector<5x1xf32>
    %cst_100 = arith.constant 9.99999974E-6 : f32
    %216 = vector.broadcast %cst_100 : f32 to vector<5x1xf32>
    %217 = arith.addf %215, %216 : vector<5x1xf32>
    %218 = math.rsqrt %217 : vector<5x1xf32>
    %219 = vector.broadcast %218 : vector<5x1xf32> to vector<5x32xf32>
    %220 = arith.mulf %210, %219 : vector<5x32xf32>
    %221 = vector.broadcast %202 : vector<1x32xf32> to vector<5x32xf32>
    %222 = arith.mulf %220, %221 : vector<5x32xf32>
    %223 = vector.broadcast %204 : vector<1x32xf32> to vector<5x32xf32>
    %224 = arith.addf %222, %223 : vector<5x32xf32>
    %c1_101 = arith.constant 1 : index
    %c0_102 = arith.constant 0 : index
    %c0_103 = arith.constant 0 : index
    %225 = vector.load %arg4[%c1_101, %c0_102, %c0_103] : memref<2x32x96xf32, #tpu.memory_space<vmem>>, vector<1x32x96xf32>
    %226 = vector.shape_cast %225 : vector<1x32x96xf32> to vector<32x96xf32>
    %cst_104 = arith.constant dense<0.000000e+00> : vector<5x96xf32>
    %227 = tpu.matmul %224, %226, %cst_104 {dimension_numbers = #tpu.dot_dimension_numbers<[1], [0], [0], [1], [0, 0, 1, 1], [], []>} : vector<5x32xf32>, vector<32x96xf32>, vector<5x96xf32> -> vector<5x96xf32>
    %c1_105 = arith.constant 1 : index
    %c0_106 = arith.constant 0 : index
    %c0_107 = arith.constant 0 : index
    %228 = vector.load %arg5[%c1_105, %c0_106, %c0_107] : memref<2x1x96xf32, #tpu.memory_space<vmem>>, vector<1x1x96xf32>
    %229 = vector.shape_cast %228 : vector<1x1x96xf32> to vector<1x96xf32>
    %230 = vector.broadcast %229 : vector<1x96xf32> to vector<5x96xf32>
    %231 = arith.addf %227, %230 : vector<5x96xf32>
    %c1_108 = arith.constant 1 : index
    %c0_109 = arith.constant 0 : index
    %c0_110 = arith.constant 0 : index
    %232 = vector.load %arg6[%c1_108, %c0_109, %c0_110] : memref<2x32x32xf32, #tpu.memory_space<vmem>>, vector<1x32x32xf32>
    %233 = vector.shape_cast %232 : vector<1x32x32xf32> to vector<32x32xf32>
    %cst_111 = arith.constant 0.000000e+00 : f32
    %234 = vector.broadcast %cst_111 : f32 to vector<5x32xf32>
    %235 = vector.extract_strided_slice %231 {offsets = [0, 0], sizes = [5, 8], strides = [1, 1]} : vector<5x96xf32> to vector<5x8xf32>
    %236 = vector.extract_strided_slice %231 {offsets = [0, 32], sizes = [5, 8], strides = [1, 1]} : vector<5x96xf32> to vector<5x8xf32>
    %237 = vector.extract_strided_slice %231 {offsets = [0, 64], sizes = [5, 8], strides = [1, 1]} : vector<5x96xf32> to vector<5x8xf32>
    %cst_112 = arith.constant dense<0.000000e+00> : vector<5x5xf32>
    %238 = tpu.matmul %235, %236, %cst_112 {dimension_numbers = #tpu.dot_dimension_numbers<[1], [1], [0], [0], [0, 0, 1, 0], [], []>} : vector<5x8xf32>, vector<5x8xf32>, vector<5x5xf32> -> vector<5x5xf32>
    %cst_113 = arith.constant 0.353553385 : f32
    %239 = vector.broadcast %cst_113 : f32 to vector<5x5xf32>
    %240 = arith.mulf %238, %239 : vector<5x5xf32>
    %cst_114 = arith.constant dense<0xFF800000> : vector<5xf32>
    %241 = vector.multi_reduction <maximumf>, %240, %cst_114 [1] : vector<5x5xf32> to vector<5xf32>
    %242 = vector.shape_cast %241 : vector<5xf32> to vector<5x1xf32>
    %243 = vector.broadcast %242 : vector<5x1xf32> to vector<5x5xf32>
    %244 = arith.subf %240, %243 : vector<5x5xf32>
    %245 = math.exp %244 : vector<5x5xf32>
    %cst_115 = arith.constant dense<0.000000e+00> : vector<5xf32>
    %246 = vector.multi_reduction <add>, %245, %cst_115 [1] : vector<5x5xf32> to vector<5xf32>
    %247 = vector.shape_cast %246 : vector<5xf32> to vector<5x1xf32>
    %248 = tpu.reciprocal %247 {approx = true} : vector<5x1xf32> -> vector<5x1xf32>
    %249 = vector.broadcast %248 : vector<5x1xf32> to vector<5x5xf32>
    %250 = arith.mulf %245, %249 : vector<5x5xf32>
    %cst_116 = arith.constant dense<0.000000e+00> : vector<5x8xf32>
    %251 = tpu.matmul %250, %237, %cst_116 {dimension_numbers = #tpu.dot_dimension_numbers<[1], [0], [0], [1], [0, 0, 1, 1], [], []>} : vector<5x5xf32>, vector<5x8xf32>, vector<5x8xf32> -> vector<5x8xf32>
    %252 = vector.extract_strided_slice %233 {offsets = [0, 0], sizes = [8, 32], strides = [1, 1]} : vector<32x32xf32> to vector<8x32xf32>
    %cst_117 = arith.constant dense<0.000000e+00> : vector<5x32xf32>
    %253 = tpu.matmul %251, %252, %cst_117 {dimension_numbers = #tpu.dot_dimension_numbers<[1], [0], [0], [1], [0, 0, 1, 1], [], []>} : vector<5x8xf32>, vector<8x32xf32>, vector<5x32xf32> -> vector<5x32xf32>
    %254 = arith.addf %234, %253 : vector<5x32xf32>
    %255 = vector.extract_strided_slice %231 {offsets = [0, 8], sizes = [5, 8], strides = [1, 1]} : vector<5x96xf32> to vector<5x8xf32>
    %256 = vector.extract_strided_slice %231 {offsets = [0, 40], sizes = [5, 8], strides = [1, 1]} : vector<5x96xf32> to vector<5x8xf32>
    %257 = vector.extract_strided_slice %231 {offsets = [0, 72], sizes = [5, 8], strides = [1, 1]} : vector<5x96xf32> to vector<5x8xf32>
    %cst_118 = arith.constant dense<0.000000e+00> : vector<5x5xf32>
    %258 = tpu.matmul %255, %256, %cst_118 {dimension_numbers = #tpu.dot_dimension_numbers<[1], [1], [0], [0], [0, 0, 1, 0], [], []>} : vector<5x8xf32>, vector<5x8xf32>, vector<5x5xf32> -> vector<5x5xf32>
    %cst_119 = arith.constant 0.353553385 : f32
    %259 = vector.broadcast %cst_119 : f32 to vector<5x5xf32>
    %260 = arith.mulf %258, %259 : vector<5x5xf32>
    %cst_120 = arith.constant dense<0xFF800000> : vector<5xf32>
    %261 = vector.multi_reduction <maximumf>, %260, %cst_120 [1] : vector<5x5xf32> to vector<5xf32>
    %262 = vector.shape_cast %261 : vector<5xf32> to vector<5x1xf32>
    %263 = vector.broadcast %262 : vector<5x1xf32> to vector<5x5xf32>
    %264 = arith.subf %260, %263 : vector<5x5xf32>
    %265 = math.exp %264 : vector<5x5xf32>
    %cst_121 = arith.constant dense<0.000000e+00> : vector<5xf32>
    %266 = vector.multi_reduction <add>, %265, %cst_121 [1] : vector<5x5xf32> to vector<5xf32>
    %267 = vector.shape_cast %266 : vector<5xf32> to vector<5x1xf32>
    %268 = tpu.reciprocal %267 {approx = true} : vector<5x1xf32> -> vector<5x1xf32>
    %269 = vector.broadcast %268 : vector<5x1xf32> to vector<5x5xf32>
    %270 = arith.mulf %265, %269 : vector<5x5xf32>
    %cst_122 = arith.constant dense<0.000000e+00> : vector<5x8xf32>
    %271 = tpu.matmul %270, %257, %cst_122 {dimension_numbers = #tpu.dot_dimension_numbers<[1], [0], [0], [1], [0, 0, 1, 1], [], []>} : vector<5x5xf32>, vector<5x8xf32>, vector<5x8xf32> -> vector<5x8xf32>
    %272 = vector.extract_strided_slice %233 {offsets = [8, 0], sizes = [8, 32], strides = [1, 1]} : vector<32x32xf32> to vector<8x32xf32>
    %cst_123 = arith.constant dense<0.000000e+00> : vector<5x32xf32>
    %273 = tpu.matmul %271, %272, %cst_123 {dimension_numbers = #tpu.dot_dimension_numbers<[1], [0], [0], [1], [0, 0, 1, 1], [], []>} : vector<5x8xf32>, vector<8x32xf32>, vector<5x32xf32> -> vector<5x32xf32>
    %274 = arith.addf %254, %273 : vector<5x32xf32>
    %275 = vector.extract_strided_slice %231 {offsets = [0, 16], sizes = [5, 8], strides = [1, 1]} : vector<5x96xf32> to vector<5x8xf32>
    %276 = vector.extract_strided_slice %231 {offsets = [0, 48], sizes = [5, 8], strides = [1, 1]} : vector<5x96xf32> to vector<5x8xf32>
    %277 = vector.extract_strided_slice %231 {offsets = [0, 80], sizes = [5, 8], strides = [1, 1]} : vector<5x96xf32> to vector<5x8xf32>
    %cst_124 = arith.constant dense<0.000000e+00> : vector<5x5xf32>
    %278 = tpu.matmul %275, %276, %cst_124 {dimension_numbers = #tpu.dot_dimension_numbers<[1], [1], [0], [0], [0, 0, 1, 0], [], []>} : vector<5x8xf32>, vector<5x8xf32>, vector<5x5xf32> -> vector<5x5xf32>
    %cst_125 = arith.constant 0.353553385 : f32
    %279 = vector.broadcast %cst_125 : f32 to vector<5x5xf32>
    %280 = arith.mulf %278, %279 : vector<5x5xf32>
    %cst_126 = arith.constant dense<0xFF800000> : vector<5xf32>
    %281 = vector.multi_reduction <maximumf>, %280, %cst_126 [1] : vector<5x5xf32> to vector<5xf32>
    %282 = vector.shape_cast %281 : vector<5xf32> to vector<5x1xf32>
    %283 = vector.broadcast %282 : vector<5x1xf32> to vector<5x5xf32>
    %284 = arith.subf %280, %283 : vector<5x5xf32>
    %285 = math.exp %284 : vector<5x5xf32>
    %cst_127 = arith.constant dense<0.000000e+00> : vector<5xf32>
    %286 = vector.multi_reduction <add>, %285, %cst_127 [1] : vector<5x5xf32> to vector<5xf32>
    %287 = vector.shape_cast %286 : vector<5xf32> to vector<5x1xf32>
    %288 = tpu.reciprocal %287 {approx = true} : vector<5x1xf32> -> vector<5x1xf32>
    %289 = vector.broadcast %288 : vector<5x1xf32> to vector<5x5xf32>
    %290 = arith.mulf %285, %289 : vector<5x5xf32>
    %cst_128 = arith.constant dense<0.000000e+00> : vector<5x8xf32>
    %291 = tpu.matmul %290, %277, %cst_128 {dimension_numbers = #tpu.dot_dimension_numbers<[1], [0], [0], [1], [0, 0, 1, 1], [], []>} : vector<5x5xf32>, vector<5x8xf32>, vector<5x8xf32> -> vector<5x8xf32>
    %292 = vector.extract_strided_slice %233 {offsets = [16, 0], sizes = [8, 32], strides = [1, 1]} : vector<32x32xf32> to vector<8x32xf32>
    %cst_129 = arith.constant dense<0.000000e+00> : vector<5x32xf32>
    %293 = tpu.matmul %291, %292, %cst_129 {dimension_numbers = #tpu.dot_dimension_numbers<[1], [0], [0], [1], [0, 0, 1, 1], [], []>} : vector<5x8xf32>, vector<8x32xf32>, vector<5x32xf32> -> vector<5x32xf32>
    %294 = arith.addf %274, %293 : vector<5x32xf32>
    %295 = vector.extract_strided_slice %231 {offsets = [0, 24], sizes = [5, 8], strides = [1, 1]} : vector<5x96xf32> to vector<5x8xf32>
    %296 = vector.extract_strided_slice %231 {offsets = [0, 56], sizes = [5, 8], strides = [1, 1]} : vector<5x96xf32> to vector<5x8xf32>
    %297 = vector.extract_strided_slice %231 {offsets = [0, 88], sizes = [5, 8], strides = [1, 1]} : vector<5x96xf32> to vector<5x8xf32>
    %cst_130 = arith.constant dense<0.000000e+00> : vector<5x5xf32>
    %298 = tpu.matmul %295, %296, %cst_130 {dimension_numbers = #tpu.dot_dimension_numbers<[1], [1], [0], [0], [0, 0, 1, 0], [], []>} : vector<5x8xf32>, vector<5x8xf32>, vector<5x5xf32> -> vector<5x5xf32>
    %cst_131 = arith.constant 0.353553385 : f32
    %299 = vector.broadcast %cst_131 : f32 to vector<5x5xf32>
    %300 = arith.mulf %298, %299 : vector<5x5xf32>
    %cst_132 = arith.constant dense<0xFF800000> : vector<5xf32>
    %301 = vector.multi_reduction <maximumf>, %300, %cst_132 [1] : vector<5x5xf32> to vector<5xf32>
    %302 = vector.shape_cast %301 : vector<5xf32> to vector<5x1xf32>
    %303 = vector.broadcast %302 : vector<5x1xf32> to vector<5x5xf32>
    %304 = arith.subf %300, %303 : vector<5x5xf32>
    %305 = math.exp %304 : vector<5x5xf32>
    %cst_133 = arith.constant dense<0.000000e+00> : vector<5xf32>
    %306 = vector.multi_reduction <add>, %305, %cst_133 [1] : vector<5x5xf32> to vector<5xf32>
    %307 = vector.shape_cast %306 : vector<5xf32> to vector<5x1xf32>
    %308 = tpu.reciprocal %307 {approx = true} : vector<5x1xf32> -> vector<5x1xf32>
    %309 = vector.broadcast %308 : vector<5x1xf32> to vector<5x5xf32>
    %310 = arith.mulf %305, %309 : vector<5x5xf32>
    %cst_134 = arith.constant dense<0.000000e+00> : vector<5x8xf32>
    %311 = tpu.matmul %310, %297, %cst_134 {dimension_numbers = #tpu.dot_dimension_numbers<[1], [0], [0], [1], [0, 0, 1, 1], [], []>} : vector<5x5xf32>, vector<5x8xf32>, vector<5x8xf32> -> vector<5x8xf32>
    %312 = vector.extract_strided_slice %233 {offsets = [24, 0], sizes = [8, 32], strides = [1, 1]} : vector<32x32xf32> to vector<8x32xf32>
    %cst_135 = arith.constant dense<0.000000e+00> : vector<5x32xf32>
    %313 = tpu.matmul %311, %312, %cst_135 {dimension_numbers = #tpu.dot_dimension_numbers<[1], [0], [0], [1], [0, 0, 1, 1], [], []>} : vector<5x8xf32>, vector<8x32xf32>, vector<5x32xf32> -> vector<5x32xf32>
    %314 = arith.addf %294, %313 : vector<5x32xf32>
    %315 = arith.addf %200, %314 : vector<5x32xf32>
    %c1_136 = arith.constant 1 : index
    %c0_137 = arith.constant 0 : index
    %c0_138 = arith.constant 0 : index
    %316 = vector.load %arg7[%c1_136, %c0_137, %c0_138] : memref<2x1x32xf32, #tpu.memory_space<vmem>>, vector<1x1x32xf32>
    %317 = vector.shape_cast %316 : vector<1x1x32xf32> to vector<1x32xf32>
    %318 = vector.broadcast %317 : vector<1x32xf32> to vector<5x32xf32>
    %319 = arith.addf %315, %318 : vector<5x32xf32>
    %c1_139 = arith.constant 1 : index
    %c0_140 = arith.constant 0 : index
    %c0_141 = arith.constant 0 : index
    %320 = vector.load %arg8[%c1_139, %c0_140, %c0_141] : memref<2x1x32xf32, #tpu.memory_space<vmem>>, vector<1x1x32xf32>
    %321 = vector.shape_cast %320 : vector<1x1x32xf32> to vector<1x32xf32>
    %c1_142 = arith.constant 1 : index
    %c0_143 = arith.constant 0 : index
    %c0_144 = arith.constant 0 : index
    %322 = vector.load %arg9[%c1_142, %c0_143, %c0_144] : memref<2x1x32xf32, #tpu.memory_space<vmem>>, vector<1x1x32xf32>
    %323 = vector.shape_cast %322 : vector<1x1x32xf32> to vector<1x32xf32>
    %cst_145 = arith.constant dense<0.000000e+00> : vector<5xf32>
    %324 = vector.multi_reduction <add>, %319, %cst_145 [1] : vector<5x32xf32> to vector<5xf32>
    %325 = vector.shape_cast %324 : vector<5xf32> to vector<5x1xf32>
    %cst_146 = arith.constant 3.200000e+01 : f32
    %326 = vector.broadcast %cst_146 : f32 to vector<5x1xf32>
    %327 = arith.divf %325, %326 : vector<5x1xf32>
    %328 = vector.broadcast %327 : vector<5x1xf32> to vector<5x32xf32>
    %329 = arith.subf %319, %328 : vector<5x32xf32>
    %330 = arith.mulf %329, %329 : vector<5x32xf32>
    %cst_147 = arith.constant dense<0.000000e+00> : vector<5xf32>
    %331 = vector.multi_reduction <add>, %330, %cst_147 [1] : vector<5x32xf32> to vector<5xf32>
    %332 = vector.shape_cast %331 : vector<5xf32> to vector<5x1xf32>
    %cst_148 = arith.constant 3.200000e+01 : f32
    %333 = vector.broadcast %cst_148 : f32 to vector<5x1xf32>
    %334 = arith.divf %332, %333 : vector<5x1xf32>
    %cst_149 = arith.constant 9.99999974E-6 : f32
    %335 = vector.broadcast %cst_149 : f32 to vector<5x1xf32>
    %336 = arith.addf %334, %335 : vector<5x1xf32>
    %337 = math.rsqrt %336 : vector<5x1xf32>
    %338 = vector.broadcast %337 : vector<5x1xf32> to vector<5x32xf32>
    %339 = arith.mulf %329, %338 : vector<5x32xf32>
    %340 = vector.broadcast %321 : vector<1x32xf32> to vector<5x32xf32>
    %341 = arith.mulf %339, %340 : vector<5x32xf32>
    %342 = vector.broadcast %323 : vector<1x32xf32> to vector<5x32xf32>
    %343 = arith.addf %341, %342 : vector<5x32xf32>
    %c1_150 = arith.constant 1 : index
    %c0_151 = arith.constant 0 : index
    %c0_152 = arith.constant 0 : index
    %344 = vector.load %arg10[%c1_150, %c0_151, %c0_152] : memref<2x32x128xf32, #tpu.memory_space<vmem>>, vector<1x32x128xf32>
    %345 = vector.shape_cast %344 : vector<1x32x128xf32> to vector<32x128xf32>
    %cst_153 = arith.constant dense<0.000000e+00> : vector<5x128xf32>
    %346 = tpu.matmul %343, %345, %cst_153 {dimension_numbers = #tpu.dot_dimension_numbers<[1], [0], [0], [1], [0, 0, 1, 1], [], []>} : vector<5x32xf32>, vector<32x128xf32>, vector<5x128xf32> -> vector<5x128xf32>
    %c1_154 = arith.constant 1 : index
    %c0_155 = arith.constant 0 : index
    %c0_156 = arith.constant 0 : index
    %347 = vector.load %arg11[%c1_154, %c0_155, %c0_156] : memref<2x1x128xf32, #tpu.memory_space<vmem>>, vector<1x1x128xf32>
    %348 = vector.shape_cast %347 : vector<1x1x128xf32> to vector<1x128xf32>
    %349 = vector.broadcast %348 : vector<1x128xf32> to vector<5x128xf32>
    %350 = arith.addf %346, %349 : vector<5x128xf32>
    %cst_157 = arith.constant 5.000000e-01 : f32
    %351 = vector.broadcast %cst_157 : f32 to vector<5x128xf32>
    %352 = arith.mulf %351, %350 : vector<5x128xf32>
    %cst_158 = arith.constant 0.707106769 : f32
    %353 = vector.broadcast %cst_158 : f32 to vector<5x128xf32>
    %354 = arith.mulf %350, %353 : vector<5x128xf32>
    %cst_159 = arith.constant 0.000000e+00 : f32
    %355 = vector.broadcast %cst_159 : f32 to vector<5x128xf32>
    %356 = arith.cmpf oge, %354, %355 : vector<5x128xf32>
    %cst_160 = arith.constant 1.000000e+00 : f32
    %cst_161 = arith.constant -1.000000e+00 : f32
    %357 = vector.broadcast %cst_160 : f32 to vector<5x128xf32>
    %358 = vector.broadcast %cst_161 : f32 to vector<5x128xf32>
    %359 = arith.select %356, %357, %358 : vector<5x128xi1>, vector<5x128xf32>
    %360 = math.absf %354 : vector<5x128xf32>
    %cst_162 = arith.constant 0.327591091 : f32
    %361 = vector.broadcast %cst_162 : f32 to vector<5x128xf32>
    %362 = arith.mulf %361, %360 : vector<5x128xf32>
    %cst_163 = arith.constant 1.000000e+00 : f32
    %363 = vector.broadcast %cst_163 : f32 to vector<5x128xf32>
    %364 = arith.addf %363, %362 : vector<5x128xf32>
    %cst_164 = arith.constant 1.000000e+00 : f32
    %365 = vector.broadcast %cst_164 : f32 to vector<5x128xf32>
    %366 = arith.divf %365, %364 : vector<5x128xf32>
    %cst_165 = arith.constant 1.06140542 : f32
    %367 = vector.broadcast %cst_165 : f32 to vector<5x128xf32>
    %368 = arith.mulf %367, %366 : vector<5x128xf32>
    %cst_166 = arith.constant -1.45315206 : f32
    %369 = vector.broadcast %cst_166 : f32 to vector<5x128xf32>
    %370 = arith.addf %368, %369 : vector<5x128xf32>
    %371 = arith.mulf %370, %366 : vector<5x128xf32>
    %cst_167 = arith.constant 1.42141378 : f32
    %372 = vector.broadcast %cst_167 : f32 to vector<5x128xf32>
    %373 = arith.addf %371, %372 : vector<5x128xf32>
    %374 = arith.mulf %373, %366 : vector<5x128xf32>
    %cst_168 = arith.constant -0.284496725 : f32
    %375 = vector.broadcast %cst_168 : f32 to vector<5x128xf32>
    %376 = arith.addf %374, %375 : vector<5x128xf32>
    %377 = arith.mulf %376, %366 : vector<5x128xf32>
    %cst_169 = arith.constant 0.254829586 : f32
    %378 = vector.broadcast %cst_169 : f32 to vector<5x128xf32>
    %379 = arith.addf %377, %378 : vector<5x128xf32>
    %380 = arith.mulf %379, %366 : vector<5x128xf32>
    %cst_170 = arith.constant 0.000000e+00 : f32
    %381 = vector.broadcast %cst_170 : f32 to vector<5x128xf32>
    %382 = arith.subf %381, %360 : vector<5x128xf32>
    %383 = arith.mulf %382, %360 : vector<5x128xf32>
    %384 = math.exp %383 : vector<5x128xf32>
    %385 = arith.mulf %380, %384 : vector<5x128xf32>
    %cst_171 = arith.constant 1.000000e+00 : f32
    %386 = vector.broadcast %cst_171 : f32 to vector<5x128xf32>
    %387 = arith.subf %386, %385 : vector<5x128xf32>
    %388 = arith.mulf %359, %387 : vector<5x128xf32>
    %cst_172 = arith.constant 1.000000e+00 : f32
    %389 = vector.broadcast %cst_172 : f32 to vector<5x128xf32>
    %390 = arith.addf %389, %388 : vector<5x128xf32>
    %391 = arith.mulf %352, %390 : vector<5x128xf32>
    %c1_173 = arith.constant 1 : index
    %c0_174 = arith.constant 0 : index
    %c0_175 = arith.constant 0 : index
    %392 = vector.load %arg12[%c1_173, %c0_174, %c0_175] : memref<2x128x32xf32, #tpu.memory_space<vmem>>, vector<1x128x32xf32>
    %393 = vector.shape_cast %392 : vector<1x128x32xf32> to vector<128x32xf32>
    %cst_176 = arith.constant dense<0.000000e+00> : vector<5x32xf32>
    %394 = tpu.matmul %391, %393, %cst_176 {dimension_numbers = #tpu.dot_dimension_numbers<[1], [0], [0], [1], [0, 0, 1, 1], [], []>} : vector<5x128xf32>, vector<128x32xf32>, vector<5x32xf32> -> vector<5x32xf32>
    %c1_177 = arith.constant 1 : index
    %c0_178 = arith.constant 0 : index
    %c0_179 = arith.constant 0 : index
    %395 = vector.load %arg13[%c1_177, %c0_178, %c0_179] : memref<2x1x32xf32, #tpu.memory_space<vmem>>, vector<1x1x32xf32>
    %396 = vector.shape_cast %395 : vector<1x1x32xf32> to vector<1x32xf32>
    %397 = vector.broadcast %396 : vector<1x32xf32> to vector<5x32xf32>
    %398 = arith.addf %394, %397 : vector<5x32xf32>
    %399 = arith.addf %319, %398 : vector<5x32xf32>
    %c0_180 = arith.constant 0 : index
    %c0_181 = arith.constant 0 : index
    %400 = vector.load %arg14[%c0_180, %c0_181] : memref<1x32xf32, #tpu.memory_space<vmem>>, vector<1x32xf32>
    %c0_182 = arith.constant 0 : index
    %c0_183 = arith.constant 0 : index
    %401 = vector.load %arg15[%c0_182, %c0_183] : memref<1x32xf32, #tpu.memory_space<vmem>>, vector<1x32xf32>
    %cst_184 = arith.constant dense<0.000000e+00> : vector<5xf32>
    %402 = vector.multi_reduction <add>, %399, %cst_184 [1] : vector<5x32xf32> to vector<5xf32>
    %403 = vector.shape_cast %402 : vector<5xf32> to vector<5x1xf32>
    %cst_185 = arith.constant 3.200000e+01 : f32
    %404 = vector.broadcast %cst_185 : f32 to vector<5x1xf32>
    %405 = arith.divf %403, %404 : vector<5x1xf32>
    %406 = vector.broadcast %405 : vector<5x1xf32> to vector<5x32xf32>
    %407 = arith.subf %399, %406 : vector<5x32xf32>
    %408 = arith.mulf %407, %407 : vector<5x32xf32>
    %cst_186 = arith.constant dense<0.000000e+00> : vector<5xf32>
    %409 = vector.multi_reduction <add>, %408, %cst_186 [1] : vector<5x32xf32> to vector<5xf32>
    %410 = vector.shape_cast %409 : vector<5xf32> to vector<5x1xf32>
    %cst_187 = arith.constant 3.200000e+01 : f32
    %411 = vector.broadcast %cst_187 : f32 to vector<5x1xf32>
    %412 = arith.divf %410, %411 : vector<5x1xf32>
    %cst_188 = arith.constant 9.99999974E-6 : f32
    %413 = vector.broadcast %cst_188 : f32 to vector<5x1xf32>
    %414 = arith.addf %412, %413 : vector<5x1xf32>
    %415 = math.rsqrt %414 : vector<5x1xf32>
    %416 = vector.broadcast %415 : vector<5x1xf32> to vector<5x32xf32>
    %417 = arith.mulf %407, %416 : vector<5x32xf32>
    %418 = vector.broadcast %400 : vector<1x32xf32> to vector<5x32xf32>
    %419 = arith.mulf %417, %418 : vector<5x32xf32>
    %420 = vector.broadcast %401 : vector<1x32xf32> to vector<5x32xf32>
    %421 = arith.addf %419, %420 : vector<5x32xf32>
    %c0_189 = arith.constant 0 : index
    %c0_190 = arith.constant 0 : index
    %422 = vector.load %arg16[%c0_189, %c0_190] : memref<32x32xf32, #tpu.memory_space<vmem>>, vector<32x32xf32>
    %cst_191 = arith.constant dense<0.000000e+00> : vector<5x32xf32>
    %423 = tpu.matmul %421, %422, %cst_191 {dimension_numbers = #tpu.dot_dimension_numbers<[1], [0], [0], [1], [0, 0, 1, 1], [], []>} : vector<5x32xf32>, vector<32x32xf32>, vector<5x32xf32> -> vector<5x32xf32>
    %c0_192 = arith.constant 0 : index
    %c0_193 = arith.constant 0 : index
    %424 = vector.load %arg17[%c0_192, %c0_193] : memref<1x32xf32, #tpu.memory_space<vmem>>, vector<1x32xf32>
    %425 = vector.broadcast %424 : vector<1x32xf32> to vector<5x32xf32>
    %426 = arith.addf %423, %425 : vector<5x32xf32>
    %c0_194 = arith.constant 0 : index
    %c0_195 = arith.constant 0 : index
    %c0_196 = arith.constant 0 : index
    %427 = vector.load %arg18[%c0_194, %c0_195, %c0_196] : memref<1x5x32xf32, #tpu.memory_space<vmem>>, vector<1x5x32xf32>
    %428 = vector.shape_cast %427 : vector<1x5x32xf32> to vector<5x32xf32>
    %429 = vector.shape_cast %426 : vector<5x32xf32> to vector<1x5x32xf32>
    tpu.vector_store %arg18[%c0_194, %c0_195, %c0_196], %429 {strides = array<i32>} : memref<1x5x32xf32, #tpu.memory_space<vmem>>, vector<1x5x32xf32>,
    return
  }
  func.func @transform_0(%arg0: i32) -> (i32, i32, i32) {
    %c0_i32 = arith.constant 0 : i32
    %c0_i32_0 = arith.constant 0 : i32
    %c0_i32_1 = arith.constant 0 : i32
    return %arg0, %c0_i32, %c0_i32_0 : i32, i32, i32
  }
  func.func @transform_1(%arg0: i32) -> (i32, i32, i32) {
    %c0_i32 = arith.constant 0 : i32
    %c0_i32_0 = arith.constant 0 : i32
    %c0_i32_1 = arith.constant 0 : i32
    %c0_i32_2 = arith.constant 0 : i32
    return %c0_i32, %c0_i32_0, %c0_i32_1 : i32, i32, i32
  }
  func.func @transform_2(%arg0: i32) -> (i32, i32, i32) {
    %c0_i32 = arith.constant 0 : i32
    %c0_i32_0 = arith.constant 0 : i32
    %c0_i32_1 = arith.constant 0 : i32
    %c0_i32_2 = arith.constant 0 : i32
    return %c0_i32, %c0_i32_0, %c0_i32_1 : i32, i32, i32
  }
  func.func @transform_3(%arg0: i32) -> (i32, i32, i32) {
    %c0_i32 = arith.constant 0 : i32
    %c0_i32_0 = arith.constant 0 : i32
    %c0_i32_1 = arith.constant 0 : i32
    %c0_i32_2 = arith.constant 0 : i32
    return %c0_i32, %c0_i32_0, %c0_i32_1 : i32, i32, i32
  }
  func.func @transform_4(%arg0: i32) -> (i32, i32, i32) {
    %c0_i32 = arith.constant 0 : i32
    %c0_i32_0 = arith.constant 0 : i32
    %c0_i32_1 = arith.constant 0 : i32
    %c0_i32_2 = arith.constant 0 : i32
    return %c0_i32, %c0_i32_0, %c0_i32_1 : i32, i32, i32
  }
  func.func @transform_5(%arg0: i32) -> (i32, i32, i32) {
    %c0_i32 = arith.constant 0 : i32
    %c0_i32_0 = arith.constant 0 : i32
    %c0_i32_1 = arith.constant 0 : i32
    %c0_i32_2 = arith.constant 0 : i32
    return %c0_i32, %c0_i32_0, %c0_i32_1 : i32, i32, i32
  }
  func.func @transform_6(%arg0: i32) -> (i32, i32, i32) {
    %c0_i32 = arith.constant 0 : i32
    %c0_i32_0 = arith.constant 0 : i32
    %c0_i32_1 = arith.constant 0 : i32
    %c0_i32_2 = arith.constant 0 : i32
    return %c0_i32, %c0_i32_0, %c0_i32_1 : i32, i32, i32
  }
  func.func @transform_7(%arg0: i32) -> (i32, i32, i32) {
    %c0_i32 = arith.constant 0 : i32
    %c0_i32_0 = arith.constant 0 : i32
    %c0_i32_1 = arith.constant 0 : i32
    %c0_i32_2 = arith.constant 0 : i32
    return %c0_i32, %c0_i32_0, %c0_i32_1 : i32, i32, i32
  }
  func.func @transform_8(%arg0: i32) -> (i32, i32, i32) {
    %c0_i32 = arith.constant 0 : i32
    %c0_i32_0 = arith.constant 0 : i32
    %c0_i32_1 = arith.constant 0 : i32
    %c0_i32_2 = arith.constant 0 : i32
    return %c0_i32, %c0_i32_0, %c0_i32_1 : i32, i32, i32
  }
  func.func @transform_9(%arg0: i32) -> (i32, i32, i32) {
    %c0_i32 = arith.constant 0 : i32
    %c0_i32_0 = arith.constant 0 : i32
    %c0_i32_1 = arith.constant 0 : i32
    %c0_i32_2 = arith.constant 0 : i32
    return %c0_i32, %c0_i32_0, %c0_i32_1 : i32, i32, i32
  }
  func.func @transform_10(%arg0: i32) -> (i32, i32, i32) {
    %c0_i32 = arith.constant 0 : i32
    %c0_i32_0 = arith.constant 0 : i32
    %c0_i32_1 = arith.constant 0 : i32
    %c0_i32_2 = arith.constant 0 : i32
    return %c0_i32, %c0_i32_0, %c0_i32_1 : i32, i32, i32
  }
  func.func @transform_11(%arg0: i32) -> (i32, i32, i32) {
    %c0_i32 = arith.constant 0 : i32
    %c0_i32_0 = arith.constant 0 : i32
    %c0_i32_1 = arith.constant 0 : i32
    %c0_i32_2 = arith.constant 0 : i32
    return %c0_i32, %c0_i32_0, %c0_i32_1 : i32, i32, i32
  }
  func.func @transform_12(%arg0: i32) -> (i32, i32, i32) {
    %c0_i32 = arith.constant 0 : i32
    %c0_i32_0 = arith.constant 0 : i32
    %c0_i32_1 = arith.constant 0 : i32
    %c0_i32_2 = arith.constant 0 : i32
    return %c0_i32, %c0_i32_0, %c0_i32_1 : i32, i32, i32
  }
  func.func @transform_13(%arg0: i32) -> (i32, i32) {
    %c0_i32 = arith.constant 0 : i32
    %c0_i32_0 = arith.constant 0 : i32
    %c0_i32_1 = arith.constant 0 : i32
    return %c0_i32, %c0_i32_0 : i32, i32
  }
  func.func @transform_14(%arg0: i32) -> (i32, i32) {
    %c0_i32 = arith.constant 0 : i32
    %c0_i32_0 = arith.constant 0 : i32
    %c0_i32_1 = arith.constant 0 : i32
    return %c0_i32, %c0_i32_0 : i32, i32
  }
  func.func @transform_15(%arg0: i32) -> (i32, i32) {
    %c0_i32 = arith.constant 0 : i32
    %c0_i32_0 = arith.constant 0 : i32
    %c0_i32_1 = arith.constant 0 : i32
    return %c0_i32, %c0_i32_0 : i32, i32
  }
  func.func @transform_16(%arg0: i32) -> (i32, i32) {
    %c0_i32 = arith.constant 0 : i32
    %c0_i32_0 = arith.constant 0 : i32
    %c0_i32_1 = arith.constant 0 : i32
    return %c0_i32, %c0_i32_0 : i32, i32
  }
  func.func @transform_17(%arg0: i32) -> (i32, i32, i32) {
    %c0_i32 = arith.constant 0 : i32
    %c0_i32_0 = arith.constant 0 : i32
    %c0_i32_1 = arith.constant 0 : i32
    return %arg0, %c0_i32, %c0_i32_0 : i32, i32, i32
  }
}

module attributes {stable_mosaic.version = 11 : i64} {
  func.func @_vit_stack_kernel(%arg0: i32, %arg1: memref<1x17x32xf32, #tpu.memory_space<vmem>>, %arg2: memref<1x1x32xf32, #tpu.memory_space<vmem>>, %arg3: memref<1x1x32xf32, #tpu.memory_space<vmem>>, %arg4: memref<1x32x96xf32, #tpu.memory_space<vmem>>, %arg5: memref<1x1x96xf32, #tpu.memory_space<vmem>>, %arg6: memref<1x32x32xf32, #tpu.memory_space<vmem>>, %arg7: memref<1x1x32xf32, #tpu.memory_space<vmem>>, %arg8: memref<1x1x32xf32, #tpu.memory_space<vmem>>, %arg9: memref<1x1x32xf32, #tpu.memory_space<vmem>>, %arg10: memref<1x32x128xf32, #tpu.memory_space<vmem>>, %arg11: memref<1x1x128xf32, #tpu.memory_space<vmem>>, %arg12: memref<1x128x32xf32, #tpu.memory_space<vmem>>, %arg13: memref<1x1x32xf32, #tpu.memory_space<vmem>>, %arg14: memref<1x32xf32, #tpu.memory_space<vmem>>, %arg15: memref<1x32xf32, #tpu.memory_space<vmem>>, %arg16: memref<32x48xf32, #tpu.memory_space<vmem>>, %arg17: memref<1x48xf32, #tpu.memory_space<vmem>>, %arg18: memref<1x17x48xf32, #tpu.memory_space<vmem>>) attributes {dimension_semantics = [#tpu.dimension_semantics<parallel>], iteration_bounds = array<i64: 2>, scalar_prefetch = 0 : i64, scratch_operands = 0 : i64, tpu.core_type = #tpu.core_type<tc>, window_params = [{transform_indices = @transform_0, window_bounds = array<i64: 1, 17, 32>}, {pipeline_mode = #tpu.pipeline_mode<synchronous>, transform_indices = @transform_1, window_bounds = array<i64: 1, 1, 32>}, {pipeline_mode = #tpu.pipeline_mode<synchronous>, transform_indices = @transform_2, window_bounds = array<i64: 1, 1, 32>}, {pipeline_mode = #tpu.pipeline_mode<synchronous>, transform_indices = @transform_3, window_bounds = array<i64: 1, 32, 96>}, {pipeline_mode = #tpu.pipeline_mode<synchronous>, transform_indices = @transform_4, window_bounds = array<i64: 1, 1, 96>}, {pipeline_mode = #tpu.pipeline_mode<synchronous>, transform_indices = @transform_5, window_bounds = array<i64: 1, 32, 32>}, {pipeline_mode = #tpu.pipeline_mode<synchronous>, transform_indices = @transform_6, window_bounds = array<i64: 1, 1, 32>}, {pipeline_mode = #tpu.pipeline_mode<synchronous>, transform_indices = @transform_7, window_bounds = array<i64: 1, 1, 32>}, {pipeline_mode = #tpu.pipeline_mode<synchronous>, transform_indices = @transform_8, window_bounds = array<i64: 1, 1, 32>}, {pipeline_mode = #tpu.pipeline_mode<synchronous>, transform_indices = @transform_9, window_bounds = array<i64: 1, 32, 128>}, {pipeline_mode = #tpu.pipeline_mode<synchronous>, transform_indices = @transform_10, window_bounds = array<i64: 1, 1, 128>}, {pipeline_mode = #tpu.pipeline_mode<synchronous>, transform_indices = @transform_11, window_bounds = array<i64: 1, 128, 32>}, {pipeline_mode = #tpu.pipeline_mode<synchronous>, transform_indices = @transform_12, window_bounds = array<i64: 1, 1, 32>}, {pipeline_mode = #tpu.pipeline_mode<synchronous>, transform_indices = @transform_13, window_bounds = array<i64: 1, 32>}, {pipeline_mode = #tpu.pipeline_mode<synchronous>, transform_indices = @transform_14, window_bounds = array<i64: 1, 32>}, {pipeline_mode = #tpu.pipeline_mode<synchronous>, transform_indices = @transform_15, window_bounds = array<i64: 32, 48>}, {pipeline_mode = #tpu.pipeline_mode<synchronous>, transform_indices = @transform_16, window_bounds = array<i64: 1, 48>}, {transform_indices = @transform_17, window_bounds = array<i64: 1, 17, 48>}]} {
    %c0 = arith.constant 0 : index
    %c0_0 = arith.constant 0 : index
    %c0_1 = arith.constant 0 : index
    %0 = vector.load %arg1[%c0, %c0_0, %c0_1] : memref<1x17x32xf32, #tpu.memory_space<vmem>>, vector<1x17x32xf32>
    %1 = vector.shape_cast %0 : vector<1x17x32xf32> to vector<17x32xf32>
    %c0_2 = arith.constant 0 : index
    %c0_3 = arith.constant 0 : index
    %c0_4 = arith.constant 0 : index
    %2 = vector.load %arg2[%c0_2, %c0_3, %c0_4] : memref<1x1x32xf32, #tpu.memory_space<vmem>>, vector<1x1x32xf32>
    %3 = vector.shape_cast %2 : vector<1x1x32xf32> to vector<1x32xf32>
    %c0_5 = arith.constant 0 : index
    %c0_6 = arith.constant 0 : index
    %c0_7 = arith.constant 0 : index
    %4 = vector.load %arg3[%c0_5, %c0_6, %c0_7] : memref<1x1x32xf32, #tpu.memory_space<vmem>>, vector<1x1x32xf32>
    %5 = vector.shape_cast %4 : vector<1x1x32xf32> to vector<1x32xf32>
    %cst = arith.constant dense<0.000000e+00> : vector<17xf32>
    %6 = vector.multi_reduction <add>, %1, %cst [1] : vector<17x32xf32> to vector<17xf32>
    %7 = vector.shape_cast %6 : vector<17xf32> to vector<17x1xf32>
    %cst_8 = arith.constant 3.200000e+01 : f32
    %8 = vector.broadcast %cst_8 : f32 to vector<17x1xf32>
    %9 = arith.divf %7, %8 : vector<17x1xf32>
    %10 = vector.broadcast %9 : vector<17x1xf32> to vector<17x32xf32>
    %11 = arith.subf %1, %10 : vector<17x32xf32>
    %12 = arith.mulf %11, %11 : vector<17x32xf32>
    %cst_9 = arith.constant dense<0.000000e+00> : vector<17xf32>
    %13 = vector.multi_reduction <add>, %12, %cst_9 [1] : vector<17x32xf32> to vector<17xf32>
    %14 = vector.shape_cast %13 : vector<17xf32> to vector<17x1xf32>
    %cst_10 = arith.constant 3.200000e+01 : f32
    %15 = vector.broadcast %cst_10 : f32 to vector<17x1xf32>
    %16 = arith.divf %14, %15 : vector<17x1xf32>
    %cst_11 = arith.constant 9.99999974E-6 : f32
    %17 = vector.broadcast %cst_11 : f32 to vector<17x1xf32>
    %18 = arith.addf %16, %17 : vector<17x1xf32>
    %19 = math.rsqrt %18 : vector<17x1xf32>
    %20 = vector.broadcast %19 : vector<17x1xf32> to vector<17x32xf32>
    %21 = arith.mulf %11, %20 : vector<17x32xf32>
    %22 = vector.broadcast %3 : vector<1x32xf32> to vector<17x32xf32>
    %23 = arith.mulf %21, %22 : vector<17x32xf32>
    %24 = vector.broadcast %5 : vector<1x32xf32> to vector<17x32xf32>
    %25 = arith.addf %23, %24 : vector<17x32xf32>
    %c0_12 = arith.constant 0 : index
    %c0_13 = arith.constant 0 : index
    %c0_14 = arith.constant 0 : index
    %26 = vector.load %arg4[%c0_12, %c0_13, %c0_14] : memref<1x32x96xf32, #tpu.memory_space<vmem>>, vector<1x32x96xf32>
    %27 = vector.shape_cast %26 : vector<1x32x96xf32> to vector<32x96xf32>
    %cst_15 = arith.constant dense<0.000000e+00> : vector<17x96xf32>
    %28 = tpu.matmul %25, %27, %cst_15 {dimension_numbers = #tpu.dot_dimension_numbers<[1], [0], [0], [1], [0, 0, 1, 1], [], []>} : vector<17x32xf32>, vector<32x96xf32>, vector<17x96xf32> -> vector<17x96xf32>
    %c0_16 = arith.constant 0 : index
    %c0_17 = arith.constant 0 : index
    %c0_18 = arith.constant 0 : index
    %29 = vector.load %arg5[%c0_16, %c0_17, %c0_18] : memref<1x1x96xf32, #tpu.memory_space<vmem>>, vector<1x1x96xf32>
    %30 = vector.shape_cast %29 : vector<1x1x96xf32> to vector<1x96xf32>
    %31 = vector.broadcast %30 : vector<1x96xf32> to vector<17x96xf32>
    %32 = arith.addf %28, %31 : vector<17x96xf32>
    %c0_19 = arith.constant 0 : index
    %c0_20 = arith.constant 0 : index
    %c0_21 = arith.constant 0 : index
    %33 = vector.load %arg6[%c0_19, %c0_20, %c0_21] : memref<1x32x32xf32, #tpu.memory_space<vmem>>, vector<1x32x32xf32>
    %34 = vector.shape_cast %33 : vector<1x32x32xf32> to vector<32x32xf32>
    %cst_22 = arith.constant 0.000000e+00 : f32
    %35 = vector.broadcast %cst_22 : f32 to vector<17x32xf32>
    %36 = vector.extract_strided_slice %32 {offsets = [0, 0], sizes = [17, 8], strides = [1, 1]} : vector<17x96xf32> to vector<17x8xf32>
    %37 = vector.extract_strided_slice %32 {offsets = [0, 32], sizes = [17, 8], strides = [1, 1]} : vector<17x96xf32> to vector<17x8xf32>
    %38 = vector.extract_strided_slice %32 {offsets = [0, 64], sizes = [17, 8], strides = [1, 1]} : vector<17x96xf32> to vector<17x8xf32>
    %cst_23 = arith.constant dense<0.000000e+00> : vector<17x17xf32>
    %39 = tpu.matmul %36, %37, %cst_23 {dimension_numbers = #tpu.dot_dimension_numbers<[1], [1], [0], [0], [0, 0, 1, 0], [], []>} : vector<17x8xf32>, vector<17x8xf32>, vector<17x17xf32> -> vector<17x17xf32>
    %cst_24 = arith.constant 0.353553385 : f32
    %40 = vector.broadcast %cst_24 : f32 to vector<17x17xf32>
    %41 = arith.mulf %39, %40 : vector<17x17xf32>
    %cst_25 = arith.constant dense<0xFF800000> : vector<17xf32>
    %42 = vector.multi_reduction <maximumf>, %41, %cst_25 [1] : vector<17x17xf32> to vector<17xf32>
    %43 = vector.shape_cast %42 : vector<17xf32> to vector<17x1xf32>
    %44 = vector.broadcast %43 : vector<17x1xf32> to vector<17x17xf32>
    %45 = arith.subf %41, %44 : vector<17x17xf32>
    %46 = math.exp %45 : vector<17x17xf32>
    %cst_26 = arith.constant dense<0.000000e+00> : vector<17xf32>
    %47 = vector.multi_reduction <add>, %46, %cst_26 [1] : vector<17x17xf32> to vector<17xf32>
    %48 = vector.shape_cast %47 : vector<17xf32> to vector<17x1xf32>
    %49 = tpu.reciprocal %48 {approx = true} : vector<17x1xf32> -> vector<17x1xf32>
    %50 = vector.broadcast %49 : vector<17x1xf32> to vector<17x17xf32>
    %51 = arith.mulf %46, %50 : vector<17x17xf32>
    %cst_27 = arith.constant dense<0.000000e+00> : vector<17x8xf32>
    %52 = tpu.matmul %51, %38, %cst_27 {dimension_numbers = #tpu.dot_dimension_numbers<[1], [0], [0], [1], [0, 0, 1, 1], [], []>} : vector<17x17xf32>, vector<17x8xf32>, vector<17x8xf32> -> vector<17x8xf32>
    %53 = vector.extract_strided_slice %34 {offsets = [0, 0], sizes = [8, 32], strides = [1, 1]} : vector<32x32xf32> to vector<8x32xf32>
    %cst_28 = arith.constant dense<0.000000e+00> : vector<17x32xf32>
    %54 = tpu.matmul %52, %53, %cst_28 {dimension_numbers = #tpu.dot_dimension_numbers<[1], [0], [0], [1], [0, 0, 1, 1], [], []>} : vector<17x8xf32>, vector<8x32xf32>, vector<17x32xf32> -> vector<17x32xf32>
    %55 = arith.addf %35, %54 : vector<17x32xf32>
    %56 = vector.extract_strided_slice %32 {offsets = [0, 8], sizes = [17, 8], strides = [1, 1]} : vector<17x96xf32> to vector<17x8xf32>
    %57 = vector.extract_strided_slice %32 {offsets = [0, 40], sizes = [17, 8], strides = [1, 1]} : vector<17x96xf32> to vector<17x8xf32>
    %58 = vector.extract_strided_slice %32 {offsets = [0, 72], sizes = [17, 8], strides = [1, 1]} : vector<17x96xf32> to vector<17x8xf32>
    %cst_29 = arith.constant dense<0.000000e+00> : vector<17x17xf32>
    %59 = tpu.matmul %56, %57, %cst_29 {dimension_numbers = #tpu.dot_dimension_numbers<[1], [1], [0], [0], [0, 0, 1, 0], [], []>} : vector<17x8xf32>, vector<17x8xf32>, vector<17x17xf32> -> vector<17x17xf32>
    %cst_30 = arith.constant 0.353553385 : f32
    %60 = vector.broadcast %cst_30 : f32 to vector<17x17xf32>
    %61 = arith.mulf %59, %60 : vector<17x17xf32>
    %cst_31 = arith.constant dense<0xFF800000> : vector<17xf32>
    %62 = vector.multi_reduction <maximumf>, %61, %cst_31 [1] : vector<17x17xf32> to vector<17xf32>
    %63 = vector.shape_cast %62 : vector<17xf32> to vector<17x1xf32>
    %64 = vector.broadcast %63 : vector<17x1xf32> to vector<17x17xf32>
    %65 = arith.subf %61, %64 : vector<17x17xf32>
    %66 = math.exp %65 : vector<17x17xf32>
    %cst_32 = arith.constant dense<0.000000e+00> : vector<17xf32>
    %67 = vector.multi_reduction <add>, %66, %cst_32 [1] : vector<17x17xf32> to vector<17xf32>
    %68 = vector.shape_cast %67 : vector<17xf32> to vector<17x1xf32>
    %69 = tpu.reciprocal %68 {approx = true} : vector<17x1xf32> -> vector<17x1xf32>
    %70 = vector.broadcast %69 : vector<17x1xf32> to vector<17x17xf32>
    %71 = arith.mulf %66, %70 : vector<17x17xf32>
    %cst_33 = arith.constant dense<0.000000e+00> : vector<17x8xf32>
    %72 = tpu.matmul %71, %58, %cst_33 {dimension_numbers = #tpu.dot_dimension_numbers<[1], [0], [0], [1], [0, 0, 1, 1], [], []>} : vector<17x17xf32>, vector<17x8xf32>, vector<17x8xf32> -> vector<17x8xf32>
    %73 = vector.extract_strided_slice %34 {offsets = [8, 0], sizes = [8, 32], strides = [1, 1]} : vector<32x32xf32> to vector<8x32xf32>
    %cst_34 = arith.constant dense<0.000000e+00> : vector<17x32xf32>
    %74 = tpu.matmul %72, %73, %cst_34 {dimension_numbers = #tpu.dot_dimension_numbers<[1], [0], [0], [1], [0, 0, 1, 1], [], []>} : vector<17x8xf32>, vector<8x32xf32>, vector<17x32xf32> -> vector<17x32xf32>
    %75 = arith.addf %55, %74 : vector<17x32xf32>
    %76 = vector.extract_strided_slice %32 {offsets = [0, 16], sizes = [17, 8], strides = [1, 1]} : vector<17x96xf32> to vector<17x8xf32>
    %77 = vector.extract_strided_slice %32 {offsets = [0, 48], sizes = [17, 8], strides = [1, 1]} : vector<17x96xf32> to vector<17x8xf32>
    %78 = vector.extract_strided_slice %32 {offsets = [0, 80], sizes = [17, 8], strides = [1, 1]} : vector<17x96xf32> to vector<17x8xf32>
    %cst_35 = arith.constant dense<0.000000e+00> : vector<17x17xf32>
    %79 = tpu.matmul %76, %77, %cst_35 {dimension_numbers = #tpu.dot_dimension_numbers<[1], [1], [0], [0], [0, 0, 1, 0], [], []>} : vector<17x8xf32>, vector<17x8xf32>, vector<17x17xf32> -> vector<17x17xf32>
    %cst_36 = arith.constant 0.353553385 : f32
    %80 = vector.broadcast %cst_36 : f32 to vector<17x17xf32>
    %81 = arith.mulf %79, %80 : vector<17x17xf32>
    %cst_37 = arith.constant dense<0xFF800000> : vector<17xf32>
    %82 = vector.multi_reduction <maximumf>, %81, %cst_37 [1] : vector<17x17xf32> to vector<17xf32>
    %83 = vector.shape_cast %82 : vector<17xf32> to vector<17x1xf32>
    %84 = vector.broadcast %83 : vector<17x1xf32> to vector<17x17xf32>
    %85 = arith.subf %81, %84 : vector<17x17xf32>
    %86 = math.exp %85 : vector<17x17xf32>
    %cst_38 = arith.constant dense<0.000000e+00> : vector<17xf32>
    %87 = vector.multi_reduction <add>, %86, %cst_38 [1] : vector<17x17xf32> to vector<17xf32>
    %88 = vector.shape_cast %87 : vector<17xf32> to vector<17x1xf32>
    %89 = tpu.reciprocal %88 {approx = true} : vector<17x1xf32> -> vector<17x1xf32>
    %90 = vector.broadcast %89 : vector<17x1xf32> to vector<17x17xf32>
    %91 = arith.mulf %86, %90 : vector<17x17xf32>
    %cst_39 = arith.constant dense<0.000000e+00> : vector<17x8xf32>
    %92 = tpu.matmul %91, %78, %cst_39 {dimension_numbers = #tpu.dot_dimension_numbers<[1], [0], [0], [1], [0, 0, 1, 1], [], []>} : vector<17x17xf32>, vector<17x8xf32>, vector<17x8xf32> -> vector<17x8xf32>
    %93 = vector.extract_strided_slice %34 {offsets = [16, 0], sizes = [8, 32], strides = [1, 1]} : vector<32x32xf32> to vector<8x32xf32>
    %cst_40 = arith.constant dense<0.000000e+00> : vector<17x32xf32>
    %94 = tpu.matmul %92, %93, %cst_40 {dimension_numbers = #tpu.dot_dimension_numbers<[1], [0], [0], [1], [0, 0, 1, 1], [], []>} : vector<17x8xf32>, vector<8x32xf32>, vector<17x32xf32> -> vector<17x32xf32>
    %95 = arith.addf %75, %94 : vector<17x32xf32>
    %96 = vector.extract_strided_slice %32 {offsets = [0, 24], sizes = [17, 8], strides = [1, 1]} : vector<17x96xf32> to vector<17x8xf32>
    %97 = vector.extract_strided_slice %32 {offsets = [0, 56], sizes = [17, 8], strides = [1, 1]} : vector<17x96xf32> to vector<17x8xf32>
    %98 = vector.extract_strided_slice %32 {offsets = [0, 88], sizes = [17, 8], strides = [1, 1]} : vector<17x96xf32> to vector<17x8xf32>
    %cst_41 = arith.constant dense<0.000000e+00> : vector<17x17xf32>
    %99 = tpu.matmul %96, %97, %cst_41 {dimension_numbers = #tpu.dot_dimension_numbers<[1], [1], [0], [0], [0, 0, 1, 0], [], []>} : vector<17x8xf32>, vector<17x8xf32>, vector<17x17xf32> -> vector<17x17xf32>
    %cst_42 = arith.constant 0.353553385 : f32
    %100 = vector.broadcast %cst_42 : f32 to vector<17x17xf32>
    %101 = arith.mulf %99, %100 : vector<17x17xf32>
    %cst_43 = arith.constant dense<0xFF800000> : vector<17xf32>
    %102 = vector.multi_reduction <maximumf>, %101, %cst_43 [1] : vector<17x17xf32> to vector<17xf32>
    %103 = vector.shape_cast %102 : vector<17xf32> to vector<17x1xf32>
    %104 = vector.broadcast %103 : vector<17x1xf32> to vector<17x17xf32>
    %105 = arith.subf %101, %104 : vector<17x17xf32>
    %106 = math.exp %105 : vector<17x17xf32>
    %cst_44 = arith.constant dense<0.000000e+00> : vector<17xf32>
    %107 = vector.multi_reduction <add>, %106, %cst_44 [1] : vector<17x17xf32> to vector<17xf32>
    %108 = vector.shape_cast %107 : vector<17xf32> to vector<17x1xf32>
    %109 = tpu.reciprocal %108 {approx = true} : vector<17x1xf32> -> vector<17x1xf32>
    %110 = vector.broadcast %109 : vector<17x1xf32> to vector<17x17xf32>
    %111 = arith.mulf %106, %110 : vector<17x17xf32>
    %cst_45 = arith.constant dense<0.000000e+00> : vector<17x8xf32>
    %112 = tpu.matmul %111, %98, %cst_45 {dimension_numbers = #tpu.dot_dimension_numbers<[1], [0], [0], [1], [0, 0, 1, 1], [], []>} : vector<17x17xf32>, vector<17x8xf32>, vector<17x8xf32> -> vector<17x8xf32>
    %113 = vector.extract_strided_slice %34 {offsets = [24, 0], sizes = [8, 32], strides = [1, 1]} : vector<32x32xf32> to vector<8x32xf32>
    %cst_46 = arith.constant dense<0.000000e+00> : vector<17x32xf32>
    %114 = tpu.matmul %112, %113, %cst_46 {dimension_numbers = #tpu.dot_dimension_numbers<[1], [0], [0], [1], [0, 0, 1, 1], [], []>} : vector<17x8xf32>, vector<8x32xf32>, vector<17x32xf32> -> vector<17x32xf32>
    %115 = arith.addf %95, %114 : vector<17x32xf32>
    %116 = arith.addf %1, %115 : vector<17x32xf32>
    %c0_47 = arith.constant 0 : index
    %c0_48 = arith.constant 0 : index
    %c0_49 = arith.constant 0 : index
    %117 = vector.load %arg7[%c0_47, %c0_48, %c0_49] : memref<1x1x32xf32, #tpu.memory_space<vmem>>, vector<1x1x32xf32>
    %118 = vector.shape_cast %117 : vector<1x1x32xf32> to vector<1x32xf32>
    %119 = vector.broadcast %118 : vector<1x32xf32> to vector<17x32xf32>
    %120 = arith.addf %116, %119 : vector<17x32xf32>
    %c0_50 = arith.constant 0 : index
    %c0_51 = arith.constant 0 : index
    %c0_52 = arith.constant 0 : index
    %121 = vector.load %arg8[%c0_50, %c0_51, %c0_52] : memref<1x1x32xf32, #tpu.memory_space<vmem>>, vector<1x1x32xf32>
    %122 = vector.shape_cast %121 : vector<1x1x32xf32> to vector<1x32xf32>
    %c0_53 = arith.constant 0 : index
    %c0_54 = arith.constant 0 : index
    %c0_55 = arith.constant 0 : index
    %123 = vector.load %arg9[%c0_53, %c0_54, %c0_55] : memref<1x1x32xf32, #tpu.memory_space<vmem>>, vector<1x1x32xf32>
    %124 = vector.shape_cast %123 : vector<1x1x32xf32> to vector<1x32xf32>
    %cst_56 = arith.constant dense<0.000000e+00> : vector<17xf32>
    %125 = vector.multi_reduction <add>, %120, %cst_56 [1] : vector<17x32xf32> to vector<17xf32>
    %126 = vector.shape_cast %125 : vector<17xf32> to vector<17x1xf32>
    %cst_57 = arith.constant 3.200000e+01 : f32
    %127 = vector.broadcast %cst_57 : f32 to vector<17x1xf32>
    %128 = arith.divf %126, %127 : vector<17x1xf32>
    %129 = vector.broadcast %128 : vector<17x1xf32> to vector<17x32xf32>
    %130 = arith.subf %120, %129 : vector<17x32xf32>
    %131 = arith.mulf %130, %130 : vector<17x32xf32>
    %cst_58 = arith.constant dense<0.000000e+00> : vector<17xf32>
    %132 = vector.multi_reduction <add>, %131, %cst_58 [1] : vector<17x32xf32> to vector<17xf32>
    %133 = vector.shape_cast %132 : vector<17xf32> to vector<17x1xf32>
    %cst_59 = arith.constant 3.200000e+01 : f32
    %134 = vector.broadcast %cst_59 : f32 to vector<17x1xf32>
    %135 = arith.divf %133, %134 : vector<17x1xf32>
    %cst_60 = arith.constant 9.99999974E-6 : f32
    %136 = vector.broadcast %cst_60 : f32 to vector<17x1xf32>
    %137 = arith.addf %135, %136 : vector<17x1xf32>
    %138 = math.rsqrt %137 : vector<17x1xf32>
    %139 = vector.broadcast %138 : vector<17x1xf32> to vector<17x32xf32>
    %140 = arith.mulf %130, %139 : vector<17x32xf32>
    %141 = vector.broadcast %122 : vector<1x32xf32> to vector<17x32xf32>
    %142 = arith.mulf %140, %141 : vector<17x32xf32>
    %143 = vector.broadcast %124 : vector<1x32xf32> to vector<17x32xf32>
    %144 = arith.addf %142, %143 : vector<17x32xf32>
    %c0_61 = arith.constant 0 : index
    %c0_62 = arith.constant 0 : index
    %c0_63 = arith.constant 0 : index
    %145 = vector.load %arg10[%c0_61, %c0_62, %c0_63] : memref<1x32x128xf32, #tpu.memory_space<vmem>>, vector<1x32x128xf32>
    %146 = vector.shape_cast %145 : vector<1x32x128xf32> to vector<32x128xf32>
    %cst_64 = arith.constant dense<0.000000e+00> : vector<17x128xf32>
    %147 = tpu.matmul %144, %146, %cst_64 {dimension_numbers = #tpu.dot_dimension_numbers<[1], [0], [0], [1], [0, 0, 1, 1], [], []>} : vector<17x32xf32>, vector<32x128xf32>, vector<17x128xf32> -> vector<17x128xf32>
    %c0_65 = arith.constant 0 : index
    %c0_66 = arith.constant 0 : index
    %c0_67 = arith.constant 0 : index
    %148 = vector.load %arg11[%c0_65, %c0_66, %c0_67] : memref<1x1x128xf32, #tpu.memory_space<vmem>>, vector<1x1x128xf32>
    %149 = vector.shape_cast %148 : vector<1x1x128xf32> to vector<1x128xf32>
    %150 = vector.broadcast %149 : vector<1x128xf32> to vector<17x128xf32>
    %151 = arith.addf %147, %150 : vector<17x128xf32>
    %cst_68 = arith.constant 5.000000e-01 : f32
    %152 = vector.broadcast %cst_68 : f32 to vector<17x128xf32>
    %153 = arith.mulf %152, %151 : vector<17x128xf32>
    %cst_69 = arith.constant 0.707106769 : f32
    %154 = vector.broadcast %cst_69 : f32 to vector<17x128xf32>
    %155 = arith.mulf %151, %154 : vector<17x128xf32>
    %cst_70 = arith.constant 0.000000e+00 : f32
    %156 = vector.broadcast %cst_70 : f32 to vector<17x128xf32>
    %157 = arith.cmpf oge, %155, %156 : vector<17x128xf32>
    %cst_71 = arith.constant 1.000000e+00 : f32
    %cst_72 = arith.constant -1.000000e+00 : f32
    %158 = vector.broadcast %cst_71 : f32 to vector<17x128xf32>
    %159 = vector.broadcast %cst_72 : f32 to vector<17x128xf32>
    %160 = arith.select %157, %158, %159 : vector<17x128xi1>, vector<17x128xf32>
    %161 = math.absf %155 : vector<17x128xf32>
    %cst_73 = arith.constant 0.327591091 : f32
    %162 = vector.broadcast %cst_73 : f32 to vector<17x128xf32>
    %163 = arith.mulf %162, %161 : vector<17x128xf32>
    %cst_74 = arith.constant 1.000000e+00 : f32
    %164 = vector.broadcast %cst_74 : f32 to vector<17x128xf32>
    %165 = arith.addf %164, %163 : vector<17x128xf32>
    %cst_75 = arith.constant 1.000000e+00 : f32
    %166 = vector.broadcast %cst_75 : f32 to vector<17x128xf32>
    %167 = arith.divf %166, %165 : vector<17x128xf32>
    %cst_76 = arith.constant 1.06140542 : f32
    %168 = vector.broadcast %cst_76 : f32 to vector<17x128xf32>
    %169 = arith.mulf %168, %167 : vector<17x128xf32>
    %cst_77 = arith.constant -1.45315206 : f32
    %170 = vector.broadcast %cst_77 : f32 to vector<17x128xf32>
    %171 = arith.addf %169, %170 : vector<17x128xf32>
    %172 = arith.mulf %171, %167 : vector<17x128xf32>
    %cst_78 = arith.constant 1.42141378 : f32
    %173 = vector.broadcast %cst_78 : f32 to vector<17x128xf32>
    %174 = arith.addf %172, %173 : vector<17x128xf32>
    %175 = arith.mulf %174, %167 : vector<17x128xf32>
    %cst_79 = arith.constant -0.284496725 : f32
    %176 = vector.broadcast %cst_79 : f32 to vector<17x128xf32>
    %177 = arith.addf %175, %176 : vector<17x128xf32>
    %178 = arith.mulf %177, %167 : vector<17x128xf32>
    %cst_80 = arith.constant 0.254829586 : f32
    %179 = vector.broadcast %cst_80 : f32 to vector<17x128xf32>
    %180 = arith.addf %178, %179 : vector<17x128xf32>
    %181 = arith.mulf %180, %167 : vector<17x128xf32>
    %cst_81 = arith.constant 0.000000e+00 : f32
    %182 = vector.broadcast %cst_81 : f32 to vector<17x128xf32>
    %183 = arith.subf %182, %161 : vector<17x128xf32>
    %184 = arith.mulf %183, %161 : vector<17x128xf32>
    %185 = math.exp %184 : vector<17x128xf32>
    %186 = arith.mulf %181, %185 : vector<17x128xf32>
    %cst_82 = arith.constant 1.000000e+00 : f32
    %187 = vector.broadcast %cst_82 : f32 to vector<17x128xf32>
    %188 = arith.subf %187, %186 : vector<17x128xf32>
    %189 = arith.mulf %160, %188 : vector<17x128xf32>
    %cst_83 = arith.constant 1.000000e+00 : f32
    %190 = vector.broadcast %cst_83 : f32 to vector<17x128xf32>
    %191 = arith.addf %190, %189 : vector<17x128xf32>
    %192 = arith.mulf %153, %191 : vector<17x128xf32>
    %c0_84 = arith.constant 0 : index
    %c0_85 = arith.constant 0 : index
    %c0_86 = arith.constant 0 : index
    %193 = vector.load %arg12[%c0_84, %c0_85, %c0_86] : memref<1x128x32xf32, #tpu.memory_space<vmem>>, vector<1x128x32xf32>
    %194 = vector.shape_cast %193 : vector<1x128x32xf32> to vector<128x32xf32>
    %cst_87 = arith.constant dense<0.000000e+00> : vector<17x32xf32>
    %195 = tpu.matmul %192, %194, %cst_87 {dimension_numbers = #tpu.dot_dimension_numbers<[1], [0], [0], [1], [0, 0, 1, 1], [], []>} : vector<17x128xf32>, vector<128x32xf32>, vector<17x32xf32> -> vector<17x32xf32>
    %c0_88 = arith.constant 0 : index
    %c0_89 = arith.constant 0 : index
    %c0_90 = arith.constant 0 : index
    %196 = vector.load %arg13[%c0_88, %c0_89, %c0_90] : memref<1x1x32xf32, #tpu.memory_space<vmem>>, vector<1x1x32xf32>
    %197 = vector.shape_cast %196 : vector<1x1x32xf32> to vector<1x32xf32>
    %198 = vector.broadcast %197 : vector<1x32xf32> to vector<17x32xf32>
    %199 = arith.addf %195, %198 : vector<17x32xf32>
    %200 = arith.addf %120, %199 : vector<17x32xf32>
    %c0_91 = arith.constant 0 : index
    %c0_92 = arith.constant 0 : index
    %201 = vector.load %arg14[%c0_91, %c0_92] : memref<1x32xf32, #tpu.memory_space<vmem>>, vector<1x32xf32>
    %c0_93 = arith.constant 0 : index
    %c0_94 = arith.constant 0 : index
    %202 = vector.load %arg15[%c0_93, %c0_94] : memref<1x32xf32, #tpu.memory_space<vmem>>, vector<1x32xf32>
    %cst_95 = arith.constant dense<0.000000e+00> : vector<17xf32>
    %203 = vector.multi_reduction <add>, %200, %cst_95 [1] : vector<17x32xf32> to vector<17xf32>
    %204 = vector.shape_cast %203 : vector<17xf32> to vector<17x1xf32>
    %cst_96 = arith.constant 3.200000e+01 : f32
    %205 = vector.broadcast %cst_96 : f32 to vector<17x1xf32>
    %206 = arith.divf %204, %205 : vector<17x1xf32>
    %207 = vector.broadcast %206 : vector<17x1xf32> to vector<17x32xf32>
    %208 = arith.subf %200, %207 : vector<17x32xf32>
    %209 = arith.mulf %208, %208 : vector<17x32xf32>
    %cst_97 = arith.constant dense<0.000000e+00> : vector<17xf32>
    %210 = vector.multi_reduction <add>, %209, %cst_97 [1] : vector<17x32xf32> to vector<17xf32>
    %211 = vector.shape_cast %210 : vector<17xf32> to vector<17x1xf32>
    %cst_98 = arith.constant 3.200000e+01 : f32
    %212 = vector.broadcast %cst_98 : f32 to vector<17x1xf32>
    %213 = arith.divf %211, %212 : vector<17x1xf32>
    %cst_99 = arith.constant 9.99999974E-6 : f32
    %214 = vector.broadcast %cst_99 : f32 to vector<17x1xf32>
    %215 = arith.addf %213, %214 : vector<17x1xf32>
    %216 = math.rsqrt %215 : vector<17x1xf32>
    %217 = vector.broadcast %216 : vector<17x1xf32> to vector<17x32xf32>
    %218 = arith.mulf %208, %217 : vector<17x32xf32>
    %219 = vector.broadcast %201 : vector<1x32xf32> to vector<17x32xf32>
    %220 = arith.mulf %218, %219 : vector<17x32xf32>
    %221 = vector.broadcast %202 : vector<1x32xf32> to vector<17x32xf32>
    %222 = arith.addf %220, %221 : vector<17x32xf32>
    %c0_100 = arith.constant 0 : index
    %c0_101 = arith.constant 0 : index
    %223 = vector.load %arg16[%c0_100, %c0_101] : memref<32x48xf32, #tpu.memory_space<vmem>>, vector<32x48xf32>
    %cst_102 = arith.constant dense<0.000000e+00> : vector<17x48xf32>
    %224 = tpu.matmul %222, %223, %cst_102 {dimension_numbers = #tpu.dot_dimension_numbers<[1], [0], [0], [1], [0, 0, 1, 1], [], []>} : vector<17x32xf32>, vector<32x48xf32>, vector<17x48xf32> -> vector<17x48xf32>
    %c0_103 = arith.constant 0 : index
    %c0_104 = arith.constant 0 : index
    %225 = vector.load %arg17[%c0_103, %c0_104] : memref<1x48xf32, #tpu.memory_space<vmem>>, vector<1x48xf32>
    %226 = vector.broadcast %225 : vector<1x48xf32> to vector<17x48xf32>
    %227 = arith.addf %224, %226 : vector<17x48xf32>
    %c0_105 = arith.constant 0 : index
    %c0_106 = arith.constant 0 : index
    %c0_107 = arith.constant 0 : index
    %228 = vector.load %arg18[%c0_105, %c0_106, %c0_107] : memref<1x17x48xf32, #tpu.memory_space<vmem>>, vector<1x17x48xf32>
    %229 = vector.shape_cast %228 : vector<1x17x48xf32> to vector<17x48xf32>
    %230 = vector.shape_cast %227 : vector<17x48xf32> to vector<1x17x48xf32>
    tpu.vector_store %arg18[%c0_105, %c0_106, %c0_107], %230 {strides = array<i32>} : memref<1x17x48xf32, #tpu.memory_space<vmem>>, vector<1x17x48xf32>,
    return
  }
  func.func @transform_0(%arg0: i32) -> (i32, i32, i32) {
    %c0_i32 = arith.constant 0 : i32
    %c0_i32_0 = arith.constant 0 : i32
    %c0_i32_1 = arith.constant 0 : i32
    return %arg0, %c0_i32, %c0_i32_0 : i32, i32, i32
  }
  func.func @transform_1(%arg0: i32) -> (i32, i32, i32) {
    %c0_i32 = arith.constant 0 : i32
    %c0_i32_0 = arith.constant 0 : i32
    %c0_i32_1 = arith.constant 0 : i32
    %c0_i32_2 = arith.constant 0 : i32
    return %c0_i32, %c0_i32_0, %c0_i32_1 : i32, i32, i32
  }
  func.func @transform_2(%arg0: i32) -> (i32, i32, i32) {
    %c0_i32 = arith.constant 0 : i32
    %c0_i32_0 = arith.constant 0 : i32
    %c0_i32_1 = arith.constant 0 : i32
    %c0_i32_2 = arith.constant 0 : i32
    return %c0_i32, %c0_i32_0, %c0_i32_1 : i32, i32, i32
  }
  func.func @transform_3(%arg0: i32) -> (i32, i32, i32) {
    %c0_i32 = arith.constant 0 : i32
    %c0_i32_0 = arith.constant 0 : i32
    %c0_i32_1 = arith.constant 0 : i32
    %c0_i32_2 = arith.constant 0 : i32
    return %c0_i32, %c0_i32_0, %c0_i32_1 : i32, i32, i32
  }
  func.func @transform_4(%arg0: i32) -> (i32, i32, i32) {
    %c0_i32 = arith.constant 0 : i32
    %c0_i32_0 = arith.constant 0 : i32
    %c0_i32_1 = arith.constant 0 : i32
    %c0_i32_2 = arith.constant 0 : i32
    return %c0_i32, %c0_i32_0, %c0_i32_1 : i32, i32, i32
  }
  func.func @transform_5(%arg0: i32) -> (i32, i32, i32) {
    %c0_i32 = arith.constant 0 : i32
    %c0_i32_0 = arith.constant 0 : i32
    %c0_i32_1 = arith.constant 0 : i32
    %c0_i32_2 = arith.constant 0 : i32
    return %c0_i32, %c0_i32_0, %c0_i32_1 : i32, i32, i32
  }
  func.func @transform_6(%arg0: i32) -> (i32, i32, i32) {
    %c0_i32 = arith.constant 0 : i32
    %c0_i32_0 = arith.constant 0 : i32
    %c0_i32_1 = arith.constant 0 : i32
    %c0_i32_2 = arith.constant 0 : i32
    return %c0_i32, %c0_i32_0, %c0_i32_1 : i32, i32, i32
  }
  func.func @transform_7(%arg0: i32) -> (i32, i32, i32) {
    %c0_i32 = arith.constant 0 : i32
    %c0_i32_0 = arith.constant 0 : i32
    %c0_i32_1 = arith.constant 0 : i32
    %c0_i32_2 = arith.constant 0 : i32
    return %c0_i32, %c0_i32_0, %c0_i32_1 : i32, i32, i32
  }
  func.func @transform_8(%arg0: i32) -> (i32, i32, i32) {
    %c0_i32 = arith.constant 0 : i32
    %c0_i32_0 = arith.constant 0 : i32
    %c0_i32_1 = arith.constant 0 : i32
    %c0_i32_2 = arith.constant 0 : i32
    return %c0_i32, %c0_i32_0, %c0_i32_1 : i32, i32, i32
  }
  func.func @transform_9(%arg0: i32) -> (i32, i32, i32) {
    %c0_i32 = arith.constant 0 : i32
    %c0_i32_0 = arith.constant 0 : i32
    %c0_i32_1 = arith.constant 0 : i32
    %c0_i32_2 = arith.constant 0 : i32
    return %c0_i32, %c0_i32_0, %c0_i32_1 : i32, i32, i32
  }
  func.func @transform_10(%arg0: i32) -> (i32, i32, i32) {
    %c0_i32 = arith.constant 0 : i32
    %c0_i32_0 = arith.constant 0 : i32
    %c0_i32_1 = arith.constant 0 : i32
    %c0_i32_2 = arith.constant 0 : i32
    return %c0_i32, %c0_i32_0, %c0_i32_1 : i32, i32, i32
  }
  func.func @transform_11(%arg0: i32) -> (i32, i32, i32) {
    %c0_i32 = arith.constant 0 : i32
    %c0_i32_0 = arith.constant 0 : i32
    %c0_i32_1 = arith.constant 0 : i32
    %c0_i32_2 = arith.constant 0 : i32
    return %c0_i32, %c0_i32_0, %c0_i32_1 : i32, i32, i32
  }
  func.func @transform_12(%arg0: i32) -> (i32, i32, i32) {
    %c0_i32 = arith.constant 0 : i32
    %c0_i32_0 = arith.constant 0 : i32
    %c0_i32_1 = arith.constant 0 : i32
    %c0_i32_2 = arith.constant 0 : i32
    return %c0_i32, %c0_i32_0, %c0_i32_1 : i32, i32, i32
  }
  func.func @transform_13(%arg0: i32) -> (i32, i32) {
    %c0_i32 = arith.constant 0 : i32
    %c0_i32_0 = arith.constant 0 : i32
    %c0_i32_1 = arith.constant 0 : i32
    return %c0_i32, %c0_i32_0 : i32, i32
  }
  func.func @transform_14(%arg0: i32) -> (i32, i32) {
    %c0_i32 = arith.constant 0 : i32
    %c0_i32_0 = arith.constant 0 : i32
    %c0_i32_1 = arith.constant 0 : i32
    return %c0_i32, %c0_i32_0 : i32, i32
  }
  func.func @transform_15(%arg0: i32) -> (i32, i32) {
    %c0_i32 = arith.constant 0 : i32
    %c0_i32_0 = arith.constant 0 : i32
    %c0_i32_1 = arith.constant 0 : i32
    return %c0_i32, %c0_i32_0 : i32, i32
  }
  func.func @transform_16(%arg0: i32) -> (i32, i32) {
    %c0_i32 = arith.constant 0 : i32
    %c0_i32_0 = arith.constant 0 : i32
    %c0_i32_1 = arith.constant 0 : i32
    return %c0_i32, %c0_i32_0 : i32, i32
  }
  func.func @transform_17(%arg0: i32) -> (i32, i32, i32) {
    %c0_i32 = arith.constant 0 : i32
    %c0_i32_0 = arith.constant 0 : i32
    %c0_i32_1 = arith.constant 0 : i32
    return %arg0, %c0_i32, %c0_i32_0 : i32, i32, i32
  }
}

module attributes {stable_mosaic.version = 11 : i64} {
  func.func @_loss_kernel(%arg0: i32, %arg1: memref<32x48xf32, #tpu.memory_space<vmem>>, %arg2: memref<32x48xf32, #tpu.memory_space<vmem>>, %arg3: memref<32x1xf32, #tpu.memory_space<vmem>>, %arg4: memref<1x1xf32, #tpu.memory_space<vmem>>) attributes {dimension_semantics = [#tpu.dimension_semantics<arbitrary>], iteration_bounds = array<i64: 1>, scalar_prefetch = 0 : i64, scratch_operands = 0 : i64, tpu.core_type = #tpu.core_type<tc>, window_params = [{pipeline_mode = #tpu.pipeline_mode<synchronous>, transform_indices = @transform_0, window_bounds = array<i64: 32, 48>}, {pipeline_mode = #tpu.pipeline_mode<synchronous>, transform_indices = @transform_1, window_bounds = array<i64: 32, 48>}, {pipeline_mode = #tpu.pipeline_mode<synchronous>, transform_indices = @transform_2, window_bounds = array<i64: 32, 1>}, {pipeline_mode = #tpu.pipeline_mode<synchronous>, transform_indices = @transform_3, window_bounds = array<i64: 1, 1>}]} {
    %c0 = arith.constant 0 : index
    %c0_0 = arith.constant 0 : index
    %0 = vector.load %arg2[%c0, %c0_0] : memref<32x48xf32, #tpu.memory_space<vmem>>, vector<32x48xf32>
    %c0_1 = arith.constant 0 : index
    %c0_2 = arith.constant 0 : index
    %1 = vector.load %arg1[%c0_1, %c0_2] : memref<32x48xf32, #tpu.memory_space<vmem>>, vector<32x48xf32>
    %2 = arith.subf %1, %0 : vector<32x48xf32>
    %3 = arith.mulf %2, %2 : vector<32x48xf32>
    %cst = arith.constant dense<0.000000e+00> : vector<32xf32>
    %4 = vector.multi_reduction <add>, %3, %cst [1] : vector<32x48xf32> to vector<32xf32>
    %5 = vector.shape_cast %4 : vector<32xf32> to vector<32x1xf32>
    %cst_3 = arith.constant 4.800000e+01 : f32
    %6 = vector.broadcast %cst_3 : f32 to vector<32x1xf32>
    %7 = arith.divf %5, %6 : vector<32x1xf32>
    %c0_4 = arith.constant 0 : index
    %c0_5 = arith.constant 0 : index
    %8 = vector.load %arg3[%c0_4, %c0_5] : memref<32x1xf32, #tpu.memory_space<vmem>>, vector<32x1xf32>
    %9 = arith.mulf %7, %8 : vector<32x1xf32>
    %10 = vector.shape_cast %9 : vector<32x1xf32> to vector<1x32x1xf32>
    %cst_6 = arith.constant dense<0.000000e+00> : vector<1xf32>
    %11 = vector.multi_reduction <add>, %10, %cst_6 [1, 2] : vector<1x32x1xf32> to vector<1xf32>
    %12 = vector.shape_cast %11 : vector<1xf32> to vector<1x1x1xf32>
    %13 = vector.extract %12[0, 0, 0] : f32 from vector<1x1x1xf32>
    %14 = vector.broadcast %13 : f32 to vector<1x1xf32>
    %15 = vector.shape_cast %8 : vector<32x1xf32> to vector<1x32x1xf32>
    %cst_7 = arith.constant dense<0.000000e+00> : vector<1xf32>
    %16 = vector.multi_reduction <add>, %15, %cst_7 [1, 2] : vector<1x32x1xf32> to vector<1xf32>
    %17 = vector.shape_cast %16 : vector<1xf32> to vector<1x1x1xf32>
    %18 = vector.extract %17[0, 0, 0] : f32 from vector<1x1x1xf32>
    %19 = vector.broadcast %18 : f32 to vector<1x1xf32>
    %20 = arith.divf %14, %19 : vector<1x1xf32>
    %c0_8 = arith.constant 0 : index
    %c0_9 = arith.constant 0 : index
    %21 = vector.load %arg4[%c0_8, %c0_9] : memref<1x1xf32, #tpu.memory_space<vmem>>, vector<1x1xf32>
    tpu.vector_store %arg4[%c0_8, %c0_9], %20 {strides = array<i32>} : memref<1x1xf32, #tpu.memory_space<vmem>>, vector<1x1xf32>,
    return
  }
  func.func @transform_0(%arg0: i32) -> (i32, i32) {
    %c0_i32 = arith.constant 0 : i32
    %c0_i32_0 = arith.constant 0 : i32
    %c0_i32_1 = arith.constant 0 : i32
    return %c0_i32, %c0_i32_0 : i32, i32
  }
  func.func @transform_1(%arg0: i32) -> (i32, i32) {
    %c0_i32 = arith.constant 0 : i32
    %c0_i32_0 = arith.constant 0 : i32
    %c0_i32_1 = arith.constant 0 : i32
    return %c0_i32, %c0_i32_0 : i32, i32
  }
  func.func @transform_2(%arg0: i32) -> (i32, i32) {
    %c0_i32 = arith.constant 0 : i32
    %c0_i32_0 = arith.constant 0 : i32
    %c0_i32_1 = arith.constant 0 : i32
    return %c0_i32, %c0_i32_0 : i32, i32
  }
  func.func @transform_3(%arg0: i32) -> (i32, i32) {
    %c0_i32 = arith.constant 0 : i32
    %c0_i32_0 = arith.constant 0 : i32
    %c0_i32_1 = arith.constant 0 : i32
    return %c0_i32, %c0_i32_0 : i32, i32
  }
}

</mosaic_0001>

<llo_original>
// kernel: mae_teacher_forward.4
$region0: #{mae_teacher_forward.4}
  #allocation0 [shape = 'u32[]', space=smem, size = 0x4, offset = 0x4, fixed_abs, tag = 'smem constant byte address 0x4 - core index']
  #allocation1 [shape = 'u32[144,128]{1,0:T(1,128)}', space=vmem, size = 0x12000, scoped, tag = 'internal scratch']
  %s0 = inlined_call_operand.vmem [shape: f32[2,16,48], index: 0, kind: input, shape index: {}]
  %s1 = inlined_call_operand.vmem [shape: f32[48,32], index: 1, kind: input, shape index: {}]
  %s2 = inlined_call_operand.vmem [shape: f32[1,32], index: 2, kind: input, shape index: {}]
  %s3 = inlined_call_operand.vmem [shape: f32[1,16,32], index: 3, kind: input, shape index: {}]
  %s4 = inlined_call_operand.vmem [shape: f32[2,16,32], index: 4, kind: output, shape index: {}]
  %s5 = sld [smem:[#allocation0]]
  $region49: #{mae_teacher_forward.4} parent=0
    _
  %s7 = ssub.s32 1, %s5
  %s8 = scalar_select 0, %s7, %s5
  loop: start=0, step=1, limit=4
  $region2: #{mae_teacher_forward.4} parent=0 // loop_pre_header
    _
  $region3: #{mae_teacher_forward.4} parent=0 // loop_header
    %s10 = sphi 0, %s14
    %p11 = scmp.ge.s32.totalorder %s10, 4
    %s20 = sphi 0, %s22
    %s23 = sphi 0, %s20
    %s24 = sphi 0, %s23
    %s40 = sphi 0, %s24
    %s44 = sphi 0, %s44
    %s46 = sphi 0, %s44
    %s47 = sphi 0, %s46
    %s61 = sphi 0, %s47
    %s65 = sphi 0, %s65
    %s67 = sphi 0, %s65
    %s68 = sphi 0, %s67
    %s82 = sphi 0, %s68
    %s86 = sphi 0, %s86
    %s88 = sphi 0, %s86
    %s89 = sphi 0, %s88
    %s103 = sphi 0, %s89
    %s109 = sphi 0, %s111
    %s112 = sphi 0, %s109
    %s113 = sphi 0, %s112
    %s129 = sphi 0, %s113
  $region4: #{mae_teacher_forward.4} parent=0 // loop_header_branch
    %13 = sbr.rel (%p11) target = $region8
  $region5: #{mae_teacher_forward.4} parent=0 // loop_body
    %s15 = ssub.s32 %s10, 1
    %s16 = ssub.s32 %s10, 2
    %s17 = sadd.s32 %s10, 1
    %s18 = ssub.s32 %s10, %s17
    %p19 = scmp.eq.s32.totalorder %s18, 0
    %s21 = sadd.s32 %s20, 1
    %s22 = scalar_select %p19, %s20, %s21
    %p25 = pneg %p19
    %p26 = scmp.eq.s32.totalorder %s10, 1
    %p27 = por %p25, %p26
    %p28 = scmp.ne.s32.totalorder %s20, %s23
    %p29 = scmp.eq.s32.totalorder %s10, 0
    %p30 = por %p28, %p29
    %p31 = scmp.ne.s32.totalorder %s20, %s23
    %p32 = scmp.eq.s32.totalorder %s15, 1
    %p33 = por %p31, %p32
    %p34 = scmp.ne.s32.totalorder %s23, %s24
    %p35 = scmp.eq.s32.totalorder %s15, 0
    %p36 = por %p34, %p35
    %p37 = scmp.ne.s32.totalorder %s23, %s24
    %p38 = scmp.eq.s32.totalorder %s16, 1
    %p39 = por %p37, %p38
    %p41 = scmp.ne.s32.totalorder %s24, %s40
    %p42 = scmp.eq.s32.totalorder %s16, 0
    %p43 = por %p41, %p42
    %s45 = sadd.s32 %s44, 1
    %p48 = scmp.eq.s32.totalorder %s10, 1
    %p49 = scmp.ne.s32.totalorder %s44, %s46
    %p50 = scmp.eq.s32.totalorder %s10, 0
    %p51 = por %p49, %p50
    %p52 = scmp.ne.s32.totalorder %s44, %s46
    %p53 = scmp.eq.s32.totalorder %s15, 1
    %p54 = por %p52, %p53
    %p55 = scmp.ne.s32.totalorder %s46, %s47
    %p56 = scmp.eq.s32.totalorder %s15, 0
    %p57 = por %p55, %p56
    %p58 = scmp.ne.s32.totalorder %s46, %s47
    %p59 = scmp.eq.s32.totalorder %s16, 1
    %p60 = por %p58, %p59
    %p62 = scmp.ne.s32.totalorder %s47, %s61
    %p63 = scmp.eq.s32.totalorder %s16, 0
    %p64 = por %p62, %p63
    %s66 = sadd.s32 %s65, 1
    %p69 = scmp.eq.s32.totalorder %s10, 1
    %p70 = scmp.ne.s32.totalorder %s65, %s67
    %p71 = scmp.eq.s32.totalorder %s10, 0
    %p72 = por %p70, %p71
    %p73 = scmp.ne.s32.totalorder %s65, %s67
    %p74 = scmp.eq.s32.totalorder %s15, 1
    %p75 = por %p73, %p74
    %p76 = scmp.ne.s32.totalorder %s67, %s68
    %p77 = scmp.eq.s32.totalorder %s15, 0
    %p78 = por %p76, %p77
    %p79 = scmp.ne.s32.totalorder %s67, %s68
    %p80 = scmp.eq.s32.totalorder %s16, 1
    %p81 = por %p79, %p80
    %p83 = scmp.ne.s32.totalorder %s68, %s82
    %p84 = scmp.eq.s32.totalorder %s16, 0
    %p85 = por %p83, %p84
    %s87 = sadd.s32 %s86, 1
    %p90 = scmp.eq.s32.totalorder %s10, 1
    %p91 = scmp.ne.s32.totalorder %s86, %s88
    %p92 = scmp.eq.s32.totalorder %s10, 0
    %p93 = por %p91, %p92
    %p94 = scmp.ne.s32.totalorder %s86, %s88
    %p95 = scmp.eq.s32.totalorder %s15, 1
    %p96 = por %p94, %p95
    %p97 = scmp.ne.s32.totalorder %s88, %s89
    %p98 = scmp.eq.s32.totalorder %s15, 0
    %p99 = por %p97, %p98
    %p100 = scmp.ne.s32.totalorder %s88, %s89
    %p101 = scmp.eq.s32.totalorder %s16, 1
    %p102 = por %p100, %p101
    %p104 = scmp.ne.s32.totalorder %s89, %s103
    %p105 = scmp.eq.s32.totalorder %s16, 0
    %p106 = por %p104, %p105
    %s107 = ssub.s32 %s10, %s17
    %p108 = scmp.eq.s32.totalorder %s107, 0
    %s110 = sadd.s32 %s109, 1
    %s111 = scalar_select %p108, %s109, %s110
    %p114 = pneg %p108
    %p115 = scmp.eq.s32.totalorder %s10, 1
    %p116 = por %p114, %p115
    %p117 = scmp.ne.s32.totalorder %s109, %s112
    %p118 = scmp.eq.s32.totalorder %s10, 0
    %p119 = por %p117, %p118
    %p120 = scmp.ne.s32.totalorder %s109, %s112
    %p121 = scmp.eq.s32.totalorder %s15, 1
    %p122 = por %p120, %p121
    %p123 = scmp.ne.s32.totalorder %s112, %s113
    %p124 = scmp.eq.s32.totalorder %s15, 0
    %p125 = por %p123, %p124
    %p126 = scmp.ne.s32.totalorder %s112, %s113
    %p127 = scmp.eq.s32.totalorder %s16, 1
    %p128 = por %p126, %p127
    %p130 = scmp.ne.s32.totalorder %s113, %s129
    %p131 = scmp.eq.s32.totalorder %s16, 0
    %p132 = por %p130, %p131
    %p133 = scmp.le.s32.totalorder 1, %s10
    %p134 = scmp.lt.s32.totalorder %s10, 3
    %p135 = pnand %p133, %p134
    %p136 = pneg %p135
    // Predicated region
    $region9: #{mae_teacher_forward.4} parent=5 // pred_check
      _
    $region10: #{mae_teacher_forward.4} parent=5 // pred_check_branch
      %138 = sbr.rel (%p135) target = $region12
    $region11: #{mae_teacher_forward.4} parent=5 // pred_region
      %s139 = ssub.s32 %s10, 1
      // Predicated region
      $region13: #{mae_teacher_forward.4} parent=11 // pred_check
        %p140 = pneg %p57
      $region14: #{mae_teacher_forward.4} parent=11 // pred_check_branch
        %142 = sbr.rel (%p140) target = $region16
      $region15: #{mae_teacher_forward.4} parent=11 // pred_region
        _
      $region16: #{mae_teacher_forward.4} parent=11 // pred_fallthru
        _
      // Predicated region
      $region17: #{mae_teacher_forward.4} parent=11 // pred_check
        %p143 = pneg %p78
      $region18: #{mae_teacher_forward.4} parent=11 // pred_check_branch
        %145 = sbr.rel (%p143) target = $region20
      $region19: #{mae_teacher_forward.4} parent=11 // pred_region
        _
      $region20: #{mae_teacher_forward.4} parent=11 // pred_fallthru
        _
      // Predicated region
      $region21: #{mae_teacher_forward.4} parent=11 // pred_check
        %p146 = pneg %p99
      $region22: #{mae_teacher_forward.4} parent=11 // pred_check_branch
        %148 = sbr.rel (%p146) target = $region24
      $region23: #{mae_teacher_forward.4} parent=11 // pred_region
        _
      $region24: #{mae_teacher_forward.4} parent=11 // pred_fallthru
        _
    $region12: #{mae_teacher_forward.4} parent=5 // pred_fallthru
      _
    %p149 = scmp.lt.s32.totalorder %s10, 2
    // Predicated region
    $region25: #{mae_teacher_forward.4} parent=5 // pred_check
      %p150 = pneg %p149
    $region26: #{mae_teacher_forward.4} parent=5 // pred_check_branch
      %152 = sbr.rel (%p150) target = $region28
    $region27: #{mae_teacher_forward.4} parent=5 // pred_region
      // Predicated region
      $region29: #{mae_teacher_forward.4} parent=27 // pred_check
        %p153 = pneg %p30
      $region30: #{mae_teacher_forward.4} parent=27 // pred_check_branch
        %155 = sbr.rel (%p153) target = $region32
      $region31: #{mae_teacher_forward.4} parent=27 // pred_region
        %p156 = scmp.lt.s32.totalorder %s10, 1
        %s157 = scalar_select %p156, %s10, 1
        %s158 = smul.addr %s157, 2
        %s159 = smul.addr %s158, 8
        %s160 = scalar_lea.vmem %s0, %s159
      $region32: #{mae_teacher_forward.4} parent=27 // pred_fallthru
        _
    $region28: #{mae_teacher_forward.4} parent=5 // pred_fallthru
      _
    %p161 = scmp.le.s32.totalorder 1, %s10
    %p162 = scmp.lt.s32.totalorder %s10, 3
    %p163 = pnand %p161, %p162
    %p164 = pneg %p163
    // Predicated region
    $region33: #{mae_teacher_forward.4} parent=5 // pred_check
      _
    $region34: #{mae_teacher_forward.4} parent=5 // pred_check_branch
      %166 = sbr.rel (%p163) target = $region36
    $region35: #{mae_teacher_forward.4} parent=5 // pred_region
      %s167 = ssub.s32 %s10, 1
      %p168 = scmp.lt.s32.totalorder %s15, 1
      %s169 = scalar_select %p168, %s15, 1
      %s170 = smul.addr %s169, 2
      %s171 = smul.addr %s170, 8
      %s172 = scalar_lea.vmem %s0, %s171
      %p173 = pneg %p36
      %p174 = pneg %p33
      %p175 = pneg %p57
      %p176 = pneg %p54
      %p177 = pneg %p78
      %p178 = pneg %p75
      %p179 = pneg %p99
      %p180 = pneg %p96
      %p181 = pneg %p125
      %p182 = pneg %p122
      %p183 = scmp.lt.s32.totalorder %s15, 1
      %s184 = scalar_select %p183, %s15, 1
      %s185 = smul.addr %s184, 2
      %s186 = smul.addr %s185, 8
      %s187 = scalar_lea.vmem %s4, %s186
      %p188 = scmp.lt.s32.totalorder %s15, 1
      %s189 = scalar_select %p188, %s15, 1
      %s190 = smul.addr %s189, 2
      %s191 = smul.addr %s190, 8
      %s192 = scalar_lea.vmem %s0, %s191
      %p193 = scmp.lt.s32.totalorder %s15, 1
      %s194 = scalar_select %p193, %s15, 1
      %s195 = smul.addr %s194, 2
      %s196 = smul.addr %s195, 8
      %s197 = scalar_lea.vmem %s4, %s196
      %v198 = vld [vmem:[%s192] sm:$0xff]
      %v199 = vld [vmem:[%s192 + $0x8] sm:$0xff]
      %v200 = vld [vmem:[%s1] sm:$0xff]
      %v201 = vld [vmem:[%s1 + $0x8] sm:$0xff]
      %v202 = vld [vmem:[%s1 + $0x10] sm:$0xff]
      %v203 = vld [vmem:[%s1 + $0x18] sm:$0xff]
      %v204 = vld [vmem:[%s1 + $0x20] sm:$0xff]
      %v205 = vld [vmem:[%s1 + $0x28] sm:$0xff]
      %v206 = vld [vmem:[%s2] sm:$0x1]
      %v208 = vlaneseq
      %v209 = vshrl.u32 %v208, 7
      %v210 = vsub.s32 0, %v209
      %v211 = vrot.slane %v206, %v210
      %vm213 = vcmask 392192
      %v215 = vsel %vm213, %v198, 0
      %v218 = vsel %vm213, %v199, 0
      %220 = vmatprep.subr.mxu0 0.0
      %221 = vmatpush1.msra.mxu0 %v200
      %222 = vmatprep.subr.mxu0 0.0
      %223 = vmatpush1.msra.mxu0 %v201
      %224 = vmatprep.subr.mxu0 0.0
      %225 = vmatpush1.msra.mxu0 %v202
      %226 = vmatprep.subr.mxu0 0.0
      %227 = vmatpush1.msra.mxu0 %v203
      %228 = vmatprep.subr.mxu0 0.0
      %229 = vmatpush1.msra.mxu0 %v204
      %230 = vmatprep.subr.mxu0 0.0
      %231 = vmatpush1.msra.mxu0 %v205
      %232 = vmatprep.subr.mxu0 0.0
      %233 = vmatpush1.msra.mxu0 0.0
      %234 = vmatprep.subr.mxu0 0.0
      %235 = vmatpush1.msra.mxu0 0.0
      %236 = vmatprep.subr.mxu0 0.0
      %237 = vmatpush1.msra.mxu0 0.0
      %238 = vmatprep.subr.mxu0 0.0
      %239 = vmatpush1.msra.mxu0 0.0
      %240 = vmatprep.subr.mxu0 0.0
      %241 = vmatpush1.msra.mxu0 0.0
      %242 = vmatprep.subr.mxu0 0.0
      %243 = vmatpush1.msra.mxu0 0.0
      %244 = vmatprep.subr.mxu0 0.0
      %245 = vmatpush1.msra.mxu0 0.0
      %246 = vmatprep.subr.mxu0 0.0
      %247 = vmatpush1.msra.mxu0 0.0
      %248 = vmatprep.subr.mxu0 0.0
      %249 = vmatpush1.msra.mxu0 0.0
      %250 = vmatprep.subr.mxu0 0.0
      %251 = vmatpush1.msra.mxu0 0.0
      %252 = vmatprep.subr.mxu0 0.0
      %253 = vmatpush1.msra.mxu0 0.0
      %254 = vmatprep.subr.mxu0 0.0
      %255 = vmatpush1.msra.mxu0 0.0
      %256 = vmatprep.subr.mxu0 0.0
      %257 = vmatpush1.msra.mxu0 0.0
      %258 = vmatprep.subr.mxu0 0.0
      %259 = vmatpush1.msra.mxu0 0.0
      %260 = vmatprep.subr.mxu0 0.0
      %261 = vmatpush1.msra.mxu0 0.0
      %262 = vmatprep.subr.mxu0 0.0
      %263 = vmatpush1.msra.mxu0 0.0
      %264 = vmatprep.subr.mxu0 0.0
      %265 = vmatpush1.msra.mxu0 0.0
      %266 = vmatprep.subr.mxu0 0.0
      %267 = vmatpush1.msra.mxu0 0.0
      %268 = vmatprep.subr.mxu0 0.0
      %269 = vmatpush1.msra.mxu0 0.0
      %270 = vmatprep.subr.mxu0 0.0
      %271 = vmatpush1.msra.mxu0 0.0
      %272 = vmatprep.subr.mxu0 0.0
      %273 = vmatpush1.msra.mxu0 0.0
      %274 = vmatprep.subr.mxu0 0.0
      %275 = vmatpush1.msra.mxu0 0.0
      %276 = vmatprep.subr.mxu0 0.0
      %277 = vmatpush1.msra.mxu0 0.0
      %278 = vmatprep.subr.mxu0 0.0
      %279 = vmatpush1.msra.mxu0 0.0
      %280 = vmatprep.subr.mxu0 0.0
      %281 = vmatpush1.msra.mxu0 0.0
      %282 = vmatprep.subr.mxu0 0.0
      %283 = vmatpush1.msra.mxu0 0.0
      %284 = vmatprep.mubr.f32.mxu0 0.0
      %285 = vmatmul.mubr.f32.gmra.mrb[0].mxu0 %v215
      %v286 = vpop.f32.mrb[0].mxu0
      %v287 = vadd.f32 %v211, %v286
      %v288 = vpop.f32.mrb[0].mxu0
      %289 = vmatprep.mubr.f32.mxu0 0.0
      %290 = vmatmul.mubr.f32.gmra.mrb[0].mxu0 %v218
      %v291 = vpop.f32.mrb[0].mxu0
      %v292 = vadd.f32 %v211, %v291
      %v293 = vpop.f32.mrb[0].mxu0
      %294 = vdwg.mxu0
      %v295 = vld [vmem:[%s3] sm:$0xff]
      %v296 = vld [vmem:[%s3 + $0x8] sm:$0xff]
      %v297 = vadd.f32 %v287, %v295
      %v298 = vadd.f32 %v292, %v296
      %vm299 = vcmask 261120
      %300 = vst.msk [vmem:[%s197] sm:$0xff] %vm299, %v297
      %301 = vst.msk [vmem:[%s197 + $0x8] sm:$0xff] %vm299, %v298
      %p302 = scmp.lt.s32.totalorder %s15, 1
      %s303 = scalar_select %p302, %s15, 1
      %s304 = smul.addr %s303, 2
      %s305 = smul.addr %s304, 8
      %s306 = scalar_lea.vmem %s4, %s305
      // Predicated region
      $region37: #{mae_teacher_forward.4} parent=35 // pred_check
        %p307 = pneg %p122
      $region38: #{mae_teacher_forward.4} parent=35 // pred_check_branch
        %309 = sbr.rel (%p307) target = $region40
      $region39: #{mae_teacher_forward.4} parent=35 // pred_region
        _
      $region40: #{mae_teacher_forward.4} parent=35 // pred_fallthru
        _
    $region36: #{mae_teacher_forward.4} parent=5 // pred_fallthru
      _
    %p310 = scmp.le.s32.totalorder 2, %s10
    // Predicated region
    $region41: #{mae_teacher_forward.4} parent=5 // pred_check
      %p311 = pneg %p310
    $region42: #{mae_teacher_forward.4} parent=5 // pred_check_branch
      %313 = sbr.rel (%p311) target = $region44
    $region43: #{mae_teacher_forward.4} parent=5 // pred_region
      %s314 = ssub.s32 %s10, 2
      // Predicated region
      $region45: #{mae_teacher_forward.4} parent=43 // pred_check
        %p315 = pneg %p128
      $region46: #{mae_teacher_forward.4} parent=43 // pred_check_branch
        %317 = sbr.rel (%p315) target = $region48
      $region47: #{mae_teacher_forward.4} parent=43 // pred_region
        %p318 = scmp.lt.s32.totalorder %s16, 1
        %s319 = scalar_select %p318, %s16, 1
        %s320 = smul.addr %s319, 2
        %s321 = smul.addr %s320, 8
        %s322 = scalar_lea.vmem %s4, %s321
      $region48: #{mae_teacher_forward.4} parent=43 // pred_fallthru
        _
    $region44: #{mae_teacher_forward.4} parent=5 // pred_fallthru
      _
  $region6: #{mae_teacher_forward.4} parent=0 // loop_footer
    %s14 = sadd.s32 1, %s10
  $region7: #{mae_teacher_forward.4} parent=0 // loop_footer_branch
    %9 = sbr.rel target = $region3
  $region8: #{mae_teacher_forward.4} parent=0 // loop_exit
    _

// kernel: mae_teacher_forward.5
$region0: #{mae_teacher_forward.5}
  #allocation0 [shape = 'u32[]', space=smem, size = 0x4, offset = 0x4, fixed_abs, tag = 'smem constant byte address 0x4 - core index']
  #allocation1 [shape = 'u32[144,128]{1,0:T(1,128)}', space=vmem, size = 0x12000, scoped, tag = 'internal scratch']
  %s0 = inlined_call_operand.vmem [shape: f32[2,5,32], index: 0, kind: input, shape index: {}]
  %s1 = inlined_call_operand.vmem [shape: f32[2,1,32], index: 1, kind: input, shape index: {}]
  %s2 = inlined_call_operand.vmem [shape: f32[2,1,32], index: 2, kind: input, shape index: {}]
  %s3 = inlined_call_operand.vmem [shape: f32[2,32,96], index: 3, kind: input, shape index: {}]
  %s4 = inlined_call_operand.vmem [shape: f32[2,1,96], index: 4, kind: input, shape index: {}]
  %s5 = inlined_call_operand.vmem [shape: f32[2,32,32], index: 5, kind: input, shape index: {}]
  %s6 = inlined_call_operand.vmem [shape: f32[2,1,32], index: 6, kind: input, shape index: {}]
  %s7 = inlined_call_operand.vmem [shape: f32[2,1,32], index: 7, kind: input, shape index: {}]
  %s8 = inlined_call_operand.vmem [shape: f32[2,1,32], index: 8, kind: input, shape index: {}]
  %s9 = inlined_call_operand.vmem [shape: f32[2,32,128], index: 9, kind: input, shape index: {}]
  %s10 = inlined_call_operand.vmem [shape: f32[2,1,128], index: 10, kind: input, shape index: {}]
  %s11 = inlined_call_operand.vmem [shape: f32[2,128,32], index: 11, kind: input, shape index: {}]
  %s12 = inlined_call_operand.vmem [shape: f32[2,1,32], index: 12, kind: input, shape index: {}]
  %s13 = inlined_call_operand.vmem [shape: f32[1,32], index: 13, kind: input, shape index: {}]
  %s14 = inlined_call_operand.vmem [shape: f32[1,32], index: 14, kind: input, shape index: {}]
  %s15 = inlined_call_operand.vmem [shape: f32[32,32], index: 15, kind: input, shape index: {}]
  %s16 = inlined_call_operand.vmem [shape: f32[1,32], index: 16, kind: input, shape index: {}]
  %s17 = inlined_call_operand.vmem [shape: f32[2,5,32], index: 17, kind: output, shape index: {}]
  %s18 = sld [smem:[#allocation0]]
  $region101: #{mae_teacher_forward.5} parent=0
    _
  %s20 = ssub.s32 1, %s18
  %s21 = scalar_select 0, %s20, %s18
  loop: start=0, step=1, limit=4
  $region2: #{mae_teacher_forward.5} parent=0 // loop_pre_header
    _
  $region3: #{mae_teacher_forward.5} parent=0 // loop_header
    %s23 = sphi 0, %s27
    %p24 = scmp.ge.s32.totalorder %s23, 4
    %s33 = sphi 0, %s35
    %s36 = sphi 0, %s33
    %s37 = sphi 0, %s36
    %s53 = sphi 0, %s37
    %s57 = sphi 0, %s57
    %s59 = sphi 0, %s57
    %s60 = sphi 0, %s59
    %s74 = sphi 0, %s60
    %s78 = sphi 0, %s78
    %s80 = sphi 0, %s78
    %s81 = sphi 0, %s80
    %s95 = sphi 0, %s81
    %s99 = sphi 0, %s99
    %s101 = sphi 0, %s99
    %s102 = sphi 0, %s101
    %s116 = sphi 0, %s102
    %s120 = sphi 0, %s120
    %s122 = sphi 0, %s120
    %s123 = sphi 0, %s122
    %s137 = sphi 0, %s123
    %s141 = sphi 0, %s141
    %s143 = sphi 0, %s141
    %s144 = sphi 0, %s143
    %s158 = sphi 0, %s144
    %s162 = sphi 0, %s162
    %s164 = sphi 0, %s162
    %s165 = sphi 0, %s164
    %s179 = sphi 0, %s165
    %s183 = sphi 0, %s183
    %s185 = sphi 0, %s183
    %s186 = sphi 0, %s185
    %s200 = sphi 0, %s186
    %s204 = sphi 0, %s204
    %s206 = sphi 0, %s204
    %s207 = sphi 0, %s206
    %s221 = sphi 0, %s207
    %s225 = sphi 0, %s225
    %s227 = sphi 0, %s225
    %s228 = sphi 0, %s227
    %s242 = sphi 0, %s228
    %s246 = sphi 0, %s246
    %s248 = sphi 0, %s246
    %s249 = sphi 0, %s248
    %s263 = sphi 0, %s249
    %s267 = sphi 0, %s267
    %s269 = sphi 0, %s267
    %s270 = sphi 0, %s269
    %s284 = sphi 0, %s270
    %s288 = sphi 0, %s288
    %s290 = sphi 0, %s288
    %s291 = sphi 0, %s290
    %s305 = sphi 0, %s291
    %s309 = sphi 0, %s309
    %s311 = sphi 0, %s309
    %s312 = sphi 0, %s311
    %s326 = sphi 0, %s312
    %s330 = sphi 0, %s330
    %s332 = sphi 0, %s330
    %s333 = sphi 0, %s332
    %s347 = sphi 0, %s333
    %s351 = sphi 0, %s351
    %s353 = sphi 0, %s351
    %s354 = sphi 0, %s353
    %s368 = sphi 0, %s354
    %s372 = sphi 0, %s372
    %s374 = sphi 0, %s372
    %s375 = sphi 0, %s374
    %s389 = sphi 0, %s375
    %s395 = sphi 0, %s397
    %s398 = sphi 0, %s395
    %s399 = sphi 0, %s398
    %s415 = sphi 0, %s399
  $region4: #{mae_teacher_forward.5} parent=0 // loop_header_branch
    %26 = sbr.rel (%p24) target = $region8
  $region5: #{mae_teacher_forward.5} parent=0 // loop_body
    %s28 = ssub.s32 %s23, 1
    %s29 = ssub.s32 %s23, 2
    %s30 = sadd.s32 %s23, 1
    %s31 = ssub.s32 %s23, %s30
    %p32 = scmp.eq.s32.totalorder %s31, 0
    %s34 = sadd.s32 %s33, 1
    %s35 = scalar_select %p32, %s33, %s34
    %p38 = pneg %p32
    %p39 = scmp.eq.s32.totalorder %s23, 1
    %p40 = por %p38, %p39
    %p41 = scmp.ne.s32.totalorder %s33, %s36
    %p42 = scmp.eq.s32.totalorder %s23, 0
    %p43 = por %p41, %p42
    %p44 = scmp.ne.s32.totalorder %s33, %s36
    %p45 = scmp.eq.s32.totalorder %s28, 1
    %p46 = por %p44, %p45
    %p47 = scmp.ne.s32.totalorder %s36, %s37
    %p48 = scmp.eq.s32.totalorder %s28, 0
    %p49 = por %p47, %p48
    %p50 = scmp.ne.s32.totalorder %s36, %s37
    %p51 = scmp.eq.s32.totalorder %s29, 1
    %p52 = por %p50, %p51
    %p54 = scmp.ne.s32.totalorder %s37, %s53
    %p55 = scmp.eq.s32.totalorder %s29, 0
    %p56 = por %p54, %p55
    %s58 = sadd.s32 %s57, 1
    %p61 = scmp.eq.s32.totalorder %s23, 1
    %p62 = scmp.ne.s32.totalorder %s57, %s59
    %p63 = scmp.eq.s32.totalorder %s23, 0
    %p64 = por %p62, %p63
    %p65 = scmp.ne.s32.totalorder %s57, %s59
    %p66 = scmp.eq.s32.totalorder %s28, 1
    %p67 = por %p65, %p66
    %p68 = scmp.ne.s32.totalorder %s59, %s60
    %p69 = scmp.eq.s32.totalorder %s28, 0
    %p70 = por %p68, %p69
    %p71 = scmp.ne.s32.totalorder %s59, %s60
    %p72 = scmp.eq.s32.totalorder %s29, 1
    %p73 = por %p71, %p72
    %p75 = scmp.ne.s32.totalorder %s60, %s74
    %p76 = scmp.eq.s32.totalorder %s29, 0
    %p77 = por %p75, %p76
    %s79 = sadd.s32 %s78, 1
    %p82 = scmp.eq.s32.totalorder %s23, 1
    %p83 = scmp.ne.s32.totalorder %s78, %s80
    %p84 = scmp.eq.s32.totalorder %s23, 0
    %p85 = por %p83, %p84
    %p86 = scmp.ne.s32.totalorder %s78, %s80
    %p87 = scmp.eq.s32.totalorder %s28, 1
    %p88 = por %p86, %p87
    %p89 = scmp.ne.s32.totalorder %s80, %s81
    %p90 = scmp.eq.s32.totalorder %s28, 0
    %p91 = por %p89, %p90
    %p92 = scmp.ne.s32.totalorder %s80, %s81
    %p93 = scmp.eq.s32.totalorder %s29, 1
    %p94 = por %p92, %p93
    %p96 = scmp.ne.s32.totalorder %s81, %s95
    %p97 = scmp.eq.s32.totalorder %s29, 0
    %p98 = por %p96, %p97
    %s100 = sadd.s32 %s99, 1
    %p103 = scmp.eq.s32.totalorder %s23, 1
    %p104 = scmp.ne.s32.totalorder %s99, %s101
    %p105 = scmp.eq.s32.totalorder %s23, 0
    %p106 = por %p104, %p105
    %p107 = scmp.ne.s32.totalorder %s99, %s101
    %p108 = scmp.eq.s32.totalorder %s28, 1
    %p109 = por %p107, %p108
    %p110 = scmp.ne.s32.totalorder %s101, %s102
    %p111 = scmp.eq.s32.totalorder %s28, 0
    %p112 = por %p110, %p111
    %p113 = scmp.ne.s32.totalorder %s101, %s102
    %p114 = scmp.eq.s32.totalorder %s29, 1
    %p115 = por %p113, %p114
    %p117 = scmp.ne.s32.totalorder %s102, %s116
    %p118 = scmp.eq.s32.totalorder %s29, 0
    %p119 = por %p117, %p118
    %s121 = sadd.s32 %s120, 1
    %p124 = scmp.eq.s32.totalorder %s23, 1
    %p125 = scmp.ne.s32.totalorder %s120, %s122
    %p126 = scmp.eq.s32.totalorder %s23, 0
    %p127 = por %p125, %p126
    %p128 = scmp.ne.s32.totalorder %s120, %s122
    %p129 = scmp.eq.s32.totalorder %s28, 1
    %p130 = por %p128, %p129
    %p131 = scmp.ne.s32.totalorder %s122, %s123
    %p132 = scmp.eq.s32.totalorder %s28, 0
    %p133 = por %p131, %p132
    %p134 = scmp.ne.s32.totalorder %s122, %s123
    %p135 = scmp.eq.s32.totalorder %s29, 1
    %p136 = por %p134, %p135
    %p138 = scmp.ne.s32.totalorder %s123, %s137
    %p139 = scmp.eq.s32.totalorder %s29, 0
    %p140 = por %p138, %p139
    %s142 = sadd.s32 %s141, 1
    %p145 = scmp.eq.s32.totalorder %s23, 1
    %p146 = scmp.ne.s32.totalorder %s141, %s143
    %p147 = scmp.eq.s32.totalorder %s23, 0
    %p148 = por %p146, %p147
    %p149 = scmp.ne.s32.totalorder %s141, %s143
    %p150 = scmp.eq.s32.totalorder %s28, 1
    %p151 = por %p149, %p150
    %p152 = scmp.ne.s32.totalorder %s143, %s144
    %p153 = scmp.eq.s32.totalorder %s28, 0
    %p154 = por %p152, %p153
    %p155 = scmp.ne.s32.totalorder %s143, %s144
    %p156 = scmp.eq.s32.totalorder %s29, 1
    %p157 = por %p155, %p156
    %p159 = scmp.ne.s32.totalorder %s144, %s158
    %p160 = scmp.eq.s32.totalorder %s29, 0
    %p161 = por %p159, %p160
    %s163 = sadd.s32 %s162, 1
    %p166 = scmp.eq.s32.totalorder %s23, 1
    %p167 = scmp.ne.s32.totalorder %s162, %s164
    %p168 = scmp.eq.s32.totalorder %s23, 0
    %p169 = por %p167, %p168
    %p170 = scmp.ne.s32.totalorder %s162, %s164
    %p171 = scmp.eq.s32.totalorder %s28, 1
    %p172 = por %p170, %p171
    %p173 = scmp.ne.s32.totalorder %s164, %s165
    %p174 = scmp.eq.s32.totalorder %s28, 0
    %p175 = por %p173, %p174
    %p176 = scmp.ne.s32.totalorder %s164, %s165
    %p177 = scmp.eq.s32.totalorder %s29, 1
    %p178 = por %p176, %p177
    %p180 = scmp.ne.s32.totalorder %s165, %s179
    %p181 = scmp.eq.s32.totalorder %s29, 0
    %p182 = por %p180, %p181
    %s184 = sadd.s32 %s183, 1
    %p187 = scmp.eq.s32.totalorder %s23, 1
    %p188 = scmp.ne.s32.totalorder %s183, %s185
    %p189 = scmp.eq.s32.totalorder %s23, 0
    %p190 = por %p188, %p189
    %p191 = scmp.ne.s32.totalorder %s183, %s185
    %p192 = scmp.eq.s32.totalorder %s28, 1
    %p193 = por %p191, %p192
    %p194 = scmp.ne.s32.totalorder %s185, %s186
    %p195 = scmp.eq.s32.totalorder %s28, 0
    %p196 = por %p194, %p195
    %p197 = scmp.ne.s32.totalorder %s185, %s186
    %p198 = scmp.eq.s32.totalorder %s29, 1
    %p199 = por %p197, %p198
    %p201 = scmp.ne.s32.totalorder %s186, %s200
    %p202 = scmp.eq.s32.totalorder %s29, 0
    %p203 = por %p201, %p202
    %s205 = sadd.s32 %s204, 1
    %p208 = scmp.eq.s32.totalorder %s23, 1
    %p209 = scmp.ne.s32.totalorder %s204, %s206
    %p210 = scmp.eq.s32.totalorder %s23, 0
    %p211 = por %p209, %p210
    %p212 = scmp.ne.s32.totalorder %s204, %s206
    %p213 = scmp.eq.s32.totalorder %s28, 1
    %p214 = por %p212, %p213
    %p215 = scmp.ne.s32.totalorder %s206, %s207
    %p216 = scmp.eq.s32.totalorder %s28, 0
    %p217 = por %p215, %p216
    %p218 = scmp.ne.s32.totalorder %s206, %s207
    %p219 = scmp.eq.s32.totalorder %s29, 1
    %p220 = por %p218, %p219
    %p222 = scmp.ne.s32.totalorder %s207, %s221
    %p223 = scmp.eq.s32.totalorder %s29, 0
    %p224 = por %p222, %p223
    %s226 = sadd.s32 %s225, 1
    %p229 = scmp.eq.s32.totalorder %s23, 1
    %p230 = scmp.ne.s32.totalorder %s225, %s227
    %p231 = scmp.eq.s32.totalorder %s23, 0
    %p232 = por %p230, %p231
    %p233 = scmp.ne.s32.totalorder %s225, %s227
    %p234 = scmp.eq.s32.totalorder %s28, 1
    %p235 = por %p233, %p234
    %p236 = scmp.ne.s32.totalorder %s227, %s228
    %p237 = scmp.eq.s32.totalorder %s28, 0
    %p238 = por %p236, %p237
    %p239 = scmp.ne.s32.totalorder %s227, %s228
    %p240 = scmp.eq.s32.totalorder %s29, 1
    %p241 = por %p239, %p240
    %p243 = scmp.ne.s32.totalorder %s228, %s242
    %p244 = scmp.eq.s32.totalorder %s29, 0
    %p245 = por %p243, %p244
    %s247 = sadd.s32 %s246, 1
    %p250 = scmp.eq.s32.totalorder %s23, 1
    %p251 = scmp.ne.s32.totalorder %s246, %s248
    %p252 = scmp.eq.s32.totalorder %s23, 0
    %p253 = por %p251, %p252
    %p254 = scmp.ne.s32.totalorder %s246, %s248
    %p255 = scmp.eq.s32.totalorder %s28, 1
    %p256 = por %p254, %p255
    %p257 = scmp.ne.s32.totalorder %s248, %s249
    %p258 = scmp.eq.s32.totalorder %s28, 0
    %p259 = por %p257, %p258
    %p260 = scmp.ne.s32.totalorder %s248, %s249
    %p261 = scmp.eq.s32.totalorder %s29, 1
    %p262 = por %p260, %p261
    %p264 = scmp.ne.s32.totalorder %s249, %s263
    %p265 = scmp.eq.s32.totalorder %s29, 0
    %p266 = por %p264, %p265
    %s268 = sadd.s32 %s267, 1
    %p271 = scmp.eq.s32.totalorder %s23, 1
    %p272 = scmp.ne.s32.totalorder %s267, %s269
    %p273 = scmp.eq.s32.totalorder %s23, 0
    %p274 = por %p272, %p273
    %p275 = scmp.ne.s32.totalorder %s267, %s269
    %p276 = scmp.eq.s32.totalorder %s28, 1
    %p277 = por %p275, %p276
    %p278 = scmp.ne.s32.totalorder %s269, %s270
    %p279 = scmp.eq.s32.totalorder %s28, 0
    %p280 = por %p278, %p279
    %p281 = scmp.ne.s32.totalorder %s269, %s270
    %p282 = scmp.eq.s32.totalorder %s29, 1
    %p283 = por %p281, %p282
    %p285 = scmp.ne.s32.totalorder %s270, %s284
    %p286 = scmp.eq.s32.totalorder %s29, 0
    %p287 = por %p285, %p286
    %s289 = sadd.s32 %s288, 1
    %p292 = scmp.eq.s32.totalorder %s23, 1
    %p293 = scmp.ne.s32.totalorder %s288, %s290
    %p294 = scmp.eq.s32.totalorder %s23, 0
    %p295 = por %p293, %p294
    %p296 = scmp.ne.s32.totalorder %s288, %s290
    %p297 = scmp.eq.s32.totalorder %s28, 1
    %p298 = por %p296, %p297
    %p299 = scmp.ne.s32.totalorder %s290, %s291
    %p300 = scmp.eq.s32.totalorder %s28, 0
    %p301 = por %p299, %p300
    %p302 = scmp.ne.s32.totalorder %s290, %s291
    %p303 = scmp.eq.s32.totalorder %s29, 1
    %p304 = por %p302, %p303
    %p306 = scmp.ne.s32.totalorder %s291, %s305
    %p307 = scmp.eq.s32.totalorder %s29, 0
    %p308 = por %p306, %p307
    %s310 = sadd.s32 %s309, 1
    %p313 = scmp.eq.s32.totalorder %s23, 1
    %p314 = scmp.ne.s32.totalorder %s309, %s311
    %p315 = scmp.eq.s32.totalorder %s23, 0
    %p316 = por %p314, %p315
    %p317 = scmp.ne.s32.totalorder %s309, %s311
    %p318 = scmp.eq.s32.totalorder %s28, 1
    %p319 = por %p317, %p318
    %p320 = scmp.ne.s32.totalorder %s311, %s312
    %p321 = scmp.eq.s32.totalorder %s28, 0
    %p322 = por %p320, %p321
    %p323 = scmp.ne.s32.totalorder %s311, %s312
    %p324 = scmp.eq.s32.totalorder %s29, 1
    %p325 = por %p323, %p324
    %p327 = scmp.ne.s32.totalorder %s312, %s326
    %p328 = scmp.eq.s32.totalorder %s29, 0
    %p329 = por %p327, %p328
    %s331 = sadd.s32 %s330, 1
    %p334 = scmp.eq.s32.totalorder %s23, 1
    %p335 = scmp.ne.s32.totalorder %s330, %s332
    %p336 = scmp.eq.s32.totalorder %s23, 0
    %p337 = por %p335, %p336
    %p338 = scmp.ne.s32.totalorder %s330, %s332
    %p339 = scmp.eq.s32.totalorder %s28, 1
    %p340 = por %p338, %p339
    %p341 = scmp.ne.s32.totalorder %s332, %s333
    %p342 = scmp.eq.s32.totalorder %s28, 0
    %p343 = por %p341, %p342
    %p344 = scmp.ne.s32.totalorder %s332, %s333
    %p345 = scmp.eq.s32.totalorder %s29, 1
    %p346 = por %p344, %p345
    %p348 = scmp.ne.s32.totalorder %s333, %s347
    %p349 = scmp.eq.s32.totalorder %s29, 0
    %p350 = por %p348, %p349
    %s352 = sadd.s32 %s351, 1
    %p355 = scmp.eq.s32.totalorder %s23, 1
    %p356 = scmp.ne.s32.totalorder %s351, %s353
    %p357 = scmp.eq.s32.totalorder %s23, 0
    %p358 = por %p356, %p357
    %p359 = scmp.ne.s32.totalorder %s351, %s353
    %p360 = scmp.eq.s32.totalorder %s28, 1
    %p361 = por %p359, %p360
    %p362 = scmp.ne.s32.totalorder %s353, %s354
    %p363 = scmp.eq.s32.totalorder %s28, 0
    %p364 = por %p362, %p363
    %p365 = scmp.ne.s32.totalorder %s353, %s354
    %p366 = scmp.eq.s32.totalorder %s29, 1
    %p367 = por %p365, %p366
    %p369 = scmp.ne.s32.totalorder %s354, %s368
    %p370 = scmp.eq.s32.totalorder %s29, 0
    %p371 = por %p369, %p370
    %s373 = sadd.s32 %s372, 1
    %p376 = scmp.eq.s32.totalorder %s23, 1
    %p377 = scmp.ne.s32.totalorder %s372, %s374
    %p378 = scmp.eq.s32.totalorder %s23, 0
    %p379 = por %p377, %p378
    %p380 = scmp.ne.s32.totalorder %s372, %s374
    %p381 = scmp.eq.s32.totalorder %s28, 1
    %p382 = por %p380, %p381
    %p383 = scmp.ne.s32.totalorder %s374, %s375
    %p384 = scmp.eq.s32.totalorder %s28, 0
    %p385 = por %p383, %p384
    %p386 = scmp.ne.s32.totalorder %s374, %s375
    %p387 = scmp.eq.s32.totalorder %s29, 1
    %p388 = por %p386, %p387
    %p390 = scmp.ne.s32.totalorder %s375, %s389
    %p391 = scmp.eq.s32.totalorder %s29, 0
    %p392 = por %p390, %p391
    %s393 = ssub.s32 %s23, %s30
    %p394 = scmp.eq.s32.totalorder %s393, 0
    %s396 = sadd.s32 %s395, 1
    %s397 = scalar_select %p394, %s395, %s396
    %p400 = pneg %p394
    %p401 = scmp.eq.s32.totalorder %s23, 1
    %p402 = por %p400, %p401
    %p403 = scmp.ne.s32.totalorder %s395, %s398
    %p404 = scmp.eq.s32.totalorder %s23, 0
    %p405 = por %p403, %p404
    %p406 = scmp.ne.s32.totalorder %s395, %s398
    %p407 = scmp.eq.s32.totalorder %s28, 1
    %p408 = por %p406, %p407
    %p409 = scmp.ne.s32.totalorder %s398, %s399
    %p410 = scmp.eq.s32.totalorder %s28, 0
    %p411 = por %p409, %p410
    %p412 = scmp.ne.s32.totalorder %s398, %s399
    %p413 = scmp.eq.s32.totalorder %s29, 1
    %p414 = por %p412, %p413
    %p416 = scmp.ne.s32.totalorder %s399, %s415
    %p417 = scmp.eq.s32.totalorder %s29, 0
    %p418 = por %p416, %p417
    %p419 = scmp.le.s32.totalorder 1, %s23
    %p420 = scmp.lt.s32.totalorder %s23, 3
    %p421 = pnand %p419, %p420
    %p422 = pneg %p421
    // Predicated region
    $region9: #{mae_teacher_forward.5} parent=5 // pred_check
      _
    $region10: #{mae_teacher_forward.5} parent=5 // pred_check_branch
      %424 = sbr.rel (%p421) target = $region12
    $region11: #{mae_teacher_forward.5} parent=5 // pred_region
      %s425 = ssub.s32 %s23, 1
      // Predicated region
      $region13: #{mae_teacher_forward.5} parent=11 // pred_check
        %p426 = pneg %p70
      $region14: #{mae_teacher_forward.5} parent=11 // pred_check_branch
        %428 = sbr.rel (%p426) target = $region16
      $region15: #{mae_teacher_forward.5} parent=11 // pred_region
        _
      $region16: #{mae_teacher_forward.5} parent=11 // pred_fallthru
        _
      // Predicated region
      $region17: #{mae_teacher_forward.5} parent=11 // pred_check
        %p429 = pneg %p91
      $region18: #{mae_teacher_forward.5} parent=11 // pred_check_branch
        %431 = sbr.rel (%p429) target = $region20
      $region19: #{mae_teacher_forward.5} parent=11 // pred_region
        _
      $region20: #{mae_teacher_forward.5} parent=11 // pred_fallthru
        _
      // Predicated region
      $region21: #{mae_teacher_forward.5} parent=11 // pred_check
        %p432 = pneg %p112
      $region22: #{mae_teacher_forward.5} parent=11 // pred_check_branch
        %434 = sbr.rel (%p432) target = $region24
      $region23: #{mae_teacher_forward.5} parent=11 // pred_region
        _
      $region24: #{mae_teacher_forward.5} parent=11 // pred_fallthru
        _
      // Predicated region
      $region25: #{mae_teacher_forward.5} parent=11 // pred_check
        %p435 = pneg %p133
      $region26: #{mae_teacher_forward.5} parent=11 // pred_check_branch
        %437 = sbr.rel (%p435) target = $region28
      $region27: #{mae_teacher_forward.5} parent=11 // pred_region
        _
      $region28: #{mae_teacher_forward.5} parent=11 // pred_fallthru
        _
      // Predicated region
      $region29: #{mae_teacher_forward.5} parent=11 // pred_check
        %p438 = pneg %p154
      $region30: #{mae_teacher_forward.5} parent=11 // pred_check_branch
        %440 = sbr.rel (%p438) target = $region32
      $region31: #{mae_teacher_forward.5} parent=11 // pred_region
        _
      $region32: #{mae_teacher_forward.5} parent=11 // pred_fallthru
        _
      // Predicated region
      $region33: #{mae_teacher_forward.5} parent=11 // pred_check
        %p441 = pneg %p175
      $region34: #{mae_teacher_forward.5} parent=11 // pred_check_branch
        %443 = sbr.rel (%p441) target = $region36
      $region35: #{mae_teacher_forward.5} parent=11 // pred_region
        _
      $region36: #{mae_teacher_forward.5} parent=11 // pred_fallthru
        _
      // Predicated region
      $region37: #{mae_teacher_forward.5} parent=11 // pred_check
        %p444 = pneg %p196
      $region38: #{mae_teacher_forward.5} parent=11 // pred_check_branch
        %446 = sbr.rel (%p444) target = $region40
      $region39: #{mae_teacher_forward.5} parent=11 // pred_region
        _
      $region40: #{mae_teacher_forward.5} parent=11 // pred_fallthru
        _
      // Predicated region
      $region41: #{mae_teacher_forward.5} parent=11 // pred_check
        %p447 = pneg %p217
      $region42: #{mae_teacher_forward.5} parent=11 // pred_check_branch
        %449 = sbr.rel (%p447) target = $region44
      $region43: #{mae_teacher_forward.5} parent=11 // pred_region
        _
      $region44: #{mae_teacher_forward.5} parent=11 // pred_fallthru
        _
      // Predicated region
      $region45: #{mae_teacher_forward.5} parent=11 // pred_check
        %p450 = pneg %p238
      $region46: #{mae_teacher_forward.5} parent=11 // pred_check_branch
        %452 = sbr.rel (%p450) target = $region48
      $region47: #{mae_teacher_forward.5} parent=11 // pred_region
        _
      $region48: #{mae_teacher_forward.5} parent=11 // pred_fallthru
        _
      // Predicated region
      $region49: #{mae_teacher_forward.5} parent=11 // pred_check
        %p453 = pneg %p259
      $region50: #{mae_teacher_forward.5} parent=11 // pred_check_branch
        %455 = sbr.rel (%p453) target = $region52
      $region51: #{mae_teacher_forward.5} parent=11 // pred_region
        _
      $region52: #{mae_teacher_forward.5} parent=11 // pred_fallthru
        _
      // Predicated region
      $region53: #{mae_teacher_forward.5} parent=11 // pred_check
        %p456 = pneg %p280
      $region54: #{mae_teacher_forward.5} parent=11 // pred_check_branch
        %458 = sbr.rel (%p456) target = $region56
      $region55: #{mae_teacher_forward.5} parent=11 // pred_region
        _
      $region56: #{mae_teacher_forward.5} parent=11 // pred_fallthru
        _
      // Predicated region
      $region57: #{mae_teacher_forward.5} parent=11 // pred_check
        %p459 = pneg %p301
      $region58: #{mae_teacher_forward.5} parent=11 // pred_check_branch
        %461 = sbr.rel (%p459) target = $region60
      $region59: #{mae_teacher_forward.5} parent=11 // pred_region
        _
      $region60: #{mae_teacher_forward.5} parent=11 // pred_fallthru
        _
      // Predicated region
      $region61: #{mae_teacher_forward.5} parent=11 // pred_check
        %p462 = pneg %p322
      $region62: #{mae_teacher_forward.5} parent=11 // pred_check_branch
        %464 = sbr.rel (%p462) target = $region64
      $region63: #{mae_teacher_forward.5} parent=11 // pred_region
        _
      $region64: #{mae_teacher_forward.5} parent=11 // pred_fallthru
        _
      // Predicated region
      $region65: #{mae_teacher_forward.5} parent=11 // pred_check
        %p465 = pneg %p343
      $region66: #{mae_teacher_forward.5} parent=11 // pred_check_branch
        %467 = sbr.rel (%p465) target = $region68
      $region67: #{mae_teacher_forward.5} parent=11 // pred_region
        _
      $region68: #{mae_teacher_forward.5} parent=11 // pred_fallthru
        _
      // Predicated region
      $region69: #{mae_teacher_forward.5} parent=11 // pred_check
        %p468 = pneg %p364
      $region70: #{mae_teacher_forward.5} parent=11 // pred_check_branch
        %470 = sbr.rel (%p468) target = $region72
      $region71: #{mae_teacher_forward.5} parent=11 // pred_region
        _
      $region72: #{mae_teacher_forward.5} parent=11 // pred_fallthru
        _
      // Predicated region
      $region73: #{mae_teacher_forward.5} parent=11 // pred_check
        %p471 = pneg %p385
      $region74: #{mae_teacher_forward.5} parent=11 // pred_check_branch
        %473 = sbr.rel (%p471) target = $region76
      $region75: #{mae_teacher_forward.5} parent=11 // pred_region
        _
      $region76: #{mae_teacher_forward.5} parent=11 // pred_fallthru
        _
    $region12: #{mae_teacher_forward.5} parent=5 // pred_fallthru
      _
    %p474 = scmp.lt.s32.totalorder %s23, 2
    // Predicated region
    $region77: #{mae_teacher_forward.5} parent=5 // pred_check
      %p475 = pneg %p474
    $region78: #{mae_teacher_forward.5} parent=5 // pred_check_branch
      %477 = sbr.rel (%p475) target = $region80
    $region79: #{mae_teacher_forward.5} parent=5 // pred_region
      // Predicated region
      $region81: #{mae_teacher_forward.5} parent=79 // pred_check
        %p478 = pneg %p43
      $region82: #{mae_teacher_forward.5} parent=79 // pred_check_branch
        %480 = sbr.rel (%p478) target = $region84
      $region83: #{mae_teacher_forward.5} parent=79 // pred_region
        %p481 = scmp.lt.s32.totalorder %s23, 1
        %s482 = scalar_select %p481, %s23, 1
        %s483 = smul.addr %s482, 8
        %s484 = scalar_lea.vmem %s0, %s483
      $region84: #{mae_teacher_forward.5} parent=79 // pred_fallthru
        _
    $region80: #{mae_teacher_forward.5} parent=5 // pred_fallthru
      _
    %p485 = scmp.le.s32.totalorder 1, %s23
    %p486 = scmp.lt.s32.totalorder %s23, 3
    %p487 = pnand %p485, %p486
    %p488 = pneg %p487
    // Predicated region
    $region85: #{mae_teacher_forward.5} parent=5 // pred_check
      _
    $region86: #{mae_teacher_forward.5} parent=5 // pred_check_branch
      %490 = sbr.rel (%p487) target = $region88
    $region87: #{mae_teacher_forward.5} parent=5 // pred_region
      %s491 = ssub.s32 %s23, 1
      %p492 = scmp.lt.s32.totalorder %s28, 1
      %s493 = scalar_select %p492, %s28, 1
      %s494 = smul.addr %s493, 8
      %s495 = scalar_lea.vmem %s0, %s494
      %p496 = pneg %p49
      %p497 = pneg %p46
      %p498 = pneg %p70
      %p499 = pneg %p67
      %p500 = pneg %p91
      %p501 = pneg %p88
      %p502 = pneg %p112
      %p503 = pneg %p109
      %p504 = pneg %p133
      %p505 = pneg %p130
      %p506 = pneg %p154
      %p507 = pneg %p151
      %p508 = pneg %p175
      %p509 = pneg %p172
      %p510 = pneg %p196
      %p511 = pneg %p193
      %p512 = pneg %p217
      %p513 = pneg %p214
      %p514 = pneg %p238
      %p515 = pneg %p235
      %p516 = pneg %p259
      %p517 = pneg %p256
      %p518 = pneg %p280
      %p519 = pneg %p277
      %p520 = pneg %p301
      %p521 = pneg %p298
      %p522 = pneg %p322
      %p523 = pneg %p319
      %p524 = pneg %p343
      %p525 = pneg %p340
      %p526 = pneg %p364
      %p527 = pneg %p361
      %p528 = pneg %p385
      %p529 = pneg %p382
      %p530 = pneg %p411
      %p531 = pneg %p408
      %p532 = scmp.lt.s32.totalorder %s28, 1
      %s533 = scalar_select %p532, %s28, 1
      %s534 = smul.addr %s533, 8
      %s535 = scalar_lea.vmem %s17, %s534
      %p536 = scmp.lt.s32.totalorder %s28, 1
      %s537 = scalar_select %p536, %s28, 1
      %s538 = smul.addr %s537, 8
      %s539 = scalar_lea.vmem %s0, %s538
      %p540 = scmp.lt.s32.totalorder %s28, 1
      %s541 = scalar_select %p540, %s28, 1
      %s542 = smul.addr %s541, 8
      %s543 = scalar_lea.vmem %s17, %s542
      %v544 = vld [vmem:[%s539] sm:$0x1f]
      %v545 = vld [vmem:[%s1] sm:$0x1]
      %v546 = vld [vmem:[%s2] sm:$0x1]
      %vm547 = vcmask 258048
      %v548 = vsel %vm547, %v544, 0.0
      %549 = vadd.xlane.f32.xlu0 %v548
      %v550 = vpop.xlane.xlu0 %549
      %v551 = vrcp.pop 32.0
      %v552 = vmul.f32 %v550, %v551
      %v553 = vsub.f32 %v544, %v552
      %v554 = vmul.f32 %v553, %v553
      %v555 = vsel %vm547, %v554, 0.0
      %556 = vadd.xlane.f32.xlu0 %v555
      %v557 = vpop.xlane.xlu0 %556
      %v558 = vmul.f32 %v557, %v551
      %v559 = vadd.f32 %v558, 1e-05
      %v560 = vrsqrt.pop %v559
      %v561 = vmul.f32 %v553, %v560
      %v563 = vlaneseq
      %v564 = vshrl.u32 %v563, 7
      %v565 = vsub.s32 0, %v564
      %v566 = vrot.slane %v545, %v565
      %v568 = vmul.f32 %v561, %v566
      %v570 = vlaneseq
      %v571 = vshrl.u32 %v570, 7
      %v572 = vsub.s32 0, %v571
      %v573 = vrot.slane %v546, %v572
      %v575 = vadd.f32 %v568, %v573
      %v576 = vld [vmem:[%s3] sm:$0xff]
      %v577 = vld [vmem:[%s3 + $0x8] sm:$0xff]
      %v578 = vld [vmem:[%s3 + $0x10] sm:$0xff]
      %v579 = vld [vmem:[%s3 + $0x18] sm:$0xff]
      %v580 = vld [vmem:[%s4] sm:$0x1]
      %v582 = vlaneseq
      %v583 = vshrl.u32 %v582, 7
      %v584 = vsub.s32 0, %v583
      %v585 = vrot.slane %v580, %v584
      %vm587 = vcmask 261120
      %v589 = vsel %vm587, %v575, 0
      %591 = vmatprep.subr.mxu0 0.0
      %592 = vmatpush1.msra.mxu0 %v576
      %593 = vmatprep.subr.mxu0 0.0
      %594 = vmatpush1.msra.mxu0 %v577
      %595 = vmatprep.subr.mxu0 0.0
      %596 = vmatpush1.msra.mxu0 %v578
      %597 = vmatprep.subr.mxu0 0.0
      %598 = vmatpush1.msra.mxu0 %v579
      %599 = vmatprep.subr.mxu0 0.0
      %600 = vmatpush1.msra.mxu0 0.0
      %601 = vmatprep.subr.mxu0 0.0
      %602 = vmatpush1.msra.mxu0 0.0
      %603 = vmatprep.subr.mxu0 0.0
      %604 = vmatpush1.msra.mxu0 0.0
      %605 = vmatprep.subr.mxu0 0.0
      %606 = vmatpush1.msra.mxu0 0.0
      %607 = vmatprep.subr.mxu0 0.0
      %608 = vmatpush1.msra.mxu0 0.0
      %609 = vmatprep.subr.mxu0 0.0
      %610 = vmatpush1.msra.mxu0 0.0
      %611 = vmatprep.subr.mxu0 0.0
      %612 = vmatpush1.msra.mxu0 0.0
      %613 = vmatprep.subr.mxu0 0.0
      %614 = vmatpush1.msra.mxu0 0.0
      %615 = vmatprep.subr.mxu0 0.0
      %616 = vmatpush1.msra.mxu0 0.0
      %617 = vmatprep.subr.mxu0 0.0
      %618 = vmatpush1.msra.mxu0 0.0
      %619 = vmatprep.subr.mxu0 0.0
      %620 = vmatpush1.msra.mxu0 0.0
      %621 = vmatprep.subr.mxu0 0.0
      %622 = vmatpush1.msra.mxu0 0.0
      %623 = vmatprep.subr.mxu0 0.0
      %624 = vmatpush1.msra.mxu0 0.0
      %625 = vmatprep.subr.mxu0 0.0
      %626 = vmatpush1.msra.mxu0 0.0
      %627 = vmatprep.subr.mxu0 0.0
      %628 = vmatpush1.msra.mxu0 0.0
      %629 = vmatprep.subr.mxu0 0.0
      %630 = vmatpush1.msra.mxu0 0.0
      %631 = vmatprep.subr.mxu0 0.0
      %632 = vmatpush1.msra.mxu0 0.0
      %633 = vmatprep.subr.mxu0 0.0
      %634 = vmatpush1.msra.mxu0 0.0
      %635 = vmatprep.subr.mxu0 0.0
      %636 = vmatpush1.msra.mxu0 0.0
      %637 = vmatprep.subr.mxu0 0.0
      %638 = vmatpush1.msra.mxu0 0.0
      %639 = vmatprep.subr.mxu0 0.0
      %640 = vmatpush1.msra.mxu0 0.0
      %641 = vmatprep.subr.mxu0 0.0
      %642 = vmatpush1.msra.mxu0 0.0
      %643 = vmatprep.subr.mxu0 0.0
      %644 = vmatpush1.msra.mxu0 0.0
      %645 = vmatprep.subr.mxu0 0.0
      %646 = vmatpush1.msra.mxu0 0.0
      %647 = vmatprep.subr.mxu0 0.0
      %648 = vmatpush1.msra.mxu0 0.0
      %649 = vmatprep.subr.mxu0 0.0
      %650 = vmatpush1.msra.mxu0 0.0
      %651 = vmatprep.subr.mxu0 0.0
      %652 = vmatpush1.msra.mxu0 0.0
      %653 = vmatprep.subr.mxu0 0.0
      %654 = vmatpush1.msra.mxu0 0.0
      %655 = vmatprep.mubr.f32.mxu0 0.0
      %656 = vmatmul.mubr.f32.gmra.mrb[0].mxu0 %v589
      %v657 = vpop.f32.mrb[0].mxu0
      %v658 = vadd.f32 %v585, %v657
      %v659 = vpop.f32.mrb[0].mxu0
      %660 = vdwg.mxu0
      %v661 = vld [vmem:[%s5] sm:$0xff]
      %v662 = vld [vmem:[%s5 + $0x8] sm:$0xff]
      %v663 = vld [vmem:[%s5 + $0x10] sm:$0xff]
      %v664 = vld [vmem:[%s5 + $0x18] sm:$0xff]
      %666 = vrot.lane.b32.xlu0 %v658, 96
      %v667 = vpop.permute.xlu0 %666
      %vm668 = vcmask 64512
      %v669 = vsel %vm668, %v658, 0
      %v671 = vsel %vm668, %v667, 0
      %673 = vmatprep.subr.mxu0 0.0
      %674 = vmatpush1.xpose.msra.mxu0 %v671
      %675 = vmatprep.subr.mxu0 0.0
      %676 = vmatpush1.xpose.msra.mxu0 0.0
      %677 = vmatprep.subr.mxu0 0.0
      %678 = vmatpush1.xpose.msra.mxu0 0.0
      %679 = vmatprep.subr.mxu0 0.0
      %680 = vmatpush1.xpose.msra.mxu0 0.0
      %681 = vmatprep.subr.mxu0 0.0
      %682 = vmatpush1.xpose.msra.mxu0 0.0
      %683 = vmatprep.subr.mxu0 0.0
      %684 = vmatpush1.xpose.msra.mxu0 0.0
      %685 = vmatprep.subr.mxu0 0.0
      %686 = vmatpush1.xpose.msra.mxu0 0.0
      %687 = vmatprep.subr.mxu0 0.0
      %688 = vmatpush1.xpose.msra.mxu0 0.0
      %689 = vmatprep.subr.mxu0 0.0
      %690 = vmatpush1.xpose.msra.mxu0 0.0
      %691 = vmatprep.subr.mxu0 0.0
      %692 = vmatpush1.xpose.msra.mxu0 0.0
      %693 = vmatprep.subr.mxu0 0.0
      %694 = vmatpush1.xpose.msra.mxu0 0.0
      %695 = vmatprep.subr.mxu0 0.0
      %696 = vmatpush1.xpose.msra.mxu0 0.0
      %697 = vmatprep.subr.mxu0 0.0
      %698 = vmatpush1.xpose.msra.mxu0 0.0
      %699 = vmatprep.subr.mxu0 0.0
      %700 = vmatpush1.xpose.msra.mxu0 0.0
      %701 = vmatprep.subr.mxu0 0.0
      %702 = vmatpush1.xpose.msra.mxu0 0.0
      %703 = vmatprep.subr.mxu0 0.0
      %704 = vmatpush1.xpose.msra.mxu0 0.0
      %705 = vmatprep.subr.mxu0 0.0
      %706 = vmatpush1.xpose.msra.mxu0 0.0
      %707 = vmatprep.subr.mxu0 0.0
      %708 = vmatpush1.xpose.msra.mxu0 0.0
      %709 = vmatprep.subr.mxu0 0.0
      %710 = vmatpush1.xpose.msra.mxu0 0.0
      %711 = vmatprep.subr.mxu0 0.0
      %712 = vmatpush1.xpose.msra.mxu0 0.0
      %713 = vmatprep.subr.mxu0 0.0
      %714 = vmatpush1.xpose.msra.mxu0 0.0
      %715 = vmatprep.subr.mxu0 0.0
      %716 = vmatpush1.xpose.msra.mxu0 0.0
      %717 = vmatprep.subr.mxu0 0.0
      %718 = vmatpush1.xpose.msra.mxu0 0.0
      %719 = vmatprep.subr.mxu0 0.0
      %720 = vmatpush1.xpose.msra.mxu0 0.0
      %721 = vmatprep.subr.mxu0 0.0
      %722 = vmatpush1.xpose.msra.mxu0 0.0
      %723 = vmatprep.subr.mxu0 0.0
      %724 = vmatpush1.xpose.msra.mxu0 0.0
      %725 = vmatprep.subr.mxu0 0.0
      %726 = vmatpush1.xpose.msra.mxu0 0.0
      %727 = vmatprep.subr.mxu0 0.0
      %728 = vmatpush1.xpose.msra.mxu0 0.0
      %729 = vmatprep.subr.mxu0 0.0
      %730 = vmatpush1.xpose.msra.mxu0 0.0
      %731 = vmatprep.subr.mxu0 0.0
      %732 = vmatpush1.xpose.msra.mxu0 0.0
      %733 = vmatprep.subr.mxu0 0.0
      %734 = vmatpush1.xpose.msra.mxu0 0.0
      %735 = vmatprep.subr.mxu0 0.0
      %736 = vmatpush1.xpose.msra.mxu0 0.0
      %737 = vmatprep.mubr.f32.mxu0 0.0
      %738 = vmatmul.mubr.f32.gmra.mrb[0].mxu0 %v669
      %v739 = vpop.f32.mrb[0].mxu0
      %v740 = vadd.f32 0.0, %v739
      %v741 = vpop.f32.mrb[0].mxu0
      %742 = vdwg.mxu0
      %v743 = vmul.f32 %v740, 0.35355338
      %vm744 = vcmask 36864
      %v745 = vsel %vm744, %v743, -inf
      %746 = vmax.xlane.f32.xlu0 %v745
      %v747 = vpop.xlane.xlu0 %746
      %v748 = vsub.f32 %v743, %v747
      %v749 = vmul.f32 %v748, 1.442695
      %v750 = vpow.pop %v749
      %v751 = vsel %vm744, %v750, 0.0
      %752 = vadd.xlane.f32.xlu0 %v751
      %v753 = vpop.xlane.xlu0 %752
      %v754 = vrcp.pop %v753
      %v755 = vmul.f32 %v750, %v754
      %756 = vrot.lane.b32.xlu0 %v658, 64
      %v757 = vpop.permute.xlu0 %756
      %vm758 = vcmask 39936
      %v760 = vsel %vm758, %v755, 0
      %vm762 = vcmask 1044480
      %v763 = vsel %vm762, %v757, 0
      %765 = vmatprep.subr.mxu0 0.0
      %766 = vmatpush1.msra.mxu0 %v763
      %767 = vmatprep.subr.mxu0 0.0
      %768 = vmatpush1.msra.mxu0 0.0
      %769 = vmatprep.subr.mxu0 0.0
      %770 = vmatpush1.msra.mxu0 0.0
      %771 = vmatprep.subr.mxu0 0.0
      %772 = vmatpush1.msra.mxu0 0.0
      %773 = vmatprep.subr.mxu0 0.0
      %774 = vmatpush1.msra.mxu0 0.0
      %775 = vmatprep.subr.mxu0 0.0
      %776 = vmatpush1.msra.mxu0 0.0
      %777 = vmatprep.subr.mxu0 0.0
      %778 = vmatpush1.msra.mxu0 0.0
      %779 = vmatprep.subr.mxu0 0.0
      %780 = vmatpush1.msra.mxu0 0.0
      %781 = vmatprep.subr.mxu0 0.0
      %782 = vmatpush1.msra.mxu0 0.0
      %783 = vmatprep.subr.mxu0 0.0
      %784 = vmatpush1.msra.mxu0 0.0
      %785 = vmatprep.subr.mxu0 0.0
      %786 = vmatpush1.msra.mxu0 0.0
      %787 = vmatprep.subr.mxu0 0.0
      %788 = vmatpush1.msra.mxu0 0.0
      %789 = vmatprep.subr.mxu0 0.0
      %790 = vmatpush1.msra.mxu0 0.0
      %791 = vmatprep.subr.mxu0 0.0
      %792 = vmatpush1.msra.mxu0 0.0
      %793 = vmatprep.subr.mxu0 0.0
      %794 = vmatpush1.msra.mxu0 0.0
      %795 = vmatprep.subr.mxu0 0.0
      %796 = vmatpush1.msra.mxu0 0.0
      %797 = vmatprep.subr.mxu0 0.0
      %798 = vmatpush1.msra.mxu0 0.0
      %799 = vmatprep.subr.mxu0 0.0
      %800 = vmatpush1.msra.mxu0 0.0
      %801 = vmatprep.subr.mxu0 0.0
      %802 = vmatpush1.msra.mxu0 0.0
      %803 = vmatprep.subr.mxu0 0.0
      %804 = vmatpush1.msra.mxu0 0.0
      %805 = vmatprep.subr.mxu0 0.0
      %806 = vmatpush1.msra.mxu0 0.0
      %807 = vmatprep.subr.mxu0 0.0
      %808 = vmatpush1.msra.mxu0 0.0
      %809 = vmatprep.subr.mxu0 0.0
      %810 = vmatpush1.msra.mxu0 0.0
      %811 = vmatprep.subr.mxu0 0.0
      %812 = vmatpush1.msra.mxu0 0.0
      %813 = vmatprep.subr.mxu0 0.0
      %814 = vmatpush1.msra.mxu0 0.0
      %815 = vmatprep.subr.mxu0 0.0
      %816 = vmatpush1.msra.mxu0 0.0
      %817 = vmatprep.subr.mxu0 0.0
      %818 = vmatpush1.msra.mxu0 0.0
      %819 = vmatprep.subr.mxu0 0.0
      %820 = vmatpush1.msra.mxu0 0.0
      %821 = vmatprep.subr.mxu0 0.0
      %822 = vmatpush1.msra.mxu0 0.0
      %823 = vmatprep.subr.mxu0 0.0
      %824 = vmatpush1.msra.mxu0 0.0
      %825 = vmatprep.subr.mxu0 0.0
      %826 = vmatpush1.msra.mxu0 0.0
      %827 = vmatprep.subr.mxu0 0.0
      %828 = vmatpush1.msra.mxu0 0.0
      %829 = vmatprep.mubr.f32.mxu0 0.0
      %830 = vmatmul.mubr.f32.gmra.mrb[0].mxu0 %v760
      %v831 = vpop.f32.mrb[0].mxu0
      %v832 = vadd.f32 0.0, %v831
      %v833 = vpop.f32.mrb[0].mxu0
      %834 = vdwg.mxu0
      %835 = vrot.lane.b32.xlu0 %v658, 120
      %v836 = vpop.permute.xlu0 %835
      %837 = vrot.lane.b32.xlu0 %v658, 88
      %v838 = vpop.permute.xlu0 %837
      %v839 = vsel %vm668, %v836, 0
      %v841 = vsel %vm668, %v838, 0
      %843 = vmatprep.subr.mxu0 0.0
      %844 = vmatpush1.xpose.msra.mxu0 %v841
      %845 = vmatprep.subr.mxu0 0.0
      %846 = vmatpush1.xpose.msra.mxu0 0.0
      %847 = vmatprep.subr.mxu0 0.0
      %848 = vmatpush1.xpose.msra.mxu0 0.0
      %849 = vmatprep.subr.mxu0 0.0
      %850 = vmatpush1.xpose.msra.mxu0 0.0
      %851 = vmatprep.subr.mxu0 0.0
      %852 = vmatpush1.xpose.msra.mxu0 0.0
      %853 = vmatprep.subr.mxu0 0.0
      %854 = vmatpush1.xpose.msra.mxu0 0.0
      %855 = vmatprep.subr.mxu0 0.0
      %856 = vmatpush1.xpose.msra.mxu0 0.0
      %857 = vmatprep.subr.mxu0 0.0
      %858 = vmatpush1.xpose.msra.mxu0 0.0
      %859 = vmatprep.subr.mxu0 0.0
      %860 = vmatpush1.xpose.msra.mxu0 0.0
      %861 = vmatprep.subr.mxu0 0.0
      %862 = vmatpush1.xpose.msra.mxu0 0.0
      %863 = vmatprep.subr.mxu0 0.0
      %864 = vmatpush1.xpose.msra.mxu0 0.0
      %865 = vmatprep.subr.mxu0 0.0
      %866 = vmatpush1.xpose.msra.mxu0 0.0
      %867 = vmatprep.subr.mxu0 0.0
      %868 = vmatpush1.xpose.msra.mxu0 0.0
      %869 = vmatprep.subr.mxu0 0.0
      %870 = vmatpush1.xpose.msra.mxu0 0.0
      %871 = vmatprep.subr.mxu0 0.0
      %872 = vmatpush1.xpose.msra.mxu0 0.0
      %873 = vmatprep.subr.mxu0 0.0
      %874 = vmatpush1.xpose.msra.mxu0 0.0
      %875 = vmatprep.subr.mxu0 0.0
      %876 = vmatpush1.xpose.msra.mxu0 0.0
      %877 = vmatprep.subr.mxu0 0.0
      %878 = vmatpush1.xpose.msra.mxu0 0.0
      %879 = vmatprep.subr.mxu0 0.0
      %880 = vmatpush1.xpose.msra.mxu0 0.0
      %881 = vmatprep.subr.mxu0 0.0
      %882 = vmatpush1.xpose.msra.mxu0 0.0
      %883 = vmatprep.subr.mxu0 0.0
      %884 = vmatpush1.xpose.msra.mxu0 0.0
      %885 = vmatprep.subr.mxu0 0.0
      %886 = vmatpush1.xpose.msra.mxu0 0.0
      %887 = vmatprep.subr.mxu0 0.0
      %888 = vmatpush1.xpose.msra.mxu0 0.0
      %889 = vmatprep.subr.mxu0 0.0
      %890 = vmatpush1.xpose.msra.mxu0 0.0
      %891 = vmatprep.subr.mxu0 0.0
      %892 = vmatpush1.xpose.msra.mxu0 0.0
      %893 = vmatprep.subr.mxu0 0.0
      %894 = vmatpush1.xpose.msra.mxu0 0.0
      %895 = vmatprep.subr.mxu0 0.0
      %896 = vmatpush1.xpose.msra.mxu0 0.0
      %897 = vmatprep.subr.mxu0 0.0
      %898 = vmatpush1.xpose.msra.mxu0 0.0
      %899 = vmatprep.subr.mxu0 0.0
      %900 = vmatpush1.xpose.msra.mxu0 0.0
      %901 = vmatprep.subr.mxu0 0.0
      %902 = vmatpush1.xpose.msra.mxu0 0.0
      %903 = vmatprep.subr.mxu0 0.0
      %904 = vmatpush1.xpose.msra.mxu0 0.0
      %905 = vmatprep.subr.mxu0 0.0
      %906 = vmatpush1.xpose.msra.mxu0 0.0
      %907 = vmatprep.mubr.f32.mxu0 0.0
      %908 = vmatmul.mubr.f32.gmra.mrb[0].mxu0 %v839
      %v909 = vpop.f32.mrb[0].mxu0
      %v910 = vadd.f32 0.0, %v909
      %v911 = vpop.f32.mrb[0].mxu0
      %912 = vdwg.mxu0
      %v913 = vmul.f32 %v910, 0.35355338
      %v914 = vsel %vm744, %v913, -inf
      %915 = vmax.xlane.f32.xlu0 %v914
      %v916 = vpop.xlane.xlu0 %915
      %v917 = vsub.f32 %v913, %v916
      %v918 = vmul.f32 %v917, 1.442695
      %v919 = vpow.pop %v918
      %v920 = vsel %vm744, %v919, 0.0
      %921 = vadd.xlane.f32.xlu0 %v920
      %v922 = vpop.xlane.xlu0 %921
      %v923 = vrcp.pop %v922
      %v924 = vmul.f32 %v919, %v923
      %925 = vrot.lane.b32.xlu0 %v658, 56
      %v926 = vpop.permute.xlu0 %925
      %v928 = vsel %vm758, %v924, 0
      %v930 = vsel %vm762, %v926, 0
      %932 = vmatprep.subr.mxu0 0.0
      %933 = vmatpush1.msra.mxu0 %v930
      %934 = vmatprep.subr.mxu0 0.0
      %935 = vmatpush1.msra.mxu0 0.0
      %936 = vmatprep.subr.mxu0 0.0
      %937 = vmatpush1.msra.mxu0 0.0
      %938 = vmatprep.subr.mxu0 0.0
      %939 = vmatpush1.msra.mxu0 0.0
      %940 = vmatprep.subr.mxu0 0.0
      %941 = vmatpush1.msra.mxu0 0.0
      %942 = vmatprep.subr.mxu0 0.0
      %943 = vmatpush1.msra.mxu0 0.0
      %944 = vmatprep.subr.mxu0 0.0
      %945 = vmatpush1.msra.mxu0 0.0
      %946 = vmatprep.subr.mxu0 0.0
      %947 = vmatpush1.msra.mxu0 0.0
      %948 = vmatprep.subr.mxu0 0.0
      %949 = vmatpush1.msra.mxu0 0.0
      %950 = vmatprep.subr.mxu0 0.0
      %951 = vmatpush1.msra.mxu0 0.0
      %952 = vmatprep.subr.mxu0 0.0
      %953 = vmatpush1.msra.mxu0 0.0
      %954 = vmatprep.subr.mxu0 0.0
      %955 = vmatpush1.msra.mxu0 0.0
      %956 = vmatprep.subr.mxu0 0.0
      %957 = vmatpush1.msra.mxu0 0.0
      %958 = vmatprep.subr.mxu0 0.0
      %959 = vmatpush1.msra.mxu0 0.0
      %960 = vmatprep.subr.mxu0 0.0
      %961 = vmatpush1.msra.mxu0 0.0
      %962 = vmatprep.subr.mxu0 0.0
      %963 = vmatpush1.msra.mxu0 0.0
      %964 = vmatprep.subr.mxu0 0.0
      %965 = vmatpush1.msra.mxu0 0.0
      %966 = vmatprep.subr.mxu0 0.0
      %967 = vmatpush1.msra.mxu0 0.0
      %968 = vmatprep.subr.mxu0 0.0
      %969 = vmatpush1.msra.mxu0 0.0
      %970 = vmatprep.subr.mxu0 0.0
      %971 = vmatpush1.msra.mxu0 0.0
      %972 = vmatprep.subr.mxu0 0.0
      %973 = vmatpush1.msra.mxu0 0.0
      %974 = vmatprep.subr.mxu0 0.0
      %975 = vmatpush1.msra.mxu0 0.0
      %976 = vmatprep.subr.mxu0 0.0
      %977 = vmatpush1.msra.mxu0 0.0
      %978 = vmatprep.subr.mxu0 0.0
      %979 = vmatpush1.msra.mxu0 0.0
      %980 = vmatprep.subr.mxu0 0.0
      %981 = vmatpush1.msra.mxu0 0.0
      %982 = vmatprep.subr.mxu0 0.0
      %983 = vmatpush1.msra.mxu0 0.0
      %984 = vmatprep.subr.mxu0 0.0
      %985 = vmatpush1.msra.mxu0 0.0
      %986 = vmatprep.subr.mxu0 0.0
      %987 = vmatpush1.msra.mxu0 0.0
      %988 = vmatprep.subr.mxu0 0.0
      %989 = vmatpush1.msra.mxu0 0.0
      %990 = vmatprep.subr.mxu0 0.0
      %991 = vmatpush1.msra.mxu0 0.0
      %992 = vmatprep.subr.mxu0 0.0
      %993 = vmatpush1.msra.mxu0 0.0
      %994 = vmatprep.subr.mxu0 0.0
      %995 = vmatpush1.msra.mxu0 0.0
      %996 = vmatprep.mubr.f32.mxu0 0.0
      %997 = vmatmul.mubr.f32.gmra.mrb[0].mxu0 %v928
      %v998 = vpop.f32.mrb[0].mxu0
      %v999 = vadd.f32 0.0, %v998
      %v1000 = vpop.f32.mrb[0].mxu0
      %1001 = vdwg.mxu0
      %v1003 = vsel %vm668, %v999, 0
      %1005 = vmatprep.subr.mxu0 0.0
      %1006 = vmatpush1.msra.mxu0 %v662
      %1007 = vmatprep.subr.mxu0 0.0
      %1008 = vmatpush1.msra.mxu0 0.0
      %1009 = vmatprep.subr.mxu0 0.0
      %1010 = vmatpush1.msra.mxu0 0.0
      %1011 = vmatprep.subr.mxu0 0.0
      %1012 = vmatpush1.msra.mxu0 0.0
      %1013 = vmatprep.subr.mxu0 0.0
      %1014 = vmatpush1.msra.mxu0 0.0
      %1015 = vmatprep.subr.mxu0 0.0
      %1016 = vmatpush1.msra.mxu0 0.0
      %1017 = vmatprep.subr.mxu0 0.0
      %1018 = vmatpush1.msra.mxu0 0.0
      %1019 = vmatprep.subr.mxu0 0.0
      %1020 = vmatpush1.msra.mxu0 0.0
      %1021 = vmatprep.subr.mxu0 0.0
      %1022 = vmatpush1.msra.mxu0 0.0
      %1023 = vmatprep.subr.mxu0 0.0
      %1024 = vmatpush1.msra.mxu0 0.0
      %1025 = vmatprep.subr.mxu0 0.0
      %1026 = vmatpush1.msra.mxu0 0.0
      %1027 = vmatprep.subr.mxu0 0.0
      %1028 = vmatpush1.msra.mxu0 0.0
      %1029 = vmatprep.subr.mxu0 0.0
      %1030 = vmatpush1.msra.mxu0 0.0
      %1031 = vmatprep.subr.mxu0 0.0
      %1032 = vmatpush1.msra.mxu0 0.0
      %1033 = vmatprep.subr.mxu0 0.0
      %1034 = vmatpush1.msra.mxu0 0.0
      %1035 = vmatprep.subr.mxu0 0.0
      %1036 = vmatpush1.msra.mxu0 0.0
      %1037 = vmatprep.subr.mxu0 0.0
      %1038 = vmatpush1.msra.mxu0 0.0
      %1039 = vmatprep.subr.mxu0 0.0
      %1040 = vmatpush1.msra.mxu0 0.0
      %1041 = vmatprep.subr.mxu0 0.0
      %1042 = vmatpush1.msra.mxu0 0.0
      %1043 = vmatprep.subr.mxu0 0.0
      %1044 = vmatpush1.msra.mxu0 0.0
      %1045 = vmatprep.subr.mxu0 0.0
      %1046 = vmatpush1.msra.mxu0 0.0
      %1047 = vmatprep.subr.mxu0 0.0
      %1048 = vmatpush1.msra.mxu0 0.0
      %1049 = vmatprep.subr.mxu0 0.0
      %1050 = vmatpush1.msra.mxu0 0.0
      %1051 = vmatprep.subr.mxu0 0.0
      %1052 = vmatpush1.msra.mxu0 0.0
      %1053 = vmatprep.subr.mxu0 0.0
      %1054 = vmatpush1.msra.mxu0 0.0
      %1055 = vmatprep.subr.mxu0 0.0
      %1056 = vmatpush1.msra.mxu0 0.0
      %1057 = vmatprep.subr.mxu0 0.0
      %1058 = vmatpush1.msra.mxu0 0.0
      %1059 = vmatprep.subr.mxu0 0.0
      %1060 = vmatpush1.msra.mxu0 0.0
      %1061 = vmatprep.subr.mxu0 0.0
      %1062 = vmatpush1.msra.mxu0 0.0
      %1063 = vmatprep.subr.mxu0 0.0
      %1064 = vmatpush1.msra.mxu0 0.0
      %1065 = vmatprep.subr.mxu0 0.0
      %1066 = vmatpush1.msra.mxu0 0.0
      %1067 = vmatprep.subr.mxu0 0.0
      %1068 = vmatpush1.msra.mxu0 0.0
      %1069 = vmatprep.mubr.f32.mxu0 0.0
      %1070 = vmatmul.mubr.f32.gmra.mrb[0].mxu0 %v1003
      %v1071 = vpop.f32.mrb[0].mxu0
      %v1072 = vadd.f32 0.0, %v1071
      %v1073 = vpop.f32.mrb[0].mxu0
      %1074 = vdwg.mxu0
      %v1076 = vsel %vm668, %v832, 0
      %1078 = vmatprep.subr.mxu0 0.0
      %1079 = vmatpush1.msra.mxu0 %v661
      %1080 = vmatprep.subr.mxu0 0.0
      %1081 = vmatpush1.msra.mxu0 0.0
      %1082 = vmatprep.subr.mxu0 0.0
      %1083 = vmatpush1.msra.mxu0 0.0
      %1084 = vmatprep.subr.mxu0 0.0
      %1085 = vmatpush1.msra.mxu0 0.0
      %1086 = vmatprep.subr.mxu0 0.0
      %1087 = vmatpush1.msra.mxu0 0.0
      %1088 = vmatprep.subr.mxu0 0.0
      %1089 = vmatpush1.msra.mxu0 0.0
      %1090 = vmatprep.subr.mxu0 0.0
      %1091 = vmatpush1.msra.mxu0 0.0
      %1092 = vmatprep.subr.mxu0 0.0
      %1093 = vmatpush1.msra.mxu0 0.0
      %1094 = vmatprep.subr.mxu0 0.0
      %1095 = vmatpush1.msra.mxu0 0.0
      %1096 = vmatprep.subr.mxu0 0.0
      %1097 = vmatpush1.msra.mxu0 0.0
      %1098 = vmatprep.subr.mxu0 0.0
      %1099 = vmatpush1.msra.mxu0 0.0
      %1100 = vmatprep.subr.mxu0 0.0
      %1101 = vmatpush1.msra.mxu0 0.0
      %1102 = vmatprep.subr.mxu0 0.0
      %1103 = vmatpush1.msra.mxu0 0.0
      %1104 = vmatprep.subr.mxu0 0.0
      %1105 = vmatpush1.msra.mxu0 0.0
      %1106 = vmatprep.subr.mxu0 0.0
      %1107 = vmatpush1.msra.mxu0 0.0
      %1108 = vmatprep.subr.mxu0 0.0
      %1109 = vmatpush1.msra.mxu0 0.0
      %1110 = vmatprep.subr.mxu0 0.0
      %1111 = vmatpush1.msra.mxu0 0.0
      %1112 = vmatprep.subr.mxu0 0.0
      %1113 = vmatpush1.msra.mxu0 0.0
      %1114 = vmatprep.subr.mxu0 0.0
      %1115 = vmatpush1.msra.mxu0 0.0
      %1116 = vmatprep.subr.mxu0 0.0
      %1117 = vmatpush1.msra.mxu0 0.0
      %1118 = vmatprep.subr.mxu0 0.0
      %1119 = vmatpush1.msra.mxu0 0.0
      %1120 = vmatprep.subr.mxu0 0.0
      %1121 = vmatpush1.msra.mxu0 0.0
      %1122 = vmatprep.subr.mxu0 0.0
      %1123 = vmatpush1.msra.mxu0 0.0
      %1124 = vmatprep.subr.mxu0 0.0
      %1125 = vmatpush1.msra.mxu0 0.0
      %1126 = vmatprep.subr.mxu0 0.0
      %1127 = vmatpush1.msra.mxu0 0.0
      %1128 = vmatprep.subr.mxu0 0.0
      %1129 = vmatpush1.msra.mxu0 0.0
      %1130 = vmatprep.subr.mxu0 0.0
      %1131 = vmatpush1.msra.mxu0 0.0
      %1132 = vmatprep.subr.mxu0 0.0
      %1133 = vmatpush1.msra.mxu0 0.0
      %1134 = vmatprep.subr.mxu0 0.0
      %1135 = vmatpush1.msra.mxu0 0.0
      %1136 = vmatprep.subr.mxu0 0.0
      %1137 = vmatpush1.msra.mxu0 0.0
      %1138 = vmatprep.subr.mxu0 0.0
      %1139 = vmatpush1.msra.mxu0 0.0
      %1140 = vmatprep.subr.mxu0 0.0
      %1141 = vmatpush1.msra.mxu0 0.0
      %1142 = vmatprep.mubr.f32.mxu0 0.0
      %1143 = vmatmul.mubr.f32.gmra.mrb[0].mxu0 %v1076
      %v1144 = vpop.f32.mrb[0].mxu0
      %v1145 = vadd.f32 %v1072, %v1144
      %v1146 = vpop.f32.mrb[0].mxu0
      %1147 = vdwg.mxu0
      %1148 = vrot.lane.b32.xlu0 %v658, 112
      %v1149 = vpop.permute.xlu0 %1148
      %1150 = vrot.lane.b32.xlu0 %v658, 80
      %v1151 = vpop.permute.xlu0 %1150
      %v1152 = vsel %vm668, %v1149, 0
      %v1154 = vsel %vm668, %v1151, 0
      %1156 = vmatprep.subr.mxu0 0.0
      %1157 = vmatpush1.xpose.msra.mxu0 %v1154
      %1158 = vmatprep.subr.mxu0 0.0
      %1159 = vmatpush1.xpose.msra.mxu0 0.0
      %1160 = vmatprep.subr.mxu0 0.0
      %1161 = vmatpush1.xpose.msra.mxu0 0.0
      %1162 = vmatprep.subr.mxu0 0.0
      %1163 = vmatpush1.xpose.msra.mxu0 0.0
      %1164 = vmatprep.subr.mxu0 0.0
      %1165 = vmatpush1.xpose.msra.mxu0 0.0
      %1166 = vmatprep.subr.mxu0 0.0
      %1167 = vmatpush1.xpose.msra.mxu0 0.0
      %1168 = vmatprep.subr.mxu0 0.0
      %1169 = vmatpush1.xpose.msra.mxu0 0.0
      %1170 = vmatprep.subr.mxu0 0.0
      %1171 = vmatpush1.xpose.msra.mxu0 0.0
      %1172 = vmatprep.subr.mxu0 0.0
      %1173 = vmatpush1.xpose.msra.mxu0 0.0
      %1174 = vmatprep.subr.mxu0 0.0
      %1175 = vmatpush1.xpose.msra.mxu0 0.0
      %1176 = vmatprep.subr.mxu0 0.0
      %1177 = vmatpush1.xpose.msra.mxu0 0.0
      %1178 = vmatprep.subr.mxu0 0.0
      %1179 = vmatpush1.xpose.msra.mxu0 0.0
      %1180 = vmatprep.subr.mxu0 0.0
      %1181 = vmatpush1.xpose.msra.mxu0 0.0
      %1182 = vmatprep.subr.mxu0 0.0
      %1183 = vmatpush1.xpose.msra.mxu0 0.0
      %1184 = vmatprep.subr.mxu0 0.0
      %1185 = vmatpush1.xpose.msra.mxu0 0.0
      %1186 = vmatprep.subr.mxu0 0.0
      %1187 = vmatpush1.xpose.msra.mxu0 0.0
      %1188 = vmatprep.subr.mxu0 0.0
      %1189 = vmatpush1.xpose.msra.mxu0 0.0
      %1190 = vmatprep.subr.mxu0 0.0
      %1191 = vmatpush1.xpose.msra.mxu0 0.0
      %1192 = vmatprep.subr.mxu0 0.0
      %1193 = vmatpush1.xpose.msra.mxu0 0.0
      %1194 = vmatprep.subr.mxu0 0.0
      %1195 = vmatpush1.xpose.msra.mxu0 0.0
      %1196 = vmatprep.subr.mxu0 0.0
      %1197 = vmatpush1.xpose.msra.mxu0 0.0
      %1198 = vmatprep.subr.mxu0 0.0
      %1199 = vmatpush1.xpose.msra.mxu0 0.0
      %1200 = vmatprep.subr.mxu0 0.0
      %1201 = vmatpush1.xpose.msra.mxu0 0.0
      %1202 = vmatprep.subr.mxu0 0.0
      %1203 = vmatpush1.xpose.msra.mxu0 0.0
      %1204 = vmatprep.subr.mxu0 0.0
      %1205 = vmatpush1.xpose.msra.mxu0 0.0
      %1206 = vmatprep.subr.mxu0 0.0
      %1207 = vmatpush1.xpose.msra.mxu0 0.0
      %1208 = vmatprep.subr.mxu0 0.0
      %1209 = vmatpush1.xpose.msra.mxu0 0.0
      %1210 = vmatprep.subr.mxu0 0.0
      %1211 = vmatpush1.xpose.msra.mxu0 0.0
      %1212 = vmatprep.subr.mxu0 0.0
      %1213 = vmatpush1.xpose.msra.mxu0 0.0
      %1214 = vmatprep.subr.mxu0 0.0
      %1215 = vmatpush1.xpose.msra.mxu0 0.0
      %1216 = vmatprep.subr.mxu0 0.0
      %1217 = vmatpush1.xpose.msra.mxu0 0.0
      %1218 = vmatprep.subr.mxu0 0.0
      %1219 = vmatpush1.xpose.msra.mxu0 0.0
      %1220 = vmatprep.mubr.f32.mxu0 0.0
      %1221 = vmatmul.mubr.f32.gmra.mrb[0].mxu0 %v1152
      %v1222 = vpop.f32.mrb[0].mxu0
      %v1223 = vadd.f32 0.0, %v1222
      %v1224 = vpop.f32.mrb[0].mxu0
      %1225 = vdwg.mxu0
      %v1226 = vmul.f32 %v1223, 0.35355338
      %v1227 = vsel %vm744, %v1226, -inf
      %1228 = vmax.xlane.f32.xlu0 %v1227
      %v1229 = vpop.xlane.xlu0 %1228
      %v1230 = vsub.f32 %v1226, %v1229
      %v1231 = vmul.f32 %v1230, 1.442695
      %v1232 = vpow.pop %v1231
      %v1233 = vsel %vm744, %v1232, 0.0
      %1234 = vadd.xlane.f32.xlu0 %v1233
      %v1235 = vpop.xlane.xlu0 %1234
      %v1236 = vrcp.pop %v1235
      %v1237 = vmul.f32 %v1232, %v1236
      %1238 = vrot.lane.b32.xlu0 %v658, 48
      %v1239 = vpop.permute.xlu0 %1238
      %v1241 = vsel %vm758, %v1237, 0
      %v1243 = vsel %vm762, %v1239, 0
      %1245 = vmatprep.subr.mxu0 0.0
      %1246 = vmatpush1.msra.mxu0 %v1243
      %1247 = vmatprep.subr.mxu0 0.0
      %1248 = vmatpush1.msra.mxu0 0.0
      %1249 = vmatprep.subr.mxu0 0.0
      %1250 = vmatpush1.msra.mxu0 0.0
      %1251 = vmatprep.subr.mxu0 0.0
      %1252 = vmatpush1.msra.mxu0 0.0
      %1253 = vmatprep.subr.mxu0 0.0
      %1254 = vmatpush1.msra.mxu0 0.0
      %1255 = vmatprep.subr.mxu0 0.0
      %1256 = vmatpush1.msra.mxu0 0.0
      %1257 = vmatprep.subr.mxu0 0.0
      %1258 = vmatpush1.msra.mxu0 0.0
      %1259 = vmatprep.subr.mxu0 0.0
      %1260 = vmatpush1.msra.mxu0 0.0
      %1261 = vmatprep.subr.mxu0 0.0
      %1262 = vmatpush1.msra.mxu0 0.0
      %1263 = vmatprep.subr.mxu0 0.0
      %1264 = vmatpush1.msra.mxu0 0.0
      %1265 = vmatprep.subr.mxu0 0.0
      %1266 = vmatpush1.msra.mxu0 0.0
      %1267 = vmatprep.subr.mxu0 0.0
      %1268 = vmatpush1.msra.mxu0 0.0
      %1269 = vmatprep.subr.mxu0 0.0
      %1270 = vmatpush1.msra.mxu0 0.0
      %1271 = vmatprep.subr.mxu0 0.0
      %1272 = vmatpush1.msra.mxu0 0.0
      %1273 = vmatprep.subr.mxu0 0.0
      %1274 = vmatpush1.msra.mxu0 0.0
      %1275 = vmatprep.subr.mxu0 0.0
      %1276 = vmatpush1.msra.mxu0 0.0
      %1277 = vmatprep.subr.mxu0 0.0
      %1278 = vmatpush1.msra.mxu0 0.0
      %1279 = vmatprep.subr.mxu0 0.0
      %1280 = vmatpush1.msra.mxu0 0.0
      %1281 = vmatprep.subr.mxu0 0.0
      %1282 = vmatpush1.msra.mxu0 0.0
      %1283 = vmatprep.subr.mxu0 0.0
      %1284 = vmatpush1.msra.mxu0 0.0
      %1285 = vmatprep.subr.mxu0 0.0
      %1286 = vmatpush1.msra.mxu0 0.0
      %1287 = vmatprep.subr.mxu0 0.0
      %1288 = vmatpush1.msra.mxu0 0.0
      %1289 = vmatprep.subr.mxu0 0.0
      %1290 = vmatpush1.msra.mxu0 0.0
      %1291 = vmatprep.subr.mxu0 0.0
      %1292 = vmatpush1.msra.mxu0 0.0
      %1293 = vmatprep.subr.mxu0 0.0
      %1294 = vmatpush1.msra.mxu0 0.0
      %1295 = vmatprep.subr.mxu0 0.0
      %1296 = vmatpush1.msra.mxu0 0.0
      %1297 = vmatprep.subr.mxu0 0.0
      %1298 = vmatpush1.msra.mxu0 0.0
      %1299 = vmatprep.subr.mxu0 0.0
      %1300 = vmatpush1.msra.mxu0 0.0
      %1301 = vmatprep.subr.mxu0 0.0
      %1302 = vmatpush1.msra.mxu0 0.0
      %1303 = vmatprep.subr.mxu0 0.0
      %1304 = vmatpush1.msra.mxu0 0.0
      %1305 = vmatprep.subr.mxu0 0.0
      %1306 = vmatpush1.msra.mxu0 0.0
      %1307 = vmatprep.subr.mxu0 0.0
      %1308 = vmatpush1.msra.mxu0 0.0
      %1309 = vmatprep.mubr.f32.mxu0 0.0
      %1310 = vmatmul.mubr.f32.gmra.mrb[0].mxu0 %v1241
      %v1311 = vpop.f32.mrb[0].mxu0
      %v1312 = vadd.f32 0.0, %v1311
      %v1313 = vpop.f32.mrb[0].mxu0
      %1314 = vdwg.mxu0
      %v1316 = vsel %vm668, %v1312, 0
      %1318 = vmatprep.subr.mxu0 0.0
      %1319 = vmatpush1.msra.mxu0 %v663
      %1320 = vmatprep.subr.mxu0 0.0
      %1321 = vmatpush1.msra.mxu0 0.0
      %1322 = vmatprep.subr.mxu0 0.0
      %1323 = vmatpush1.msra.mxu0 0.0
      %1324 = vmatprep.subr.mxu0 0.0
      %1325 = vmatpush1.msra.mxu0 0.0
      %1326 = vmatprep.subr.mxu0 0.0
      %1327 = vmatpush1.msra.mxu0 0.0
      %1328 = vmatprep.subr.mxu0 0.0
      %1329 = vmatpush1.msra.mxu0 0.0
      %1330 = vmatprep.subr.mxu0 0.0
      %1331 = vmatpush1.msra.mxu0 0.0
      %1332 = vmatprep.subr.mxu0 0.0
      %1333 = vmatpush1.msra.mxu0 0.0
      %1334 = vmatprep.subr.mxu0 0.0
      %1335 = vmatpush1.msra.mxu0 0.0
      %1336 = vmatprep.subr.mxu0 0.0
      %1337 = vmatpush1.msra.mxu0 0.0
      %1338 = vmatprep.subr.mxu0 0.0
      %1339 = vmatpush1.msra.mxu0 0.0
      %1340 = vmatprep.subr.mxu0 0.0
      %1341 = vmatpush1.msra.mxu0 0.0
      %1342 = vmatprep.subr.mxu0 0.0
      %1343 = vmatpush1.msra.mxu0 0.0
      %1344 = vmatprep.subr.mxu0 0.0
      %1345 = vmatpush1.msra.mxu0 0.0
      %1346 = vmatprep.subr.mxu0 0.0
      %1347 = vmatpush1.msra.mxu0 0.0
      %1348 = vmatprep.subr.mxu0 0.0
      %1349 = vmatpush1.msra.mxu0 0.0
      %1350 = vmatprep.subr.mxu0 0.0
      %1351 = vmatpush1.msra.mxu0 0.0
      %1352 = vmatprep.subr.mxu0 0.0
      %1353 = vmatpush1.msra.mxu0 0.0
      %1354 = vmatprep.subr.mxu0 0.0
      %1355 = vmatpush1.msra.mxu0 0.0
      %1356 = vmatprep.subr.mxu0 0.0
      %1357 = vmatpush1.msra.mxu0 0.0
      %1358 = vmatprep.subr.mxu0 0.0
      %1359 = vmatpush1.msra.mxu0 0.0
      %1360 = vmatprep.subr.mxu0 0.0
      %1361 = vmatpush1.msra.mxu0 0.0
      %1362 = vmatprep.subr.mxu0 0.0
      %1363 = vmatpush1.msra.mxu0 0.0
      %1364 = vmatprep.subr.mxu0 0.0
      %1365 = vmatpush1.msra.mxu0 0.0
      %1366 = vmatprep.subr.mxu0 0.0
      %1367 = vmatpush1.msra.mxu0 0.0
      %1368 = vmatprep.subr.mxu0 0.0
      %1369 = vmatpush1.msra.mxu0 0.0
      %1370 = vmatprep.subr.mxu0 0.0
      %1371 = vmatpush1.msra.mxu0 0.0
      %1372 = vmatprep.subr.mxu0 0.0
      %1373 = vmatpush1.msra.mxu0 0.0
      %1374 = vmatprep.subr.mxu0 0.0
      %1375 = vmatpush1.msra.mxu0 0.0
      %1376 = vmatprep.subr.mxu0 0.0
      %1377 = vmatpush1.msra.mxu0 0.0
      %1378 = vmatprep.subr.mxu0 0.0
      %1379 = vmatpush1.msra.mxu0 0.0
      %1380 = vmatprep.subr.mxu0 0.0
      %1381 = vmatpush1.msra.mxu0 0.0
      %1382 = vmatprep.mubr.f32.mxu0 0.0
      %1383 = vmatmul.mubr.f32.gmra.mrb[0].mxu0 %v1316
      %v1384 = vpop.f32.mrb[0].mxu0
      %v1385 = vadd.f32 0.0, %v1384
      %v1386 = vpop.f32.mrb[0].mxu0
      %1387 = vdwg.mxu0
      %v1388 = vadd.f32 %v1145, %v1385
      %1389 = vrot.lane.b32.xlu0 %v658, 104
      %v1390 = vpop.permute.xlu0 %1389
      %1391 = vrot.lane.b32.xlu0 %v658, 72
      %v1392 = vpop.permute.xlu0 %1391
      %v1393 = vsel %vm668, %v1390, 0
      %v1395 = vsel %vm668, %v1392, 0
      %1397 = vmatprep.subr.mxu0 0.0
      %1398 = vmatpush1.xpose.msra.mxu0 %v1395
      %1399 = vmatprep.subr.mxu0 0.0
      %1400 = vmatpush1.xpose.msra.mxu0 0.0
      %1401 = vmatprep.subr.mxu0 0.0
      %1402 = vmatpush1.xpose.msra.mxu0 0.0
      %1403 = vmatprep.subr.mxu0 0.0
      %1404 = vmatpush1.xpose.msra.mxu0 0.0
      %1405 = vmatprep.subr.mxu0 0.0
      %1406 = vmatpush1.xpose.msra.mxu0 0.0
      %1407 = vmatprep.subr.mxu0 0.0
      %1408 = vmatpush1.xpose.msra.mxu0 0.0
      %1409 = vmatprep.subr.mxu0 0.0
      %1410 = vmatpush1.xpose.msra.mxu0 0.0
      %1411 = vmatprep.subr.mxu0 0.0
      %1412 = vmatpush1.xpose.msra.mxu0 0.0
      %1413 = vmatprep.subr.mxu0 0.0
      %1414 = vmatpush1.xpose.msra.mxu0 0.0
      %1415 = vmatprep.subr.mxu0 0.0
      %1416 = vmatpush1.xpose.msra.mxu0 0.0
      %1417 = vmatprep.subr.mxu0 0.0
      %1418 = vmatpush1.xpose.msra.mxu0 0.0
      %1419 = vmatprep.subr.mxu0 0.0
      %1420 = vmatpush1.xpose.msra.mxu0 0.0
      %1421 = vmatprep.subr.mxu0 0.0
      %1422 = vmatpush1.xpose.msra.mxu0 0.0
      %1423 = vmatprep.subr.mxu0 0.0
      %1424 = vmatpush1.xpose.msra.mxu0 0.0
      %1425 = vmatprep.subr.mxu0 0.0
      %1426 = vmatpush1.xpose.msra.mxu0 0.0
      %1427 = vmatprep.subr.mxu0 0.0
      %1428 = vmatpush1.xpose.msra.mxu0 0.0
      %1429 = vmatprep.subr.mxu0 0.0
      %1430 = vmatpush1.xpose.msra.mxu0 0.0
      %1431 = vmatprep.subr.mxu0 0.0
      %1432 = vmatpush1.xpose.msra.mxu0 0.0
      %1433 = vmatprep.subr.mxu0 0.0
      %1434 = vmatpush1.xpose.msra.mxu0 0.0
      %1435 = vmatprep.subr.mxu0 0.0
      %1436 = vmatpush1.xpose.msra.mxu0 0.0
      %1437 = vmatprep.subr.mxu0 0.0
      %1438 = vmatpush1.xpose.msra.mxu0 0.0
      %1439 = vmatprep.subr.mxu0 0.0
      %1440 = vmatpush1.xpose.msra.mxu0 0.0
      %1441 = vmatprep.subr.mxu0 0.0
      %1442 = vmatpush1.xpose.msra.mxu0 0.0
      %1443 = vmatprep.subr.mxu0 0.0
      %1444 = vmatpush1.xpose.msra.mxu0 0.0
      %1445 = vmatprep.subr.mxu0 0.0
      %1446 = vmatpush1.xpose.msra.mxu0 0.0
      %1447 = vmatprep.subr.mxu0 0.0
      %1448 = vmatpush1.xpose.msra.mxu0 0.0
      %1449 = vmatprep.subr.mxu0 0.0
      %1450 = vmatpush1.xpose.msra.mxu0 0.0
      %1451 = vmatprep.subr.mxu0 0.0
      %1452 = vmatpush1.xpose.msra.mxu0 0.0
      %1453 = vmatprep.subr.mxu0 0.0
      %1454 = vmatpush1.xpose.msra.mxu0 0.0
      %1455 = vmatprep.subr.mxu0 0.0
      %1456 = vmatpush1.xpose.msra.mxu0 0.0
      %1457 = vmatprep.subr.mxu0 0.0
      %1458 = vmatpush1.xpose.msra.mxu0 0.0
      %1459 = vmatprep.subr.mxu0 0.0
      %1460 = vmatpush1.xpose.msra.mxu0 0.0
      %1461 = vmatprep.mubr.f32.mxu0 0.0
      %1462 = vmatmul.mubr.f32.gmra.mrb[0].mxu0 %v1393
      %v1463 = vpop.f32.mrb[0].mxu0
      %v1464 = vadd.f32 0.0, %v1463
      %v1465 = vpop.f32.mrb[0].mxu0
      %1466 = vdwg.mxu0
      %v1467 = vmul.f32 %v1464, 0.35355338
      %v1468 = vsel %vm744, %v1467, -inf
      %1469 = vmax.xlane.f32.xlu0 %v1468
      %v1470 = vpop.xlane.xlu0 %1469
      %v1471 = vsub.f32 %v1467, %v1470
      %v1472 = vmul.f32 %v1471, 1.442695
      %v1473 = vpow.pop %v1472
      %v1474 = vsel %vm744, %v1473, 0.0
      %1475 = vadd.xlane.f32.xlu0 %v1474
      %v1476 = vpop.xlane.xlu0 %1475
      %v1477 = vrcp.pop %v1476
      %v1478 = vmul.f32 %v1473, %v1477
      %1479 = vrot.lane.b32.xlu0 %v658, 40
      %v1480 = vpop.permute.xlu0 %1479
      %v1482 = vsel %vm758, %v1478, 0
      %v1484 = vsel %vm762, %v1480, 0
      %1486 = vmatprep.subr.mxu0 0.0
      %1487 = vmatpush1.msra.mxu0 %v1484
      %1488 = vmatprep.subr.mxu0 0.0
      %1489 = vmatpush1.msra.mxu0 0.0
      %1490 = vmatprep.subr.mxu0 0.0
      %1491 = vmatpush1.msra.mxu0 0.0
      %1492 = vmatprep.subr.mxu0 0.0
      %1493 = vmatpush1.msra.mxu0 0.0
      %1494 = vmatprep.subr.mxu0 0.0
      %1495 = vmatpush1.msra.mxu0 0.0
      %1496 = vmatprep.subr.mxu0 0.0
      %1497 = vmatpush1.msra.mxu0 0.0
      %1498 = vmatprep.subr.mxu0 0.0
      %1499 = vmatpush1.msra.mxu0 0.0
      %1500 = vmatprep.subr.mxu0 0.0
      %1501 = vmatpush1.msra.mxu0 0.0
      %1502 = vmatprep.subr.mxu0 0.0
      %1503 = vmatpush1.msra.mxu0 0.0
      %1504 = vmatprep.subr.mxu0 0.0
      %1505 = vmatpush1.msra.mxu0 0.0
      %1506 = vmatprep.subr.mxu0 0.0
      %1507 = vmatpush1.msra.mxu0 0.0
      %1508 = vmatprep.subr.mxu0 0.0
      %1509 = vmatpush1.msra.mxu0 0.0
      %1510 = vmatprep.subr.mxu0 0.0
      %1511 = vmatpush1.msra.mxu0 0.0
      %1512 = vmatprep.subr.mxu0 0.0
      %1513 = vmatpush1.msra.mxu0 0.0
      %1514 = vmatprep.subr.mxu0 0.0
      %1515 = vmatpush1.msra.mxu0 0.0
      %1516 = vmatprep.subr.mxu0 0.0
      %1517 = vmatpush1.msra.mxu0 0.0
      %1518 = vmatprep.subr.mxu0 0.0
      %1519 = vmatpush1.msra.mxu0 0.0
      %1520 = vmatprep.subr.mxu0 0.0
      %1521 = vmatpush1.msra.mxu0 0.0
      %1522 = vmatprep.subr.mxu0 0.0
      %1523 = vmatpush1.msra.mxu0 0.0
      %1524 = vmatprep.subr.mxu0 0.0
      %1525 = vmatpush1.msra.mxu0 0.0
      %1526 = vmatprep.subr.mxu0 0.0
      %1527 = vmatpush1.msra.mxu0 0.0
      %1528 = vmatprep.subr.mxu0 0.0
      %1529 = vmatpush1.msra.mxu0 0.0
      %1530 = vmatprep.subr.mxu0 0.0
      %1531 = vmatpush1.msra.mxu0 0.0
      %1532 = vmatprep.subr.mxu0 0.0
      %1533 = vmatpush1.msra.mxu0 0.0
      %1534 = vmatprep.subr.mxu0 0.0
      %1535 = vmatpush1.msra.mxu0 0.0
      %1536 = vmatprep.subr.mxu0 0.0
      %1537 = vmatpush1.msra.mxu0 0.0
      %1538 = vmatprep.subr.mxu0 0.0
      %1539 = vmatpush1.msra.mxu0 0.0
      %1540 = vmatprep.subr.mxu0 0.0
      %1541 = vmatpush1.msra.mxu0 0.0
      %1542 = vmatprep.subr.mxu0 0.0
      %1543 = vmatpush1.msra.mxu0 0.0
      %1544 = vmatprep.subr.mxu0 0.0
      %1545 = vmatpush1.msra.mxu0 0.0
      %1546 = vmatprep.subr.mxu0 0.0
      %1547 = vmatpush1.msra.mxu0 0.0
      %1548 = vmatprep.subr.mxu0 0.0
      %1549 = vmatpush1.msra.mxu0 0.0
      %1550 = vmatprep.mubr.f32.mxu0 0.0
      %1551 = vmatmul.mubr.f32.gmra.mrb[0].mxu0 %v1482
      %v1552 = vpop.f32.mrb[0].mxu0
      %v1553 = vadd.f32 0.0, %v1552
      %v1554 = vpop.f32.mrb[0].mxu0
      %1555 = vdwg.mxu0
      %v1557 = vsel %vm668, %v1553, 0
      %1559 = vmatprep.subr.mxu0 0.0
      %1560 = vmatpush1.msra.mxu0 %v664
      %1561 = vmatprep.subr.mxu0 0.0
      %1562 = vmatpush1.msra.mxu0 0.0
      %1563 = vmatprep.subr.mxu0 0.0
      %1564 = vmatpush1.msra.mxu0 0.0
      %1565 = vmatprep.subr.mxu0 0.0
      %1566 = vmatpush1.msra.mxu0 0.0
      %1567 = vmatprep.subr.mxu0 0.0
      %1568 = vmatpush1.msra.mxu0 0.0
      %1569 = vmatprep.subr.mxu0 0.0
      %1570 = vmatpush1.msra.mxu0 0.0
      %1571 = vmatprep.subr.mxu0 0.0
      %1572 = vmatpush1.msra.mxu0 0.0
      %1573 = vmatprep.subr.mxu0 0.0
      %1574 = vmatpush1.msra.mxu0 0.0
      %1575 = vmatprep.subr.mxu0 0.0
      %1576 = vmatpush1.msra.mxu0 0.0
      %1577 = vmatprep.subr.mxu0 0.0
      %1578 = vmatpush1.msra.mxu0 0.0
      %1579 = vmatprep.subr.mxu0 0.0
      %1580 = vmatpush1.msra.mxu0 0.0
      %1581 = vmatprep.subr.mxu0 0.0
      %1582 = vmatpush1.msra.mxu0 0.0
      %1583 = vmatprep.subr.mxu0 0.0
      %1584 = vmatpush1.msra.mxu0 0.0
      %1585 = vmatprep.subr.mxu0 0.0
      %1586 = vmatpush1.msra.mxu0 0.0
      %1587 = vmatprep.subr.mxu0 0.0
      %1588 = vmatpush1.msra.mxu0 0.0
      %1589 = vmatprep.subr.mxu0 0.0
      %1590 = vmatpush1.msra.mxu0 0.0
      %1591 = vmatprep.subr.mxu0 0.0
      %1592 = vmatpush1.msra.mxu0 0.0
      %1593 = vmatprep.subr.mxu0 0.0
      %1594 = vmatpush1.msra.mxu0 0.0
      %1595 = vmatprep.subr.mxu0 0.0
      %1596 = vmatpush1.msra.mxu0 0.0
      %1597 = vmatprep.subr.mxu0 0.0
      %1598 = vmatpush1.msra.mxu0 0.0
      %1599 = vmatprep.subr.mxu0 0.0
      %1600 = vmatpush1.msra.mxu0 0.0
      %1601 = vmatprep.subr.mxu0 0.0
      %1602 = vmatpush1.msra.mxu0 0.0
      %1603 = vmatprep.subr.mxu0 0.0
      %1604 = vmatpush1.msra.mxu0 0.0
      %1605 = vmatprep.subr.mxu0 0.0
      %1606 = vmatpush1.msra.mxu0 0.0
      %1607 = vmatprep.subr.mxu0 0.0
      %1608 = vmatpush1.msra.mxu0 0.0
      %1609 = vmatprep.subr.mxu0 0.0
      %1610 = vmatpush1.msra.mxu0 0.0
      %1611 = vmatprep.subr.mxu0 0.0
      %1612 = vmatpush1.msra.mxu0 0.0
      %1613 = vmatprep.subr.mxu0 0.0
      %1614 = vmatpush1.msra.mxu0 0.0
      %1615 = vmatprep.subr.mxu0 0.0
      %1616 = vmatpush1.msra.mxu0 0.0
      %1617 = vmatprep.subr.mxu0 0.0
      %1618 = vmatpush1.msra.mxu0 0.0
      %1619 = vmatprep.subr.mxu0 0.0
      %1620 = vmatpush1.msra.mxu0 0.0
      %1621 = vmatprep.subr.mxu0 0.0
      %1622 = vmatpush1.msra.mxu0 0.0
      %1623 = vmatprep.mubr.f32.mxu0 0.0
      %1624 = vmatmul.mubr.f32.gmra.mrb[0].mxu0 %v1557
      %v1625 = vpop.f32.mrb[0].mxu0
      %v1626 = vadd.f32 0.0, %v1625
      %v1627 = vpop.f32.mrb[0].mxu0
      %1628 = vdwg.mxu0
      %v1629 = vadd.f32 %v1388, %v1626
      %v1630 = vadd.f32 %v544, %v1629
      %v1631 = vld [vmem:[%s6] sm:$0x1]
      %v1633 = vlaneseq
      %v1634 = vshrl.u32 %v1633, 7
      %v1635 = vsub.s32 0, %v1634
      %v1636 = vrot.slane %v1631, %v1635
      %v1638 = vadd.f32 %v1630, %v1636
      %v1639 = vld [vmem:[%s7] sm:$0x1]
      %v1640 = vld [vmem:[%s8] sm:$0x1]
      %v1641 = vsel %vm547, %v1638, 0.0
      %1642 = vadd.xlane.f32.xlu0 %v1641
      %v1643 = vpop.xlane.xlu0 %1642
      %v1644 = vmul.f32 %v1643, %v551
      %v1645 = vsub.f32 %v1638, %v1644
      %v1646 = vmul.f32 %v1645, %v1645
      %v1647 = vsel %vm547, %v1646, 0.0
      %1648 = vadd.xlane.f32.xlu0 %v1647
      %v1649 = vpop.xlane.xlu0 %1648
      %v1650 = vmul.f32 %v1649, %v551
      %v1651 = vadd.f32 %v1650, 1e-05
      %v1652 = vrsqrt.pop %v1651
      %v1653 = vmul.f32 %v1645, %v1652
      %v1655 = vlaneseq
      %v1656 = vshrl.u32 %v1655, 7
      %v1657 = vsub.s32 0, %v1656
      %v1658 = vrot.slane %v1639, %v1657
      %v1660 = vmul.f32 %v1653, %v1658
      %v1662 = vlaneseq
      %v1663 = vshrl.u32 %v1662, 7
      %v1664 = vsub.s32 0, %v1663
      %v1665 = vrot.slane %v1640, %v1664
      %v1667 = vadd.f32 %v1660, %v1665
      %v1668 = vld [vmem:[%s9] sm:$0xff]
      %v1669 = vld [vmem:[%s9 + $0x8] sm:$0xff]
      %v1670 = vld [vmem:[%s9 + $0x10] sm:$0xff]
      %v1671 = vld [vmem:[%s9 + $0x18] sm:$0xff]
      %v1672 = vld [vmem:[%s10] sm:$0x1]
      %v1674 = vlaneseq
      %v1675 = vshrl.u32 %v1674, 7
      %v1676 = vsub.s32 0, %v1675
      %v1677 = vrot.slane %v1672, %v1676
      %v1680 = vsel %vm587, %v1667, 0
      %1682 = vmatprep.subr.mxu0 0.0
      %1683 = vmatpush1.msra.mxu0 %v1668
      %1684 = vmatprep.subr.mxu0 0.0
      %1685 = vmatpush1.msra.mxu0 %v1669
      %1686 = vmatprep.subr.mxu0 0.0
      %1687 = vmatpush1.msra.mxu0 %v1670
      %1688 = vmatprep.subr.mxu0 0.0
      %1689 = vmatpush1.msra.mxu0 %v1671
      %1690 = vmatprep.subr.mxu0 0.0
      %1691 = vmatpush1.msra.mxu0 0.0
      %1692 = vmatprep.subr.mxu0 0.0
      %1693 = vmatpush1.msra.mxu0 0.0
      %1694 = vmatprep.subr.mxu0 0.0
      %1695 = vmatpush1.msra.mxu0 0.0
      %1696 = vmatprep.subr.mxu0 0.0
      %1697 = vmatpush1.msra.mxu0 0.0
      %1698 = vmatprep.subr.mxu0 0.0
      %1699 = vmatpush1.msra.mxu0 0.0
      %1700 = vmatprep.subr.mxu0 0.0
      %1701 = vmatpush1.msra.mxu0 0.0
      %1702 = vmatprep.subr.mxu0 0.0
      %1703 = vmatpush1.msra.mxu0 0.0
      %1704 = vmatprep.subr.mxu0 0.0
      %1705 = vmatpush1.msra.mxu0 0.0
      %1706 = vmatprep.subr.mxu0 0.0
      %1707 = vmatpush1.msra.mxu0 0.0
      %1708 = vmatprep.subr.mxu0 0.0
      %1709 = vmatpush1.msra.mxu0 0.0
      %1710 = vmatprep.subr.mxu0 0.0
      %1711 = vmatpush1.msra.mxu0 0.0
      %1712 = vmatprep.subr.mxu0 0.0
      %1713 = vmatpush1.msra.mxu0 0.0
      %1714 = vmatprep.subr.mxu0 0.0
      %1715 = vmatpush1.msra.mxu0 0.0
      %1716 = vmatprep.subr.mxu0 0.0
      %1717 = vmatpush1.msra.mxu0 0.0
      %1718 = vmatprep.subr.mxu0 0.0
      %1719 = vmatpush1.msra.mxu0 0.0
      %1720 = vmatprep.subr.mxu0 0.0
      %1721 = vmatpush1.msra.mxu0 0.0
      %1722 = vmatprep.subr.mxu0 0.0
      %1723 = vmatpush1.msra.mxu0 0.0
      %1724 = vmatprep.subr.mxu0 0.0
      %1725 = vmatpush1.msra.mxu0 0.0
      %1726 = vmatprep.subr.mxu0 0.0
      %1727 = vmatpush1.msra.mxu0 0.0
      %1728 = vmatprep.subr.mxu0 0.0
      %1729 = vmatpush1.msra.mxu0 0.0
      %1730 = vmatprep.subr.mxu0 0.0
      %1731 = vmatpush1.msra.mxu0 0.0
      %1732 = vmatprep.subr.mxu0 0.0
      %1733 = vmatpush1.msra.mxu0 0.0
      %1734 = vmatprep.subr.mxu0 0.0
      %1735 = vmatpush1.msra.mxu0 0.0
      %1736 = vmatprep.subr.mxu0 0.0
      %1737 = vmatpush1.msra.mxu0 0.0
      %1738 = vmatprep.subr.mxu0 0.0
      %1739 = vmatpush1.msra.mxu0 0.0
      %1740 = vmatprep.subr.mxu0 0.0
      %1741 = vmatpush1.msra.mxu0 0.0
      %1742 = vmatprep.subr.mxu0 0.0
      %1743 = vmatpush1.msra.mxu0 0.0
      %1744 = vmatprep.subr.mxu0 0.0
      %1745 = vmatpush1.msra.mxu0 0.0
      %1746 = vmatprep.mubr.f32.mxu0 0.0
      %1747 = vmatmul.mubr.f32.gmra.mrb[0].mxu0 %v1680
      %v1748 = vpop.f32.mrb[0].mxu0
      %v1749 = vadd.f32 %v1677, %v1748
      %v1750 = vpop.f32.mrb[0].mxu0
      %1751 = vdwg.mxu0
      %v1752 = vmul.f32 %v1749, 0.5
      %v1753 = vmul.f32 %v1749, 0.70710677
      %vm1754 = vcmp.ge.f32.partialorder %v1753, 0.0
      %v1755 = vsel %vm1754, 1.0, -1.0
      %v1756 = vand.u32 2147483647, %v1753
      %v1757 = vmul.f32 %v1756, 0.3275911
      %v1758 = vadd.f32 %v1757, 1.0
      %v1759 = vrcp.pop %v1758
      %v1760 = vmul.f32 1.0, %v1759
      %v1761 = vmul.f32 %v1760, 1.0614054
      %v1762 = vadd.f32 %v1761, -1.4531521
      %v1763 = vmul.f32 %v1762, %v1760
      %v1764 = vadd.f32 %v1763, 1.4214138
      %v1765 = vmul.f32 %v1764, %v1760
      %v1766 = vadd.f32 %v1765, -0.28449672
      %v1767 = vmul.f32 %v1766, %v1760
      %v1768 = vadd.f32 %v1767, 0.2548296
      %v1769 = vmul.f32 %v1768, %v1760
      %v1770 = vsub.f32 0.0, %v1756
      %v1771 = vmul.f32 %v1770, %v1756
      %v1772 = vmul.f32 %v1771, 1.442695
      %v1773 = vpow.pop %v1772
      %v1774 = vmul.f32 %v1769, %v1773
      %v1775 = vsub.f32 1.0, %v1774
      %v1776 = vmul.f32 %v1755, %v1775
      %v1777 = vadd.f32 %v1776, 1.0
      %v1778 = vmul.f32 %v1752, %v1777
      %v1779 = vld [vmem:[%s11] sm:$0xff]
      %v1780 = vld [vmem:[%s11 + $0x8] sm:$0xff]
      %v1781 = vld [vmem:[%s11 + $0x10] sm:$0xff]
      %v1782 = vld [vmem:[%s11 + $0x18] sm:$0xff]
      %v1783 = vld [vmem:[%s11 + $0x20] sm:$0xff]
      %v1784 = vld [vmem:[%s11 + $0x28] sm:$0xff]
      %v1785 = vld [vmem:[%s11 + $0x30] sm:$0xff]
      %v1786 = vld [vmem:[%s11 + $0x38] sm:$0xff]
      %v1787 = vld [vmem:[%s11 + $0x40] sm:$0xff]
      %v1788 = vld [vmem:[%s11 + $0x48] sm:$0xff]
      %v1789 = vld [vmem:[%s11 + $0x50] sm:$0xff]
      %v1790 = vld [vmem:[%s11 + $0x58] sm:$0xff]
      %v1791 = vld [vmem:[%s11 + $0x60] sm:$0xff]
      %v1792 = vld [vmem:[%s11 + $0x68] sm:$0xff]
      %v1793 = vld [vmem:[%s11 + $0x70] sm:$0xff]
      %v1794 = vld [vmem:[%s11 + $0x78] sm:$0xff]
      %v1795 = vld [vmem:[%s12] sm:$0x1]
      %v1797 = vlaneseq
      %v1798 = vshrl.u32 %v1797, 7
      %v1799 = vsub.s32 0, %v1798
      %v1800 = vrot.slane %v1795, %v1799
      %1802 = vmatprep.subr.mxu0 0.0
      %1803 = vmatpush1.msra.mxu0 %v1779
      %1804 = vmatprep.subr.mxu0 0.0
      %1805 = vmatpush1.msra.mxu0 %v1780
      %1806 = vmatprep.subr.mxu0 0.0
      %1807 = vmatpush1.msra.mxu0 %v1781
      %1808 = vmatprep.subr.mxu0 0.0
      %1809 = vmatpush1.msra.mxu0 %v1782
      %1810 = vmatprep.subr.mxu0 0.0
      %1811 = vmatpush1.msra.mxu0 %v1783
      %1812 = vmatprep.subr.mxu0 0.0
      %1813 = vmatpush1.msra.mxu0 %v1784
      %1814 = vmatprep.subr.mxu0 0.0
      %1815 = vmatpush1.msra.mxu0 %v1785
      %1816 = vmatprep.subr.mxu0 0.0
      %1817 = vmatpush1.msra.mxu0 %v1786
      %1818 = vmatprep.subr.mxu0 0.0
      %1819 = vmatpush1.msra.mxu0 %v1787
      %1820 = vmatprep.subr.mxu0 0.0
      %1821 = vmatpush1.msra.mxu0 %v1788
      %1822 = vmatprep.subr.mxu0 0.0
      %1823 = vmatpush1.msra.mxu0 %v1789
      %1824 = vmatprep.subr.mxu0 0.0
      %1825 = vmatpush1.msra.mxu0 %v1790
      %1826 = vmatprep.subr.mxu0 0.0
      %1827 = vmatpush1.msra.mxu0 %v1791
      %1828 = vmatprep.subr.mxu0 0.0
      %1829 = vmatpush1.msra.mxu0 %v1792
      %1830 = vmatprep.subr.mxu0 0.0
      %1831 = vmatpush1.msra.mxu0 %v1793
      %1832 = vmatprep.subr.mxu0 0.0
      %1833 = vmatpush1.msra.mxu0 %v1794
      %1834 = vmatprep.subr.mxu0 0.0
      %1835 = vmatpush1.msra.mxu0 0.0
      %1836 = vmatprep.subr.mxu0 0.0
      %1837 = vmatpush1.msra.mxu0 0.0
      %1838 = vmatprep.subr.mxu0 0.0
      %1839 = vmatpush1.msra.mxu0 0.0
      %1840 = vmatprep.subr.mxu0 0.0
      %1841 = vmatpush1.msra.mxu0 0.0
      %1842 = vmatprep.subr.mxu0 0.0
      %1843 = vmatpush1.msra.mxu0 0.0
      %1844 = vmatprep.subr.mxu0 0.0
      %1845 = vmatpush1.msra.mxu0 0.0
      %1846 = vmatprep.subr.mxu0 0.0
      %1847 = vmatpush1.msra.mxu0 0.0
      %1848 = vmatprep.subr.mxu0 0.0
      %1849 = vmatpush1.msra.mxu0 0.0
      %1850 = vmatprep.subr.mxu0 0.0
      %1851 = vmatpush1.msra.mxu0 0.0
      %1852 = vmatprep.subr.mxu0 0.0
      %1853 = vmatpush1.msra.mxu0 0.0
      %1854 = vmatprep.subr.mxu0 0.0
      %1855 = vmatpush1.msra.mxu0 0.0
      %1856 = vmatprep.subr.mxu0 0.0
      %1857 = vmatpush1.msra.mxu0 0.0
      %1858 = vmatprep.subr.mxu0 0.0
      %1859 = vmatpush1.msra.mxu0 0.0
      %1860 = vmatprep.subr.mxu0 0.0
      %1861 = vmatpush1.msra.mxu0 0.0
      %1862 = vmatprep.subr.mxu0 0.0
      %1863 = vmatpush1.msra.mxu0 0.0
      %1864 = vmatprep.subr.mxu0 0.0
      %1865 = vmatpush1.msra.mxu0 0.0
      %1866 = vmatprep.mubr.f32.mxu0 0.0
      %1867 = vmatmul.mubr.f32.gmra.mrb[0].mxu0 %v1778
      %v1868 = vpop.f32.mrb[0].mxu0
      %v1869 = vadd.f32 %v1800, %v1868
      %v1870 = vpop.f32.mrb[0].mxu0
      %1871 = vdwg.mxu0
      %v1872 = vadd.f32 %v1638, %v1869
      %s1873 = scalar_lea.vmem %s1, 1
      %v1874 = vld [vmem:[%s1873] sm:$0x1]
      %s1875 = scalar_lea.vmem %s2, 1
      %v1876 = vld [vmem:[%s1875] sm:$0x1]
      %v1877 = vsel %vm547, %v1872, 0.0
      %1878 = vadd.xlane.f32.xlu0 %v1877
      %v1879 = vpop.xlane.xlu0 %1878
      %v1880 = vmul.f32 %v1879, %v551
      %v1881 = vsub.f32 %v1872, %v1880
      %v1882 = vmul.f32 %v1881, %v1881
      %v1883 = vsel %vm547, %v1882, 0.0
      %1884 = vadd.xlane.f32.xlu0 %v1883
      %v1885 = vpop.xlane.xlu0 %1884
      %v1886 = vmul.f32 %v1885, %v551
      %v1887 = vadd.f32 %v1886, 1e-05
      %v1888 = vrsqrt.pop %v1887
      %v1889 = vmul.f32 %v1881, %v1888
      %v1891 = vlaneseq
      %v1892 = vshrl.u32 %v1891, 7
      %v1893 = vsub.s32 0, %v1892
      %v1894 = vrot.slane %v1874, %v1893
      %v1896 = vmul.f32 %v1889, %v1894
      %v1898 = vlaneseq
      %v1899 = vshrl.u32 %v1898, 7
      %v1900 = vsub.s32 0, %v1899
      %v1901 = vrot.slane %v1876, %v1900
      %v1903 = vadd.f32 %v1896, %v1901
      %s1904 = scalar_lea.vmem %s3, 32
      %v1905 = vld [vmem:[%s1904] sm:$0xff]
      %v1906 = vld [vmem:[%s1904 + $0x8] sm:$0xff]
      %v1907 = vld [vmem:[%s1904 + $0x10] sm:$0xff]
      %v1908 = vld [vmem:[%s1904 + $0x18] sm:$0xff]
      %s1909 = scalar_lea.vmem %s4, 1
      %v1910 = vld [vmem:[%s1909] sm:$0x1]
      %v1912 = vlaneseq
      %v1913 = vshrl.u32 %v1912, 7
      %v1914 = vsub.s32 0, %v1913
      %v1915 = vrot.slane %v1910, %v1914
      %v1918 = vsel %vm587, %v1903, 0
      %1920 = vmatprep.subr.mxu0 0.0
      %1921 = vmatpush1.msra.mxu0 %v1905
      %1922 = vmatprep.subr.mxu0 0.0
      %1923 = vmatpush1.msra.mxu0 %v1906
      %1924 = vmatprep.subr.mxu0 0.0
      %1925 = vmatpush1.msra.mxu0 %v1907
      %1926 = vmatprep.subr.mxu0 0.0
      %1927 = vmatpush1.msra.mxu0 %v1908
      %1928 = vmatprep.subr.mxu0 0.0
      %1929 = vmatpush1.msra.mxu0 0.0
      %1930 = vmatprep.subr.mxu0 0.0
      %1931 = vmatpush1.msra.mxu0 0.0
      %1932 = vmatprep.subr.mxu0 0.0
      %1933 = vmatpush1.msra.mxu0 0.0
      %1934 = vmatprep.subr.mxu0 0.0
      %1935 = vmatpush1.msra.mxu0 0.0
      %1936 = vmatprep.subr.mxu0 0.0
      %1937 = vmatpush1.msra.mxu0 0.0
      %1938 = vmatprep.subr.mxu0 0.0
      %1939 = vmatpush1.msra.mxu0 0.0
      %1940 = vmatprep.subr.mxu0 0.0
      %1941 = vmatpush1.msra.mxu0 0.0
      %1942 = vmatprep.subr.mxu0 0.0
      %1943 = vmatpush1.msra.mxu0 0.0
      %1944 = vmatprep.subr.mxu0 0.0
      %1945 = vmatpush1.msra.mxu0 0.0
      %1946 = vmatprep.subr.mxu0 0.0
      %1947 = vmatpush1.msra.mxu0 0.0
      %1948 = vmatprep.subr.mxu0 0.0
      %1949 = vmatpush1.msra.mxu0 0.0
      %1950 = vmatprep.subr.mxu0 0.0
      %1951 = vmatpush1.msra.mxu0 0.0
      %1952 = vmatprep.subr.mxu0 0.0
      %1953 = vmatpush1.msra.mxu0 0.0
      %1954 = vmatprep.subr.mxu0 0.0
      %1955 = vmatpush1.msra.mxu0 0.0
      %1956 = vmatprep.subr.mxu0 0.0
      %1957 = vmatpush1.msra.mxu0 0.0
      %1958 = vmatprep.subr.mxu0 0.0
      %1959 = vmatpush1.msra.mxu0 0.0
      %1960 = vmatprep.subr.mxu0 0.0
      %1961 = vmatpush1.msra.mxu0 0.0
      %1962 = vmatprep.subr.mxu0 0.0
      %1963 = vmatpush1.msra.mxu0 0.0
      %1964 = vmatprep.subr.mxu0 0.0
      %1965 = vmatpush1.msra.mxu0 0.0
      %1966 = vmatprep.subr.mxu0 0.0
      %1967 = vmatpush1.msra.mxu0 0.0
      %1968 = vmatprep.subr.mxu0 0.0
      %1969 = vmatpush1.msra.mxu0 0.0
      %1970 = vmatprep.subr.mxu0 0.0
      %1971 = vmatpush1.msra.mxu0 0.0
      %1972 = vmatprep.subr.mxu0 0.0
      %1973 = vmatpush1.msra.mxu0 0.0
      %1974 = vmatprep.subr.mxu0 0.0
      %1975 = vmatpush1.msra.mxu0 0.0
      %1976 = vmatprep.subr.mxu0 0.0
      %1977 = vmatpush1.msra.mxu0 0.0
      %1978 = vmatprep.subr.mxu0 0.0
      %1979 = vmatpush1.msra.mxu0 0.0
      %1980 = vmatprep.subr.mxu0 0.0
      %1981 = vmatpush1.msra.mxu0 0.0
      %1982 = vmatprep.subr.mxu0 0.0
      %1983 = vmatpush1.msra.mxu0 0.0
      %1984 = vmatprep.mubr.f32.mxu0 0.0
      %1985 = vmatmul.mubr.f32.gmra.mrb[0].mxu0 %v1918
      %v1986 = vpop.f32.mrb[0].mxu0
      %v1987 = vadd.f32 %v1915, %v1986
      %v1988 = vpop.f32.mrb[0].mxu0
      %1989 = vdwg.mxu0
      %s1990 = scalar_lea.vmem %s5, 32
      %v1991 = vld [vmem:[%s1990] sm:$0xff]
      %v1992 = vld [vmem:[%s1990 + $0x8] sm:$0xff]
      %v1993 = vld [vmem:[%s1990 + $0x10] sm:$0xff]
      %v1994 = vld [vmem:[%s1990 + $0x18] sm:$0xff]
      %1996 = vrot.lane.b32.xlu0 %v1987, 96
      %v1997 = vpop.permute.xlu0 %1996
      %v1998 = vsel %vm668, %v1987, 0
      %v2000 = vsel %vm668, %v1997, 0
      %2002 = vmatprep.subr.mxu0 0.0
      %2003 = vmatpush1.xpose.msra.mxu0 %v2000
      %2004 = vmatprep.subr.mxu0 0.0
      %2005 = vmatpush1.xpose.msra.mxu0 0.0
      %2006 = vmatprep.subr.mxu0 0.0
      %2007 = vmatpush1.xpose.msra.mxu0 0.0
      %2008 = vmatprep.subr.mxu0 0.0
      %2009 = vmatpush1.xpose.msra.mxu0 0.0
      %2010 = vmatprep.subr.mxu0 0.0
      %2011 = vmatpush1.xpose.msra.mxu0 0.0
      %2012 = vmatprep.subr.mxu0 0.0
      %2013 = vmatpush1.xpose.msra.mxu0 0.0
      %2014 = vmatprep.subr.mxu0 0.0
      %2015 = vmatpush1.xpose.msra.mxu0 0.0
      %2016 = vmatprep.subr.mxu0 0.0
      %2017 = vmatpush1.xpose.msra.mxu0 0.0
      %2018 = vmatprep.subr.mxu0 0.0
      %2019 = vmatpush1.xpose.msra.mxu0 0.0
      %2020 = vmatprep.subr.mxu0 0.0
      %2021 = vmatpush1.xpose.msra.mxu0 0.0
      %2022 = vmatprep.subr.mxu0 0.0
      %2023 = vmatpush1.xpose.msra.mxu0 0.0
      %2024 = vmatprep.subr.mxu0 0.0
      %2025 = vmatpush1.xpose.msra.mxu0 0.0
      %2026 = vmatprep.subr.mxu0 0.0
      %2027 = vmatpush1.xpose.msra.mxu0 0.0
      %2028 = vmatprep.subr.mxu0 0.0
      %2029 = vmatpush1.xpose.msra.mxu0 0.0
      %2030 = vmatprep.subr.mxu0 0.0
      %2031 = vmatpush1.xpose.msra.mxu0 0.0
      %2032 = vmatprep.subr.mxu0 0.0
      %2033 = vmatpush1.xpose.msra.mxu0 0.0
      %2034 = vmatprep.subr.mxu0 0.0
      %2035 = vmatpush1.xpose.msra.mxu0 0.0
      %2036 = vmatprep.subr.mxu0 0.0
      %2037 = vmatpush1.xpose.msra.mxu0 0.0
      %2038 = vmatprep.subr.mxu0 0.0
      %2039 = vmatpush1.xpose.msra.mxu0 0.0
      %2040 = vmatprep.subr.mxu0 0.0
      %2041 = vmatpush1.xpose.msra.mxu0 0.0
      %2042 = vmatprep.subr.mxu0 0.0
      %2043 = vmatpush1.xpose.msra.mxu0 0.0
      %2044 = vmatprep.subr.mxu0 0.0
      %2045 = vmatpush1.xpose.msra.mxu0 0.0
      %2046 = vmatprep.subr.mxu0 0.0
      %2047 = vmatpush1.xpose.msra.mxu0 0.0
      %2048 = vmatprep.subr.mxu0 0.0
      %2049 = vmatpush1.xpose.msra.mxu0 0.0
      %2050 = vmatprep.subr.mxu0 0.0
      %2051 = vmatpush1.xpose.msra.mxu0 0.0
      %2052 = vmatprep.subr.mxu0 0.0
      %2053 = vmatpush1.xpose.msra.mxu0 0.0
      %2054 = vmatprep.subr.mxu0 0.0
      %2055 = vmatpush1.xpose.msra.mxu0 0.0
      %2056 = vmatprep.subr.mxu0 0.0
      %2057 = vmatpush1.xpose.msra.mxu0 0.0
      %2058 = vmatprep.subr.mxu0 0.0
      %2059 = vmatpush1.xpose.msra.mxu0 0.0
      %2060 = vmatprep.subr.mxu0 0.0
      %2061 = vmatpush1.xpose.msra.mxu0 0.0
      %2062 = vmatprep.subr.mxu0 0.0
      %2063 = vmatpush1.xpose.msra.mxu0 0.0
      %2064 = vmatprep.subr.mxu0 0.0
      %2065 = vmatpush1.xpose.msra.mxu0 0.0
      %2066 = vmatprep.mubr.f32.mxu0 0.0
      %2067 = vmatmul.mubr.f32.gmra.mrb[0].mxu0 %v1998
      %v2068 = vpop.f32.mrb[0].mxu0
      %v2069 = vadd.f32 0.0, %v2068
      %v2070 = vpop.f32.mrb[0].mxu0
      %2071 = vdwg.mxu0
      %v2072 = vmul.f32 %v2069, 0.35355338
      %v2073 = vsel %vm744, %v2072, -inf
      %2074 = vmax.xlane.f32.xlu0 %v2073
      %v2075 = vpop.xlane.xlu0 %2074
      %v2076 = vsub.f32 %v2072, %v2075
      %v2077 = vmul.f32 %v2076, 1.442695
      %v2078 = vpow.pop %v2077
      %v2079 = vsel %vm744, %v2078, 0.0
      %2080 = vadd.xlane.f32.xlu0 %v2079
      %v2081 = vpop.xlane.xlu0 %2080
      %v2082 = vrcp.pop %v2081
      %v2083 = vmul.f32 %v2078, %v2082
      %2084 = vrot.lane.b32.xlu0 %v1987, 64
      %v2085 = vpop.permute.xlu0 %2084
      %v2087 = vsel %vm758, %v2083, 0
      %v2089 = vsel %vm762, %v2085, 0
      %2091 = vmatprep.subr.mxu0 0.0
      %2092 = vmatpush1.msra.mxu0 %v2089
      %2093 = vmatprep.subr.mxu0 0.0
      %2094 = vmatpush1.msra.mxu0 0.0
      %2095 = vmatprep.subr.mxu0 0.0
      %2096 = vmatpush1.msra.mxu0 0.0
      %2097 = vmatprep.subr.mxu0 0.0
      %2098 = vmatpush1.msra.mxu0 0.0
      %2099 = vmatprep.subr.mxu0 0.0
      %2100 = vmatpush1.msra.mxu0 0.0
      %2101 = vmatprep.subr.mxu0 0.0
      %2102 = vmatpush1.msra.mxu0 0.0
      %2103 = vmatprep.subr.mxu0 0.0
      %2104 = vmatpush1.msra.mxu0 0.0
      %2105 = vmatprep.subr.mxu0 0.0
      %2106 = vmatpush1.msra.mxu0 0.0
      %2107 = vmatprep.subr.mxu0 0.0
      %2108 = vmatpush1.msra.mxu0 0.0
      %2109 = vmatprep.subr.mxu0 0.0
      %2110 = vmatpush1.msra.mxu0 0.0
      %2111 = vmatprep.subr.mxu0 0.0
      %2112 = vmatpush1.msra.mxu0 0.0
      %2113 = vmatprep.subr.mxu0 0.0
      %2114 = vmatpush1.msra.mxu0 0.0
      %2115 = vmatprep.subr.mxu0 0.0
      %2116 = vmatpush1.msra.mxu0 0.0
      %2117 = vmatprep.subr.mxu0 0.0
      %2118 = vmatpush1.msra.mxu0 0.0
      %2119 = vmatprep.subr.mxu0 0.0
      %2120 = vmatpush1.msra.mxu0 0.0
      %2121 = vmatprep.subr.mxu0 0.0
      %2122 = vmatpush1.msra.mxu0 0.0
      %2123 = vmatprep.subr.mxu0 0.0
      %2124 = vmatpush1.msra.mxu0 0.0
      %2125 = vmatprep.subr.mxu0 0.0
      %2126 = vmatpush1.msra.mxu0 0.0
      %2127 = vmatprep.subr.mxu0 0.0
      %2128 = vmatpush1.msra.mxu0 0.0
      %2129 = vmatprep.subr.mxu0 0.0
      %2130 = vmatpush1.msra.mxu0 0.0
      %2131 = vmatprep.subr.mxu0 0.0
      %2132 = vmatpush1.msra.mxu0 0.0
      %2133 = vmatprep.subr.mxu0 0.0
      %2134 = vmatpush1.msra.mxu0 0.0
      %2135 = vmatprep.subr.mxu0 0.0
      %2136 = vmatpush1.msra.mxu0 0.0
      %2137 = vmatprep.subr.mxu0 0.0
      %2138 = vmatpush1.msra.mxu0 0.0
      %2139 = vmatprep.subr.mxu0 0.0
      %2140 = vmatpush1.msra.mxu0 0.0
      %2141 = vmatprep.subr.mxu0 0.0
      %2142 = vmatpush1.msra.mxu0 0.0
      %2143 = vmatprep.subr.mxu0 0.0
      %2144 = vmatpush1.msra.mxu0 0.0
      %2145 = vmatprep.subr.mxu0 0.0
      %2146 = vmatpush1.msra.mxu0 0.0
      %2147 = vmatprep.subr.mxu0 0.0
      %2148 = vmatpush1.msra.mxu0 0.0
      %2149 = vmatprep.subr.mxu0 0.0
      %2150 = vmatpush1.msra.mxu0 0.0
      %2151 = vmatprep.subr.mxu0 0.0
      %2152 = vmatpush1.msra.mxu0 0.0
      %2153 = vmatprep.subr.mxu0 0.0
      %2154 = vmatpush1.msra.mxu0 0.0
      %2155 = vmatprep.mubr.f32.mxu0 0.0
      %2156 = vmatmul.mubr.f32.gmra.mrb[0].mxu0 %v2087
      %v2157 = vpop.f32.mrb[0].mxu0
      %v2158 = vadd.f32 0.0, %v2157
      %v2159 = vpop.f32.mrb[0].mxu0
      %2160 = vdwg.mxu0
      %2161 = vrot.lane.b32.xlu0 %v1987, 120
      %v2162 = vpop.permute.xlu0 %2161
      %2163 = vrot.lane.b32.xlu0 %v1987, 88
      %v2164 = vpop.permute.xlu0 %2163
      %v2165 = vsel %vm668, %v2162, 0
      %v2167 = vsel %vm668, %v2164, 0
      %2169 = vmatprep.subr.mxu0 0.0
      %2170 = vmatpush1.xpose.msra.mxu0 %v2167
      %2171 = vmatprep.subr.mxu0 0.0
      %2172 = vmatpush1.xpose.msra.mxu0 0.0
      %2173 = vmatprep.subr.mxu0 0.0
      %2174 = vmatpush1.xpose.msra.mxu0 0.0
      %2175 = vmatprep.subr.mxu0 0.0
      %2176 = vmatpush1.xpose.msra.mxu0 0.0
      %2177 = vmatprep.subr.mxu0 0.0
      %2178 = vmatpush1.xpose.msra.mxu0 0.0
      %2179 = vmatprep.subr.mxu0 0.0
      %2180 = vmatpush1.xpose.msra.mxu0 0.0
      %2181 = vmatprep.subr.mxu0 0.0
      %2182 = vmatpush1.xpose.msra.mxu0 0.0
      %2183 = vmatprep.subr.mxu0 0.0
      %2184 = vmatpush1.xpose.msra.mxu0 0.0
      %2185 = vmatprep.subr.mxu0 0.0
      %2186 = vmatpush1.xpose.msra.mxu0 0.0
      %2187 = vmatprep.subr.mxu0 0.0
      %2188 = vmatpush1.xpose.msra.mxu0 0.0
      %2189 = vmatprep.subr.mxu0 0.0
      %2190 = vmatpush1.xpose.msra.mxu0 0.0
      %2191 = vmatprep.subr.mxu0 0.0
      %2192 = vmatpush1.xpose.msra.mxu0 0.0
      %2193 = vmatprep.subr.mxu0 0.0
      %2194 = vmatpush1.xpose.msra.mxu0 0.0
      %2195 = vmatprep.subr.mxu0 0.0
      %2196 = vmatpush1.xpose.msra.mxu0 0.0
      %2197 = vmatprep.subr.mxu0 0.0
      %2198 = vmatpush1.xpose.msra.mxu0 0.0
      %2199 = vmatprep.subr.mxu0 0.0
      %2200 = vmatpush1.xpose.msra.mxu0 0.0
      %2201 = vmatprep.subr.mxu0 0.0
      %2202 = vmatpush1.xpose.msra.mxu0 0.0
      %2203 = vmatprep.subr.mxu0 0.0
      %2204 = vmatpush1.xpose.msra.mxu0 0.0
      %2205 = vmatprep.subr.mxu0 0.0
      %2206 = vmatpush1.xpose.msra.mxu0 0.0
      %2207 = vmatprep.subr.mxu0 0.0
      %2208 = vmatpush1.xpose.msra.mxu0 0.0
      %2209 = vmatprep.subr.mxu0 0.0
      %2210 = vmatpush1.xpose.msra.mxu0 0.0
      %2211 = vmatprep.subr.mxu0 0.0
      %2212 = vmatpush1.xpose.msra.mxu0 0.0
      %2213 = vmatprep.subr.mxu0 0.0
      %2214 = vmatpush1.xpose.msra.mxu0 0.0
      %2215 = vmatprep.subr.mxu0 0.0
      %2216 = vmatpush1.xpose.msra.mxu0 0.0
      %2217 = vmatprep.subr.mxu0 0.0
      %2218 = vmatpush1.xpose.msra.mxu0 0.0
      %2219 = vmatprep.subr.mxu0 0.0
      %2220 = vmatpush1.xpose.msra.mxu0 0.0
      %2221 = vmatprep.subr.mxu0 0.0
      %2222 = vmatpush1.xpose.msra.mxu0 0.0
      %2223 = vmatprep.subr.mxu0 0.0
      %2224 = vmatpush1.xpose.msra.mxu0 0.0
      %2225 = vmatprep.subr.mxu0 0.0
      %2226 = vmatpush1.xpose.msra.mxu0 0.0
      %2227 = vmatprep.subr.mxu0 0.0
      %2228 = vmatpush1.xpose.msra.mxu0 0.0
      %2229 = vmatprep.subr.mxu0 0.0
      %2230 = vmatpush1.xpose.msra.mxu0 0.0
      %2231 = vmatprep.subr.mxu0 0.0
      %2232 = vmatpush1.xpose.msra.mxu0 0.0
      %2233 = vmatprep.mubr.f32.mxu0 0.0
      %2234 = vmatmul.mubr.f32.gmra.mrb[0].mxu0 %v2165
      %v2235 = vpop.f32.mrb[0].mxu0
      %v2236 = vadd.f32 0.0, %v2235
      %v2237 = vpop.f32.mrb[0].mxu0
      %2238 = vdwg.mxu0
      %v2239 = vmul.f32 %v2236, 0.35355338
      %v2240 = vsel %vm744, %v2239, -inf
      %2241 = vmax.xlane.f32.xlu0 %v2240
      %v2242 = vpop.xlane.xlu0 %2241
      %v2243 = vsub.f32 %v2239, %v2242
      %v2244 = vmul.f32 %v2243, 1.442695
      %v2245 = vpow.pop %v2244
      %v2246 = vsel %vm744, %v2245, 0.0
      %2247 = vadd.xlane.f32.xlu0 %v2246
      %v2248 = vpop.xlane.xlu0 %2247
      %v2249 = vrcp.pop %v2248
      %v2250 = vmul.f32 %v2245, %v2249
      %2251 = vrot.lane.b32.xlu0 %v1987, 56
      %v2252 = vpop.permute.xlu0 %2251
      %v2254 = vsel %vm758, %v2250, 0
      %v2256 = vsel %vm762, %v2252, 0
      %2258 = vmatprep.subr.mxu0 0.0
      %2259 = vmatpush1.msra.mxu0 %v2256
      %2260 = vmatprep.subr.mxu0 0.0
      %2261 = vmatpush1.msra.mxu0 0.0
      %2262 = vmatprep.subr.mxu0 0.0
      %2263 = vmatpush1.msra.mxu0 0.0
      %2264 = vmatprep.subr.mxu0 0.0
      %2265 = vmatpush1.msra.mxu0 0.0
      %2266 = vmatprep.subr.mxu0 0.0
      %2267 = vmatpush1.msra.mxu0 0.0
      %2268 = vmatprep.subr.mxu0 0.0
      %2269 = vmatpush1.msra.mxu0 0.0
      %2270 = vmatprep.subr.mxu0 0.0
      %2271 = vmatpush1.msra.mxu0 0.0
      %2272 = vmatprep.subr.mxu0 0.0
      %2273 = vmatpush1.msra.mxu0 0.0
      %2274 = vmatprep.subr.mxu0 0.0
      %2275 = vmatpush1.msra.mxu0 0.0
      %2276 = vmatprep.subr.mxu0 0.0
      %2277 = vmatpush1.msra.mxu0 0.0
      %2278 = vmatprep.subr.mxu0 0.0
      %2279 = vmatpush1.msra.mxu0 0.0
      %2280 = vmatprep.subr.mxu0 0.0
      %2281 = vmatpush1.msra.mxu0 0.0
      %2282 = vmatprep.subr.mxu0 0.0
      %2283 = vmatpush1.msra.mxu0 0.0
      %2284 = vmatprep.subr.mxu0 0.0
      %2285 = vmatpush1.msra.mxu0 0.0
      %2286 = vmatprep.subr.mxu0 0.0
      %2287 = vmatpush1.msra.mxu0 0.0
      %2288 = vmatprep.subr.mxu0 0.0
      %2289 = vmatpush1.msra.mxu0 0.0
      %2290 = vmatprep.subr.mxu0 0.0
      %2291 = vmatpush1.msra.mxu0 0.0
      %2292 = vmatprep.subr.mxu0 0.0
      %2293 = vmatpush1.msra.mxu0 0.0
      %2294 = vmatprep.subr.mxu0 0.0
      %2295 = vmatpush1.msra.mxu0 0.0
      %2296 = vmatprep.subr.mxu0 0.0
      %2297 = vmatpush1.msra.mxu0 0.0
      %2298 = vmatprep.subr.mxu0 0.0
      %2299 = vmatpush1.msra.mxu0 0.0
      %2300 = vmatprep.subr.mxu0 0.0
      %2301 = vmatpush1.msra.mxu0 0.0
      %2302 = vmatprep.subr.mxu0 0.0
      %2303 = vmatpush1.msra.mxu0 0.0
      %2304 = vmatprep.subr.mxu0 0.0
      %2305 = vmatpush1.msra.mxu0 0.0
      %2306 = vmatprep.subr.mxu0 0.0
      %2307 = vmatpush1.msra.mxu0 0.0
      %2308 = vmatprep.subr.mxu0 0.0
      %2309 = vmatpush1.msra.mxu0 0.0
      %2310 = vmatprep.subr.mxu0 0.0
      %2311 = vmatpush1.msra.mxu0 0.0
      %2312 = vmatprep.subr.mxu0 0.0
      %2313 = vmatpush1.msra.mxu0 0.0
      %2314 = vmatprep.subr.mxu0 0.0
      %2315 = vmatpush1.msra.mxu0 0.0
      %2316 = vmatprep.subr.mxu0 0.0
      %2317 = vmatpush1.msra.mxu0 0.0
      %2318 = vmatprep.subr.mxu0 0.0
      %2319 = vmatpush1.msra.mxu0 0.0
      %2320 = vmatprep.subr.mxu0 0.0
      %2321 = vmatpush1.msra.mxu0 0.0
      %2322 = vmatprep.mubr.f32.mxu0 0.0
      %2323 = vmatmul.mubr.f32.gmra.mrb[0].mxu0 %v2254
      %v2324 = vpop.f32.mrb[0].mxu0
      %v2325 = vadd.f32 0.0, %v2324
      %v2326 = vpop.f32.mrb[0].mxu0
      %2327 = vdwg.mxu0
      %v2329 = vsel %vm668, %v2325, 0
      %2331 = vmatprep.subr.mxu0 0.0
      %2332 = vmatpush1.msra.mxu0 %v1992
      %2333 = vmatprep.subr.mxu0 0.0
      %2334 = vmatpush1.msra.mxu0 0.0
      %2335 = vmatprep.subr.mxu0 0.0
      %2336 = vmatpush1.msra.mxu0 0.0
      %2337 = vmatprep.subr.mxu0 0.0
      %2338 = vmatpush1.msra.mxu0 0.0
      %2339 = vmatprep.subr.mxu0 0.0
      %2340 = vmatpush1.msra.mxu0 0.0
      %2341 = vmatprep.subr.mxu0 0.0
      %2342 = vmatpush1.msra.mxu0 0.0
      %2343 = vmatprep.subr.mxu0 0.0
      %2344 = vmatpush1.msra.mxu0 0.0
      %2345 = vmatprep.subr.mxu0 0.0
      %2346 = vmatpush1.msra.mxu0 0.0
      %2347 = vmatprep.subr.mxu0 0.0
      %2348 = vmatpush1.msra.mxu0 0.0
      %2349 = vmatprep.subr.mxu0 0.0
      %2350 = vmatpush1.msra.mxu0 0.0
      %2351 = vmatprep.subr.mxu0 0.0
      %2352 = vmatpush1.msra.mxu0 0.0
      %2353 = vmatprep.subr.mxu0 0.0
      %2354 = vmatpush1.msra.mxu0 0.0
      %2355 = vmatprep.subr.mxu0 0.0
      %2356 = vmatpush1.msra.mxu0 0.0
      %2357 = vmatprep.subr.mxu0 0.0
      %2358 = vmatpush1.msra.mxu0 0.0
      %2359 = vmatprep.subr.mxu0 0.0
      %2360 = vmatpush1.msra.mxu0 0.0
      %2361 = vmatprep.subr.mxu0 0.0
      %2362 = vmatpush1.msra.mxu0 0.0
      %2363 = vmatprep.subr.mxu0 0.0
      %2364 = vmatpush1.msra.mxu0 0.0
      %2365 = vmatprep.subr.mxu0 0.0
      %2366 = vmatpush1.msra.mxu0 0.0
      %2367 = vmatprep.subr.mxu0 0.0
      %2368 = vmatpush1.msra.mxu0 0.0
      %2369 = vmatprep.subr.mxu0 0.0
      %2370 = vmatpush1.msra.mxu0 0.0
      %2371 = vmatprep.subr.mxu0 0.0
      %2372 = vmatpush1.msra.mxu0 0.0
      %2373 = vmatprep.subr.mxu0 0.0
      %2374 = vmatpush1.msra.mxu0 0.0
      %2375 = vmatprep.subr.mxu0 0.0
      %2376 = vmatpush1.msra.mxu0 0.0
      %2377 = vmatprep.subr.mxu0 0.0
      %2378 = vmatpush1.msra.mxu0 0.0
      %2379 = vmatprep.subr.mxu0 0.0
      %2380 = vmatpush1.msra.mxu0 0.0
      %2381 = vmatprep.subr.mxu0 0.0
      %2382 = vmatpush1.msra.mxu0 0.0
      %2383 = vmatprep.subr.mxu0 0.0
      %2384 = vmatpush1.msra.mxu0 0.0
      %2385 = vmatprep.subr.mxu0 0.0
      %2386 = vmatpush1.msra.mxu0 0.0
      %2387 = vmatprep.subr.mxu0 0.0
      %2388 = vmatpush1.msra.mxu0 0.0
      %2389 = vmatprep.subr.mxu0 0.0
      %2390 = vmatpush1.msra.mxu0 0.0
      %2391 = vmatprep.subr.mxu0 0.0
      %2392 = vmatpush1.msra.mxu0 0.0
      %2393 = vmatprep.subr.mxu0 0.0
      %2394 = vmatpush1.msra.mxu0 0.0
      %2395 = vmatprep.mubr.f32.mxu0 0.0
      %2396 = vmatmul.mubr.f32.gmra.mrb[0].mxu0 %v2329
      %v2397 = vpop.f32.mrb[0].mxu0
      %v2398 = vadd.f32 0.0, %v2397
      %v2399 = vpop.f32.mrb[0].mxu0
      %2400 = vdwg.mxu0
      %v2402 = vsel %vm668, %v2158, 0
      %2404 = vmatprep.subr.mxu0 0.0
      %2405 = vmatpush1.msra.mxu0 %v1991
      %2406 = vmatprep.subr.mxu0 0.0
      %2407 = vmatpush1.msra.mxu0 0.0
      %2408 = vmatprep.subr.mxu0 0.0
      %2409 = vmatpush1.msra.mxu0 0.0
      %2410 = vmatprep.subr.mxu0 0.0
      %2411 = vmatpush1.msra.mxu0 0.0
      %2412 = vmatprep.subr.mxu0 0.0
      %2413 = vmatpush1.msra.mxu0 0.0
      %2414 = vmatprep.subr.mxu0 0.0
      %2415 = vmatpush1.msra.mxu0 0.0
      %2416 = vmatprep.subr.mxu0 0.0
      %2417 = vmatpush1.msra.mxu0 0.0
      %2418 = vmatprep.subr.mxu0 0.0
      %2419 = vmatpush1.msra.mxu0 0.0
      %2420 = vmatprep.subr.mxu0 0.0
      %2421 = vmatpush1.msra.mxu0 0.0
      %2422 = vmatprep.subr.mxu0 0.0
      %2423 = vmatpush1.msra.mxu0 0.0
      %2424 = vmatprep.subr.mxu0 0.0
      %2425 = vmatpush1.msra.mxu0 0.0
      %2426 = vmatprep.subr.mxu0 0.0
      %2427 = vmatpush1.msra.mxu0 0.0
      %2428 = vmatprep.subr.mxu0 0.0
      %2429 = vmatpush1.msra.mxu0 0.0
      %2430 = vmatprep.subr.mxu0 0.0
      %2431 = vmatpush1.msra.mxu0 0.0
      %2432 = vmatprep.subr.mxu0 0.0
      %2433 = vmatpush1.msra.mxu0 0.0
      %2434 = vmatprep.subr.mxu0 0.0
      %2435 = vmatpush1.msra.mxu0 0.0
      %2436 = vmatprep.subr.mxu0 0.0
      %2437 = vmatpush1.msra.mxu0 0.0
      %2438 = vmatprep.subr.mxu0 0.0
      %2439 = vmatpush1.msra.mxu0 0.0
      %2440 = vmatprep.subr.mxu0 0.0
      %2441 = vmatpush1.msra.mxu0 0.0
      %2442 = vmatprep.subr.mxu0 0.0
      %2443 = vmatpush1.msra.mxu0 0.0
      %2444 = vmatprep.subr.mxu0 0.0
      %2445 = vmatpush1.msra.mxu0 0.0
      %2446 = vmatprep.subr.mxu0 0.0
      %2447 = vmatpush1.msra.mxu0 0.0
      %2448 = vmatprep.subr.mxu0 0.0
      %2449 = vmatpush1.msra.mxu0 0.0
      %2450 = vmatprep.subr.mxu0 0.0
      %2451 = vmatpush1.msra.mxu0 0.0
      %2452 = vmatprep.subr.mxu0 0.0
      %2453 = vmatpush1.msra.mxu0 0.0
      %2454 = vmatprep.subr.mxu0 0.0
      %2455 = vmatpush1.msra.mxu0 0.0
      %2456 = vmatprep.subr.mxu0 0.0
      %2457 = vmatpush1.msra.mxu0 0.0
      %2458 = vmatprep.subr.mxu0 0.0
      %2459 = vmatpush1.msra.mxu0 0.0
      %2460 = vmatprep.subr.mxu0 0.0
      %2461 = vmatpush1.msra.mxu0 0.0
      %2462 = vmatprep.subr.mxu0 0.0
      %2463 = vmatpush1.msra.mxu0 0.0
      %2464 = vmatprep.subr.mxu0 0.0
      %2465 = vmatpush1.msra.mxu0 0.0
      %2466 = vmatprep.subr.mxu0 0.0
      %2467 = vmatpush1.msra.mxu0 0.0
      %2468 = vmatprep.mubr.f32.mxu0 0.0
      %2469 = vmatmul.mubr.f32.gmra.mrb[0].mxu0 %v2402
      %v2470 = vpop.f32.mrb[0].mxu0
      %v2471 = vadd.f32 %v2398, %v2470
      %v2472 = vpop.f32.mrb[0].mxu0
      %2473 = vdwg.mxu0
      %2474 = vrot.lane.b32.xlu0 %v1987, 112
      %v2475 = vpop.permute.xlu0 %2474
      %2476 = vrot.lane.b32.xlu0 %v1987, 80
      %v2477 = vpop.permute.xlu0 %2476
      %v2478 = vsel %vm668, %v2475, 0
      %v2480 = vsel %vm668, %v2477, 0
      %2482 = vmatprep.subr.mxu0 0.0
      %2483 = vmatpush1.xpose.msra.mxu0 %v2480
      %2484 = vmatprep.subr.mxu0 0.0
      %2485 = vmatpush1.xpose.msra.mxu0 0.0
      %2486 = vmatprep.subr.mxu0 0.0
      %2487 = vmatpush1.xpose.msra.mxu0 0.0
      %2488 = vmatprep.subr.mxu0 0.0
      %2489 = vmatpush1.xpose.msra.mxu0 0.0
      %2490 = vmatprep.subr.mxu0 0.0
      %2491 = vmatpush1.xpose.msra.mxu0 0.0
      %2492 = vmatprep.subr.mxu0 0.0
      %2493 = vmatpush1.xpose.msra.mxu0 0.0
      %2494 = vmatprep.subr.mxu0 0.0
      %2495 = vmatpush1.xpose.msra.mxu0 0.0
      %2496 = vmatprep.subr.mxu0 0.0
      %2497 = vmatpush1.xpose.msra.mxu0 0.0
      %2498 = vmatprep.subr.mxu0 0.0
      %2499 = vmatpush1.xpose.msra.mxu0 0.0
      %2500 = vmatprep.subr.mxu0 0.0
      %2501 = vmatpush1.xpose.msra.mxu0 0.0
      %2502 = vmatprep.subr.mxu0 0.0
      %2503 = vmatpush1.xpose.msra.mxu0 0.0
      %2504 = vmatprep.subr.mxu0 0.0
      %2505 = vmatpush1.xpose.msra.mxu0 0.0
      %2506 = vmatprep.subr.mxu0 0.0
      %2507 = vmatpush1.xpose.msra.mxu0 0.0
      %2508 = vmatprep.subr.mxu0 0.0
      %2509 = vmatpush1.xpose.msra.mxu0 0.0
      %2510 = vmatprep.subr.mxu0 0.0
      %2511 = vmatpush1.xpose.msra.mxu0 0.0
      %2512 = vmatprep.subr.mxu0 0.0
      %2513 = vmatpush1.xpose.msra.mxu0 0.0
      %2514 = vmatprep.subr.mxu0 0.0
      %2515 = vmatpush1.xpose.msra.mxu0 0.0
      %2516 = vmatprep.subr.mxu0 0.0
      %2517 = vmatpush1.xpose.msra.mxu0 0.0
      %2518 = vmatprep.subr.mxu0 0.0
      %2519 = vmatpush1.xpose.msra.mxu0 0.0
      %2520 = vmatprep.subr.mxu0 0.0
      %2521 = vmatpush1.xpose.msra.mxu0 0.0
      %2522 = vmatprep.subr.mxu0 0.0
      %2523 = vmatpush1.xpose.msra.mxu0 0.0
      %2524 = vmatprep.subr.mxu0 0.0
      %2525 = vmatpush1.xpose.msra.mxu0 0.0
      %2526 = vmatprep.subr.mxu0 0.0
      %2527 = vmatpush1.xpose.msra.mxu0 0.0
      %2528 = vmatprep.subr.mxu0 0.0
      %2529 = vmatpush1.xpose.msra.mxu0 0.0
      %2530 = vmatprep.subr.mxu0 0.0
      %2531 = vmatpush1.xpose.msra.mxu0 0.0
      %2532 = vmatprep.subr.mxu0 0.0
      %2533 = vmatpush1.xpose.msra.mxu0 0.0
      %2534 = vmatprep.subr.mxu0 0.0
      %2535 = vmatpush1.xpose.msra.mxu0 0.0
      %2536 = vmatprep.subr.mxu0 0.0
      %2537 = vmatpush1.xpose.msra.mxu0 0.0
      %2538 = vmatprep.subr.mxu0 0.0
      %2539 = vmatpush1.xpose.msra.mxu0 0.0
      %2540 = vmatprep.subr.mxu0 0.0
      %2541 = vmatpush1.xpose.msra.mxu0 0.0
      %2542 = vmatprep.subr.mxu0 0.0
      %2543 = vmatpush1.xpose.msra.mxu0 0.0
      %2544 = vmatprep.subr.mxu0 0.0
      %2545 = vmatpush1.xpose.msra.mxu0 0.0
      %2546 = vmatprep.mubr.f32.mxu0 0.0
      %2547 = vmatmul.mubr.f32.gmra.mrb[0].mxu0 %v2478
      %v2548 = vpop.f32.mrb[0].mxu0
      %v2549 = vadd.f32 0.0, %v2548
      %v2550 = vpop.f32.mrb[0].mxu0
      %2551 = vdwg.mxu0
      %v2552 = vmul.f32 %v2549, 0.35355338
      %v2553 = vsel %vm744, %v2552, -inf
      %2554 = vmax.xlane.f32.xlu0 %v2553
      %v2555 = vpop.xlane.xlu0 %2554
      %v2556 = vsub.f32 %v2552, %v2555
      %v2557 = vmul.f32 %v2556, 1.442695
      %v2558 = vpow.pop %v2557
      %v2559 = vsel %vm744, %v2558, 0.0
      %2560 = vadd.xlane.f32.xlu0 %v2559
      %v2561 = vpop.xlane.xlu0 %2560
      %v2562 = vrcp.pop %v2561
      %v2563 = vmul.f32 %v2558, %v2562
      %2564 = vrot.lane.b32.xlu0 %v1987, 48
      %v2565 = vpop.permute.xlu0 %2564
      %v2567 = vsel %vm758, %v2563, 0
      %v2569 = vsel %vm762, %v2565, 0
      %2571 = vmatprep.subr.mxu0 0.0
      %2572 = vmatpush1.msra.mxu0 %v2569
      %2573 = vmatprep.subr.mxu0 0.0
      %2574 = vmatpush1.msra.mxu0 0.0
      %2575 = vmatprep.subr.mxu0 0.0
      %2576 = vmatpush1.msra.mxu0 0.0
      %2577 = vmatprep.subr.mxu0 0.0
      %2578 = vmatpush1.msra.mxu0 0.0
      %2579 = vmatprep.subr.mxu0 0.0
      %2580 = vmatpush1.msra.mxu0 0.0
      %2581 = vmatprep.subr.mxu0 0.0
      %2582 = vmatpush1.msra.mxu0 0.0
      %2583 = vmatprep.subr.mxu0 0.0
      %2584 = vmatpush1.msra.mxu0 0.0
      %2585 = vmatprep.subr.mxu0 0.0
      %2586 = vmatpush1.msra.mxu0 0.0
      %2587 = vmatprep.subr.mxu0 0.0
      %2588 = vmatpush1.msra.mxu0 0.0
      %2589 = vmatprep.subr.mxu0 0.0
      %2590 = vmatpush1.msra.mxu0 0.0
      %2591 = vmatprep.subr.mxu0 0.0
      %2592 = vmatpush1.msra.mxu0 0.0
      %2593 = vmatprep.subr.mxu0 0.0
      %2594 = vmatpush1.msra.mxu0 0.0
      %2595 = vmatprep.subr.mxu0 0.0
      %2596 = vmatpush1.msra.mxu0 0.0
      %2597 = vmatprep.subr.mxu0 0.0
      %2598 = vmatpush1.msra.mxu0 0.0
      %2599 = vmatprep.subr.mxu0 0.0
      %2600 = vmatpush1.msra.mxu0 0.0
      %2601 = vmatprep.subr.mxu0 0.0
      %2602 = vmatpush1.msra.mxu0 0.0
      %2603 = vmatprep.subr.mxu0 0.0
      %2604 = vmatpush1.msra.mxu0 0.0
      %2605 = vmatprep.subr.mxu0 0.0
      %2606 = vmatpush1.msra.mxu0 0.0
      %2607 = vmatprep.subr.mxu0 0.0
      %2608 = vmatpush1.msra.mxu0 0.0
      %2609 = vmatprep.subr.mxu0 0.0
      %2610 = vmatpush1.msra.mxu0 0.0
      %2611 = vmatprep.subr.mxu0 0.0
      %2612 = vmatpush1.msra.mxu0 0.0
      %2613 = vmatprep.subr.mxu0 0.0
      %2614 = vmatpush1.msra.mxu0 0.0
      %2615 = vmatprep.subr.mxu0 0.0
      %2616 = vmatpush1.msra.mxu0 0.0
      %2617 = vmatprep.subr.mxu0 0.0
      %2618 = vmatpush1.msra.mxu0 0.0
      %2619 = vmatprep.subr.mxu0 0.0
      %2620 = vmatpush1.msra.mxu0 0.0
      %2621 = vmatprep.subr.mxu0 0.0
      %2622 = vmatpush1.msra.mxu0 0.0
      %2623 = vmatprep.subr.mxu0 0.0
      %2624 = vmatpush1.msra.mxu0 0.0
      %2625 = vmatprep.subr.mxu0 0.0
      %2626 = vmatpush1.msra.mxu0 0.0
      %2627 = vmatprep.subr.mxu0 0.0
      %2628 = vmatpush1.msra.mxu0 0.0
      %2629 = vmatprep.subr.mxu0 0.0
      %2630 = vmatpush1.msra.mxu0 0.0
      %2631 = vmatprep.subr.mxu0 0.0
      %2632 = vmatpush1.msra.mxu0 0.0
      %2633 = vmatprep.subr.mxu0 0.0
      %2634 = vmatpush1.msra.mxu0 0.0
      %2635 = vmatprep.mubr.f32.mxu0 0.0
      %2636 = vmatmul.mubr.f32.gmra.mrb[0].mxu0 %v2567
      %v2637 = vpop.f32.mrb[0].mxu0
      %v2638 = vadd.f32 0.0, %v2637
      %v2639 = vpop.f32.mrb[0].mxu0
      %2640 = vdwg.mxu0
      %v2642 = vsel %vm668, %v2638, 0
      %2644 = vmatprep.subr.mxu0 0.0
      %2645 = vmatpush1.msra.mxu0 %v1993
      %2646 = vmatprep.subr.mxu0 0.0
      %2647 = vmatpush1.msra.mxu0 0.0
      %2648 = vmatprep.subr.mxu0 0.0
      %2649 = vmatpush1.msra.mxu0 0.0
      %2650 = vmatprep.subr.mxu0 0.0
      %2651 = vmatpush1.msra.mxu0 0.0
      %2652 = vmatprep.subr.mxu0 0.0
      %2653 = vmatpush1.msra.mxu0 0.0
      %2654 = vmatprep.subr.mxu0 0.0
      %2655 = vmatpush1.msra.mxu0 0.0
      %2656 = vmatprep.subr.mxu0 0.0
      %2657 = vmatpush1.msra.mxu0 0.0
      %2658 = vmatprep.subr.mxu0 0.0
      %2659 = vmatpush1.msra.mxu0 0.0
      %2660 = vmatprep.subr.mxu0 0.0
      %2661 = vmatpush1.msra.mxu0 0.0
      %2662 = vmatprep.subr.mxu0 0.0
      %2663 = vmatpush1.msra.mxu0 0.0
      %2664 = vmatprep.subr.mxu0 0.0
      %2665 = vmatpush1.msra.mxu0 0.0
      %2666 = vmatprep.subr.mxu0 0.0
      %2667 = vmatpush1.msra.mxu0 0.0
      %2668 = vmatprep.subr.mxu0 0.0
      %2669 = vmatpush1.msra.mxu0 0.0
      %2670 = vmatprep.subr.mxu0 0.0
      %2671 = vmatpush1.msra.mxu0 0.0
      %2672 = vmatprep.subr.mxu0 0.0
      %2673 = vmatpush1.msra.mxu0 0.0
      %2674 = vmatprep.subr.mxu0 0.0
      %2675 = vmatpush1.msra.mxu0 0.0
      %2676 = vmatprep.subr.mxu0 0.0
      %2677 = vmatpush1.msra.mxu0 0.0
      %2678 = vmatprep.subr.mxu0 0.0
      %2679 = vmatpush1.msra.mxu0 0.0
      %2680 = vmatprep.subr.mxu0 0.0
      %2681 = vmatpush1.msra.mxu0 0.0
      %2682 = vmatprep.subr.mxu0 0.0
      %2683 = vmatpush1.msra.mxu0 0.0
      %2684 = vmatprep.subr.mxu0 0.0
      %2685 = vmatpush1.msra.mxu0 0.0
      %2686 = vmatprep.subr.mxu0 0.0
      %2687 = vmatpush1.msra.mxu0 0.0
      %2688 = vmatprep.subr.mxu0 0.0
      %2689 = vmatpush1.msra.mxu0 0.0
      %2690 = vmatprep.subr.mxu0 0.0
      %2691 = vmatpush1.msra.mxu0 0.0
      %2692 = vmatprep.subr.mxu0 0.0
      %2693 = vmatpush1.msra.mxu0 0.0
      %2694 = vmatprep.subr.mxu0 0.0
      %2695 = vmatpush1.msra.mxu0 0.0
      %2696 = vmatprep.subr.mxu0 0.0
      %2697 = vmatpush1.msra.mxu0 0.0
      %2698 = vmatprep.subr.mxu0 0.0
      %2699 = vmatpush1.msra.mxu0 0.0
      %2700 = vmatprep.subr.mxu0 0.0
      %2701 = vmatpush1.msra.mxu0 0.0
      %2702 = vmatprep.subr.mxu0 0.0
      %2703 = vmatpush1.msra.mxu0 0.0
      %2704 = vmatprep.subr.mxu0 0.0
      %2705 = vmatpush1.msra.mxu0 0.0
      %2706 = vmatprep.subr.mxu0 0.0
      %2707 = vmatpush1.msra.mxu0 0.0
      %2708 = vmatprep.mubr.f32.mxu0 0.0
      %2709 = vmatmul.mubr.f32.gmra.mrb[0].mxu0 %v2642
      %v2710 = vpop.f32.mrb[0].mxu0
      %v2711 = vadd.f32 0.0, %v2710
      %v2712 = vpop.f32.mrb[0].mxu0
      %2713 = vdwg.mxu0
      %v2714 = vadd.f32 %v2471, %v2711
      %2715 = vrot.lane.b32.xlu0 %v1987, 104
      %v2716 = vpop.permute.xlu0 %2715
      %2717 = vrot.lane.b32.xlu0 %v1987, 72
      %v2718 = vpop.permute.xlu0 %2717
      %v2719 = vsel %vm668, %v2716, 0
      %v2721 = vsel %vm668, %v2718, 0
      %2723 = vmatprep.subr.mxu0 0.0
      %2724 = vmatpush1.xpose.msra.mxu0 %v2721
      %2725 = vmatprep.subr.mxu0 0.0
      %2726 = vmatpush1.xpose.msra.mxu0 0.0
      %2727 = vmatprep.subr.mxu0 0.0
      %2728 = vmatpush1.xpose.msra.mxu0 0.0
      %2729 = vmatprep.subr.mxu0 0.0
      %2730 = vmatpush1.xpose.msra.mxu0 0.0
      %2731 = vmatprep.subr.mxu0 0.0
      %2732 = vmatpush1.xpose.msra.mxu0 0.0
      %2733 = vmatprep.subr.mxu0 0.0
      %2734 = vmatpush1.xpose.msra.mxu0 0.0
      %2735 = vmatprep.subr.mxu0 0.0
      %2736 = vmatpush1.xpose.msra.mxu0 0.0
      %2737 = vmatprep.subr.mxu0 0.0
      %2738 = vmatpush1.xpose.msra.mxu0 0.0
      %2739 = vmatprep.subr.mxu0 0.0
      %2740 = vmatpush1.xpose.msra.mxu0 0.0
      %2741 = vmatprep.subr.mxu0 0.0
      %2742 = vmatpush1.xpose.msra.mxu0 0.0
      %2743 = vmatprep.subr.mxu0 0.0
      %2744 = vmatpush1.xpose.msra.mxu0 0.0
      %2745 = vmatprep.subr.mxu0 0.0
      %2746 = vmatpush1.xpose.msra.mxu0 0.0
      %2747 = vmatprep.subr.mxu0 0.0
      %2748 = vmatpush1.xpose.msra.mxu0 0.0
      %2749 = vmatprep.subr.mxu0 0.0
      %2750 = vmatpush1.xpose.msra.mxu0 0.0
      %2751 = vmatprep.subr.mxu0 0.0
      %2752 = vmatpush1.xpose.msra.mxu0 0.0
      %2753 = vmatprep.subr.mxu0 0.0
      %2754 = vmatpush1.xpose.msra.mxu0 0.0
      %2755 = vmatprep.subr.mxu0 0.0
      %2756 = vmatpush1.xpose.msra.mxu0 0.0
      %2757 = vmatprep.subr.mxu0 0.0
      %2758 = vmatpush1.xpose.msra.mxu0 0.0
      %2759 = vmatprep.subr.mxu0 0.0
      %2760 = vmatpush1.xpose.msra.mxu0 0.0
      %2761 = vmatprep.subr.mxu0 0.0
      %2762 = vmatpush1.xpose.msra.mxu0 0.0
      %2763 = vmatprep.subr.mxu0 0.0
      %2764 = vmatpush1.xpose.msra.mxu0 0.0
      %2765 = vmatprep.subr.mxu0 0.0
      %2766 = vmatpush1.xpose.msra.mxu0 0.0
      %2767 = vmatprep.subr.mxu0 0.0
      %2768 = vmatpush1.xpose.msra.mxu0 0.0
      %2769 = vmatprep.subr.mxu0 0.0
      %2770 = vmatpush1.xpose.msra.mxu0 0.0
      %2771 = vmatprep.subr.mxu0 0.0
      %2772 = vmatpush1.xpose.msra.mxu0 0.0
      %2773 = vmatprep.subr.mxu0 0.0
      %2774 = vmatpush1.xpose.msra.mxu0 0.0
      %2775 = vmatprep.subr.mxu0 0.0
      %2776 = vmatpush1.xpose.msra.mxu0 0.0
      %2777 = vmatprep.subr.mxu0 0.0
      %2778 = vmatpush1.xpose.msra.mxu0 0.0
      %2779 = vmatprep.subr.mxu0 0.0
      %2780 = vmatpush1.xpose.msra.mxu0 0.0
      %2781 = vmatprep.subr.mxu0 0.0
      %2782 = vmatpush1.xpose.msra.mxu0 0.0
      %2783 = vmatprep.subr.mxu0 0.0
      %2784 = vmatpush1.xpose.msra.mxu0 0.0
      %2785 = vmatprep.subr.mxu0 0.0
      %2786 = vmatpush1.xpose.msra.mxu0 0.0
      %2787 = vmatprep.mubr.f32.mxu0 0.0
      %2788 = vmatmul.mubr.f32.gmra.mrb[0].mxu0 %v2719
      %v2789 = vpop.f32.mrb[0].mxu0
      %v2790 = vadd.f32 0.0, %v2789
      %v2791 = vpop.f32.mrb[0].mxu0
      %2792 = vdwg.mxu0
      %v2793 = vmul.f32 %v2790, 0.35355338
      %v2794 = vsel %vm744, %v2793, -inf
      %2795 = vmax.xlane.f32.xlu0 %v2794
      %v2796 = vpop.xlane.xlu0 %2795
      %v2797 = vsub.f32 %v2793, %v2796
      %v2798 = vmul.f32 %v2797, 1.442695
      %v2799 = vpow.pop %v2798
      %v2800 = vsel %vm744, %v2799, 0.0
      %2801 = vadd.xlane.f32.xlu0 %v2800
      %v2802 = vpop.xlane.xlu0 %2801
      %v2803 = vrcp.pop %v2802
      %v2804 = vmul.f32 %v2799, %v2803
      %2805 = vrot.lane.b32.xlu0 %v1987, 40
      %v2806 = vpop.permute.xlu0 %2805
      %v2808 = vsel %vm758, %v2804, 0
      %v2810 = vsel %vm762, %v2806, 0
      %2812 = vmatprep.subr.mxu0 0.0
      %2813 = vmatpush1.msra.mxu0 %v2810
      %2814 = vmatprep.subr.mxu0 0.0
      %2815 = vmatpush1.msra.mxu0 0.0
      %2816 = vmatprep.subr.mxu0 0.0
      %2817 = vmatpush1.msra.mxu0 0.0
      %2818 = vmatprep.subr.mxu0 0.0
      %2819 = vmatpush1.msra.mxu0 0.0
      %2820 = vmatprep.subr.mxu0 0.0
      %2821 = vmatpush1.msra.mxu0 0.0
      %2822 = vmatprep.subr.mxu0 0.0
      %2823 = vmatpush1.msra.mxu0 0.0
      %2824 = vmatprep.subr.mxu0 0.0
      %2825 = vmatpush1.msra.mxu0 0.0
      %2826 = vmatprep.subr.mxu0 0.0
      %2827 = vmatpush1.msra.mxu0 0.0
      %2828 = vmatprep.subr.mxu0 0.0
      %2829 = vmatpush1.msra.mxu0 0.0
      %2830 = vmatprep.subr.mxu0 0.0
      %2831 = vmatpush1.msra.mxu0 0.0
      %2832 = vmatprep.subr.mxu0 0.0
      %2833 = vmatpush1.msra.mxu0 0.0
      %2834 = vmatprep.subr.mxu0 0.0
      %2835 = vmatpush1.msra.mxu0 0.0
      %2836 = vmatprep.subr.mxu0 0.0
      %2837 = vmatpush1.msra.mxu0 0.0
      %2838 = vmatprep.subr.mxu0 0.0
      %2839 = vmatpush1.msra.mxu0 0.0
      %2840 = vmatprep.subr.mxu0 0.0
      %2841 = vmatpush1.msra.mxu0 0.0
      %2842 = vmatprep.subr.mxu0 0.0
      %2843 = vmatpush1.msra.mxu0 0.0
      %2844 = vmatprep.subr.mxu0 0.0
      %2845 = vmatpush1.msra.mxu0 0.0
      %2846 = vmatprep.subr.mxu0 0.0
      %2847 = vmatpush1.msra.mxu0 0.0
      %2848 = vmatprep.subr.mxu0 0.0
      %2849 = vmatpush1.msra.mxu0 0.0
      %2850 = vmatprep.subr.mxu0 0.0
      %2851 = vmatpush1.msra.mxu0 0.0
      %2852 = vmatprep.subr.mxu0 0.0
      %2853 = vmatpush1.msra.mxu0 0.0
      %2854 = vmatprep.subr.mxu0 0.0
      %2855 = vmatpush1.msra.mxu0 0.0
      %2856 = vmatprep.subr.mxu0 0.0
      %2857 = vmatpush1.msra.mxu0 0.0
      %2858 = vmatprep.subr.mxu0 0.0
      %2859 = vmatpush1.msra.mxu0 0.0
      %2860 = vmatprep.subr.mxu0 0.0
      %2861 = vmatpush1.msra.mxu0 0.0
      %2862 = vmatprep.subr.mxu0 0.0
      %2863 = vmatpush1.msra.mxu0 0.0
      %2864 = vmatprep.subr.mxu0 0.0
      %2865 = vmatpush1.msra.mxu0 0.0
      %2866 = vmatprep.subr.mxu0 0.0
      %2867 = vmatpush1.msra.mxu0 0.0
      %2868 = vmatprep.subr.mxu0 0.0
      %2869 = vmatpush1.msra.mxu0 0.0
      %2870 = vmatprep.subr.mxu0 0.0
      %2871 = vmatpush1.msra.mxu0 0.0
      %2872 = vmatprep.subr.mxu0 0.0
      %2873 = vmatpush1.msra.mxu0 0.0
      %2874 = vmatprep.subr.mxu0 0.0
      %2875 = vmatpush1.msra.mxu0 0.0
      %2876 = vmatprep.mubr.f32.mxu0 0.0
      %2877 = vmatmul.mubr.f32.gmra.mrb[0].mxu0 %v2808
      %v2878 = vpop.f32.mrb[0].mxu0
      %v2879 = vadd.f32 0.0, %v2878
      %v2880 = vpop.f32.mrb[0].mxu0
      %2881 = vdwg.mxu0
      %v2883 = vsel %vm668, %v2879, 0
      %2885 = vmatprep.subr.mxu0 0.0
      %2886 = vmatpush1.msra.mxu0 %v1994
      %2887 = vmatprep.subr.mxu0 0.0
      %2888 = vmatpush1.msra.mxu0 0.0
      %2889 = vmatprep.subr.mxu0 0.0
      %2890 = vmatpush1.msra.mxu0 0.0
      %2891 = vmatprep.subr.mxu0 0.0
      %2892 = vmatpush1.msra.mxu0 0.0
      %2893 = vmatprep.subr.mxu0 0.0
      %2894 = vmatpush1.msra.mxu0 0.0
      %2895 = vmatprep.subr.mxu0 0.0
      %2896 = vmatpush1.msra.mxu0 0.0
      %2897 = vmatprep.subr.mxu0 0.0
      %2898 = vmatpush1.msra.mxu0 0.0
      %2899 = vmatprep.subr.mxu0 0.0
      %2900 = vmatpush1.msra.mxu0 0.0
      %2901 = vmatprep.subr.mxu0 0.0
      %2902 = vmatpush1.msra.mxu0 0.0
      %2903 = vmatprep.subr.mxu0 0.0
      %2904 = vmatpush1.msra.mxu0 0.0
      %2905 = vmatprep.subr.mxu0 0.0
      %2906 = vmatpush1.msra.mxu0 0.0
      %2907 = vmatprep.subr.mxu0 0.0
      %2908 = vmatpush1.msra.mxu0 0.0
      %2909 = vmatprep.subr.mxu0 0.0
      %2910 = vmatpush1.msra.mxu0 0.0
      %2911 = vmatprep.subr.mxu0 0.0
      %2912 = vmatpush1.msra.mxu0 0.0
      %2913 = vmatprep.subr.mxu0 0.0
      %2914 = vmatpush1.msra.mxu0 0.0
      %2915 = vmatprep.subr.mxu0 0.0
      %2916 = vmatpush1.msra.mxu0 0.0
      %2917 = vmatprep.subr.mxu0 0.0
      %2918 = vmatpush1.msra.mxu0 0.0
      %2919 = vmatprep.subr.mxu0 0.0
      %2920 = vmatpush1.msra.mxu0 0.0
      %2921 = vmatprep.subr.mxu0 0.0
      %2922 = vmatpush1.msra.mxu0 0.0
      %2923 = vmatprep.subr.mxu0 0.0
      %2924 = vmatpush1.msra.mxu0 0.0
      %2925 = vmatprep.subr.mxu0 0.0
      %2926 = vmatpush1.msra.mxu0 0.0
      %2927 = vmatprep.subr.mxu0 0.0
      %2928 = vmatpush1.msra.mxu0 0.0
      %2929 = vmatprep.subr.mxu0 0.0
      %2930 = vmatpush1.msra.mxu0 0.0
      %2931 = vmatprep.subr.mxu0 0.0
      %2932 = vmatpush1.msra.mxu0 0.0
      %2933 = vmatprep.subr.mxu0 0.0
      %2934 = vmatpush1.msra.mxu0 0.0
      %2935 = vmatprep.subr.mxu0 0.0
      %2936 = vmatpush1.msra.mxu0 0.0
      %2937 = vmatprep.subr.mxu0 0.0
      %2938 = vmatpush1.msra.mxu0 0.0
      %2939 = vmatprep.subr.mxu0 0.0
      %2940 = vmatpush1.msra.mxu0 0.0
      %2941 = vmatprep.subr.mxu0 0.0
      %2942 = vmatpush1.msra.mxu0 0.0
      %2943 = vmatprep.subr.mxu0 0.0
      %2944 = vmatpush1.msra.mxu0 0.0
      %2945 = vmatprep.subr.mxu0 0.0
      %2946 = vmatpush1.msra.mxu0 0.0
      %2947 = vmatprep.subr.mxu0 0.0
      %2948 = vmatpush1.msra.mxu0 0.0
      %2949 = vmatprep.mubr.f32.mxu0 0.0
      %2950 = vmatmul.mubr.f32.gmra.mrb[0].mxu0 %v2883
      %v2951 = vpop.f32.mrb[0].mxu0
      %v2952 = vadd.f32 0.0, %v2951
      %v2953 = vpop.f32.mrb[0].mxu0
      %2954 = vdwg.mxu0
      %v2955 = vadd.f32 %v2714, %v2952
      %v2956 = vadd.f32 %v1872, %v2955
      %s2957 = scalar_lea.vmem %s6, 1
      %v2958 = vld [vmem:[%s2957] sm:$0x1]
      %v2960 = vlaneseq
      %v2961 = vshrl.u32 %v2960, 7
      %v2962 = vsub.s32 0, %v2961
      %v2963 = vrot.slane %v2958, %v2962
      %v2965 = vadd.f32 %v2956, %v2963
      %s2966 = scalar_lea.vmem %s7, 1
      %v2967 = vld [vmem:[%s2966] sm:$0x1]
      %s2968 = scalar_lea.vmem %s8, 1
      %v2969 = vld [vmem:[%s2968] sm:$0x1]
      %v2970 = vsel %vm547, %v2965, 0.0
      %2971 = vadd.xlane.f32.xlu0 %v2970
      %v2972 = vpop.xlane.xlu0 %2971
      %v2973 = vmul.f32 %v2972, %v551
      %v2974 = vsub.f32 %v2965, %v2973
      %v2975 = vmul.f32 %v2974, %v2974
      %v2976 = vsel %vm547, %v2975, 0.0
      %2977 = vadd.xlane.f32.xlu0 %v2976
      %v2978 = vpop.xlane.xlu0 %2977
      %v2979 = vmul.f32 %v2978, %v551
      %v2980 = vadd.f32 %v2979, 1e-05
      %v2981 = vrsqrt.pop %v2980
      %v2982 = vmul.f32 %v2974, %v2981
      %v2984 = vlaneseq
      %v2985 = vshrl.u32 %v2984, 7
      %v2986 = vsub.s32 0, %v2985
      %v2987 = vrot.slane %v2967, %v2986
      %v2989 = vmul.f32 %v2982, %v2987
      %v2991 = vlaneseq
      %v2992 = vshrl.u32 %v2991, 7
      %v2993 = vsub.s32 0, %v2992
      %v2994 = vrot.slane %v2969, %v2993
      %v2996 = vadd.f32 %v2989, %v2994
      %s2997 = scalar_lea.vmem %s9, 32
      %v2998 = vld [vmem:[%s2997] sm:$0xff]
      %v2999 = vld [vmem:[%s2997 + $0x8] sm:$0xff]
      %v3000 = vld [vmem:[%s2997 + $0x10] sm:$0xff]
      %v3001 = vld [vmem:[%s2997 + $0x18] sm:$0xff]
      %s3002 = scalar_lea.vmem %s10, 1
      %v3003 = vld [vmem:[%s3002] sm:$0x1]
      %v3005 = vlaneseq
      %v3006 = vshrl.u32 %v3005, 7
      %v3007 = vsub.s32 0, %v3006
      %v3008 = vrot.slane %v3003, %v3007
      %v3011 = vsel %vm587, %v2996, 0
      %3013 = vmatprep.subr.mxu0 0.0
      %3014 = vmatpush1.msra.mxu0 %v2998
      %3015 = vmatprep.subr.mxu0 0.0
      %3016 = vmatpush1.msra.mxu0 %v2999
      %3017 = vmatprep.subr.mxu0 0.0
      %3018 = vmatpush1.msra.mxu0 %v3000
      %3019 = vmatprep.subr.mxu0 0.0
      %3020 = vmatpush1.msra.mxu0 %v3001
      %3021 = vmatprep.subr.mxu0 0.0
      %3022 = vmatpush1.msra.mxu0 0.0
      %3023 = vmatprep.subr.mxu0 0.0
      %3024 = vmatpush1.msra.mxu0 0.0
      %3025 = vmatprep.subr.mxu0 0.0
      %3026 = vmatpush1.msra.mxu0 0.0
      %3027 = vmatprep.subr.mxu0 0.0
      %3028 = vmatpush1.msra.mxu0 0.0
      %3029 = vmatprep.subr.mxu0 0.0
      %3030 = vmatpush1.msra.mxu0 0.0
      %3031 = vmatprep.subr.mxu0 0.0
      %3032 = vmatpush1.msra.mxu0 0.0
      %3033 = vmatprep.subr.mxu0 0.0
      %3034 = vmatpush1.msra.mxu0 0.0
      %3035 = vmatprep.subr.mxu0 0.0
      %3036 = vmatpush1.msra.mxu0 0.0
      %3037 = vmatprep.subr.mxu0 0.0
      %3038 = vmatpush1.msra.mxu0 0.0
      %3039 = vmatprep.subr.mxu0 0.0
      %3040 = vmatpush1.msra.mxu0 0.0
      %3041 = vmatprep.subr.mxu0 0.0
      %3042 = vmatpush1.msra.mxu0 0.0
      %3043 = vmatprep.subr.mxu0 0.0
      %3044 = vmatpush1.msra.mxu0 0.0
      %3045 = vmatprep.subr.mxu0 0.0
      %3046 = vmatpush1.msra.mxu0 0.0
      %3047 = vmatprep.subr.mxu0 0.0
      %3048 = vmatpush1.msra.mxu0 0.0
      %3049 = vmatprep.subr.mxu0 0.0
      %3050 = vmatpush1.msra.mxu0 0.0
      %3051 = vmatprep.subr.mxu0 0.0
      %3052 = vmatpush1.msra.mxu0 0.0
      %3053 = vmatprep.subr.mxu0 0.0
      %3054 = vmatpush1.msra.mxu0 0.0
      %3055 = vmatprep.subr.mxu0 0.0
      %3056 = vmatpush1.msra.mxu0 0.0
      %3057 = vmatprep.subr.mxu0 0.0
      %3058 = vmatpush1.msra.mxu0 0.0
      %3059 = vmatprep.subr.mxu0 0.0
      %3060 = vmatpush1.msra.mxu0 0.0
      %3061 = vmatprep.subr.mxu0 0.0
      %3062 = vmatpush1.msra.mxu0 0.0
      %3063 = vmatprep.subr.mxu0 0.0
      %3064 = vmatpush1.msra.mxu0 0.0
      %3065 = vmatprep.subr.mxu0 0.0
      %3066 = vmatpush1.msra.mxu0 0.0
      %3067 = vmatprep.subr.mxu0 0.0
      %3068 = vmatpush1.msra.mxu0 0.0
      %3069 = vmatprep.subr.mxu0 0.0
      %3070 = vmatpush1.msra.mxu0 0.0
      %3071 = vmatprep.subr.mxu0 0.0
      %3072 = vmatpush1.msra.mxu0 0.0
      %3073 = vmatprep.subr.mxu0 0.0
      %3074 = vmatpush1.msra.mxu0 0.0
      %3075 = vmatprep.subr.mxu0 0.0
      %3076 = vmatpush1.msra.mxu0 0.0
      %3077 = vmatprep.mubr.f32.mxu0 0.0
      %3078 = vmatmul.mubr.f32.gmra.mrb[0].mxu0 %v3011
      %v3079 = vpop.f32.mrb[0].mxu0
      %v3080 = vadd.f32 %v3008, %v3079
      %v3081 = vpop.f32.mrb[0].mxu0
      %3082 = vdwg.mxu0
      %v3083 = vmul.f32 %v3080, 0.5
      %v3084 = vmul.f32 %v3080, 0.70710677
      %vm3085 = vcmp.ge.f32.partialorder %v3084, 0.0
      %v3086 = vsel %vm3085, 1.0, -1.0
      %v3087 = vand.u32 2147483647, %v3084
      %v3088 = vmul.f32 %v3087, 0.3275911
      %v3089 = vadd.f32 %v3088, 1.0
      %v3090 = vrcp.pop %v3089
      %v3091 = vmul.f32 1.0, %v3090
      %v3092 = vmul.f32 %v3091, 1.0614054
      %v3093 = vadd.f32 %v3092, -1.4531521
      %v3094 = vmul.f32 %v3093, %v3091
      %v3095 = vadd.f32 %v3094, 1.4214138
      %v3096 = vmul.f32 %v3095, %v3091
      %v3097 = vadd.f32 %v3096, -0.28449672
      %v3098 = vmul.f32 %v3097, %v3091
      %v3099 = vadd.f32 %v3098, 0.2548296
      %v3100 = vmul.f32 %v3099, %v3091
      %v3101 = vsub.f32 0.0, %v3087
      %v3102 = vmul.f32 %v3101, %v3087
      %v3103 = vmul.f32 %v3102, 1.442695
      %v3104 = vpow.pop %v3103
      %v3105 = vmul.f32 %v3100, %v3104
      %v3106 = vsub.f32 1.0, %v3105
      %v3107 = vmul.f32 %v3086, %v3106
      %v3108 = vadd.f32 %v3107, 1.0
      %v3109 = vmul.f32 %v3083, %v3108
      %s3110 = scalar_lea.vmem %s11, 128
      %v3111 = vld [vmem:[%s3110] sm:$0xff]
      %v3112 = vld [vmem:[%s3110 + $0x8] sm:$0xff]
      %v3113 = vld [vmem:[%s3110 + $0x10] sm:$0xff]
      %v3114 = vld [vmem:[%s3110 + $0x18] sm:$0xff]
      %v3115 = vld [vmem:[%s3110 + $0x20] sm:$0xff]
      %v3116 = vld [vmem:[%s3110 + $0x28] sm:$0xff]
      %v3117 = vld [vmem:[%s3110 + $0x30] sm:$0xff]
      %v3118 = vld [vmem:[%s3110 + $0x38] sm:$0xff]
      %v3119 = vld [vmem:[%s3110 + $0x40] sm:$0xff]
      %v3120 = vld [vmem:[%s3110 + $0x48] sm:$0xff]
      %v3121 = vld [vmem:[%s3110 + $0x50] sm:$0xff]
      %v3122 = vld [vmem:[%s3110 + $0x58] sm:$0xff]
      %v3123 = vld [vmem:[%s3110 + $0x60] sm:$0xff]
      %v3124 = vld [vmem:[%s3110 + $0x68] sm:$0xff]
      %v3125 = vld [vmem:[%s3110 + $0x70] sm:$0xff]
      %v3126 = vld [vmem:[%s3110 + $0x78] sm:$0xff]
      %s3127 = scalar_lea.vmem %s12, 1
      %v3128 = vld [vmem:[%s3127] sm:$0x1]
      %v3130 = vlaneseq
      %v3131 = vshrl.u32 %v3130, 7
      %v3132 = vsub.s32 0, %v3131
      %v3133 = vrot.slane %v3128, %v3132
      %3135 = vmatprep.subr.mxu0 0.0
      %3136 = vmatpush1.msra.mxu0 %v3111
      %3137 = vmatprep.subr.mxu0 0.0
      %3138 = vmatpush1.msra.mxu0 %v3112
      %3139 = vmatprep.subr.mxu0 0.0
      %3140 = vmatpush1.msra.mxu0 %v3113
      %3141 = vmatprep.subr.mxu0 0.0
      %3142 = vmatpush1.msra.mxu0 %v3114
      %3143 = vmatprep.subr.mxu0 0.0
      %3144 = vmatpush1.msra.mxu0 %v3115
      %3145 = vmatprep.subr.mxu0 0.0
      %3146 = vmatpush1.msra.mxu0 %v3116
      %3147 = vmatprep.subr.mxu0 0.0
      %3148 = vmatpush1.msra.mxu0 %v3117
      %3149 = vmatprep.subr.mxu0 0.0
      %3150 = vmatpush1.msra.mxu0 %v3118
      %3151 = vmatprep.subr.mxu0 0.0
      %3152 = vmatpush1.msra.mxu0 %v3119
      %3153 = vmatprep.subr.mxu0 0.0
      %3154 = vmatpush1.msra.mxu0 %v3120
      %3155 = vmatprep.subr.mxu0 0.0
      %3156 = vmatpush1.msra.mxu0 %v3121
      %3157 = vmatprep.subr.mxu0 0.0
      %3158 = vmatpush1.msra.mxu0 %v3122
      %3159 = vmatprep.subr.mxu0 0.0
      %3160 = vmatpush1.msra.mxu0 %v3123
      %3161 = vmatprep.subr.mxu0 0.0
      %3162 = vmatpush1.msra.mxu0 %v3124
      %3163 = vmatprep.subr.mxu0 0.0
      %3164 = vmatpush1.msra.mxu0 %v3125
      %3165 = vmatprep.subr.mxu0 0.0
      %3166 = vmatpush1.msra.mxu0 %v3126
      %3167 = vmatprep.subr.mxu0 0.0
      %3168 = vmatpush1.msra.mxu0 0.0
      %3169 = vmatprep.subr.mxu0 0.0
      %3170 = vmatpush1.msra.mxu0 0.0
      %3171 = vmatprep.subr.mxu0 0.0
      %3172 = vmatpush1.msra.mxu0 0.0
      %3173 = vmatprep.subr.mxu0 0.0
      %3174 = vmatpush1.msra.mxu0 0.0
      %3175 = vmatprep.subr.mxu0 0.0
      %3176 = vmatpush1.msra.mxu0 0.0
      %3177 = vmatprep.subr.mxu0 0.0
      %3178 = vmatpush1.msra.mxu0 0.0
      %3179 = vmatprep.subr.mxu0 0.0
      %3180 = vmatpush1.msra.mxu0 0.0
      %3181 = vmatprep.subr.mxu0 0.0
      %3182 = vmatpush1.msra.mxu0 0.0
      %3183 = vmatprep.subr.mxu0 0.0
      %3184 = vmatpush1.msra.mxu0 0.0
      %3185 = vmatprep.subr.mxu0 0.0
      %3186 = vmatpush1.msra.mxu0 0.0
      %3187 = vmatprep.subr.mxu0 0.0
      %3188 = vmatpush1.msra.mxu0 0.0
      %3189 = vmatprep.subr.mxu0 0.0
      %3190 = vmatpush1.msra.mxu0 0.0
      %3191 = vmatprep.subr.mxu0 0.0
      %3192 = vmatpush1.msra.mxu0 0.0
      %3193 = vmatprep.subr.mxu0 0.0
      %3194 = vmatpush1.msra.mxu0 0.0
      %3195 = vmatprep.subr.mxu0 0.0
      %3196 = vmatpush1.msra.mxu0 0.0
      %3197 = vmatprep.subr.mxu0 0.0
      %3198 = vmatpush1.msra.mxu0 0.0
      %3199 = vmatprep.mubr.f32.mxu0 0.0
      %3200 = vmatmul.mubr.f32.gmra.mrb[0].mxu0 %v3109
      %v3201 = vpop.f32.mrb[0].mxu0
      %v3202 = vadd.f32 %v3133, %v3201
      %v3203 = vpop.f32.mrb[0].mxu0
      %3204 = vdwg.mxu0
      %v3205 = vadd.f32 %v2965, %v3202
      %v3206 = vld [vmem:[%s13] sm:$0x1]
      %v3207 = vld [vmem:[%s14] sm:$0x1]
      %v3208 = vsel %vm547, %v3205, 0.0
      %3209 = vadd.xlane.f32.xlu0 %v3208
      %v3210 = vpop.xlane.xlu0 %3209
      %v3211 = vmul.f32 %v3210, %v551
      %v3212 = vsub.f32 %v3205, %v3211
      %v3213 = vmul.f32 %v3212, %v3212
      %v3214 = vsel %vm547, %v3213, 0.0
      %3215 = vadd.xlane.f32.xlu0 %v3214
      %v3216 = vpop.xlane.xlu0 %3215
      %v3217 = vmul.f32 %v3216, %v551
      %v3218 = vadd.f32 %v3217, 1e-05
      %v3219 = vrsqrt.pop %v3218
      %v3220 = vmul.f32 %v3212, %v3219
      %v3222 = vlaneseq
      %v3223 = vshrl.u32 %v3222, 7
      %v3224 = vsub.s32 0, %v3223
      %v3225 = vrot.slane %v3206, %v3224
      %v3227 = vmul.f32 %v3220, %v3225
      %v3229 = vlaneseq
      %v3230 = vshrl.u32 %v3229, 7
      %v3231 = vsub.s32 0, %v3230
      %v3232 = vrot.slane %v3207, %v3231
      %v3234 = vadd.f32 %v3227, %v3232
      %v3235 = vld [vmem:[%s15] sm:$0xff]
      %v3236 = vld [vmem:[%s15 + $0x8] sm:$0xff]
      %v3237 = vld [vmem:[%s15 + $0x10] sm:$0xff]
      %v3238 = vld [vmem:[%s15 + $0x18] sm:$0xff]
      %v3239 = vld [vmem:[%s16] sm:$0x1]
      %v3241 = vlaneseq
      %v3242 = vshrl.u32 %v3241, 7
      %v3243 = vsub.s32 0, %v3242
      %v3244 = vrot.slane %v3239, %v3243
      %v3247 = vsel %vm587, %v3234, 0
      %3249 = vmatprep.subr.mxu0 0.0
      %3250 = vmatpush1.msra.mxu0 %v3235
      %3251 = vmatprep.subr.mxu0 0.0
      %3252 = vmatpush1.msra.mxu0 %v3236
      %3253 = vmatprep.subr.mxu0 0.0
      %3254 = vmatpush1.msra.mxu0 %v3237
      %3255 = vmatprep.subr.mxu0 0.0
      %3256 = vmatpush1.msra.mxu0 %v3238
      %3257 = vmatprep.subr.mxu0 0.0
      %3258 = vmatpush1.msra.mxu0 0.0
      %3259 = vmatprep.subr.mxu0 0.0
      %3260 = vmatpush1.msra.mxu0 0.0
      %3261 = vmatprep.subr.mxu0 0.0
      %3262 = vmatpush1.msra.mxu0 0.0
      %3263 = vmatprep.subr.mxu0 0.0
      %3264 = vmatpush1.msra.mxu0 0.0
      %3265 = vmatprep.subr.mxu0 0.0
      %3266 = vmatpush1.msra.mxu0 0.0
      %3267 = vmatprep.subr.mxu0 0.0
      %3268 = vmatpush1.msra.mxu0 0.0
      %3269 = vmatprep.subr.mxu0 0.0
      %3270 = vmatpush1.msra.mxu0 0.0
      %3271 = vmatprep.subr.mxu0 0.0
      %3272 = vmatpush1.msra.mxu0 0.0
      %3273 = vmatprep.subr.mxu0 0.0
      %3274 = vmatpush1.msra.mxu0 0.0
      %3275 = vmatprep.subr.mxu0 0.0
      %3276 = vmatpush1.msra.mxu0 0.0
      %3277 = vmatprep.subr.mxu0 0.0
      %3278 = vmatpush1.msra.mxu0 0.0
      %3279 = vmatprep.subr.mxu0 0.0
      %3280 = vmatpush1.msra.mxu0 0.0
      %3281 = vmatprep.subr.mxu0 0.0
      %3282 = vmatpush1.msra.mxu0 0.0
      %3283 = vmatprep.subr.mxu0 0.0
      %3284 = vmatpush1.msra.mxu0 0.0
      %3285 = vmatprep.subr.mxu0 0.0
      %3286 = vmatpush1.msra.mxu0 0.0
      %3287 = vmatprep.subr.mxu0 0.0
      %3288 = vmatpush1.msra.mxu0 0.0
      %3289 = vmatprep.subr.mxu0 0.0
      %3290 = vmatpush1.msra.mxu0 0.0
      %3291 = vmatprep.subr.mxu0 0.0
      %3292 = vmatpush1.msra.mxu0 0.0
      %3293 = vmatprep.subr.mxu0 0.0
      %3294 = vmatpush1.msra.mxu0 0.0
      %3295 = vmatprep.subr.mxu0 0.0
      %3296 = vmatpush1.msra.mxu0 0.0
      %3297 = vmatprep.subr.mxu0 0.0
      %3298 = vmatpush1.msra.mxu0 0.0
      %3299 = vmatprep.subr.mxu0 0.0
      %3300 = vmatpush1.msra.mxu0 0.0
      %3301 = vmatprep.subr.mxu0 0.0
      %3302 = vmatpush1.msra.mxu0 0.0
      %3303 = vmatprep.subr.mxu0 0.0
      %3304 = vmatpush1.msra.mxu0 0.0
      %3305 = vmatprep.subr.mxu0 0.0
      %3306 = vmatpush1.msra.mxu0 0.0
      %3307 = vmatprep.subr.mxu0 0.0
      %3308 = vmatpush1.msra.mxu0 0.0
      %3309 = vmatprep.subr.mxu0 0.0
      %3310 = vmatpush1.msra.mxu0 0.0
      %3311 = vmatprep.subr.mxu0 0.0
      %3312 = vmatpush1.msra.mxu0 0.0
      %3313 = vmatprep.mubr.f32.mxu0 0.0
      %3314 = vmatmul.mubr.f32.gmra.mrb[0].mxu0 %v3247
      %v3315 = vpop.f32.mrb[0].mxu0
      %v3316 = vadd.f32 %v3244, %v3315
      %v3317 = vpop.f32.mrb[0].mxu0
      %3318 = vdwg.mxu0
      %3319 = vst.msk [vmem:[%s543] sm:$0x1f] %vm547, %v3316
      %p3320 = scmp.lt.s32.totalorder %s28, 1
      %s3321 = scalar_select %p3320, %s28, 1
      %s3322 = smul.addr %s3321, 8
      %s3323 = scalar_lea.vmem %s17, %s3322
      // Predicated region
      $region89: #{mae_teacher_forward.5} parent=87 // pred_check
        %p3324 = pneg %p408
      $region90: #{mae_teacher_forward.5} parent=87 // pred_check_branch
        %3326 = sbr.rel (%p3324) target = $region92
      $region91: #{mae_teacher_forward.5} parent=87 // pred_region
        _
      $region92: #{mae_teacher_forward.5} parent=87 // pred_fallthru
        _
    $region88: #{mae_teacher_forward.5} parent=5 // pred_fallthru
      _
    %p3327 = scmp.le.s32.totalorder 2, %s23
    // Predicated region
    $region93: #{mae_teacher_forward.5} parent=5 // pred_check
      %p3328 = pneg %p3327
    $region94: #{mae_teacher_forward.5} parent=5 // pred_check_branch
      %3330 = sbr.rel (%p3328) target = $region96
    $region95: #{mae_teacher_forward.5} parent=5 // pred_region
      %s3331 = ssub.s32 %s23, 2
      // Predicated region
      $region97: #{mae_teacher_forward.5} parent=95 // pred_check
        %p3332 = pneg %p414
      $region98: #{mae_teacher_forward.5} parent=95 // pred_check_branch
        %3334 = sbr.rel (%p3332) target = $region100
      $region99: #{mae_teacher_forward.5} parent=95 // pred_region
        %p3335 = scmp.lt.s32.totalorder %s29, 1
        %s3336 = scalar_select %p3335, %s29, 1
        %s3337 = smul.addr %s3336, 8
        %s3338 = scalar_lea.vmem %s17, %s3337
      $region100: #{mae_teacher_forward.5} parent=95 // pred_fallthru
        _
    $region96: #{mae_teacher_forward.5} parent=5 // pred_fallthru
      _
  $region6: #{mae_teacher_forward.5} parent=0 // loop_footer
    %s27 = sadd.s32 1, %s23
  $region7: #{mae_teacher_forward.5} parent=0 // loop_footer_branch
    %22 = sbr.rel target = $region3
  $region8: #{mae_teacher_forward.5} parent=0 // loop_exit
    _

// kernel: mae_teacher_forward.7
$region0: #{mae_teacher_forward.7}
  #allocation0 [shape = 'u32[]', space=smem, size = 0x4, offset = 0x4, fixed_abs, tag = 'smem constant byte address 0x4 - core index']
  #allocation1 [shape = 'u32[144,128]{1,0:T(1,128)}', space=vmem, size = 0x12000, scoped, tag = 'internal scratch']
  %s0 = inlined_call_operand.vmem [shape: f32[32,48], index: 0, kind: input, shape index: {}]
  %s1 = inlined_call_operand.vmem [shape: f32[32,48], index: 1, kind: input, shape index: {}]
  %s2 = inlined_call_operand.vmem [shape: f32[32,1], index: 2, kind: input, shape index: {}]
  %s3 = inlined_call_operand.hbm [shape: f32[1,1], index: 3, kind: output, shape index: {}]
  %s4 = sld [smem:[#allocation0]]
  $region22: #{mae_teacher_forward.7} parent=0
    _
  %s6 = ssub.s32 1, %s4
  %s7 = scalar_select 0, %s6, %s4
  $region1: #{mae_teacher_forward.7} parent=0
    #allocation2 [shape = 'u8[512]{0}', space=vmem, size = 0x400, scoped, tag = 'output window, operand 0, single buffered']
    #allocation3 [shape = 's32[1]{0}', space=sflag, size = 0x4, scoped, tag = 'scoped memory for mae_teacher_forward.7']
    %8 = vsyncpa [#allocation3], 0
    // Predicated region
    $region2: #{mae_teacher_forward.7} parent=1 // pred_check
      _
    $region3: #{mae_teacher_forward.7} parent=1 // pred_check_branch
      %10 = sbr.rel (0) target = $region5
    $region4: #{mae_teacher_forward.7} parent=1 // pred_region
      _
    $region5: #{mae_teacher_forward.7} parent=1 // pred_fallthru
      _
    // Predicated region
    $region6: #{mae_teacher_forward.7} parent=1 // pred_check
      _
    $region7: #{mae_teacher_forward.7} parent=1 // pred_check_branch
      %12 = sbr.rel (0) target = $region9
    $region8: #{mae_teacher_forward.7} parent=1 // pred_region
      _
    $region9: #{mae_teacher_forward.7} parent=1 // pred_fallthru
      _
    // Predicated region
    $region10: #{mae_teacher_forward.7} parent=1 // pred_check
      _
    $region11: #{mae_teacher_forward.7} parent=1 // pred_check_branch
      %14 = sbr.rel (0) target = $region13
    $region12: #{mae_teacher_forward.7} parent=1 // pred_region
      _
    $region13: #{mae_teacher_forward.7} parent=1 // pred_fallthru
      _
    %v15 = vld [vmem:[%s1] sm:$0xff]
    %v16 = vld [vmem:[%s1 + $0x8] sm:$0xff]
    %v17 = vld [vmem:[%s1 + $0x10] sm:$0xff]
    %v18 = vld [vmem:[%s1 + $0x18] sm:$0xff]
    %v19 = vld [vmem:[%s0] sm:$0xff]
    %v20 = vld [vmem:[%s0 + $0x8] sm:$0xff]
    %v21 = vld [vmem:[%s0 + $0x10] sm:$0xff]
    %v22 = vld [vmem:[%s0 + $0x18] sm:$0xff]
    %v23 = vsub.f32 %v19, %v15
    %v24 = vsub.f32 %v20, %v16
    %v25 = vsub.f32 %v21, %v17
    %v26 = vsub.f32 %v22, %v18
    %v27 = vmul.f32 %v23, %v23
    %v28 = vmul.f32 %v24, %v24
    %v29 = vmul.f32 %v25, %v25
    %v30 = vmul.f32 %v26, %v26
    %vm31 = vcmask 392192
    %v32 = vsel %vm31, %v27, 0.0
    %33 = vadd.xlane.f32.xlu0 %v32
    %v34 = vpop.xlane.xlu0 %33
    %v35 = vsel %vm31, %v28, 0.0
    %36 = vadd.xlane.f32.xlu0 %v35
    %v37 = vpop.xlane.xlu0 %36
    %v38 = vsel %vm31, %v29, 0.0
    %39 = vadd.xlane.f32.xlu0 %v38
    %v40 = vpop.xlane.xlu0 %39
    %v41 = vsel %vm31, %v30, 0.0
    %42 = vadd.xlane.f32.xlu0 %v41
    %v43 = vpop.xlane.xlu0 %42
    %v44 = vrcp.pop 48.0
    %v45 = vmul.f32 %v34, %v44
    %v46 = vmul.f32 %v37, %v44
    %v47 = vmul.f32 %v40, %v44
    %v48 = vmul.f32 %v43, %v44
    %v49 = vld [vmem:[%s2] sm:$0xff]
    %v50 = vld [vmem:[%s2 + $0x8] sm:$0xff]
    %v51 = vld [vmem:[%s2 + $0x10] sm:$0xff]
    %v52 = vld [vmem:[%s2 + $0x18] sm:$0xff]
    %v53 = vmul.f32 %v45, %v49
    %v54 = vmul.f32 %v46, %v50
    %v55 = vmul.f32 %v47, %v51
    %v56 = vmul.f32 %v48, %v52
    %vm57 = vcmask 7168
    %v58 = vsel %vm57, %v53, 0.0
    %v59 = vsel %vm57, %v54, 0.0
    %v60 = vadd.f32 %v58, %v59
    %v61 = vsel %vm57, %v55, 0.0
    %v62 = vadd.f32 %v60, %v61
    %v63 = vsel %vm57, %v56, 0.0
    %v64 = vadd.f32 %v62, %v63
    %65 = vadd.xlane.f32.xlu0 %v64
    %v66 = vpop.xlane.xlu0 %65
    %v67 = vrot.slane %v66, 4
    %v68 = vadd.f32 %v66, %v67
    %v69 = vrot.slane %v68, 2
    %v70 = vadd.f32 %v68, %v69
    %v71 = vrot.slane %v70, 1
    %v72 = vadd.f32 %v70, %v71
    %s73 = vtos %v72
    %v74 = vstv %s73
    %v75 = vsel %vm57, %v49, 0.0
    %v76 = vsel %vm57, %v50, 0.0
    %v77 = vadd.f32 %v75, %v76
    %v78 = vsel %vm57, %v51, 0.0
    %v79 = vadd.f32 %v77, %v78
    %v80 = vsel %vm57, %v52, 0.0
    %v81 = vadd.f32 %v79, %v80
    %82 = vadd.xlane.f32.xlu0 %v81
    %v83 = vpop.xlane.xlu0 %82
    %v84 = vrot.slane %v83, 4
    %v85 = vadd.f32 %v83, %v84
    %v86 = vrot.slane %v85, 2
    %v87 = vadd.f32 %v85, %v86
    %v88 = vrot.slane %v87, 1
    %v89 = vadd.f32 %v87, %v88
    %s90 = vtos %v89
    %v91 = vstv %s90
    %v92 = vrcp.pop %v91
    %v93 = vmul.f32 %v74, %v92
    %vm94 = vcmask 0
    %95 = vst.msk [vmem:[#allocation2] sm:$0x1] %vm94, %v93
    // Predicated region
    $region14: #{mae_teacher_forward.7} parent=1 // pred_check
      _
    $region15: #{mae_teacher_forward.7} parent=1 // pred_check_branch
      %97 = sbr.rel (0) target = $region17
    $region16: #{mae_teacher_forward.7} parent=1 // pred_region
      %s99 = ssub.s32 16, 16
      %100 = vsyncadd [#allocation3], %s99
      %s102 = sshll.u32 [#allocation2], 4
      %s103 = int_to_ptr.vmem [resolvable:$true] %s102
      %105 = dma.vmem_to_hbm [thread:$0]  %s103, 16, %s3, [#allocation3]
    $region17: #{mae_teacher_forward.7} parent=1 // pred_fallthru
      _
    // Predicated region
    $region18: #{mae_teacher_forward.7} parent=1 // pred_check
      _
    $region19: #{mae_teacher_forward.7} parent=1 // pred_check_branch
      %107 = sbr.rel (0) target = $region21
    $region20: #{mae_teacher_forward.7} parent=1 // pred_region
      %108 = dma.done [#allocation3], 16
    $region21: #{mae_teacher_forward.7} parent=1 // pred_fallthru
      _
    %109 = vsyncpa [#allocation3], 1

// kernel: mae_teacher_forward.6
$region0: #{mae_teacher_forward.6}
  #allocation0 [shape = 'u32[]', space=smem, size = 0x4, offset = 0x4, fixed_abs, tag = 'smem constant byte address 0x4 - core index']
  #allocation1 [shape = 'u32[144,128]{1,0:T(1,128)}', space=vmem, size = 0x12000, scoped, tag = 'internal scratch']
  %s0 = inlined_call_operand.vmem [shape: f32[2,17,32], index: 0, kind: input, shape index: {}]
  %s1 = inlined_call_operand.vmem [shape: f32[1,1,32], index: 1, kind: input, shape index: {}]
  %s2 = inlined_call_operand.vmem [shape: f32[1,1,32], index: 2, kind: input, shape index: {}]
  %s3 = inlined_call_operand.vmem [shape: f32[1,32,96], index: 3, kind: input, shape index: {}]
  %s4 = inlined_call_operand.vmem [shape: f32[1,1,96], index: 4, kind: input, shape index: {}]
  %s5 = inlined_call_operand.vmem [shape: f32[1,32,32], index: 5, kind: input, shape index: {}]
  %s6 = inlined_call_operand.vmem [shape: f32[1,1,32], index: 6, kind: input, shape index: {}]
  %s7 = inlined_call_operand.vmem [shape: f32[1,1,32], index: 7, kind: input, shape index: {}]
  %s8 = inlined_call_operand.vmem [shape: f32[1,1,32], index: 8, kind: input, shape index: {}]
  %s9 = inlined_call_operand.vmem [shape: f32[1,32,128], index: 9, kind: input, shape index: {}]
  %s10 = inlined_call_operand.vmem [shape: f32[1,1,128], index: 10, kind: input, shape index: {}]
  %s11 = inlined_call_operand.vmem [shape: f32[1,128,32], index: 11, kind: input, shape index: {}]
  %s12 = inlined_call_operand.vmem [shape: f32[1,1,32], index: 12, kind: input, shape index: {}]
  %s13 = inlined_call_operand.vmem [shape: f32[1,32], index: 13, kind: input, shape index: {}]
  %s14 = inlined_call_operand.vmem [shape: f32[1,32], index: 14, kind: input, shape index: {}]
  %s15 = inlined_call_operand.vmem [shape: f32[32,48], index: 15, kind: input, shape index: {}]
  %s16 = inlined_call_operand.vmem [shape: f32[1,48], index: 16, kind: input, shape index: {}]
  %s17 = inlined_call_operand.vmem [shape: f32[2,17,48], index: 17, kind: output, shape index: {}]
  %s18 = sld [smem:[#allocation0]]
  $region101: #{mae_teacher_forward.6} parent=0
    _
  %s20 = ssub.s32 1, %s18
  %s21 = scalar_select 0, %s20, %s18
  loop: start=0, step=1, limit=4
  $region2: #{mae_teacher_forward.6} parent=0 // loop_pre_header
    _
  $region3: #{mae_teacher_forward.6} parent=0 // loop_header
    %s23 = sphi 0, %s27
    %p24 = scmp.ge.s32.totalorder %s23, 4
    %s33 = sphi 0, %s35
    %s36 = sphi 0, %s33
    %s37 = sphi 0, %s36
    %s53 = sphi 0, %s37
    %s57 = sphi 0, %s57
    %s59 = sphi 0, %s57
    %s60 = sphi 0, %s59
    %s74 = sphi 0, %s60
    %s78 = sphi 0, %s78
    %s80 = sphi 0, %s78
    %s81 = sphi 0, %s80
    %s95 = sphi 0, %s81
    %s99 = sphi 0, %s99
    %s101 = sphi 0, %s99
    %s102 = sphi 0, %s101
    %s116 = sphi 0, %s102
    %s120 = sphi 0, %s120
    %s122 = sphi 0, %s120
    %s123 = sphi 0, %s122
    %s137 = sphi 0, %s123
    %s141 = sphi 0, %s141
    %s143 = sphi 0, %s141
    %s144 = sphi 0, %s143
    %s158 = sphi 0, %s144
    %s162 = sphi 0, %s162
    %s164 = sphi 0, %s162
    %s165 = sphi 0, %s164
    %s179 = sphi 0, %s165
    %s183 = sphi 0, %s183
    %s185 = sphi 0, %s183
    %s186 = sphi 0, %s185
    %s200 = sphi 0, %s186
    %s204 = sphi 0, %s204
    %s206 = sphi 0, %s204
    %s207 = sphi 0, %s206
    %s221 = sphi 0, %s207
    %s225 = sphi 0, %s225
    %s227 = sphi 0, %s225
    %s228 = sphi 0, %s227
    %s242 = sphi 0, %s228
    %s246 = sphi 0, %s246
    %s248 = sphi 0, %s246
    %s249 = sphi 0, %s248
    %s263 = sphi 0, %s249
    %s267 = sphi 0, %s267
    %s269 = sphi 0, %s267
    %s270 = sphi 0, %s269
    %s284 = sphi 0, %s270
    %s288 = sphi 0, %s288
    %s290 = sphi 0, %s288
    %s291 = sphi 0, %s290
    %s305 = sphi 0, %s291
    %s309 = sphi 0, %s309
    %s311 = sphi 0, %s309
    %s312 = sphi 0, %s311
    %s326 = sphi 0, %s312
    %s330 = sphi 0, %s330
    %s332 = sphi 0, %s330
    %s333 = sphi 0, %s332
    %s347 = sphi 0, %s333
    %s351 = sphi 0, %s351
    %s353 = sphi 0, %s351
    %s354 = sphi 0, %s353
    %s368 = sphi 0, %s354
    %s372 = sphi 0, %s372
    %s374 = sphi 0, %s372
    %s375 = sphi 0, %s374
    %s389 = sphi 0, %s375
    %s395 = sphi 0, %s397
    %s398 = sphi 0, %s395
    %s399 = sphi 0, %s398
    %s415 = sphi 0, %s399
  $region4: #{mae_teacher_forward.6} parent=0 // loop_header_branch
    %26 = sbr.rel (%p24) target = $region8
  $region5: #{mae_teacher_forward.6} parent=0 // loop_body
    %s28 = ssub.s32 %s23, 1
    %s29 = ssub.s32 %s23, 2
    %s30 = sadd.s32 %s23, 1
    %s31 = ssub.s32 %s23, %s30
    %p32 = scmp.eq.s32.totalorder %s31, 0
    %s34 = sadd.s32 %s33, 1
    %s35 = scalar_select %p32, %s33, %s34
    %p38 = pneg %p32
    %p39 = scmp.eq.s32.totalorder %s23, 1
    %p40 = por %p38, %p39
    %p41 = scmp.ne.s32.totalorder %s33, %s36
    %p42 = scmp.eq.s32.totalorder %s23, 0
    %p43 = por %p41, %p42
    %p44 = scmp.ne.s32.totalorder %s33, %s36
    %p45 = scmp.eq.s32.totalorder %s28, 1
    %p46 = por %p44, %p45
    %p47 = scmp.ne.s32.totalorder %s36, %s37
    %p48 = scmp.eq.s32.totalorder %s28, 0
    %p49 = por %p47, %p48
    %p50 = scmp.ne.s32.totalorder %s36, %s37
    %p51 = scmp.eq.s32.totalorder %s29, 1
    %p52 = por %p50, %p51
    %p54 = scmp.ne.s32.totalorder %s37, %s53
    %p55 = scmp.eq.s32.totalorder %s29, 0
    %p56 = por %p54, %p55
    %s58 = sadd.s32 %s57, 1
    %p61 = scmp.eq.s32.totalorder %s23, 1
    %p62 = scmp.ne.s32.totalorder %s57, %s59
    %p63 = scmp.eq.s32.totalorder %s23, 0
    %p64 = por %p62, %p63
    %p65 = scmp.ne.s32.totalorder %s57, %s59
    %p66 = scmp.eq.s32.totalorder %s28, 1
    %p67 = por %p65, %p66
    %p68 = scmp.ne.s32.totalorder %s59, %s60
    %p69 = scmp.eq.s32.totalorder %s28, 0
    %p70 = por %p68, %p69
    %p71 = scmp.ne.s32.totalorder %s59, %s60
    %p72 = scmp.eq.s32.totalorder %s29, 1
    %p73 = por %p71, %p72
    %p75 = scmp.ne.s32.totalorder %s60, %s74
    %p76 = scmp.eq.s32.totalorder %s29, 0
    %p77 = por %p75, %p76
    %s79 = sadd.s32 %s78, 1
    %p82 = scmp.eq.s32.totalorder %s23, 1
    %p83 = scmp.ne.s32.totalorder %s78, %s80
    %p84 = scmp.eq.s32.totalorder %s23, 0
    %p85 = por %p83, %p84
    %p86 = scmp.ne.s32.totalorder %s78, %s80
    %p87 = scmp.eq.s32.totalorder %s28, 1
    %p88 = por %p86, %p87
    %p89 = scmp.ne.s32.totalorder %s80, %s81
    %p90 = scmp.eq.s32.totalorder %s28, 0
    %p91 = por %p89, %p90
    %p92 = scmp.ne.s32.totalorder %s80, %s81
    %p93 = scmp.eq.s32.totalorder %s29, 1
    %p94 = por %p92, %p93
    %p96 = scmp.ne.s32.totalorder %s81, %s95
    %p97 = scmp.eq.s32.totalorder %s29, 0
    %p98 = por %p96, %p97
    %s100 = sadd.s32 %s99, 1
    %p103 = scmp.eq.s32.totalorder %s23, 1
    %p104 = scmp.ne.s32.totalorder %s99, %s101
    %p105 = scmp.eq.s32.totalorder %s23, 0
    %p106 = por %p104, %p105
    %p107 = scmp.ne.s32.totalorder %s99, %s101
    %p108 = scmp.eq.s32.totalorder %s28, 1
    %p109 = por %p107, %p108
    %p110 = scmp.ne.s32.totalorder %s101, %s102
    %p111 = scmp.eq.s32.totalorder %s28, 0
    %p112 = por %p110, %p111
    %p113 = scmp.ne.s32.totalorder %s101, %s102
    %p114 = scmp.eq.s32.totalorder %s29, 1
    %p115 = por %p113, %p114
    %p117 = scmp.ne.s32.totalorder %s102, %s116
    %p118 = scmp.eq.s32.totalorder %s29, 0
    %p119 = por %p117, %p118
    %s121 = sadd.s32 %s120, 1
    %p124 = scmp.eq.s32.totalorder %s23, 1
    %p125 = scmp.ne.s32.totalorder %s120, %s122
    %p126 = scmp.eq.s32.totalorder %s23, 0
    %p127 = por %p125, %p126
    %p128 = scmp.ne.s32.totalorder %s120, %s122
    %p129 = scmp.eq.s32.totalorder %s28, 1
    %p130 = por %p128, %p129
    %p131 = scmp.ne.s32.totalorder %s122, %s123
    %p132 = scmp.eq.s32.totalorder %s28, 0
    %p133 = por %p131, %p132
    %p134 = scmp.ne.s32.totalorder %s122, %s123
    %p135 = scmp.eq.s32.totalorder %s29, 1
    %p136 = por %p134, %p135
    %p138 = scmp.ne.s32.totalorder %s123, %s137
    %p139 = scmp.eq.s32.totalorder %s29, 0
    %p140 = por %p138, %p139
    %s142 = sadd.s32 %s141, 1
    %p145 = scmp.eq.s32.totalorder %s23, 1
    %p146 = scmp.ne.s32.totalorder %s141, %s143
    %p147 = scmp.eq.s32.totalorder %s23, 0
    %p148 = por %p146, %p147
    %p149 = scmp.ne.s32.totalorder %s141, %s143
    %p150 = scmp.eq.s32.totalorder %s28, 1
    %p151 = por %p149, %p150
    %p152 = scmp.ne.s32.totalorder %s143, %s144
    %p153 = scmp.eq.s32.totalorder %s28, 0
    %p154 = por %p152, %p153
    %p155 = scmp.ne.s32.totalorder %s143, %s144
    %p156 = scmp.eq.s32.totalorder %s29, 1
    %p157 = por %p155, %p156
    %p159 = scmp.ne.s32.totalorder %s144, %s158
    %p160 = scmp.eq.s32.totalorder %s29, 0
    %p161 = por %p159, %p160
    %s163 = sadd.s32 %s162, 1
    %p166 = scmp.eq.s32.totalorder %s23, 1
    %p167 = scmp.ne.s32.totalorder %s162, %s164
    %p168 = scmp.eq.s32.totalorder %s23, 0
    %p169 = por %p167, %p168
    %p170 = scmp.ne.s32.totalorder %s162, %s164
    %p171 = scmp.eq.s32.totalorder %s28, 1
    %p172 = por %p170, %p171
    %p173 = scmp.ne.s32.totalorder %s164, %s165
    %p174 = scmp.eq.s32.totalorder %s28, 0
    %p175 = por %p173, %p174
    %p176 = scmp.ne.s32.totalorder %s164, %s165
    %p177 = scmp.eq.s32.totalorder %s29, 1
    %p178 = por %p176, %p177
    %p180 = scmp.ne.s32.totalorder %s165, %s179
    %p181 = scmp.eq.s32.totalorder %s29, 0
    %p182 = por %p180, %p181
    %s184 = sadd.s32 %s183, 1
    %p187 = scmp.eq.s32.totalorder %s23, 1
    %p188 = scmp.ne.s32.totalorder %s183, %s185
    %p189 = scmp.eq.s32.totalorder %s23, 0
    %p190 = por %p188, %p189
    %p191 = scmp.ne.s32.totalorder %s183, %s185
    %p192 = scmp.eq.s32.totalorder %s28, 1
    %p193 = por %p191, %p192
    %p194 = scmp.ne.s32.totalorder %s185, %s186
    %p195 = scmp.eq.s32.totalorder %s28, 0
    %p196 = por %p194, %p195
    %p197 = scmp.ne.s32.totalorder %s185, %s186
    %p198 = scmp.eq.s32.totalorder %s29, 1
    %p199 = por %p197, %p198
    %p201 = scmp.ne.s32.totalorder %s186, %s200
    %p202 = scmp.eq.s32.totalorder %s29, 0
    %p203 = por %p201, %p202
    %s205 = sadd.s32 %s204, 1
    %p208 = scmp.eq.s32.totalorder %s23, 1
    %p209 = scmp.ne.s32.totalorder %s204, %s206
    %p210 = scmp.eq.s32.totalorder %s23, 0
    %p211 = por %p209, %p210
    %p212 = scmp.ne.s32.totalorder %s204, %s206
    %p213 = scmp.eq.s32.totalorder %s28, 1
    %p214 = por %p212, %p213
    %p215 = scmp.ne.s32.totalorder %s206, %s207
    %p216 = scmp.eq.s32.totalorder %s28, 0
    %p217 = por %p215, %p216
    %p218 = scmp.ne.s32.totalorder %s206, %s207
    %p219 = scmp.eq.s32.totalorder %s29, 1
    %p220 = por %p218, %p219
    %p222 = scmp.ne.s32.totalorder %s207, %s221
    %p223 = scmp.eq.s32.totalorder %s29, 0
    %p224 = por %p222, %p223
    %s226 = sadd.s32 %s225, 1
    %p229 = scmp.eq.s32.totalorder %s23, 1
    %p230 = scmp.ne.s32.totalorder %s225, %s227
    %p231 = scmp.eq.s32.totalorder %s23, 0
    %p232 = por %p230, %p231
    %p233 = scmp.ne.s32.totalorder %s225, %s227
    %p234 = scmp.eq.s32.totalorder %s28, 1
    %p235 = por %p233, %p234
    %p236 = scmp.ne.s32.totalorder %s227, %s228
    %p237 = scmp.eq.s32.totalorder %s28, 0
    %p238 = por %p236, %p237
    %p239 = scmp.ne.s32.totalorder %s227, %s228
    %p240 = scmp.eq.s32.totalorder %s29, 1
    %p241 = por %p239, %p240
    %p243 = scmp.ne.s32.totalorder %s228, %s242
    %p244 = scmp.eq.s32.totalorder %s29, 0
    %p245 = por %p243, %p244
    %s247 = sadd.s32 %s246, 1
    %p250 = scmp.eq.s32.totalorder %s23, 1
    %p251 = scmp.ne.s32.totalorder %s246, %s248
    %p252 = scmp.eq.s32.totalorder %s23, 0
    %p253 = por %p251, %p252
    %p254 = scmp.ne.s32.totalorder %s246, %s248
    %p255 = scmp.eq.s32.totalorder %s28, 1
    %p256 = por %p254, %p255
    %p257 = scmp.ne.s32.totalorder %s248, %s249
    %p258 = scmp.eq.s32.totalorder %s28, 0
    %p259 = por %p257, %p258
    %p260 = scmp.ne.s32.totalorder %s248, %s249
    %p261 = scmp.eq.s32.totalorder %s29, 1
    %p262 = por %p260, %p261
    %p264 = scmp.ne.s32.totalorder %s249, %s263
    %p265 = scmp.eq.s32.totalorder %s29, 0
    %p266 = por %p264, %p265
    %s268 = sadd.s32 %s267, 1
    %p271 = scmp.eq.s32.totalorder %s23, 1
    %p272 = scmp.ne.s32.totalorder %s267, %s269
    %p273 = scmp.eq.s32.totalorder %s23, 0
    %p274 = por %p272, %p273
    %p275 = scmp.ne.s32.totalorder %s267, %s269
    %p276 = scmp.eq.s32.totalorder %s28, 1
    %p277 = por %p275, %p276
    %p278 = scmp.ne.s32.totalorder %s269, %s270
    %p279 = scmp.eq.s32.totalorder %s28, 0
    %p280 = por %p278, %p279
    %p281 = scmp.ne.s32.totalorder %s269, %s270
    %p282 = scmp.eq.s32.totalorder %s29, 1
    %p283 = por %p281, %p282
    %p285 = scmp.ne.s32.totalorder %s270, %s284
    %p286 = scmp.eq.s32.totalorder %s29, 0
    %p287 = por %p285, %p286
    %s289 = sadd.s32 %s288, 1
    %p292 = scmp.eq.s32.totalorder %s23, 1
    %p293 = scmp.ne.s32.totalorder %s288, %s290
    %p294 = scmp.eq.s32.totalorder %s23, 0
    %p295 = por %p293, %p294
    %p296 = scmp.ne.s32.totalorder %s288, %s290
    %p297 = scmp.eq.s32.totalorder %s28, 1
    %p298 = por %p296, %p297
    %p299 = scmp.ne.s32.totalorder %s290, %s291
    %p300 = scmp.eq.s32.totalorder %s28, 0
    %p301 = por %p299, %p300
    %p302 = scmp.ne.s32.totalorder %s290, %s291
    %p303 = scmp.eq.s32.totalorder %s29, 1
    %p304 = por %p302, %p303
    %p306 = scmp.ne.s32.totalorder %s291, %s305
    %p307 = scmp.eq.s32.totalorder %s29, 0
    %p308 = por %p306, %p307
    %s310 = sadd.s32 %s309, 1
    %p313 = scmp.eq.s32.totalorder %s23, 1
    %p314 = scmp.ne.s32.totalorder %s309, %s311
    %p315 = scmp.eq.s32.totalorder %s23, 0
    %p316 = por %p314, %p315
    %p317 = scmp.ne.s32.totalorder %s309, %s311
    %p318 = scmp.eq.s32.totalorder %s28, 1
    %p319 = por %p317, %p318
    %p320 = scmp.ne.s32.totalorder %s311, %s312
    %p321 = scmp.eq.s32.totalorder %s28, 0
    %p322 = por %p320, %p321
    %p323 = scmp.ne.s32.totalorder %s311, %s312
    %p324 = scmp.eq.s32.totalorder %s29, 1
    %p325 = por %p323, %p324
    %p327 = scmp.ne.s32.totalorder %s312, %s326
    %p328 = scmp.eq.s32.totalorder %s29, 0
    %p329 = por %p327, %p328
    %s331 = sadd.s32 %s330, 1
    %p334 = scmp.eq.s32.totalorder %s23, 1
    %p335 = scmp.ne.s32.totalorder %s330, %s332
    %p336 = scmp.eq.s32.totalorder %s23, 0
    %p337 = por %p335, %p336
    %p338 = scmp.ne.s32.totalorder %s330, %s332
    %p339 = scmp.eq.s32.totalorder %s28, 1
    %p340 = por %p338, %p339
    %p341 = scmp.ne.s32.totalorder %s332, %s333
    %p342 = scmp.eq.s32.totalorder %s28, 0
    %p343 = por %p341, %p342
    %p344 = scmp.ne.s32.totalorder %s332, %s333
    %p345 = scmp.eq.s32.totalorder %s29, 1
    %p346 = por %p344, %p345
    %p348 = scmp.ne.s32.totalorder %s333, %s347
    %p349 = scmp.eq.s32.totalorder %s29, 0
    %p350 = por %p348, %p349
    %s352 = sadd.s32 %s351, 1
    %p355 = scmp.eq.s32.totalorder %s23, 1
    %p356 = scmp.ne.s32.totalorder %s351, %s353
    %p357 = scmp.eq.s32.totalorder %s23, 0
    %p358 = por %p356, %p357
    %p359 = scmp.ne.s32.totalorder %s351, %s353
    %p360 = scmp.eq.s32.totalorder %s28, 1
    %p361 = por %p359, %p360
    %p362 = scmp.ne.s32.totalorder %s353, %s354
    %p363 = scmp.eq.s32.totalorder %s28, 0
    %p364 = por %p362, %p363
    %p365 = scmp.ne.s32.totalorder %s353, %s354
    %p366 = scmp.eq.s32.totalorder %s29, 1
    %p367 = por %p365, %p366
    %p369 = scmp.ne.s32.totalorder %s354, %s368
    %p370 = scmp.eq.s32.totalorder %s29, 0
    %p371 = por %p369, %p370
    %s373 = sadd.s32 %s372, 1
    %p376 = scmp.eq.s32.totalorder %s23, 1
    %p377 = scmp.ne.s32.totalorder %s372, %s374
    %p378 = scmp.eq.s32.totalorder %s23, 0
    %p379 = por %p377, %p378
    %p380 = scmp.ne.s32.totalorder %s372, %s374
    %p381 = scmp.eq.s32.totalorder %s28, 1
    %p382 = por %p380, %p381
    %p383 = scmp.ne.s32.totalorder %s374, %s375
    %p384 = scmp.eq.s32.totalorder %s28, 0
    %p385 = por %p383, %p384
    %p386 = scmp.ne.s32.totalorder %s374, %s375
    %p387 = scmp.eq.s32.totalorder %s29, 1
    %p388 = por %p386, %p387
    %p390 = scmp.ne.s32.totalorder %s375, %s389
    %p391 = scmp.eq.s32.totalorder %s29, 0
    %p392 = por %p390, %p391
    %s393 = ssub.s32 %s23, %s30
    %p394 = scmp.eq.s32.totalorder %s393, 0
    %s396 = sadd.s32 %s395, 1
    %s397 = scalar_select %p394, %s395, %s396
    %p400 = pneg %p394
    %p401 = scmp.eq.s32.totalorder %s23, 1
    %p402 = por %p400, %p401
    %p403 = scmp.ne.s32.totalorder %s395, %s398
    %p404 = scmp.eq.s32.totalorder %s23, 0
    %p405 = por %p403, %p404
    %p406 = scmp.ne.s32.totalorder %s395, %s398
    %p407 = scmp.eq.s32.totalorder %s28, 1
    %p408 = por %p406, %p407
    %p409 = scmp.ne.s32.totalorder %s398, %s399
    %p410 = scmp.eq.s32.totalorder %s28, 0
    %p411 = por %p409, %p410
    %p412 = scmp.ne.s32.totalorder %s398, %s399
    %p413 = scmp.eq.s32.totalorder %s29, 1
    %p414 = por %p412, %p413
    %p416 = scmp.ne.s32.totalorder %s399, %s415
    %p417 = scmp.eq.s32.totalorder %s29, 0
    %p418 = por %p416, %p417
    %p419 = scmp.le.s32.totalorder 1, %s23
    %p420 = scmp.lt.s32.totalorder %s23, 3
    %p421 = pnand %p419, %p420
    %p422 = pneg %p421
    // Predicated region
    $region9: #{mae_teacher_forward.6} parent=5 // pred_check
      _
    $region10: #{mae_teacher_forward.6} parent=5 // pred_check_branch
      %424 = sbr.rel (%p421) target = $region12
    $region11: #{mae_teacher_forward.6} parent=5 // pred_region
      %s425 = ssub.s32 %s23, 1
      // Predicated region
      $region13: #{mae_teacher_forward.6} parent=11 // pred_check
        %p426 = pneg %p70
      $region14: #{mae_teacher_forward.6} parent=11 // pred_check_branch
        %428 = sbr.rel (%p426) target = $region16
      $region15: #{mae_teacher_forward.6} parent=11 // pred_region
        _
      $region16: #{mae_teacher_forward.6} parent=11 // pred_fallthru
        _
      // Predicated region
      $region17: #{mae_teacher_forward.6} parent=11 // pred_check
        %p429 = pneg %p91
      $region18: #{mae_teacher_forward.6} parent=11 // pred_check_branch
        %431 = sbr.rel (%p429) target = $region20
      $region19: #{mae_teacher_forward.6} parent=11 // pred_region
        _
      $region20: #{mae_teacher_forward.6} parent=11 // pred_fallthru
        _
      // Predicated region
      $region21: #{mae_teacher_forward.6} parent=11 // pred_check
        %p432 = pneg %p112
      $region22: #{mae_teacher_forward.6} parent=11 // pred_check_branch
        %434 = sbr.rel (%p432) target = $region24
      $region23: #{mae_teacher_forward.6} parent=11 // pred_region
        _
      $region24: #{mae_teacher_forward.6} parent=11 // pred_fallthru
        _
      // Predicated region
      $region25: #{mae_teacher_forward.6} parent=11 // pred_check
        %p435 = pneg %p133
      $region26: #{mae_teacher_forward.6} parent=11 // pred_check_branch
        %437 = sbr.rel (%p435) target = $region28
      $region27: #{mae_teacher_forward.6} parent=11 // pred_region
        _
      $region28: #{mae_teacher_forward.6} parent=11 // pred_fallthru
        _
      // Predicated region
      $region29: #{mae_teacher_forward.6} parent=11 // pred_check
        %p438 = pneg %p154
      $region30: #{mae_teacher_forward.6} parent=11 // pred_check_branch
        %440 = sbr.rel (%p438) target = $region32
      $region31: #{mae_teacher_forward.6} parent=11 // pred_region
        _
      $region32: #{mae_teacher_forward.6} parent=11 // pred_fallthru
        _
      // Predicated region
      $region33: #{mae_teacher_forward.6} parent=11 // pred_check
        %p441 = pneg %p175
      $region34: #{mae_teacher_forward.6} parent=11 // pred_check_branch
        %443 = sbr.rel (%p441) target = $region36
      $region35: #{mae_teacher_forward.6} parent=11 // pred_region
        _
      $region36: #{mae_teacher_forward.6} parent=11 // pred_fallthru
        _
      // Predicated region
      $region37: #{mae_teacher_forward.6} parent=11 // pred_check
        %p444 = pneg %p196
      $region38: #{mae_teacher_forward.6} parent=11 // pred_check_branch
        %446 = sbr.rel (%p444) target = $region40
      $region39: #{mae_teacher_forward.6} parent=11 // pred_region
        _
      $region40: #{mae_teacher_forward.6} parent=11 // pred_fallthru
        _
      // Predicated region
      $region41: #{mae_teacher_forward.6} parent=11 // pred_check
        %p447 = pneg %p217
      $region42: #{mae_teacher_forward.6} parent=11 // pred_check_branch
        %449 = sbr.rel (%p447) target = $region44
      $region43: #{mae_teacher_forward.6} parent=11 // pred_region
        _
      $region44: #{mae_teacher_forward.6} parent=11 // pred_fallthru
        _
      // Predicated region
      $region45: #{mae_teacher_forward.6} parent=11 // pred_check
        %p450 = pneg %p238
      $region46: #{mae_teacher_forward.6} parent=11 // pred_check_branch
        %452 = sbr.rel (%p450) target = $region48
      $region47: #{mae_teacher_forward.6} parent=11 // pred_region
        _
      $region48: #{mae_teacher_forward.6} parent=11 // pred_fallthru
        _
      // Predicated region
      $region49: #{mae_teacher_forward.6} parent=11 // pred_check
        %p453 = pneg %p259
      $region50: #{mae_teacher_forward.6} parent=11 // pred_check_branch
        %455 = sbr.rel (%p453) target = $region52
      $region51: #{mae_teacher_forward.6} parent=11 // pred_region
        _
      $region52: #{mae_teacher_forward.6} parent=11 // pred_fallthru
        _
      // Predicated region
      $region53: #{mae_teacher_forward.6} parent=11 // pred_check
        %p456 = pneg %p280
      $region54: #{mae_teacher_forward.6} parent=11 // pred_check_branch
        %458 = sbr.rel (%p456) target = $region56
      $region55: #{mae_teacher_forward.6} parent=11 // pred_region
        _
      $region56: #{mae_teacher_forward.6} parent=11 // pred_fallthru
        _
      // Predicated region
      $region57: #{mae_teacher_forward.6} parent=11 // pred_check
        %p459 = pneg %p301
      $region58: #{mae_teacher_forward.6} parent=11 // pred_check_branch
        %461 = sbr.rel (%p459) target = $region60
      $region59: #{mae_teacher_forward.6} parent=11 // pred_region
        _
      $region60: #{mae_teacher_forward.6} parent=11 // pred_fallthru
        _
      // Predicated region
      $region61: #{mae_teacher_forward.6} parent=11 // pred_check
        %p462 = pneg %p322
      $region62: #{mae_teacher_forward.6} parent=11 // pred_check_branch
        %464 = sbr.rel (%p462) target = $region64
      $region63: #{mae_teacher_forward.6} parent=11 // pred_region
        _
      $region64: #{mae_teacher_forward.6} parent=11 // pred_fallthru
        _
      // Predicated region
      $region65: #{mae_teacher_forward.6} parent=11 // pred_check
        %p465 = pneg %p343
      $region66: #{mae_teacher_forward.6} parent=11 // pred_check_branch
        %467 = sbr.rel (%p465) target = $region68
      $region67: #{mae_teacher_forward.6} parent=11 // pred_region
        _
      $region68: #{mae_teacher_forward.6} parent=11 // pred_fallthru
        _
      // Predicated region
      $region69: #{mae_teacher_forward.6} parent=11 // pred_check
        %p468 = pneg %p364
      $region70: #{mae_teacher_forward.6} parent=11 // pred_check_branch
        %470 = sbr.rel (%p468) target = $region72
      $region71: #{mae_teacher_forward.6} parent=11 // pred_region
        _
      $region72: #{mae_teacher_forward.6} parent=11 // pred_fallthru
        _
      // Predicated region
      $region73: #{mae_teacher_forward.6} parent=11 // pred_check
        %p471 = pneg %p385
      $region74: #{mae_teacher_forward.6} parent=11 // pred_check_branch
        %473 = sbr.rel (%p471) target = $region76
      $region75: #{mae_teacher_forward.6} parent=11 // pred_region
        _
      $region76: #{mae_teacher_forward.6} parent=11 // pred_fallthru
        _
    $region12: #{mae_teacher_forward.6} parent=5 // pred_fallthru
      _
    %p474 = scmp.lt.s32.totalorder %s23, 2
    // Predicated region
    $region77: #{mae_teacher_forward.6} parent=5 // pred_check
      %p475 = pneg %p474
    $region78: #{mae_teacher_forward.6} parent=5 // pred_check_branch
      %477 = sbr.rel (%p475) target = $region80
    $region79: #{mae_teacher_forward.6} parent=5 // pred_region
      // Predicated region
      $region81: #{mae_teacher_forward.6} parent=79 // pred_check
        %p478 = pneg %p43
      $region82: #{mae_teacher_forward.6} parent=79 // pred_check_branch
        %480 = sbr.rel (%p478) target = $region84
      $region83: #{mae_teacher_forward.6} parent=79 // pred_region
        %p481 = scmp.lt.s32.totalorder %s23, 1
        %s482 = scalar_select %p481, %s23, 1
        %s483 = smul.addr %s482, 3
        %s484 = smul.addr %s483, 8
        %s485 = scalar_lea.vmem %s0, %s484
      $region84: #{mae_teacher_forward.6} parent=79 // pred_fallthru
        _
    $region80: #{mae_teacher_forward.6} parent=5 // pred_fallthru
      _
    %p486 = scmp.le.s32.totalorder 1, %s23
    %p487 = scmp.lt.s32.totalorder %s23, 3
    %p488 = pnand %p486, %p487
    %p489 = pneg %p488
    // Predicated region
    $region85: #{mae_teacher_forward.6} parent=5 // pred_check
      _
    $region86: #{mae_teacher_forward.6} parent=5 // pred_check_branch
      %491 = sbr.rel (%p488) target = $region88
    $region87: #{mae_teacher_forward.6} parent=5 // pred_region
      %s492 = ssub.s32 %s23, 1
      %p493 = scmp.lt.s32.totalorder %s28, 1
      %s494 = scalar_select %p493, %s28, 1
      %s495 = smul.addr %s494, 3
      %s496 = smul.addr %s495, 8
      %s497 = scalar_lea.vmem %s0, %s496
      %p498 = pneg %p49
      %p499 = pneg %p46
      %p500 = pneg %p70
      %p501 = pneg %p67
      %p502 = pneg %p91
      %p503 = pneg %p88
      %p504 = pneg %p112
      %p505 = pneg %p109
      %p506 = pneg %p133
      %p507 = pneg %p130
      %p508 = pneg %p154
      %p509 = pneg %p151
      %p510 = pneg %p175
      %p511 = pneg %p172
      %p512 = pneg %p196
      %p513 = pneg %p193
      %p514 = pneg %p217
      %p515 = pneg %p214
      %p516 = pneg %p238
      %p517 = pneg %p235
      %p518 = pneg %p259
      %p519 = pneg %p256
      %p520 = pneg %p280
      %p521 = pneg %p277
      %p522 = pneg %p301
      %p523 = pneg %p298
      %p524 = pneg %p322
      %p525 = pneg %p319
      %p526 = pneg %p343
      %p527 = pneg %p340
      %p528 = pneg %p364
      %p529 = pneg %p361
      %p530 = pneg %p385
      %p531 = pneg %p382
      %p532 = pneg %p411
      %p533 = pneg %p408
      %p534 = scmp.lt.s32.totalorder %s28, 1
      %s535 = scalar_select %p534, %s28, 1
      %s536 = smul.addr %s535, 3
      %s537 = smul.addr %s536, 8
      %s538 = scalar_lea.vmem %s17, %s537
      %p539 = scmp.lt.s32.totalorder %s28, 1
      %s540 = scalar_select %p539, %s28, 1
      %s541 = smul.addr %s540, 3
      %s542 = smul.addr %s541, 8
      %s543 = scalar_lea.vmem %s0, %s542
      %p544 = scmp.lt.s32.totalorder %s28, 1
      %s545 = scalar_select %p544, %s28, 1
      %s546 = smul.addr %s545, 3
      %s547 = smul.addr %s546, 8
      %s548 = scalar_lea.vmem %s17, %s547
      %v549 = vld [vmem:[%s543] sm:$0xff]
      %v550 = vld [vmem:[%s543 + $0x8] sm:$0xff]
      %v551 = vld [vmem:[%s543 + $0x10] sm:$0x1]
      %v552 = vld [vmem:[%s1] sm:$0x1]
      %v553 = vld [vmem:[%s2] sm:$0x1]
      %vm554 = vcmask 261120
      %v555 = vsel %vm554, %v549, 0.0
      %556 = vadd.xlane.f32.xlu0 %v555
      %v557 = vpop.xlane.xlu0 %556
      %v558 = vsel %vm554, %v550, 0.0
      %559 = vadd.xlane.f32.xlu0 %v558
      %v560 = vpop.xlane.xlu0 %559
      %vm561 = vcmask 253952
      %v562 = vsel %vm561, %v551, 0.0
      %563 = vadd.xlane.f32.xlu0 %v562
      %v564 = vpop.xlane.xlu0 %563
      %v565 = vrcp.pop 32.0
      %v566 = vmul.f32 %v557, %v565
      %v567 = vmul.f32 %v560, %v565
      %v568 = vmul.f32 %v564, %v565
      %v569 = vsub.f32 %v549, %v566
      %v570 = vsub.f32 %v550, %v567
      %v571 = vsub.f32 %v551, %v568
      %v572 = vmul.f32 %v569, %v569
      %v573 = vmul.f32 %v570, %v570
      %v574 = vmul.f32 %v571, %v571
      %v575 = vsel %vm554, %v572, 0.0
      %576 = vadd.xlane.f32.xlu0 %v575
      %v577 = vpop.xlane.xlu0 %576
      %v578 = vsel %vm554, %v573, 0.0
      %579 = vadd.xlane.f32.xlu0 %v578
      %v580 = vpop.xlane.xlu0 %579
      %v581 = vsel %vm561, %v574, 0.0
      %582 = vadd.xlane.f32.xlu0 %v581
      %v583 = vpop.xlane.xlu0 %582
      %v584 = vmul.f32 %v577, %v565
      %v585 = vmul.f32 %v580, %v565
      %v586 = vmul.f32 %v583, %v565
      %v587 = vadd.f32 %v584, 1e-05
      %v588 = vadd.f32 %v585, 1e-05
      %v589 = vadd.f32 %v586, 1e-05
      %v590 = vrsqrt.pop %v587
      %v591 = vrsqrt.pop %v588
      %v592 = vrsqrt.pop %v589
      %v593 = vmul.f32 %v569, %v590
      %v594 = vmul.f32 %v570, %v591
      %v595 = vmul.f32 %v571, %v592
      %v597 = vlaneseq
      %v598 = vshrl.u32 %v597, 7
      %v599 = vsub.s32 0, %v598
      %v600 = vrot.slane %v552, %v599
      %v602 = vmul.f32 %v593, %v600
      %v603 = vmul.f32 %v594, %v600
      %v604 = vmul.f32 %v595, %v600
      %v606 = vlaneseq
      %v607 = vshrl.u32 %v606, 7
      %v608 = vsub.s32 0, %v607
      %v609 = vrot.slane %v553, %v608
      %v611 = vadd.f32 %v602, %v609
      %v612 = vadd.f32 %v603, %v609
      %v613 = vadd.f32 %v604, %v609
      %v614 = vld [vmem:[%s3] sm:$0xff]
      %v615 = vld [vmem:[%s3 + $0x8] sm:$0xff]
      %v616 = vld [vmem:[%s3 + $0x10] sm:$0xff]
      %v617 = vld [vmem:[%s3 + $0x18] sm:$0xff]
      %v618 = vld [vmem:[%s4] sm:$0x1]
      %v620 = vlaneseq
      %v621 = vshrl.u32 %v620, 7
      %v622 = vsub.s32 0, %v621
      %v623 = vrot.slane %v618, %v622
      %v626 = vsel %vm554, %v611, 0
      %v629 = vsel %vm554, %v612, 0
      %v632 = vsel %vm554, %v613, 0
      %634 = vmatprep.subr.mxu0 0.0
      %635 = vmatpush1.msra.mxu0 %v614
      %636 = vmatprep.subr.mxu0 0.0
      %637 = vmatpush1.msra.mxu0 %v615
      %638 = vmatprep.subr.mxu0 0.0
      %639 = vmatpush1.msra.mxu0 %v616
      %640 = vmatprep.subr.mxu0 0.0
      %641 = vmatpush1.msra.mxu0 %v617
      %642 = vmatprep.subr.mxu0 0.0
      %643 = vmatpush1.msra.mxu0 0.0
      %644 = vmatprep.subr.mxu0 0.0
      %645 = vmatpush1.msra.mxu0 0.0
      %646 = vmatprep.subr.mxu0 0.0
      %647 = vmatpush1.msra.mxu0 0.0
      %648 = vmatprep.subr.mxu0 0.0
      %649 = vmatpush1.msra.mxu0 0.0
      %650 = vmatprep.subr.mxu0 0.0
      %651 = vmatpush1.msra.mxu0 0.0
      %652 = vmatprep.subr.mxu0 0.0
      %653 = vmatpush1.msra.mxu0 0.0
      %654 = vmatprep.subr.mxu0 0.0
      %655 = vmatpush1.msra.mxu0 0.0
      %656 = vmatprep.subr.mxu0 0.0
      %657 = vmatpush1.msra.mxu0 0.0
      %658 = vmatprep.subr.mxu0 0.0
      %659 = vmatpush1.msra.mxu0 0.0
      %660 = vmatprep.subr.mxu0 0.0
      %661 = vmatpush1.msra.mxu0 0.0
      %662 = vmatprep.subr.mxu0 0.0
      %663 = vmatpush1.msra.mxu0 0.0
      %664 = vmatprep.subr.mxu0 0.0
      %665 = vmatpush1.msra.mxu0 0.0
      %666 = vmatprep.subr.mxu0 0.0
      %667 = vmatpush1.msra.mxu0 0.0
      %668 = vmatprep.subr.mxu0 0.0
      %669 = vmatpush1.msra.mxu0 0.0
      %670 = vmatprep.subr.mxu0 0.0
      %671 = vmatpush1.msra.mxu0 0.0
      %672 = vmatprep.subr.mxu0 0.0
      %673 = vmatpush1.msra.mxu0 0.0
      %674 = vmatprep.subr.mxu0 0.0
      %675 = vmatpush1.msra.mxu0 0.0
      %676 = vmatprep.subr.mxu0 0.0
      %677 = vmatpush1.msra.mxu0 0.0
      %678 = vmatprep.subr.mxu0 0.0
      %679 = vmatpush1.msra.mxu0 0.0
      %680 = vmatprep.subr.mxu0 0.0
      %681 = vmatpush1.msra.mxu0 0.0
      %682 = vmatprep.subr.mxu0 0.0
      %683 = vmatpush1.msra.mxu0 0.0
      %684 = vmatprep.subr.mxu0 0.0
      %685 = vmatpush1.msra.mxu0 0.0
      %686 = vmatprep.subr.mxu0 0.0
      %687 = vmatpush1.msra.mxu0 0.0
      %688 = vmatprep.subr.mxu0 0.0
      %689 = vmatpush1.msra.mxu0 0.0
      %690 = vmatprep.subr.mxu0 0.0
      %691 = vmatpush1.msra.mxu0 0.0
      %692 = vmatprep.subr.mxu0 0.0
      %693 = vmatpush1.msra.mxu0 0.0
      %694 = vmatprep.subr.mxu0 0.0
      %695 = vmatpush1.msra.mxu0 0.0
      %696 = vmatprep.subr.mxu0 0.0
      %697 = vmatpush1.msra.mxu0 0.0
      %698 = vmatprep.mubr.f32.mxu0 0.0
      %699 = vmatmul.mubr.f32.gmra.mrb[0].mxu0 %v626
      %v700 = vpop.f32.mrb[0].mxu0
      %v701 = vadd.f32 %v623, %v700
      %v702 = vpop.f32.mrb[0].mxu0
      %703 = vmatprep.mubr.f32.mxu0 0.0
      %704 = vmatmul.mubr.f32.gmra.mrb[0].mxu0 %v629
      %v705 = vpop.f32.mrb[0].mxu0
      %v706 = vadd.f32 %v623, %v705
      %v707 = vpop.f32.mrb[0].mxu0
      %708 = vmatprep.mubr.f32.mxu0 0.0
      %709 = vmatmul.mubr.f32.gmra.mrb[0].mxu0 %v632
      %v710 = vpop.f32.mrb[0].mxu0
      %v711 = vadd.f32 %v623, %v710
      %v712 = vpop.f32.mrb[0].mxu0
      %713 = vdwg.mxu0
      %v714 = vld [vmem:[%s5] sm:$0xff]
      %v715 = vld [vmem:[%s5 + $0x8] sm:$0xff]
      %v716 = vld [vmem:[%s5 + $0x10] sm:$0xff]
      %v717 = vld [vmem:[%s5 + $0x18] sm:$0xff]
      %721 = vrot.lane.b32.xlu0 %v701, 96
      %v722 = vpop.permute.xlu0 %721
      %723 = vrot.lane.b32.xlu0 %v706, 96
      %v724 = vpop.permute.xlu0 %723
      %725 = vrot.lane.b32.xlu0 %v711, 96
      %v726 = vpop.permute.xlu0 %725
      %vm727 = vcmask 64512
      %v728 = vsel %vm727, %v701, 0
      %v730 = vsel %vm727, %v706, 0
      %v732 = vsel %vm727, %v711, 0
      %v734 = vsel %vm727, %v722, 0
      %v736 = vsel %vm727, %v724, 0
      %v738 = vsel %vm727, %v726, 0
      %740 = vmatprep.subr.mxu0 0.0
      %741 = vmatpush1.xpose.msra.mxu0 %v734
      %742 = vmatprep.subr.mxu0 0.0
      %743 = vmatpush1.xpose.msra.mxu0 %v736
      %744 = vmatprep.subr.mxu0 0.0
      %745 = vmatpush1.xpose.msra.mxu0 %v738
      %746 = vmatprep.subr.mxu0 0.0
      %747 = vmatpush1.xpose.msra.mxu0 0.0
      %748 = vmatprep.subr.mxu0 0.0
      %749 = vmatpush1.xpose.msra.mxu0 0.0
      %750 = vmatprep.subr.mxu0 0.0
      %751 = vmatpush1.xpose.msra.mxu0 0.0
      %752 = vmatprep.subr.mxu0 0.0
      %753 = vmatpush1.xpose.msra.mxu0 0.0
      %754 = vmatprep.subr.mxu0 0.0
      %755 = vmatpush1.xpose.msra.mxu0 0.0
      %756 = vmatprep.subr.mxu0 0.0
      %757 = vmatpush1.xpose.msra.mxu0 0.0
      %758 = vmatprep.subr.mxu0 0.0
      %759 = vmatpush1.xpose.msra.mxu0 0.0
      %760 = vmatprep.subr.mxu0 0.0
      %761 = vmatpush1.xpose.msra.mxu0 0.0
      %762 = vmatprep.subr.mxu0 0.0
      %763 = vmatpush1.xpose.msra.mxu0 0.0
      %764 = vmatprep.subr.mxu0 0.0
      %765 = vmatpush1.xpose.msra.mxu0 0.0
      %766 = vmatprep.subr.mxu0 0.0
      %767 = vmatpush1.xpose.msra.mxu0 0.0
      %768 = vmatprep.subr.mxu0 0.0
      %769 = vmatpush1.xpose.msra.mxu0 0.0
      %770 = vmatprep.subr.mxu0 0.0
      %771 = vmatpush1.xpose.msra.mxu0 0.0
      %772 = vmatprep.subr.mxu0 0.0
      %773 = vmatpush1.xpose.msra.mxu0 0.0
      %774 = vmatprep.subr.mxu0 0.0
      %775 = vmatpush1.xpose.msra.mxu0 0.0
      %776 = vmatprep.subr.mxu0 0.0
      %777 = vmatpush1.xpose.msra.mxu0 0.0
      %778 = vmatprep.subr.mxu0 0.0
      %779 = vmatpush1.xpose.msra.mxu0 0.0
      %780 = vmatprep.subr.mxu0 0.0
      %781 = vmatpush1.xpose.msra.mxu0 0.0
      %782 = vmatprep.subr.mxu0 0.0
      %783 = vmatpush1.xpose.msra.mxu0 0.0
      %784 = vmatprep.subr.mxu0 0.0
      %785 = vmatpush1.xpose.msra.mxu0 0.0
      %786 = vmatprep.subr.mxu0 0.0
      %787 = vmatpush1.xpose.msra.mxu0 0.0
      %788 = vmatprep.subr.mxu0 0.0
      %789 = vmatpush1.xpose.msra.mxu0 0.0
      %790 = vmatprep.subr.mxu0 0.0
      %791 = vmatpush1.xpose.msra.mxu0 0.0
      %792 = vmatprep.subr.mxu0 0.0
      %793 = vmatpush1.xpose.msra.mxu0 0.0
      %794 = vmatprep.subr.mxu0 0.0
      %795 = vmatpush1.xpose.msra.mxu0 0.0
      %796 = vmatprep.subr.mxu0 0.0
      %797 = vmatpush1.xpose.msra.mxu0 0.0
      %798 = vmatprep.subr.mxu0 0.0
      %799 = vmatpush1.xpose.msra.mxu0 0.0
      %800 = vmatprep.subr.mxu0 0.0
      %801 = vmatpush1.xpose.msra.mxu0 0.0
      %802 = vmatprep.subr.mxu0 0.0
      %803 = vmatpush1.xpose.msra.mxu0 0.0
      %804 = vmatprep.mubr.f32.mxu0 0.0
      %805 = vmatmul.mubr.f32.gmra.mrb[0].mxu0 %v728
      %v806 = vpop.f32.mrb[0].mxu0
      %v807 = vadd.f32 0.0, %v806
      %v808 = vpop.f32.mrb[0].mxu0
      %809 = vmatprep.mubr.f32.mxu0 0.0
      %810 = vmatmul.mubr.f32.gmra.mrb[0].mxu0 %v730
      %v811 = vpop.f32.mrb[0].mxu0
      %v812 = vadd.f32 0.0, %v811
      %v813 = vpop.f32.mrb[0].mxu0
      %814 = vmatprep.mubr.f32.mxu0 0.0
      %815 = vmatmul.mubr.f32.gmra.mrb[0].mxu0 %v732
      %v816 = vpop.f32.mrb[0].mxu0
      %v817 = vadd.f32 0.0, %v816
      %v818 = vpop.f32.mrb[0].mxu0
      %819 = vdwg.mxu0
      %v820 = vmul.f32 %v807, 0.35355338
      %v821 = vmul.f32 %v812, 0.35355338
      %v822 = vmul.f32 %v817, 0.35355338
      %vm823 = vcmask 138240
      %v824 = vsel %vm823, %v820, -inf
      %825 = vmax.xlane.f32.xlu0 %v824
      %v826 = vpop.xlane.xlu0 %825
      %v827 = vsel %vm823, %v821, -inf
      %828 = vmax.xlane.f32.xlu0 %v827
      %v829 = vpop.xlane.xlu0 %828
      %vm830 = vcmask 131072
      %v831 = vsel %vm830, %v822, -inf
      %832 = vmax.xlane.f32.xlu0 %v831
      %v833 = vpop.xlane.xlu0 %832
      %v834 = vsub.f32 %v820, %v826
      %v835 = vsub.f32 %v821, %v829
      %v836 = vsub.f32 %v822, %v833
      %v837 = vmul.f32 %v834, 1.442695
      %v838 = vpow.pop %v837
      %v839 = vmul.f32 %v835, 1.442695
      %v840 = vpow.pop %v839
      %v841 = vmul.f32 %v836, 1.442695
      %v842 = vpow.pop %v841
      %v843 = vsel %vm823, %v838, 0.0
      %844 = vadd.xlane.f32.xlu0 %v843
      %v845 = vpop.xlane.xlu0 %844
      %v846 = vsel %vm823, %v840, 0.0
      %847 = vadd.xlane.f32.xlu0 %v846
      %v848 = vpop.xlane.xlu0 %847
      %v849 = vsel %vm830, %v842, 0.0
      %850 = vadd.xlane.f32.xlu0 %v849
      %v851 = vpop.xlane.xlu0 %850
      %v852 = vrcp.pop %v845
      %v853 = vrcp.pop %v848
      %v854 = vrcp.pop %v851
      %v855 = vmul.f32 %v838, %v852
      %v856 = vmul.f32 %v840, %v853
      %v857 = vmul.f32 %v842, %v854
      %858 = vrot.lane.b32.xlu0 %v701, 64
      %v859 = vpop.permute.xlu0 %858
      %860 = vrot.lane.b32.xlu0 %v706, 64
      %v861 = vpop.permute.xlu0 %860
      %862 = vrot.lane.b32.xlu0 %v711, 64
      %v863 = vpop.permute.xlu0 %862
      %v867 = vsel %vm823, %v855, 0
      %v870 = vsel %vm823, %v856, 0
      %v873 = vsel %vm823, %v857, 0
      %vm875 = vcmask 1040384
      %v876 = vsel %vm875, %v863, 0
      %878 = vmatprep.subr.mxu0 0.0
      %879 = vmatpush1.msra.mxu0 %v859
      %880 = vmatprep.subr.mxu0 0.0
      %881 = vmatpush1.msra.mxu0 %v861
      %882 = vmatprep.subr.mxu0 0.0
      %883 = vmatpush1.msra.mxu0 %v876
      %884 = vmatprep.subr.mxu0 0.0
      %885 = vmatpush1.msra.mxu0 0.0
      %886 = vmatprep.subr.mxu0 0.0
      %887 = vmatpush1.msra.mxu0 0.0
      %888 = vmatprep.subr.mxu0 0.0
      %889 = vmatpush1.msra.mxu0 0.0
      %890 = vmatprep.subr.mxu0 0.0
      %891 = vmatpush1.msra.mxu0 0.0
      %892 = vmatprep.subr.mxu0 0.0
      %893 = vmatpush1.msra.mxu0 0.0
      %894 = vmatprep.subr.mxu0 0.0
      %895 = vmatpush1.msra.mxu0 0.0
      %896 = vmatprep.subr.mxu0 0.0
      %897 = vmatpush1.msra.mxu0 0.0
      %898 = vmatprep.subr.mxu0 0.0
      %899 = vmatpush1.msra.mxu0 0.0
      %900 = vmatprep.subr.mxu0 0.0
      %901 = vmatpush1.msra.mxu0 0.0
      %902 = vmatprep.subr.mxu0 0.0
      %903 = vmatpush1.msra.mxu0 0.0
      %904 = vmatprep.subr.mxu0 0.0
      %905 = vmatpush1.msra.mxu0 0.0
      %906 = vmatprep.subr.mxu0 0.0
      %907 = vmatpush1.msra.mxu0 0.0
      %908 = vmatprep.subr.mxu0 0.0
      %909 = vmatpush1.msra.mxu0 0.0
      %910 = vmatprep.subr.mxu0 0.0
      %911 = vmatpush1.msra.mxu0 0.0
      %912 = vmatprep.subr.mxu0 0.0
      %913 = vmatpush1.msra.mxu0 0.0
      %914 = vmatprep.subr.mxu0 0.0
      %915 = vmatpush1.msra.mxu0 0.0
      %916 = vmatprep.subr.mxu0 0.0
      %917 = vmatpush1.msra.mxu0 0.0
      %918 = vmatprep.subr.mxu0 0.0
      %919 = vmatpush1.msra.mxu0 0.0
      %920 = vmatprep.subr.mxu0 0.0
      %921 = vmatpush1.msra.mxu0 0.0
      %922 = vmatprep.subr.mxu0 0.0
      %923 = vmatpush1.msra.mxu0 0.0
      %924 = vmatprep.subr.mxu0 0.0
      %925 = vmatpush1.msra.mxu0 0.0
      %926 = vmatprep.subr.mxu0 0.0
      %927 = vmatpush1.msra.mxu0 0.0
      %928 = vmatprep.subr.mxu0 0.0
      %929 = vmatpush1.msra.mxu0 0.0
      %930 = vmatprep.subr.mxu0 0.0
      %931 = vmatpush1.msra.mxu0 0.0
      %932 = vmatprep.subr.mxu0 0.0
      %933 = vmatpush1.msra.mxu0 0.0
      %934 = vmatprep.subr.mxu0 0.0
      %935 = vmatpush1.msra.mxu0 0.0
      %936 = vmatprep.subr.mxu0 0.0
      %937 = vmatpush1.msra.mxu0 0.0
      %938 = vmatprep.subr.mxu0 0.0
      %939 = vmatpush1.msra.mxu0 0.0
      %940 = vmatprep.subr.mxu0 0.0
      %941 = vmatpush1.msra.mxu0 0.0
      %942 = vmatprep.mubr.f32.mxu0 0.0
      %943 = vmatmul.mubr.f32.gmra.mrb[0].mxu0 %v867
      %v944 = vpop.f32.mrb[0].mxu0
      %v945 = vadd.f32 0.0, %v944
      %v946 = vpop.f32.mrb[0].mxu0
      %947 = vmatprep.mubr.f32.mxu0 0.0
      %948 = vmatmul.mubr.f32.gmra.mrb[0].mxu0 %v870
      %v949 = vpop.f32.mrb[0].mxu0
      %v950 = vadd.f32 0.0, %v949
      %v951 = vpop.f32.mrb[0].mxu0
      %952 = vmatprep.mubr.f32.mxu0 0.0
      %953 = vmatmul.mubr.f32.gmra.mrb[0].mxu0 %v873
      %v954 = vpop.f32.mrb[0].mxu0
      %v955 = vadd.f32 0.0, %v954
      %v956 = vpop.f32.mrb[0].mxu0
      %957 = vdwg.mxu0
      %958 = vrot.lane.b32.xlu0 %v701, 120
      %v959 = vpop.permute.xlu0 %958
      %960 = vrot.lane.b32.xlu0 %v706, 120
      %v961 = vpop.permute.xlu0 %960
      %962 = vrot.lane.b32.xlu0 %v711, 120
      %v963 = vpop.permute.xlu0 %962
      %964 = vrot.lane.b32.xlu0 %v701, 88
      %v965 = vpop.permute.xlu0 %964
      %966 = vrot.lane.b32.xlu0 %v706, 88
      %v967 = vpop.permute.xlu0 %966
      %968 = vrot.lane.b32.xlu0 %v711, 88
      %v969 = vpop.permute.xlu0 %968
      %v970 = vsel %vm727, %v959, 0
      %v972 = vsel %vm727, %v961, 0
      %v974 = vsel %vm727, %v963, 0
      %v976 = vsel %vm727, %v965, 0
      %v978 = vsel %vm727, %v967, 0
      %v980 = vsel %vm727, %v969, 0
      %982 = vmatprep.subr.mxu0 0.0
      %983 = vmatpush1.xpose.msra.mxu0 %v976
      %984 = vmatprep.subr.mxu0 0.0
      %985 = vmatpush1.xpose.msra.mxu0 %v978
      %986 = vmatprep.subr.mxu0 0.0
      %987 = vmatpush1.xpose.msra.mxu0 %v980
      %988 = vmatprep.subr.mxu0 0.0
      %989 = vmatpush1.xpose.msra.mxu0 0.0
      %990 = vmatprep.subr.mxu0 0.0
      %991 = vmatpush1.xpose.msra.mxu0 0.0
      %992 = vmatprep.subr.mxu0 0.0
      %993 = vmatpush1.xpose.msra.mxu0 0.0
      %994 = vmatprep.subr.mxu0 0.0
      %995 = vmatpush1.xpose.msra.mxu0 0.0
      %996 = vmatprep.subr.mxu0 0.0
      %997 = vmatpush1.xpose.msra.mxu0 0.0
      %998 = vmatprep.subr.mxu0 0.0
      %999 = vmatpush1.xpose.msra.mxu0 0.0
      %1000 = vmatprep.subr.mxu0 0.0
      %1001 = vmatpush1.xpose.msra.mxu0 0.0
      %1002 = vmatprep.subr.mxu0 0.0
      %1003 = vmatpush1.xpose.msra.mxu0 0.0
      %1004 = vmatprep.subr.mxu0 0.0
      %1005 = vmatpush1.xpose.msra.mxu0 0.0
      %1006 = vmatprep.subr.mxu0 0.0
      %1007 = vmatpush1.xpose.msra.mxu0 0.0
      %1008 = vmatprep.subr.mxu0 0.0
      %1009 = vmatpush1.xpose.msra.mxu0 0.0
      %1010 = vmatprep.subr.mxu0 0.0
      %1011 = vmatpush1.xpose.msra.mxu0 0.0
      %1012 = vmatprep.subr.mxu0 0.0
      %1013 = vmatpush1.xpose.msra.mxu0 0.0
      %1014 = vmatprep.subr.mxu0 0.0
      %1015 = vmatpush1.xpose.msra.mxu0 0.0
      %1016 = vmatprep.subr.mxu0 0.0
      %1017 = vmatpush1.xpose.msra.mxu0 0.0
      %1018 = vmatprep.subr.mxu0 0.0
      %1019 = vmatpush1.xpose.msra.mxu0 0.0
      %1020 = vmatprep.subr.mxu0 0.0
      %1021 = vmatpush1.xpose.msra.mxu0 0.0
      %1022 = vmatprep.subr.mxu0 0.0
      %1023 = vmatpush1.xpose.msra.mxu0 0.0
      %1024 = vmatprep.subr.mxu0 0.0
      %1025 = vmatpush1.xpose.msra.mxu0 0.0
      %1026 = vmatprep.subr.mxu0 0.0
      %1027 = vmatpush1.xpose.msra.mxu0 0.0
      %1028 = vmatprep.subr.mxu0 0.0
      %1029 = vmatpush1.xpose.msra.mxu0 0.0
      %1030 = vmatprep.subr.mxu0 0.0
      %1031 = vmatpush1.xpose.msra.mxu0 0.0
      %1032 = vmatprep.subr.mxu0 0.0
      %1033 = vmatpush1.xpose.msra.mxu0 0.0
      %1034 = vmatprep.subr.mxu0 0.0
      %1035 = vmatpush1.xpose.msra.mxu0 0.0
      %1036 = vmatprep.subr.mxu0 0.0
      %1037 = vmatpush1.xpose.msra.mxu0 0.0
      %1038 = vmatprep.subr.mxu0 0.0
      %1039 = vmatpush1.xpose.msra.mxu0 0.0
      %1040 = vmatprep.subr.mxu0 0.0
      %1041 = vmatpush1.xpose.msra.mxu0 0.0
      %1042 = vmatprep.subr.mxu0 0.0
      %1043 = vmatpush1.xpose.msra.mxu0 0.0
      %1044 = vmatprep.subr.mxu0 0.0
      %1045 = vmatpush1.xpose.msra.mxu0 0.0
      %1046 = vmatprep.mubr.f32.mxu0 0.0
      %1047 = vmatmul.mubr.f32.gmra.mrb[0].mxu0 %v970
      %v1048 = vpop.f32.mrb[0].mxu0
      %v1049 = vadd.f32 0.0, %v1048
      %v1050 = vpop.f32.mrb[0].mxu0
      %1051 = vmatprep.mubr.f32.mxu0 0.0
      %1052 = vmatmul.mubr.f32.gmra.mrb[0].mxu0 %v972
      %v1053 = vpop.f32.mrb[0].mxu0
      %v1054 = vadd.f32 0.0, %v1053
      %v1055 = vpop.f32.mrb[0].mxu0
      %1056 = vmatprep.mubr.f32.mxu0 0.0
      %1057 = vmatmul.mubr.f32.gmra.mrb[0].mxu0 %v974
      %v1058 = vpop.f32.mrb[0].mxu0
      %v1059 = vadd.f32 0.0, %v1058
      %v1060 = vpop.f32.mrb[0].mxu0
      %1061 = vdwg.mxu0
      %v1062 = vmul.f32 %v1049, 0.35355338
      %v1063 = vmul.f32 %v1054, 0.35355338
      %v1064 = vmul.f32 %v1059, 0.35355338
      %v1065 = vsel %vm823, %v1062, -inf
      %1066 = vmax.xlane.f32.xlu0 %v1065
      %v1067 = vpop.xlane.xlu0 %1066
      %v1068 = vsel %vm823, %v1063, -inf
      %1069 = vmax.xlane.f32.xlu0 %v1068
      %v1070 = vpop.xlane.xlu0 %1069
      %v1071 = vsel %vm830, %v1064, -inf
      %1072 = vmax.xlane.f32.xlu0 %v1071
      %v1073 = vpop.xlane.xlu0 %1072
      %v1074 = vsub.f32 %v1062, %v1067
      %v1075 = vsub.f32 %v1063, %v1070
      %v1076 = vsub.f32 %v1064, %v1073
      %v1077 = vmul.f32 %v1074, 1.442695
      %v1078 = vpow.pop %v1077
      %v1079 = vmul.f32 %v1075, 1.442695
      %v1080 = vpow.pop %v1079
      %v1081 = vmul.f32 %v1076, 1.442695
      %v1082 = vpow.pop %v1081
      %v1083 = vsel %vm823, %v1078, 0.0
      %1084 = vadd.xlane.f32.xlu0 %v1083
      %v1085 = vpop.xlane.xlu0 %1084
      %v1086 = vsel %vm823, %v1080, 0.0
      %1087 = vadd.xlane.f32.xlu0 %v1086
      %v1088 = vpop.xlane.xlu0 %1087
      %v1089 = vsel %vm830, %v1082, 0.0
      %1090 = vadd.xlane.f32.xlu0 %v1089
      %v1091 = vpop.xlane.xlu0 %1090
      %v1092 = vrcp.pop %v1085
      %v1093 = vrcp.pop %v1088
      %v1094 = vrcp.pop %v1091
      %v1095 = vmul.f32 %v1078, %v1092
      %v1096 = vmul.f32 %v1080, %v1093
      %v1097 = vmul.f32 %v1082, %v1094
      %1098 = vrot.lane.b32.xlu0 %v701, 56
      %v1099 = vpop.permute.xlu0 %1098
      %1100 = vrot.lane.b32.xlu0 %v706, 56
      %v1101 = vpop.permute.xlu0 %1100
      %1102 = vrot.lane.b32.xlu0 %v711, 56
      %v1103 = vpop.permute.xlu0 %1102
      %v1107 = vsel %vm823, %v1095, 0
      %v1110 = vsel %vm823, %v1096, 0
      %v1113 = vsel %vm823, %v1097, 0
      %v1115 = vsel %vm875, %v1103, 0
      %1117 = vmatprep.subr.mxu0 0.0
      %1118 = vmatpush1.msra.mxu0 %v1099
      %1119 = vmatprep.subr.mxu0 0.0
      %1120 = vmatpush1.msra.mxu0 %v1101
      %1121 = vmatprep.subr.mxu0 0.0
      %1122 = vmatpush1.msra.mxu0 %v1115
      %1123 = vmatprep.subr.mxu0 0.0
      %1124 = vmatpush1.msra.mxu0 0.0
      %1125 = vmatprep.subr.mxu0 0.0
      %1126 = vmatpush1.msra.mxu0 0.0
      %1127 = vmatprep.subr.mxu0 0.0
      %1128 = vmatpush1.msra.mxu0 0.0
      %1129 = vmatprep.subr.mxu0 0.0
      %1130 = vmatpush1.msra.mxu0 0.0
      %1131 = vmatprep.subr.mxu0 0.0
      %1132 = vmatpush1.msra.mxu0 0.0
      %1133 = vmatprep.subr.mxu0 0.0
      %1134 = vmatpush1.msra.mxu0 0.0
      %1135 = vmatprep.subr.mxu0 0.0
      %1136 = vmatpush1.msra.mxu0 0.0
      %1137 = vmatprep.subr.mxu0 0.0
      %1138 = vmatpush1.msra.mxu0 0.0
      %1139 = vmatprep.subr.mxu0 0.0
      %1140 = vmatpush1.msra.mxu0 0.0
      %1141 = vmatprep.subr.mxu0 0.0
      %1142 = vmatpush1.msra.mxu0 0.0
      %1143 = vmatprep.subr.mxu0 0.0
      %1144 = vmatpush1.msra.mxu0 0.0
      %1145 = vmatprep.subr.mxu0 0.0
      %1146 = vmatpush1.msra.mxu0 0.0
      %1147 = vmatprep.subr.mxu0 0.0
      %1148 = vmatpush1.msra.mxu0 0.0
      %1149 = vmatprep.subr.mxu0 0.0
      %1150 = vmatpush1.msra.mxu0 0.0
      %1151 = vmatprep.subr.mxu0 0.0
      %1152 = vmatpush1.msra.mxu0 0.0
      %1153 = vmatprep.subr.mxu0 0.0
      %1154 = vmatpush1.msra.mxu0 0.0
      %1155 = vmatprep.subr.mxu0 0.0
      %1156 = vmatpush1.msra.mxu0 0.0
      %1157 = vmatprep.subr.mxu0 0.0
      %1158 = vmatpush1.msra.mxu0 0.0
      %1159 = vmatprep.subr.mxu0 0.0
      %1160 = vmatpush1.msra.mxu0 0.0
      %1161 = vmatprep.subr.mxu0 0.0
      %1162 = vmatpush1.msra.mxu0 0.0
      %1163 = vmatprep.subr.mxu0 0.0
      %1164 = vmatpush1.msra.mxu0 0.0
      %1165 = vmatprep.subr.mxu0 0.0
      %1166 = vmatpush1.msra.mxu0 0.0
      %1167 = vmatprep.subr.mxu0 0.0
      %1168 = vmatpush1.msra.mxu0 0.0
      %1169 = vmatprep.subr.mxu0 0.0
      %1170 = vmatpush1.msra.mxu0 0.0
      %1171 = vmatprep.subr.mxu0 0.0
      %1172 = vmatpush1.msra.mxu0 0.0
      %1173 = vmatprep.subr.mxu0 0.0
      %1174 = vmatpush1.msra.mxu0 0.0
      %1175 = vmatprep.subr.mxu0 0.0
      %1176 = vmatpush1.msra.mxu0 0.0
      %1177 = vmatprep.subr.mxu0 0.0
      %1178 = vmatpush1.msra.mxu0 0.0
      %1179 = vmatprep.subr.mxu0 0.0
      %1180 = vmatpush1.msra.mxu0 0.0
      %1181 = vmatprep.mubr.f32.mxu0 0.0
      %1182 = vmatmul.mubr.f32.gmra.mrb[0].mxu0 %v1107
      %v1183 = vpop.f32.mrb[0].mxu0
      %v1184 = vadd.f32 0.0, %v1183
      %v1185 = vpop.f32.mrb[0].mxu0
      %1186 = vmatprep.mubr.f32.mxu0 0.0
      %1187 = vmatmul.mubr.f32.gmra.mrb[0].mxu0 %v1110
      %v1188 = vpop.f32.mrb[0].mxu0
      %v1189 = vadd.f32 0.0, %v1188
      %v1190 = vpop.f32.mrb[0].mxu0
      %1191 = vmatprep.mubr.f32.mxu0 0.0
      %1192 = vmatmul.mubr.f32.gmra.mrb[0].mxu0 %v1113
      %v1193 = vpop.f32.mrb[0].mxu0
      %v1194 = vadd.f32 0.0, %v1193
      %v1195 = vpop.f32.mrb[0].mxu0
      %1196 = vdwg.mxu0
      %v1198 = vsel %vm727, %v1184, 0
      %v1201 = vsel %vm727, %v1189, 0
      %v1204 = vsel %vm727, %v1194, 0
      %1206 = vmatprep.subr.mxu0 0.0
      %1207 = vmatpush1.msra.mxu0 %v715
      %1208 = vmatprep.subr.mxu0 0.0
      %1209 = vmatpush1.msra.mxu0 0.0
      %1210 = vmatprep.subr.mxu0 0.0
      %1211 = vmatpush1.msra.mxu0 0.0
      %1212 = vmatprep.subr.mxu0 0.0
      %1213 = vmatpush1.msra.mxu0 0.0
      %1214 = vmatprep.subr.mxu0 0.0
      %1215 = vmatpush1.msra.mxu0 0.0
      %1216 = vmatprep.subr.mxu0 0.0
      %1217 = vmatpush1.msra.mxu0 0.0
      %1218 = vmatprep.subr.mxu0 0.0
      %1219 = vmatpush1.msra.mxu0 0.0
      %1220 = vmatprep.subr.mxu0 0.0
      %1221 = vmatpush1.msra.mxu0 0.0
      %1222 = vmatprep.subr.mxu0 0.0
      %1223 = vmatpush1.msra.mxu0 0.0
      %1224 = vmatprep.subr.mxu0 0.0
      %1225 = vmatpush1.msra.mxu0 0.0
      %1226 = vmatprep.subr.mxu0 0.0
      %1227 = vmatpush1.msra.mxu0 0.0
      %1228 = vmatprep.subr.mxu0 0.0
      %1229 = vmatpush1.msra.mxu0 0.0
      %1230 = vmatprep.subr.mxu0 0.0
      %1231 = vmatpush1.msra.mxu0 0.0
      %1232 = vmatprep.subr.mxu0 0.0
      %1233 = vmatpush1.msra.mxu0 0.0
      %1234 = vmatprep.subr.mxu0 0.0
      %1235 = vmatpush1.msra.mxu0 0.0
      %1236 = vmatprep.subr.mxu0 0.0
      %1237 = vmatpush1.msra.mxu0 0.0
      %1238 = vmatprep.subr.mxu0 0.0
      %1239 = vmatpush1.msra.mxu0 0.0
      %1240 = vmatprep.subr.mxu0 0.0
      %1241 = vmatpush1.msra.mxu0 0.0
      %1242 = vmatprep.subr.mxu0 0.0
      %1243 = vmatpush1.msra.mxu0 0.0
      %1244 = vmatprep.subr.mxu0 0.0
      %1245 = vmatpush1.msra.mxu0 0.0
      %1246 = vmatprep.subr.mxu0 0.0
      %1247 = vmatpush1.msra.mxu0 0.0
      %1248 = vmatprep.subr.mxu0 0.0
      %1249 = vmatpush1.msra.mxu0 0.0
      %1250 = vmatprep.subr.mxu0 0.0
      %1251 = vmatpush1.msra.mxu0 0.0
      %1252 = vmatprep.subr.mxu0 0.0
      %1253 = vmatpush1.msra.mxu0 0.0
      %1254 = vmatprep.subr.mxu0 0.0
      %1255 = vmatpush1.msra.mxu0 0.0
      %1256 = vmatprep.subr.mxu0 0.0
      %1257 = vmatpush1.msra.mxu0 0.0
      %1258 = vmatprep.subr.mxu0 0.0
      %1259 = vmatpush1.msra.mxu0 0.0
      %1260 = vmatprep.subr.mxu0 0.0
      %1261 = vmatpush1.msra.mxu0 0.0
      %1262 = vmatprep.subr.mxu0 0.0
      %1263 = vmatpush1.msra.mxu0 0.0
      %1264 = vmatprep.subr.mxu0 0.0
      %1265 = vmatpush1.msra.mxu0 0.0
      %1266 = vmatprep.subr.mxu0 0.0
      %1267 = vmatpush1.msra.mxu0 0.0
      %1268 = vmatprep.subr.mxu0 0.0
      %1269 = vmatpush1.msra.mxu0 0.0
      %1270 = vmatprep.mubr.f32.mxu0 0.0
      %1271 = vmatmul.mubr.f32.gmra.mrb[0].mxu0 %v1198
      %v1272 = vpop.f32.mrb[0].mxu0
      %v1273 = vadd.f32 0.0, %v1272
      %v1274 = vpop.f32.mrb[0].mxu0
      %1275 = vmatprep.mubr.f32.mxu0 0.0
      %1276 = vmatmul.mubr.f32.gmra.mrb[0].mxu0 %v1201
      %v1277 = vpop.f32.mrb[0].mxu0
      %v1278 = vadd.f32 0.0, %v1277
      %v1279 = vpop.f32.mrb[0].mxu0
      %1280 = vmatprep.mubr.f32.mxu0 0.0
      %1281 = vmatmul.mubr.f32.gmra.mrb[0].mxu0 %v1204
      %v1282 = vpop.f32.mrb[0].mxu0
      %v1283 = vadd.f32 0.0, %v1282
      %v1284 = vpop.f32.mrb[0].mxu0
      %1285 = vdwg.mxu0
      %v1287 = vsel %vm727, %v945, 0
      %v1290 = vsel %vm727, %v950, 0
      %v1293 = vsel %vm727, %v955, 0
      %1295 = vmatprep.subr.mxu0 0.0
      %1296 = vmatpush1.msra.mxu0 %v714
      %1297 = vmatprep.subr.mxu0 0.0
      %1298 = vmatpush1.msra.mxu0 0.0
      %1299 = vmatprep.subr.mxu0 0.0
      %1300 = vmatpush1.msra.mxu0 0.0
      %1301 = vmatprep.subr.mxu0 0.0
      %1302 = vmatpush1.msra.mxu0 0.0
      %1303 = vmatprep.subr.mxu0 0.0
      %1304 = vmatpush1.msra.mxu0 0.0
      %1305 = vmatprep.subr.mxu0 0.0
      %1306 = vmatpush1.msra.mxu0 0.0
      %1307 = vmatprep.subr.mxu0 0.0
      %1308 = vmatpush1.msra.mxu0 0.0
      %1309 = vmatprep.subr.mxu0 0.0
      %1310 = vmatpush1.msra.mxu0 0.0
      %1311 = vmatprep.subr.mxu0 0.0
      %1312 = vmatpush1.msra.mxu0 0.0
      %1313 = vmatprep.subr.mxu0 0.0
      %1314 = vmatpush1.msra.mxu0 0.0
      %1315 = vmatprep.subr.mxu0 0.0
      %1316 = vmatpush1.msra.mxu0 0.0
      %1317 = vmatprep.subr.mxu0 0.0
      %1318 = vmatpush1.msra.mxu0 0.0
      %1319 = vmatprep.subr.mxu0 0.0
      %1320 = vmatpush1.msra.mxu0 0.0
      %1321 = vmatprep.subr.mxu0 0.0
      %1322 = vmatpush1.msra.mxu0 0.0
      %1323 = vmatprep.subr.mxu0 0.0
      %1324 = vmatpush1.msra.mxu0 0.0
      %1325 = vmatprep.subr.mxu0 0.0
      %1326 = vmatpush1.msra.mxu0 0.0
      %1327 = vmatprep.subr.mxu0 0.0
      %1328 = vmatpush1.msra.mxu0 0.0
      %1329 = vmatprep.subr.mxu0 0.0
      %1330 = vmatpush1.msra.mxu0 0.0
      %1331 = vmatprep.subr.mxu0 0.0
      %1332 = vmatpush1.msra.mxu0 0.0
      %1333 = vmatprep.subr.mxu0 0.0
      %1334 = vmatpush1.msra.mxu0 0.0
      %1335 = vmatprep.subr.mxu0 0.0
      %1336 = vmatpush1.msra.mxu0 0.0
      %1337 = vmatprep.subr.mxu0 0.0
      %1338 = vmatpush1.msra.mxu0 0.0
      %1339 = vmatprep.subr.mxu0 0.0
      %1340 = vmatpush1.msra.mxu0 0.0
      %1341 = vmatprep.subr.mxu0 0.0
      %1342 = vmatpush1.msra.mxu0 0.0
      %1343 = vmatprep.subr.mxu0 0.0
      %1344 = vmatpush1.msra.mxu0 0.0
      %1345 = vmatprep.subr.mxu0 0.0
      %1346 = vmatpush1.msra.mxu0 0.0
      %1347 = vmatprep.subr.mxu0 0.0
      %1348 = vmatpush1.msra.mxu0 0.0
      %1349 = vmatprep.subr.mxu0 0.0
      %1350 = vmatpush1.msra.mxu0 0.0
      %1351 = vmatprep.subr.mxu0 0.0
      %1352 = vmatpush1.msra.mxu0 0.0
      %1353 = vmatprep.subr.mxu0 0.0
      %1354 = vmatpush1.msra.mxu0 0.0
      %1355 = vmatprep.subr.mxu0 0.0
      %1356 = vmatpush1.msra.mxu0 0.0
      %1357 = vmatprep.subr.mxu0 0.0
      %1358 = vmatpush1.msra.mxu0 0.0
      %1359 = vmatprep.mubr.f32.mxu0 0.0
      %1360 = vmatmul.mubr.f32.gmra.mrb[0].mxu0 %v1287
      %v1361 = vpop.f32.mrb[0].mxu0
      %v1362 = vadd.f32 %v1273, %v1361
      %v1363 = vpop.f32.mrb[0].mxu0
      %1364 = vmatprep.mubr.f32.mxu0 0.0
      %1365 = vmatmul.mubr.f32.gmra.mrb[0].mxu0 %v1290
      %v1366 = vpop.f32.mrb[0].mxu0
      %v1367 = vadd.f32 %v1278, %v1366
      %v1368 = vpop.f32.mrb[0].mxu0
      %1369 = vmatprep.mubr.f32.mxu0 0.0
      %1370 = vmatmul.mubr.f32.gmra.mrb[0].mxu0 %v1293
      %v1371 = vpop.f32.mrb[0].mxu0
      %v1372 = vadd.f32 %v1283, %v1371
      %v1373 = vpop.f32.mrb[0].mxu0
      %1374 = vdwg.mxu0
      %1375 = vrot.lane.b32.xlu0 %v701, 112
      %v1376 = vpop.permute.xlu0 %1375
      %1377 = vrot.lane.b32.xlu0 %v706, 112
      %v1378 = vpop.permute.xlu0 %1377
      %1379 = vrot.lane.b32.xlu0 %v711, 112
      %v1380 = vpop.permute.xlu0 %1379
      %1381 = vrot.lane.b32.xlu0 %v701, 80
      %v1382 = vpop.permute.xlu0 %1381
      %1383 = vrot.lane.b32.xlu0 %v706, 80
      %v1384 = vpop.permute.xlu0 %1383
      %1385 = vrot.lane.b32.xlu0 %v711, 80
      %v1386 = vpop.permute.xlu0 %1385
      %v1387 = vsel %vm727, %v1376, 0
      %v1389 = vsel %vm727, %v1378, 0
      %v1391 = vsel %vm727, %v1380, 0
      %v1393 = vsel %vm727, %v1382, 0
      %v1395 = vsel %vm727, %v1384, 0
      %v1397 = vsel %vm727, %v1386, 0
      %1399 = vmatprep.subr.mxu0 0.0
      %1400 = vmatpush1.xpose.msra.mxu0 %v1393
      %1401 = vmatprep.subr.mxu0 0.0
      %1402 = vmatpush1.xpose.msra.mxu0 %v1395
      %1403 = vmatprep.subr.mxu0 0.0
      %1404 = vmatpush1.xpose.msra.mxu0 %v1397
      %1405 = vmatprep.subr.mxu0 0.0
      %1406 = vmatpush1.xpose.msra.mxu0 0.0
      %1407 = vmatprep.subr.mxu0 0.0
      %1408 = vmatpush1.xpose.msra.mxu0 0.0
      %1409 = vmatprep.subr.mxu0 0.0
      %1410 = vmatpush1.xpose.msra.mxu0 0.0
      %1411 = vmatprep.subr.mxu0 0.0
      %1412 = vmatpush1.xpose.msra.mxu0 0.0
      %1413 = vmatprep.subr.mxu0 0.0
      %1414 = vmatpush1.xpose.msra.mxu0 0.0
      %1415 = vmatprep.subr.mxu0 0.0
      %1416 = vmatpush1.xpose.msra.mxu0 0.0
      %1417 = vmatprep.subr.mxu0 0.0
      %1418 = vmatpush1.xpose.msra.mxu0 0.0
      %1419 = vmatprep.subr.mxu0 0.0
      %1420 = vmatpush1.xpose.msra.mxu0 0.0
      %1421 = vmatprep.subr.mxu0 0.0
      %1422 = vmatpush1.xpose.msra.mxu0 0.0
      %1423 = vmatprep.subr.mxu0 0.0
      %1424 = vmatpush1.xpose.msra.mxu0 0.0
      %1425 = vmatprep.subr.mxu0 0.0
      %1426 = vmatpush1.xpose.msra.mxu0 0.0
      %1427 = vmatprep.subr.mxu0 0.0
      %1428 = vmatpush1.xpose.msra.mxu0 0.0
      %1429 = vmatprep.subr.mxu0 0.0
      %1430 = vmatpush1.xpose.msra.mxu0 0.0
      %1431 = vmatprep.subr.mxu0 0.0
      %1432 = vmatpush1.xpose.msra.mxu0 0.0
      %1433 = vmatprep.subr.mxu0 0.0
      %1434 = vmatpush1.xpose.msra.mxu0 0.0
      %1435 = vmatprep.subr.mxu0 0.0
      %1436 = vmatpush1.xpose.msra.mxu0 0.0
      %1437 = vmatprep.subr.mxu0 0.0
      %1438 = vmatpush1.xpose.msra.mxu0 0.0
      %1439 = vmatprep.subr.mxu0 0.0
      %1440 = vmatpush1.xpose.msra.mxu0 0.0
      %1441 = vmatprep.subr.mxu0 0.0
      %1442 = vmatpush1.xpose.msra.mxu0 0.0
      %1443 = vmatprep.subr.mxu0 0.0
      %1444 = vmatpush1.xpose.msra.mxu0 0.0
      %1445 = vmatprep.subr.mxu0 0.0
      %1446 = vmatpush1.xpose.msra.mxu0 0.0
      %1447 = vmatprep.subr.mxu0 0.0
      %1448 = vmatpush1.xpose.msra.mxu0 0.0
      %1449 = vmatprep.subr.mxu0 0.0
      %1450 = vmatpush1.xpose.msra.mxu0 0.0
      %1451 = vmatprep.subr.mxu0 0.0
      %1452 = vmatpush1.xpose.msra.mxu0 0.0
      %1453 = vmatprep.subr.mxu0 0.0
      %1454 = vmatpush1.xpose.msra.mxu0 0.0
      %1455 = vmatprep.subr.mxu0 0.0
      %1456 = vmatpush1.xpose.msra.mxu0 0.0
      %1457 = vmatprep.subr.mxu0 0.0
      %1458 = vmatpush1.xpose.msra.mxu0 0.0
      %1459 = vmatprep.subr.mxu0 0.0
      %1460 = vmatpush1.xpose.msra.mxu0 0.0
      %1461 = vmatprep.subr.mxu0 0.0
      %1462 = vmatpush1.xpose.msra.mxu0 0.0
      %1463 = vmatprep.mubr.f32.mxu0 0.0
      %1464 = vmatmul.mubr.f32.gmra.mrb[0].mxu0 %v1387
      %v1465 = vpop.f32.mrb[0].mxu0
      %v1466 = vadd.f32 0.0, %v1465
      %v1467 = vpop.f32.mrb[0].mxu0
      %1468 = vmatprep.mubr.f32.mxu0 0.0
      %1469 = vmatmul.mubr.f32.gmra.mrb[0].mxu0 %v1389
      %v1470 = vpop.f32.mrb[0].mxu0
      %v1471 = vadd.f32 0.0, %v1470
      %v1472 = vpop.f32.mrb[0].mxu0
      %1473 = vmatprep.mubr.f32.mxu0 0.0
      %1474 = vmatmul.mubr.f32.gmra.mrb[0].mxu0 %v1391
      %v1475 = vpop.f32.mrb[0].mxu0
      %v1476 = vadd.f32 0.0, %v1475
      %v1477 = vpop.f32.mrb[0].mxu0
      %1478 = vdwg.mxu0
      %v1479 = vmul.f32 %v1466, 0.35355338
      %v1480 = vmul.f32 %v1471, 0.35355338
      %v1481 = vmul.f32 %v1476, 0.35355338
      %v1482 = vsel %vm823, %v1479, -inf
      %1483 = vmax.xlane.f32.xlu0 %v1482
      %v1484 = vpop.xlane.xlu0 %1483
      %v1485 = vsel %vm823, %v1480, -inf
      %1486 = vmax.xlane.f32.xlu0 %v1485
      %v1487 = vpop.xlane.xlu0 %1486
      %v1488 = vsel %vm830, %v1481, -inf
      %1489 = vmax.xlane.f32.xlu0 %v1488
      %v1490 = vpop.xlane.xlu0 %1489
      %v1491 = vsub.f32 %v1479, %v1484
      %v1492 = vsub.f32 %v1480, %v1487
      %v1493 = vsub.f32 %v1481, %v1490
      %v1494 = vmul.f32 %v1491, 1.442695
      %v1495 = vpow.pop %v1494
      %v1496 = vmul.f32 %v1492, 1.442695
      %v1497 = vpow.pop %v1496
      %v1498 = vmul.f32 %v1493, 1.442695
      %v1499 = vpow.pop %v1498
      %v1500 = vsel %vm823, %v1495, 0.0
      %1501 = vadd.xlane.f32.xlu0 %v1500
      %v1502 = vpop.xlane.xlu0 %1501
      %v1503 = vsel %vm823, %v1497, 0.0
      %1504 = vadd.xlane.f32.xlu0 %v1503
      %v1505 = vpop.xlane.xlu0 %1504
      %v1506 = vsel %vm830, %v1499, 0.0
      %1507 = vadd.xlane.f32.xlu0 %v1506
      %v1508 = vpop.xlane.xlu0 %1507
      %v1509 = vrcp.pop %v1502
      %v1510 = vrcp.pop %v1505
      %v1511 = vrcp.pop %v1508
      %v1512 = vmul.f32 %v1495, %v1509
      %v1513 = vmul.f32 %v1497, %v1510
      %v1514 = vmul.f32 %v1499, %v1511
      %1515 = vrot.lane.b32.xlu0 %v701, 48
      %v1516 = vpop.permute.xlu0 %1515
      %1517 = vrot.lane.b32.xlu0 %v706, 48
      %v1518 = vpop.permute.xlu0 %1517
      %1519 = vrot.lane.b32.xlu0 %v711, 48
      %v1520 = vpop.permute.xlu0 %1519
      %v1524 = vsel %vm823, %v1512, 0
      %v1527 = vsel %vm823, %v1513, 0
      %v1530 = vsel %vm823, %v1514, 0
      %v1532 = vsel %vm875, %v1520, 0
      %1534 = vmatprep.subr.mxu0 0.0
      %1535 = vmatpush1.msra.mxu0 %v1516
      %1536 = vmatprep.subr.mxu0 0.0
      %1537 = vmatpush1.msra.mxu0 %v1518
      %1538 = vmatprep.subr.mxu0 0.0
      %1539 = vmatpush1.msra.mxu0 %v1532
      %1540 = vmatprep.subr.mxu0 0.0
      %1541 = vmatpush1.msra.mxu0 0.0
      %1542 = vmatprep.subr.mxu0 0.0
      %1543 = vmatpush1.msra.mxu0 0.0
      %1544 = vmatprep.subr.mxu0 0.0
      %1545 = vmatpush1.msra.mxu0 0.0
      %1546 = vmatprep.subr.mxu0 0.0
      %1547 = vmatpush1.msra.mxu0 0.0
      %1548 = vmatprep.subr.mxu0 0.0
      %1549 = vmatpush1.msra.mxu0 0.0
      %1550 = vmatprep.subr.mxu0 0.0
      %1551 = vmatpush1.msra.mxu0 0.0
      %1552 = vmatprep.subr.mxu0 0.0
      %1553 = vmatpush1.msra.mxu0 0.0
      %1554 = vmatprep.subr.mxu0 0.0
      %1555 = vmatpush1.msra.mxu0 0.0
      %1556 = vmatprep.subr.mxu0 0.0
      %1557 = vmatpush1.msra.mxu0 0.0
      %1558 = vmatprep.subr.mxu0 0.0
      %1559 = vmatpush1.msra.mxu0 0.0
      %1560 = vmatprep.subr.mxu0 0.0
      %1561 = vmatpush1.msra.mxu0 0.0
      %1562 = vmatprep.subr.mxu0 0.0
      %1563 = vmatpush1.msra.mxu0 0.0
      %1564 = vmatprep.subr.mxu0 0.0
      %1565 = vmatpush1.msra.mxu0 0.0
      %1566 = vmatprep.subr.mxu0 0.0
      %1567 = vmatpush1.msra.mxu0 0.0
      %1568 = vmatprep.subr.mxu0 0.0
      %1569 = vmatpush1.msra.mxu0 0.0
      %1570 = vmatprep.subr.mxu0 0.0
      %1571 = vmatpush1.msra.mxu0 0.0
      %1572 = vmatprep.subr.mxu0 0.0
      %1573 = vmatpush1.msra.mxu0 0.0
      %1574 = vmatprep.subr.mxu0 0.0
      %1575 = vmatpush1.msra.mxu0 0.0
      %1576 = vmatprep.subr.mxu0 0.0
      %1577 = vmatpush1.msra.mxu0 0.0
      %1578 = vmatprep.subr.mxu0 0.0
      %1579 = vmatpush1.msra.mxu0 0.0
      %1580 = vmatprep.subr.mxu0 0.0
      %1581 = vmatpush1.msra.mxu0 0.0
      %1582 = vmatprep.subr.mxu0 0.0
      %1583 = vmatpush1.msra.mxu0 0.0
      %1584 = vmatprep.subr.mxu0 0.0
      %1585 = vmatpush1.msra.mxu0 0.0
      %1586 = vmatprep.subr.mxu0 0.0
      %1587 = vmatpush1.msra.mxu0 0.0
      %1588 = vmatprep.subr.mxu0 0.0
      %1589 = vmatpush1.msra.mxu0 0.0
      %1590 = vmatprep.subr.mxu0 0.0
      %1591 = vmatpush1.msra.mxu0 0.0
      %1592 = vmatprep.subr.mxu0 0.0
      %1593 = vmatpush1.msra.mxu0 0.0
      %1594 = vmatprep.subr.mxu0 0.0
      %1595 = vmatpush1.msra.mxu0 0.0
      %1596 = vmatprep.subr.mxu0 0.0
      %1597 = vmatpush1.msra.mxu0 0.0
      %1598 = vmatprep.mubr.f32.mxu0 0.0
      %1599 = vmatmul.mubr.f32.gmra.mrb[0].mxu0 %v1524
      %v1600 = vpop.f32.mrb[0].mxu0
      %v1601 = vadd.f32 0.0, %v1600
      %v1602 = vpop.f32.mrb[0].mxu0
      %1603 = vmatprep.mubr.f32.mxu0 0.0
      %1604 = vmatmul.mubr.f32.gmra.mrb[0].mxu0 %v1527
      %v1605 = vpop.f32.mrb[0].mxu0
      %v1606 = vadd.f32 0.0, %v1605
      %v1607 = vpop.f32.mrb[0].mxu0
      %1608 = vmatprep.mubr.f32.mxu0 0.0
      %1609 = vmatmul.mubr.f32.gmra.mrb[0].mxu0 %v1530
      %v1610 = vpop.f32.mrb[0].mxu0
      %v1611 = vadd.f32 0.0, %v1610
      %v1612 = vpop.f32.mrb[0].mxu0
      %1613 = vdwg.mxu0
      %v1615 = vsel %vm727, %v1601, 0
      %v1618 = vsel %vm727, %v1606, 0
      %v1621 = vsel %vm727, %v1611, 0
      %1623 = vmatprep.subr.mxu0 0.0
      %1624 = vmatpush1.msra.mxu0 %v716
      %1625 = vmatprep.subr.mxu0 0.0
      %1626 = vmatpush1.msra.mxu0 0.0
      %1627 = vmatprep.subr.mxu0 0.0
      %1628 = vmatpush1.msra.mxu0 0.0
      %1629 = vmatprep.subr.mxu0 0.0
      %1630 = vmatpush1.msra.mxu0 0.0
      %1631 = vmatprep.subr.mxu0 0.0
      %1632 = vmatpush1.msra.mxu0 0.0
      %1633 = vmatprep.subr.mxu0 0.0
      %1634 = vmatpush1.msra.mxu0 0.0
      %1635 = vmatprep.subr.mxu0 0.0
      %1636 = vmatpush1.msra.mxu0 0.0
      %1637 = vmatprep.subr.mxu0 0.0
      %1638 = vmatpush1.msra.mxu0 0.0
      %1639 = vmatprep.subr.mxu0 0.0
      %1640 = vmatpush1.msra.mxu0 0.0
      %1641 = vmatprep.subr.mxu0 0.0
      %1642 = vmatpush1.msra.mxu0 0.0
      %1643 = vmatprep.subr.mxu0 0.0
      %1644 = vmatpush1.msra.mxu0 0.0
      %1645 = vmatprep.subr.mxu0 0.0
      %1646 = vmatpush1.msra.mxu0 0.0
      %1647 = vmatprep.subr.mxu0 0.0
      %1648 = vmatpush1.msra.mxu0 0.0
      %1649 = vmatprep.subr.mxu0 0.0
      %1650 = vmatpush1.msra.mxu0 0.0
      %1651 = vmatprep.subr.mxu0 0.0
      %1652 = vmatpush1.msra.mxu0 0.0
      %1653 = vmatprep.subr.mxu0 0.0
      %1654 = vmatpush1.msra.mxu0 0.0
      %1655 = vmatprep.subr.mxu0 0.0
      %1656 = vmatpush1.msra.mxu0 0.0
      %1657 = vmatprep.subr.mxu0 0.0
      %1658 = vmatpush1.msra.mxu0 0.0
      %1659 = vmatprep.subr.mxu0 0.0
      %1660 = vmatpush1.msra.mxu0 0.0
      %1661 = vmatprep.subr.mxu0 0.0
      %1662 = vmatpush1.msra.mxu0 0.0
      %1663 = vmatprep.subr.mxu0 0.0
      %1664 = vmatpush1.msra.mxu0 0.0
      %1665 = vmatprep.subr.mxu0 0.0
      %1666 = vmatpush1.msra.mxu0 0.0
      %1667 = vmatprep.subr.mxu0 0.0
      %1668 = vmatpush1.msra.mxu0 0.0
      %1669 = vmatprep.subr.mxu0 0.0
      %1670 = vmatpush1.msra.mxu0 0.0
      %1671 = vmatprep.subr.mxu0 0.0
      %1672 = vmatpush1.msra.mxu0 0.0
      %1673 = vmatprep.subr.mxu0 0.0
      %1674 = vmatpush1.msra.mxu0 0.0
      %1675 = vmatprep.subr.mxu0 0.0
      %1676 = vmatpush1.msra.mxu0 0.0
      %1677 = vmatprep.subr.mxu0 0.0
      %1678 = vmatpush1.msra.mxu0 0.0
      %1679 = vmatprep.subr.mxu0 0.0
      %1680 = vmatpush1.msra.mxu0 0.0
      %1681 = vmatprep.subr.mxu0 0.0
      %1682 = vmatpush1.msra.mxu0 0.0
      %1683 = vmatprep.subr.mxu0 0.0
      %1684 = vmatpush1.msra.mxu0 0.0
      %1685 = vmatprep.subr.mxu0 0.0
      %1686 = vmatpush1.msra.mxu0 0.0
      %1687 = vmatprep.mubr.f32.mxu0 0.0
      %1688 = vmatmul.mubr.f32.gmra.mrb[0].mxu0 %v1615
      %v1689 = vpop.f32.mrb[0].mxu0
      %v1690 = vadd.f32 0.0, %v1689
      %v1691 = vpop.f32.mrb[0].mxu0
      %1692 = vmatprep.mubr.f32.mxu0 0.0
      %1693 = vmatmul.mubr.f32.gmra.mrb[0].mxu0 %v1618
      %v1694 = vpop.f32.mrb[0].mxu0
      %v1695 = vadd.f32 0.0, %v1694
      %v1696 = vpop.f32.mrb[0].mxu0
      %1697 = vmatprep.mubr.f32.mxu0 0.0
      %1698 = vmatmul.mubr.f32.gmra.mrb[0].mxu0 %v1621
      %v1699 = vpop.f32.mrb[0].mxu0
      %v1700 = vadd.f32 0.0, %v1699
      %v1701 = vpop.f32.mrb[0].mxu0
      %1702 = vdwg.mxu0
      %v1703 = vadd.f32 %v1362, %v1690
      %v1704 = vadd.f32 %v1367, %v1695
      %v1705 = vadd.f32 %v1372, %v1700
      %1706 = vrot.lane.b32.xlu0 %v701, 104
      %v1707 = vpop.permute.xlu0 %1706
      %1708 = vrot.lane.b32.xlu0 %v706, 104
      %v1709 = vpop.permute.xlu0 %1708
      %1710 = vrot.lane.b32.xlu0 %v711, 104
      %v1711 = vpop.permute.xlu0 %1710
      %1712 = vrot.lane.b32.xlu0 %v701, 72
      %v1713 = vpop.permute.xlu0 %1712
      %1714 = vrot.lane.b32.xlu0 %v706, 72
      %v1715 = vpop.permute.xlu0 %1714
      %1716 = vrot.lane.b32.xlu0 %v711, 72
      %v1717 = vpop.permute.xlu0 %1716
      %v1718 = vsel %vm727, %v1707, 0
      %v1720 = vsel %vm727, %v1709, 0
      %v1722 = vsel %vm727, %v1711, 0
      %v1724 = vsel %vm727, %v1713, 0
      %v1726 = vsel %vm727, %v1715, 0
      %v1728 = vsel %vm727, %v1717, 0
      %1730 = vmatprep.subr.mxu0 0.0
      %1731 = vmatpush1.xpose.msra.mxu0 %v1724
      %1732 = vmatprep.subr.mxu0 0.0
      %1733 = vmatpush1.xpose.msra.mxu0 %v1726
      %1734 = vmatprep.subr.mxu0 0.0
      %1735 = vmatpush1.xpose.msra.mxu0 %v1728
      %1736 = vmatprep.subr.mxu0 0.0
      %1737 = vmatpush1.xpose.msra.mxu0 0.0
      %1738 = vmatprep.subr.mxu0 0.0
      %1739 = vmatpush1.xpose.msra.mxu0 0.0
      %1740 = vmatprep.subr.mxu0 0.0
      %1741 = vmatpush1.xpose.msra.mxu0 0.0
      %1742 = vmatprep.subr.mxu0 0.0
      %1743 = vmatpush1.xpose.msra.mxu0 0.0
      %1744 = vmatprep.subr.mxu0 0.0
      %1745 = vmatpush1.xpose.msra.mxu0 0.0
      %1746 = vmatprep.subr.mxu0 0.0
      %1747 = vmatpush1.xpose.msra.mxu0 0.0
      %1748 = vmatprep.subr.mxu0 0.0
      %1749 = vmatpush1.xpose.msra.mxu0 0.0
      %1750 = vmatprep.subr.mxu0 0.0
      %1751 = vmatpush1.xpose.msra.mxu0 0.0
      %1752 = vmatprep.subr.mxu0 0.0
      %1753 = vmatpush1.xpose.msra.mxu0 0.0
      %1754 = vmatprep.subr.mxu0 0.0
      %1755 = vmatpush1.xpose.msra.mxu0 0.0
      %1756 = vmatprep.subr.mxu0 0.0
      %1757 = vmatpush1.xpose.msra.mxu0 0.0
      %1758 = vmatprep.subr.mxu0 0.0
      %1759 = vmatpush1.xpose.msra.mxu0 0.0
      %1760 = vmatprep.subr.mxu0 0.0
      %1761 = vmatpush1.xpose.msra.mxu0 0.0
      %1762 = vmatprep.subr.mxu0 0.0
      %1763 = vmatpush1.xpose.msra.mxu0 0.0
      %1764 = vmatprep.subr.mxu0 0.0
      %1765 = vmatpush1.xpose.msra.mxu0 0.0
      %1766 = vmatprep.subr.mxu0 0.0
      %1767 = vmatpush1.xpose.msra.mxu0 0.0
      %1768 = vmatprep.subr.mxu0 0.0
      %1769 = vmatpush1.xpose.msra.mxu0 0.0
      %1770 = vmatprep.subr.mxu0 0.0
      %1771 = vmatpush1.xpose.msra.mxu0 0.0
      %1772 = vmatprep.subr.mxu0 0.0
      %1773 = vmatpush1.xpose.msra.mxu0 0.0
      %1774 = vmatprep.subr.mxu0 0.0
      %1775 = vmatpush1.xpose.msra.mxu0 0.0
      %1776 = vmatprep.subr.mxu0 0.0
      %1777 = vmatpush1.xpose.msra.mxu0 0.0
      %1778 = vmatprep.subr.mxu0 0.0
      %1779 = vmatpush1.xpose.msra.mxu0 0.0
      %1780 = vmatprep.subr.mxu0 0.0
      %1781 = vmatpush1.xpose.msra.mxu0 0.0
      %1782 = vmatprep.subr.mxu0 0.0
      %1783 = vmatpush1.xpose.msra.mxu0 0.0
      %1784 = vmatprep.subr.mxu0 0.0
      %1785 = vmatpush1.xpose.msra.mxu0 0.0
      %1786 = vmatprep.subr.mxu0 0.0
      %1787 = vmatpush1.xpose.msra.mxu0 0.0
      %1788 = vmatprep.subr.mxu0 0.0
      %1789 = vmatpush1.xpose.msra.mxu0 0.0
      %1790 = vmatprep.subr.mxu0 0.0
      %1791 = vmatpush1.xpose.msra.mxu0 0.0
      %1792 = vmatprep.subr.mxu0 0.0
      %1793 = vmatpush1.xpose.msra.mxu0 0.0
      %1794 = vmatprep.mubr.f32.mxu0 0.0
      %1795 = vmatmul.mubr.f32.gmra.mrb[0].mxu0 %v1718
      %v1796 = vpop.f32.mrb[0].mxu0
      %v1797 = vadd.f32 0.0, %v1796
      %v1798 = vpop.f32.mrb[0].mxu0
      %1799 = vmatprep.mubr.f32.mxu0 0.0
      %1800 = vmatmul.mubr.f32.gmra.mrb[0].mxu0 %v1720
      %v1801 = vpop.f32.mrb[0].mxu0
      %v1802 = vadd.f32 0.0, %v1801
      %v1803 = vpop.f32.mrb[0].mxu0
      %1804 = vmatprep.mubr.f32.mxu0 0.0
      %1805 = vmatmul.mubr.f32.gmra.mrb[0].mxu0 %v1722
      %v1806 = vpop.f32.mrb[0].mxu0
      %v1807 = vadd.f32 0.0, %v1806
      %v1808 = vpop.f32.mrb[0].mxu0
      %1809 = vdwg.mxu0
      %v1810 = vmul.f32 %v1797, 0.35355338
      %v1811 = vmul.f32 %v1802, 0.35355338
      %v1812 = vmul.f32 %v1807, 0.35355338
      %v1813 = vsel %vm823, %v1810, -inf
      %1814 = vmax.xlane.f32.xlu0 %v1813
      %v1815 = vpop.xlane.xlu0 %1814
      %v1816 = vsel %vm823, %v1811, -inf
      %1817 = vmax.xlane.f32.xlu0 %v1816
      %v1818 = vpop.xlane.xlu0 %1817
      %v1819 = vsel %vm830, %v1812, -inf
      %1820 = vmax.xlane.f32.xlu0 %v1819
      %v1821 = vpop.xlane.xlu0 %1820
      %v1822 = vsub.f32 %v1810, %v1815
      %v1823 = vsub.f32 %v1811, %v1818
      %v1824 = vsub.f32 %v1812, %v1821
      %v1825 = vmul.f32 %v1822, 1.442695
      %v1826 = vpow.pop %v1825
      %v1827 = vmul.f32 %v1823, 1.442695
      %v1828 = vpow.pop %v1827
      %v1829 = vmul.f32 %v1824, 1.442695
      %v1830 = vpow.pop %v1829
      %v1831 = vsel %vm823, %v1826, 0.0
      %1832 = vadd.xlane.f32.xlu0 %v1831
      %v1833 = vpop.xlane.xlu0 %1832
      %v1834 = vsel %vm823, %v1828, 0.0
      %1835 = vadd.xlane.f32.xlu0 %v1834
      %v1836 = vpop.xlane.xlu0 %1835
      %v1837 = vsel %vm830, %v1830, 0.0
      %1838 = vadd.xlane.f32.xlu0 %v1837
      %v1839 = vpop.xlane.xlu0 %1838
      %v1840 = vrcp.pop %v1833
      %v1841 = vrcp.pop %v1836
      %v1842 = vrcp.pop %v1839
      %v1843 = vmul.f32 %v1826, %v1840
      %v1844 = vmul.f32 %v1828, %v1841
      %v1845 = vmul.f32 %v1830, %v1842
      %1846 = vrot.lane.b32.xlu0 %v701, 40
      %v1847 = vpop.permute.xlu0 %1846
      %1848 = vrot.lane.b32.xlu0 %v706, 40
      %v1849 = vpop.permute.xlu0 %1848
      %1850 = vrot.lane.b32.xlu0 %v711, 40
      %v1851 = vpop.permute.xlu0 %1850
      %v1855 = vsel %vm823, %v1843, 0
      %v1858 = vsel %vm823, %v1844, 0
      %v1861 = vsel %vm823, %v1845, 0
      %v1863 = vsel %vm875, %v1851, 0
      %1865 = vmatprep.subr.mxu0 0.0
      %1866 = vmatpush1.msra.mxu0 %v1847
      %1867 = vmatprep.subr.mxu0 0.0
      %1868 = vmatpush1.msra.mxu0 %v1849
      %1869 = vmatprep.subr.mxu0 0.0
      %1870 = vmatpush1.msra.mxu0 %v1863
      %1871 = vmatprep.subr.mxu0 0.0
      %1872 = vmatpush1.msra.mxu0 0.0
      %1873 = vmatprep.subr.mxu0 0.0
      %1874 = vmatpush1.msra.mxu0 0.0
      %1875 = vmatprep.subr.mxu0 0.0
      %1876 = vmatpush1.msra.mxu0 0.0
      %1877 = vmatprep.subr.mxu0 0.0
      %1878 = vmatpush1.msra.mxu0 0.0
      %1879 = vmatprep.subr.mxu0 0.0
      %1880 = vmatpush1.msra.mxu0 0.0
      %1881 = vmatprep.subr.mxu0 0.0
      %1882 = vmatpush1.msra.mxu0 0.0
      %1883 = vmatprep.subr.mxu0 0.0
      %1884 = vmatpush1.msra.mxu0 0.0
      %1885 = vmatprep.subr.mxu0 0.0
      %1886 = vmatpush1.msra.mxu0 0.0
      %1887 = vmatprep.subr.mxu0 0.0
      %1888 = vmatpush1.msra.mxu0 0.0
      %1889 = vmatprep.subr.mxu0 0.0
      %1890 = vmatpush1.msra.mxu0 0.0
      %1891 = vmatprep.subr.mxu0 0.0
      %1892 = vmatpush1.msra.mxu0 0.0
      %1893 = vmatprep.subr.mxu0 0.0
      %1894 = vmatpush1.msra.mxu0 0.0
      %1895 = vmatprep.subr.mxu0 0.0
      %1896 = vmatpush1.msra.mxu0 0.0
      %1897 = vmatprep.subr.mxu0 0.0
      %1898 = vmatpush1.msra.mxu0 0.0
      %1899 = vmatprep.subr.mxu0 0.0
      %1900 = vmatpush1.msra.mxu0 0.0
      %1901 = vmatprep.subr.mxu0 0.0
      %1902 = vmatpush1.msra.mxu0 0.0
      %1903 = vmatprep.subr.mxu0 0.0
      %1904 = vmatpush1.msra.mxu0 0.0
      %1905 = vmatprep.subr.mxu0 0.0
      %1906 = vmatpush1.msra.mxu0 0.0
      %1907 = vmatprep.subr.mxu0 0.0
      %1908 = vmatpush1.msra.mxu0 0.0
      %1909 = vmatprep.subr.mxu0 0.0
      %1910 = vmatpush1.msra.mxu0 0.0
      %1911 = vmatprep.subr.mxu0 0.0
      %1912 = vmatpush1.msra.mxu0 0.0
      %1913 = vmatprep.subr.mxu0 0.0
      %1914 = vmatpush1.msra.mxu0 0.0
      %1915 = vmatprep.subr.mxu0 0.0
      %1916 = vmatpush1.msra.mxu0 0.0
      %1917 = vmatprep.subr.mxu0 0.0
      %1918 = vmatpush1.msra.mxu0 0.0
      %1919 = vmatprep.subr.mxu0 0.0
      %1920 = vmatpush1.msra.mxu0 0.0
      %1921 = vmatprep.subr.mxu0 0.0
      %1922 = vmatpush1.msra.mxu0 0.0
      %1923 = vmatprep.subr.mxu0 0.0
      %1924 = vmatpush1.msra.mxu0 0.0
      %1925 = vmatprep.subr.mxu0 0.0
      %1926 = vmatpush1.msra.mxu0 0.0
      %1927 = vmatprep.subr.mxu0 0.0
      %1928 = vmatpush1.msra.mxu0 0.0
      %1929 = vmatprep.mubr.f32.mxu0 0.0
      %1930 = vmatmul.mubr.f32.gmra.mrb[0].mxu0 %v1855
      %v1931 = vpop.f32.mrb[0].mxu0
      %v1932 = vadd.f32 0.0, %v1931
      %v1933 = vpop.f32.mrb[0].mxu0
      %1934 = vmatprep.mubr.f32.mxu0 0.0
      %1935 = vmatmul.mubr.f32.gmra.mrb[0].mxu0 %v1858
      %v1936 = vpop.f32.mrb[0].mxu0
      %v1937 = vadd.f32 0.0, %v1936
      %v1938 = vpop.f32.mrb[0].mxu0
      %1939 = vmatprep.mubr.f32.mxu0 0.0
      %1940 = vmatmul.mubr.f32.gmra.mrb[0].mxu0 %v1861
      %v1941 = vpop.f32.mrb[0].mxu0
      %v1942 = vadd.f32 0.0, %v1941
      %v1943 = vpop.f32.mrb[0].mxu0
      %1944 = vdwg.mxu0
      %v1946 = vsel %vm727, %v1932, 0
      %v1949 = vsel %vm727, %v1937, 0
      %v1952 = vsel %vm727, %v1942, 0
      %1954 = vmatprep.subr.mxu0 0.0
      %1955 = vmatpush1.msra.mxu0 %v717
      %1956 = vmatprep.subr.mxu0 0.0
      %1957 = vmatpush1.msra.mxu0 0.0
      %1958 = vmatprep.subr.mxu0 0.0
      %1959 = vmatpush1.msra.mxu0 0.0
      %1960 = vmatprep.subr.mxu0 0.0
      %1961 = vmatpush1.msra.mxu0 0.0
      %1962 = vmatprep.subr.mxu0 0.0
      %1963 = vmatpush1.msra.mxu0 0.0
      %1964 = vmatprep.subr.mxu0 0.0
      %1965 = vmatpush1.msra.mxu0 0.0
      %1966 = vmatprep.subr.mxu0 0.0
      %1967 = vmatpush1.msra.mxu0 0.0
      %1968 = vmatprep.subr.mxu0 0.0
      %1969 = vmatpush1.msra.mxu0 0.0
      %1970 = vmatprep.subr.mxu0 0.0
      %1971 = vmatpush1.msra.mxu0 0.0
      %1972 = vmatprep.subr.mxu0 0.0
      %1973 = vmatpush1.msra.mxu0 0.0
      %1974 = vmatprep.subr.mxu0 0.0
      %1975 = vmatpush1.msra.mxu0 0.0
      %1976 = vmatprep.subr.mxu0 0.0
      %1977 = vmatpush1.msra.mxu0 0.0
      %1978 = vmatprep.subr.mxu0 0.0
      %1979 = vmatpush1.msra.mxu0 0.0
      %1980 = vmatprep.subr.mxu0 0.0
      %1981 = vmatpush1.msra.mxu0 0.0
      %1982 = vmatprep.subr.mxu0 0.0
      %1983 = vmatpush1.msra.mxu0 0.0
      %1984 = vmatprep.subr.mxu0 0.0
      %1985 = vmatpush1.msra.mxu0 0.0
      %1986 = vmatprep.subr.mxu0 0.0
      %1987 = vmatpush1.msra.mxu0 0.0
      %1988 = vmatprep.subr.mxu0 0.0
      %1989 = vmatpush1.msra.mxu0 0.0
      %1990 = vmatprep.subr.mxu0 0.0
      %1991 = vmatpush1.msra.mxu0 0.0
      %1992 = vmatprep.subr.mxu0 0.0
      %1993 = vmatpush1.msra.mxu0 0.0
      %1994 = vmatprep.subr.mxu0 0.0
      %1995 = vmatpush1.msra.mxu0 0.0
      %1996 = vmatprep.subr.mxu0 0.0
      %1997 = vmatpush1.msra.mxu0 0.0
      %1998 = vmatprep.subr.mxu0 0.0
      %1999 = vmatpush1.msra.mxu0 0.0
      %2000 = vmatprep.subr.mxu0 0.0
      %2001 = vmatpush1.msra.mxu0 0.0
      %2002 = vmatprep.subr.mxu0 0.0
      %2003 = vmatpush1.msra.mxu0 0.0
      %2004 = vmatprep.subr.mxu0 0.0
      %2005 = vmatpush1.msra.mxu0 0.0
      %2006 = vmatprep.subr.mxu0 0.0
      %2007 = vmatpush1.msra.mxu0 0.0
      %2008 = vmatprep.subr.mxu0 0.0
      %2009 = vmatpush1.msra.mxu0 0.0
      %2010 = vmatprep.subr.mxu0 0.0
      %2011 = vmatpush1.msra.mxu0 0.0
      %2012 = vmatprep.subr.mxu0 0.0
      %2013 = vmatpush1.msra.mxu0 0.0
      %2014 = vmatprep.subr.mxu0 0.0
      %2015 = vmatpush1.msra.mxu0 0.0
      %2016 = vmatprep.subr.mxu0 0.0
      %2017 = vmatpush1.msra.mxu0 0.0
      %2018 = vmatprep.mubr.f32.mxu0 0.0
      %2019 = vmatmul.mubr.f32.gmra.mrb[0].mxu0 %v1946
      %v2020 = vpop.f32.mrb[0].mxu0
      %v2021 = vadd.f32 0.0, %v2020
      %v2022 = vpop.f32.mrb[0].mxu0
      %2023 = vmatprep.mubr.f32.mxu0 0.0
      %2024 = vmatmul.mubr.f32.gmra.mrb[0].mxu0 %v1949
      %v2025 = vpop.f32.mrb[0].mxu0
      %v2026 = vadd.f32 0.0, %v2025
      %v2027 = vpop.f32.mrb[0].mxu0
      %2028 = vmatprep.mubr.f32.mxu0 0.0
      %2029 = vmatmul.mubr.f32.gmra.mrb[0].mxu0 %v1952
      %v2030 = vpop.f32.mrb[0].mxu0
      %v2031 = vadd.f32 0.0, %v2030
      %v2032 = vpop.f32.mrb[0].mxu0
      %2033 = vdwg.mxu0
      %v2034 = vadd.f32 %v1703, %v2021
      %v2035 = vadd.f32 %v1704, %v2026
      %v2036 = vadd.f32 %v1705, %v2031
      %v2037 = vadd.f32 %v549, %v2034
      %v2038 = vadd.f32 %v550, %v2035
      %v2039 = vadd.f32 %v551, %v2036
      %v2040 = vld [vmem:[%s6] sm:$0x1]
      %v2042 = vlaneseq
      %v2043 = vshrl.u32 %v2042, 7
      %v2044 = vsub.s32 0, %v2043
      %v2045 = vrot.slane %v2040, %v2044
      %v2047 = vadd.f32 %v2037, %v2045
      %v2048 = vadd.f32 %v2038, %v2045
      %v2049 = vadd.f32 %v2039, %v2045
      %v2050 = vld [vmem:[%s7] sm:$0x1]
      %v2051 = vld [vmem:[%s8] sm:$0x1]
      %v2052 = vsel %vm554, %v2047, 0.0
      %2053 = vadd.xlane.f32.xlu0 %v2052
      %v2054 = vpop.xlane.xlu0 %2053
      %v2055 = vsel %vm554, %v2048, 0.0
      %2056 = vadd.xlane.f32.xlu0 %v2055
      %v2057 = vpop.xlane.xlu0 %2056
      %v2058 = vsel %vm561, %v2049, 0.0
      %2059 = vadd.xlane.f32.xlu0 %v2058
      %v2060 = vpop.xlane.xlu0 %2059
      %v2061 = vmul.f32 %v2054, %v565
      %v2062 = vmul.f32 %v2057, %v565
      %v2063 = vmul.f32 %v2060, %v565
      %v2064 = vsub.f32 %v2047, %v2061
      %v2065 = vsub.f32 %v2048, %v2062
      %v2066 = vsub.f32 %v2049, %v2063
      %v2067 = vmul.f32 %v2064, %v2064
      %v2068 = vmul.f32 %v2065, %v2065
      %v2069 = vmul.f32 %v2066, %v2066
      %v2070 = vsel %vm554, %v2067, 0.0
      %2071 = vadd.xlane.f32.xlu0 %v2070
      %v2072 = vpop.xlane.xlu0 %2071
      %v2073 = vsel %vm554, %v2068, 0.0
      %2074 = vadd.xlane.f32.xlu0 %v2073
      %v2075 = vpop.xlane.xlu0 %2074
      %v2076 = vsel %vm561, %v2069, 0.0
      %2077 = vadd.xlane.f32.xlu0 %v2076
      %v2078 = vpop.xlane.xlu0 %2077
      %v2079 = vmul.f32 %v2072, %v565
      %v2080 = vmul.f32 %v2075, %v565
      %v2081 = vmul.f32 %v2078, %v565
      %v2082 = vadd.f32 %v2079, 1e-05
      %v2083 = vadd.f32 %v2080, 1e-05
      %v2084 = vadd.f32 %v2081, 1e-05
      %v2085 = vrsqrt.pop %v2082
      %v2086 = vrsqrt.pop %v2083
      %v2087 = vrsqrt.pop %v2084
      %v2088 = vmul.f32 %v2064, %v2085
      %v2089 = vmul.f32 %v2065, %v2086
      %v2090 = vmul.f32 %v2066, %v2087
      %v2092 = vlaneseq
      %v2093 = vshrl.u32 %v2092, 7
      %v2094 = vsub.s32 0, %v2093
      %v2095 = vrot.slane %v2050, %v2094
      %v2097 = vmul.f32 %v2088, %v2095
      %v2098 = vmul.f32 %v2089, %v2095
      %v2099 = vmul.f32 %v2090, %v2095
      %v2101 = vlaneseq
      %v2102 = vshrl.u32 %v2101, 7
      %v2103 = vsub.s32 0, %v2102
      %v2104 = vrot.slane %v2051, %v2103
      %v2106 = vadd.f32 %v2097, %v2104
      %v2107 = vadd.f32 %v2098, %v2104
      %v2108 = vadd.f32 %v2099, %v2104
      %v2109 = vld [vmem:[%s9] sm:$0xff]
      %v2110 = vld [vmem:[%s9 + $0x8] sm:$0xff]
      %v2111 = vld [vmem:[%s9 + $0x10] sm:$0xff]
      %v2112 = vld [vmem:[%s9 + $0x18] sm:$0xff]
      %v2113 = vld [vmem:[%s10] sm:$0x1]
      %v2115 = vlaneseq
      %v2116 = vshrl.u32 %v2115, 7
      %v2117 = vsub.s32 0, %v2116
      %v2118 = vrot.slane %v2113, %v2117
      %v2121 = vsel %vm554, %v2106, 0
      %v2124 = vsel %vm554, %v2107, 0
      %v2127 = vsel %vm554, %v2108, 0
      %2129 = vmatprep.subr.mxu0 0.0
      %2130 = vmatpush1.msra.mxu0 %v2109
      %2131 = vmatprep.subr.mxu0 0.0
      %2132 = vmatpush1.msra.mxu0 %v2110
      %2133 = vmatprep.subr.mxu0 0.0
      %2134 = vmatpush1.msra.mxu0 %v2111
      %2135 = vmatprep.subr.mxu0 0.0
      %2136 = vmatpush1.msra.mxu0 %v2112
      %2137 = vmatprep.subr.mxu0 0.0
      %2138 = vmatpush1.msra.mxu0 0.0
      %2139 = vmatprep.subr.mxu0 0.0
      %2140 = vmatpush1.msra.mxu0 0.0
      %2141 = vmatprep.subr.mxu0 0.0
      %2142 = vmatpush1.msra.mxu0 0.0
      %2143 = vmatprep.subr.mxu0 0.0
      %2144 = vmatpush1.msra.mxu0 0.0
      %2145 = vmatprep.subr.mxu0 0.0
      %2146 = vmatpush1.msra.mxu0 0.0
      %2147 = vmatprep.subr.mxu0 0.0
      %2148 = vmatpush1.msra.mxu0 0.0
      %2149 = vmatprep.subr.mxu0 0.0
      %2150 = vmatpush1.msra.mxu0 0.0
      %2151 = vmatprep.subr.mxu0 0.0
      %2152 = vmatpush1.msra.mxu0 0.0
      %2153 = vmatprep.subr.mxu0 0.0
      %2154 = vmatpush1.msra.mxu0 0.0
      %2155 = vmatprep.subr.mxu0 0.0
      %2156 = vmatpush1.msra.mxu0 0.0
      %2157 = vmatprep.subr.mxu0 0.0
      %2158 = vmatpush1.msra.mxu0 0.0
      %2159 = vmatprep.subr.mxu0 0.0
      %2160 = vmatpush1.msra.mxu0 0.0
      %2161 = vmatprep.subr.mxu0 0.0
      %2162 = vmatpush1.msra.mxu0 0.0
      %2163 = vmatprep.subr.mxu0 0.0
      %2164 = vmatpush1.msra.mxu0 0.0
      %2165 = vmatprep.subr.mxu0 0.0
      %2166 = vmatpush1.msra.mxu0 0.0
      %2167 = vmatprep.subr.mxu0 0.0
      %2168 = vmatpush1.msra.mxu0 0.0
      %2169 = vmatprep.subr.mxu0 0.0
      %2170 = vmatpush1.msra.mxu0 0.0
      %2171 = vmatprep.subr.mxu0 0.0
      %2172 = vmatpush1.msra.mxu0 0.0
      %2173 = vmatprep.subr.mxu0 0.0
      %2174 = vmatpush1.msra.mxu0 0.0
      %2175 = vmatprep.subr.mxu0 0.0
      %2176 = vmatpush1.msra.mxu0 0.0
      %2177 = vmatprep.subr.mxu0 0.0
      %2178 = vmatpush1.msra.mxu0 0.0
      %2179 = vmatprep.subr.mxu0 0.0
      %2180 = vmatpush1.msra.mxu0 0.0
      %2181 = vmatprep.subr.mxu0 0.0
      %2182 = vmatpush1.msra.mxu0 0.0
      %2183 = vmatprep.subr.mxu0 0.0
      %2184 = vmatpush1.msra.mxu0 0.0
      %2185 = vmatprep.subr.mxu0 0.0
      %2186 = vmatpush1.msra.mxu0 0.0
      %2187 = vmatprep.subr.mxu0 0.0
      %2188 = vmatpush1.msra.mxu0 0.0
      %2189 = vmatprep.subr.mxu0 0.0
      %2190 = vmatpush1.msra.mxu0 0.0
      %2191 = vmatprep.subr.mxu0 0.0
      %2192 = vmatpush1.msra.mxu0 0.0
      %2193 = vmatprep.mubr.f32.mxu0 0.0
      %2194 = vmatmul.mubr.f32.gmra.mrb[0].mxu0 %v2121
      %v2195 = vpop.f32.mrb[0].mxu0
      %v2196 = vadd.f32 %v2118, %v2195
      %v2197 = vpop.f32.mrb[0].mxu0
      %2198 = vmatprep.mubr.f32.mxu0 0.0
      %2199 = vmatmul.mubr.f32.gmra.mrb[0].mxu0 %v2124
      %v2200 = vpop.f32.mrb[0].mxu0
      %v2201 = vadd.f32 %v2118, %v2200
      %v2202 = vpop.f32.mrb[0].mxu0
      %2203 = vmatprep.mubr.f32.mxu0 0.0
      %2204 = vmatmul.mubr.f32.gmra.mrb[0].mxu0 %v2127
      %v2205 = vpop.f32.mrb[0].mxu0
      %v2206 = vadd.f32 %v2118, %v2205
      %v2207 = vpop.f32.mrb[0].mxu0
      %2208 = vdwg.mxu0
      %v2209 = vmul.f32 %v2196, 0.5
      %v2210 = vmul.f32 %v2201, 0.5
      %v2211 = vmul.f32 %v2206, 0.5
      %v2212 = vmul.f32 %v2196, 0.70710677
      %v2213 = vmul.f32 %v2201, 0.70710677
      %v2214 = vmul.f32 %v2206, 0.70710677
      %vm2215 = vcmp.ge.f32.partialorder %v2212, 0.0
      %vm2216 = vcmp.ge.f32.partialorder %v2213, 0.0
      %vm2217 = vcmp.ge.f32.partialorder %v2214, 0.0
      %v2218 = vsel %vm2215, 1.0, -1.0
      %v2219 = vsel %vm2216, 1.0, -1.0
      %v2220 = vsel %vm2217, 1.0, -1.0
      %v2221 = vand.u32 2147483647, %v2212
      %v2222 = vand.u32 2147483647, %v2213
      %v2223 = vand.u32 2147483647, %v2214
      %v2224 = vmul.f32 %v2221, 0.3275911
      %v2225 = vmul.f32 %v2222, 0.3275911
      %v2226 = vmul.f32 %v2223, 0.3275911
      %v2227 = vadd.f32 %v2224, 1.0
      %v2228 = vadd.f32 %v2225, 1.0
      %v2229 = vadd.f32 %v2226, 1.0
      %v2230 = vrcp.pop %v2227
      %v2231 = vmul.f32 1.0, %v2230
      %v2232 = vrcp.pop %v2228
      %v2233 = vmul.f32 1.0, %v2232
      %v2234 = vrcp.pop %v2229
      %v2235 = vmul.f32 1.0, %v2234
      %v2236 = vmul.f32 %v2231, 1.0614054
      %v2237 = vmul.f32 %v2233, 1.0614054
      %v2238 = vmul.f32 %v2235, 1.0614054
      %v2239 = vadd.f32 %v2236, -1.4531521
      %v2240 = vadd.f32 %v2237, -1.4531521
      %v2241 = vadd.f32 %v2238, -1.4531521
      %v2242 = vmul.f32 %v2239, %v2231
      %v2243 = vmul.f32 %v2240, %v2233
      %v2244 = vmul.f32 %v2241, %v2235
      %v2245 = vadd.f32 %v2242, 1.4214138
      %v2246 = vadd.f32 %v2243, 1.4214138
      %v2247 = vadd.f32 %v2244, 1.4214138
      %v2248 = vmul.f32 %v2245, %v2231
      %v2249 = vmul.f32 %v2246, %v2233
      %v2250 = vmul.f32 %v2247, %v2235
      %v2251 = vadd.f32 %v2248, -0.28449672
      %v2252 = vadd.f32 %v2249, -0.28449672
      %v2253 = vadd.f32 %v2250, -0.28449672
      %v2254 = vmul.f32 %v2251, %v2231
      %v2255 = vmul.f32 %v2252, %v2233
      %v2256 = vmul.f32 %v2253, %v2235
      %v2257 = vadd.f32 %v2254, 0.2548296
      %v2258 = vadd.f32 %v2255, 0.2548296
      %v2259 = vadd.f32 %v2256, 0.2548296
      %v2260 = vmul.f32 %v2257, %v2231
      %v2261 = vmul.f32 %v2258, %v2233
      %v2262 = vmul.f32 %v2259, %v2235
      %v2263 = vsub.f32 0.0, %v2221
      %v2264 = vsub.f32 0.0, %v2222
      %v2265 = vsub.f32 0.0, %v2223
      %v2266 = vmul.f32 %v2263, %v2221
      %v2267 = vmul.f32 %v2264, %v2222
      %v2268 = vmul.f32 %v2265, %v2223
      %v2269 = vmul.f32 %v2266, 1.442695
      %v2270 = vpow.pop %v2269
      %v2271 = vmul.f32 %v2267, 1.442695
      %v2272 = vpow.pop %v2271
      %v2273 = vmul.f32 %v2268, 1.442695
      %v2274 = vpow.pop %v2273
      %v2275 = vmul.f32 %v2260, %v2270
      %v2276 = vmul.f32 %v2261, %v2272
      %v2277 = vmul.f32 %v2262, %v2274
      %v2278 = vsub.f32 1.0, %v2275
      %v2279 = vsub.f32 1.0, %v2276
      %v2280 = vsub.f32 1.0, %v2277
      %v2281 = vmul.f32 %v2218, %v2278
      %v2282 = vmul.f32 %v2219, %v2279
      %v2283 = vmul.f32 %v2220, %v2280
      %v2284 = vadd.f32 %v2281, 1.0
      %v2285 = vadd.f32 %v2282, 1.0
      %v2286 = vadd.f32 %v2283, 1.0
      %v2287 = vmul.f32 %v2209, %v2284
      %v2288 = vmul.f32 %v2210, %v2285
      %v2289 = vmul.f32 %v2211, %v2286
      %v2290 = vld [vmem:[%s11] sm:$0xff]
      %v2291 = vld [vmem:[%s11 + $0x8] sm:$0xff]
      %v2292 = vld [vmem:[%s11 + $0x10] sm:$0xff]
      %v2293 = vld [vmem:[%s11 + $0x18] sm:$0xff]
      %v2294 = vld [vmem:[%s11 + $0x20] sm:$0xff]
      %v2295 = vld [vmem:[%s11 + $0x28] sm:$0xff]
      %v2296 = vld [vmem:[%s11 + $0x30] sm:$0xff]
      %v2297 = vld [vmem:[%s11 + $0x38] sm:$0xff]
      %v2298 = vld [vmem:[%s11 + $0x40] sm:$0xff]
      %v2299 = vld [vmem:[%s11 + $0x48] sm:$0xff]
      %v2300 = vld [vmem:[%s11 + $0x50] sm:$0xff]
      %v2301 = vld [vmem:[%s11 + $0x58] sm:$0xff]
      %v2302 = vld [vmem:[%s11 + $0x60] sm:$0xff]
      %v2303 = vld [vmem:[%s11 + $0x68] sm:$0xff]
      %v2304 = vld [vmem:[%s11 + $0x70] sm:$0xff]
      %v2305 = vld [vmem:[%s11 + $0x78] sm:$0xff]
      %v2306 = vld [vmem:[%s12] sm:$0x1]
      %v2308 = vlaneseq
      %v2309 = vshrl.u32 %v2308, 7
      %v2310 = vsub.s32 0, %v2309
      %v2311 = vrot.slane %v2306, %v2310
      %2313 = vmatprep.subr.mxu0 0.0
      %2314 = vmatpush1.msra.mxu0 %v2290
      %2315 = vmatprep.subr.mxu0 0.0
      %2316 = vmatpush1.msra.mxu0 %v2291
      %2317 = vmatprep.subr.mxu0 0.0
      %2318 = vmatpush1.msra.mxu0 %v2292
      %2319 = vmatprep.subr.mxu0 0.0
      %2320 = vmatpush1.msra.mxu0 %v2293
      %2321 = vmatprep.subr.mxu0 0.0
      %2322 = vmatpush1.msra.mxu0 %v2294
      %2323 = vmatprep.subr.mxu0 0.0
      %2324 = vmatpush1.msra.mxu0 %v2295
      %2325 = vmatprep.subr.mxu0 0.0
      %2326 = vmatpush1.msra.mxu0 %v2296
      %2327 = vmatprep.subr.mxu0 0.0
      %2328 = vmatpush1.msra.mxu0 %v2297
      %2329 = vmatprep.subr.mxu0 0.0
      %2330 = vmatpush1.msra.mxu0 %v2298
      %2331 = vmatprep.subr.mxu0 0.0
      %2332 = vmatpush1.msra.mxu0 %v2299
      %2333 = vmatprep.subr.mxu0 0.0
      %2334 = vmatpush1.msra.mxu0 %v2300
      %2335 = vmatprep.subr.mxu0 0.0
      %2336 = vmatpush1.msra.mxu0 %v2301
      %2337 = vmatprep.subr.mxu0 0.0
      %2338 = vmatpush1.msra.mxu0 %v2302
      %2339 = vmatprep.subr.mxu0 0.0
      %2340 = vmatpush1.msra.mxu0 %v2303
      %2341 = vmatprep.subr.mxu0 0.0
      %2342 = vmatpush1.msra.mxu0 %v2304
      %2343 = vmatprep.subr.mxu0 0.0
      %2344 = vmatpush1.msra.mxu0 %v2305
      %2345 = vmatprep.subr.mxu0 0.0
      %2346 = vmatpush1.msra.mxu0 0.0
      %2347 = vmatprep.subr.mxu0 0.0
      %2348 = vmatpush1.msra.mxu0 0.0
      %2349 = vmatprep.subr.mxu0 0.0
      %2350 = vmatpush1.msra.mxu0 0.0
      %2351 = vmatprep.subr.mxu0 0.0
      %2352 = vmatpush1.msra.mxu0 0.0
      %2353 = vmatprep.subr.mxu0 0.0
      %2354 = vmatpush1.msra.mxu0 0.0
      %2355 = vmatprep.subr.mxu0 0.0
      %2356 = vmatpush1.msra.mxu0 0.0
      %2357 = vmatprep.subr.mxu0 0.0
      %2358 = vmatpush1.msra.mxu0 0.0
      %2359 = vmatprep.subr.mxu0 0.0
      %2360 = vmatpush1.msra.mxu0 0.0
      %2361 = vmatprep.subr.mxu0 0.0
      %2362 = vmatpush1.msra.mxu0 0.0
      %2363 = vmatprep.subr.mxu0 0.0
      %2364 = vmatpush1.msra.mxu0 0.0
      %2365 = vmatprep.subr.mxu0 0.0
      %2366 = vmatpush1.msra.mxu0 0.0
      %2367 = vmatprep.subr.mxu0 0.0
      %2368 = vmatpush1.msra.mxu0 0.0
      %2369 = vmatprep.subr.mxu0 0.0
      %2370 = vmatpush1.msra.mxu0 0.0
      %2371 = vmatprep.subr.mxu0 0.0
      %2372 = vmatpush1.msra.mxu0 0.0
      %2373 = vmatprep.subr.mxu0 0.0
      %2374 = vmatpush1.msra.mxu0 0.0
      %2375 = vmatprep.subr.mxu0 0.0
      %2376 = vmatpush1.msra.mxu0 0.0
      %2377 = vmatprep.mubr.f32.mxu0 0.0
      %2378 = vmatmul.mubr.f32.gmra.mrb[0].mxu0 %v2287
      %v2379 = vpop.f32.mrb[0].mxu0
      %v2380 = vadd.f32 %v2311, %v2379
      %v2381 = vpop.f32.mrb[0].mxu0
      %2382 = vmatprep.mubr.f32.mxu0 0.0
      %2383 = vmatmul.mubr.f32.gmra.mrb[0].mxu0 %v2288
      %v2384 = vpop.f32.mrb[0].mxu0
      %v2385 = vadd.f32 %v2311, %v2384
      %v2386 = vpop.f32.mrb[0].mxu0
      %2387 = vmatprep.mubr.f32.mxu0 0.0
      %2388 = vmatmul.mubr.f32.gmra.mrb[0].mxu0 %v2289
      %v2389 = vpop.f32.mrb[0].mxu0
      %v2390 = vadd.f32 %v2311, %v2389
      %v2391 = vpop.f32.mrb[0].mxu0
      %2392 = vdwg.mxu0
      %v2393 = vadd.f32 %v2047, %v2380
      %v2394 = vadd.f32 %v2048, %v2385
      %v2395 = vadd.f32 %v2049, %v2390
      %v2396 = vld [vmem:[%s13] sm:$0x1]
      %v2397 = vld [vmem:[%s14] sm:$0x1]
      %v2398 = vsel %vm554, %v2393, 0.0
      %2399 = vadd.xlane.f32.xlu0 %v2398
      %v2400 = vpop.xlane.xlu0 %2399
      %v2401 = vsel %vm554, %v2394, 0.0
      %2402 = vadd.xlane.f32.xlu0 %v2401
      %v2403 = vpop.xlane.xlu0 %2402
      %v2404 = vsel %vm561, %v2395, 0.0
      %2405 = vadd.xlane.f32.xlu0 %v2404
      %v2406 = vpop.xlane.xlu0 %2405
      %v2407 = vmul.f32 %v2400, %v565
      %v2408 = vmul.f32 %v2403, %v565
      %v2409 = vmul.f32 %v2406, %v565
      %v2410 = vsub.f32 %v2393, %v2407
      %v2411 = vsub.f32 %v2394, %v2408
      %v2412 = vsub.f32 %v2395, %v2409
      %v2413 = vmul.f32 %v2410, %v2410
      %v2414 = vmul.f32 %v2411, %v2411
      %v2415 = vmul.f32 %v2412, %v2412
      %v2416 = vsel %vm554, %v2413, 0.0
      %2417 = vadd.xlane.f32.xlu0 %v2416
      %v2418 = vpop.xlane.xlu0 %2417
      %v2419 = vsel %vm554, %v2414, 0.0
      %2420 = vadd.xlane.f32.xlu0 %v2419
      %v2421 = vpop.xlane.xlu0 %2420
      %v2422 = vsel %vm561, %v2415, 0.0
      %2423 = vadd.xlane.f32.xlu0 %v2422
      %v2424 = vpop.xlane.xlu0 %2423
      %v2425 = vmul.f32 %v2418, %v565
      %v2426 = vmul.f32 %v2421, %v565
      %v2427 = vmul.f32 %v2424, %v565
      %v2428 = vadd.f32 %v2425, 1e-05
      %v2429 = vadd.f32 %v2426, 1e-05
      %v2430 = vadd.f32 %v2427, 1e-05
      %v2431 = vrsqrt.pop %v2428
      %v2432 = vrsqrt.pop %v2429
      %v2433 = vrsqrt.pop %v2430
      %v2434 = vmul.f32 %v2410, %v2431
      %v2435 = vmul.f32 %v2411, %v2432
      %v2436 = vmul.f32 %v2412, %v2433
      %v2438 = vlaneseq
      %v2439 = vshrl.u32 %v2438, 7
      %v2440 = vsub.s32 0, %v2439
      %v2441 = vrot.slane %v2396, %v2440
      %v2443 = vmul.f32 %v2434, %v2441
      %v2444 = vmul.f32 %v2435, %v2441
      %v2445 = vmul.f32 %v2436, %v2441
      %v2447 = vlaneseq
      %v2448 = vshrl.u32 %v2447, 7
      %v2449 = vsub.s32 0, %v2448
      %v2450 = vrot.slane %v2397, %v2449
      %v2452 = vadd.f32 %v2443, %v2450
      %v2453 = vadd.f32 %v2444, %v2450
      %v2454 = vadd.f32 %v2445, %v2450
      %v2455 = vld [vmem:[%s15] sm:$0xff]
      %v2456 = vld [vmem:[%s15 + $0x8] sm:$0xff]
      %v2457 = vld [vmem:[%s15 + $0x10] sm:$0xff]
      %v2458 = vld [vmem:[%s15 + $0x18] sm:$0xff]
      %v2459 = vld [vmem:[%s16] sm:$0x1]
      %v2461 = vlaneseq
      %v2462 = vshrl.u32 %v2461, 7
      %v2463 = vsub.s32 0, %v2462
      %v2464 = vrot.slane %v2459, %v2463
      %v2467 = vsel %vm554, %v2452, 0
      %v2470 = vsel %vm554, %v2453, 0
      %v2473 = vsel %vm554, %v2454, 0
      %2475 = vmatprep.subr.mxu0 0.0
      %2476 = vmatpush1.msra.mxu0 %v2455
      %2477 = vmatprep.subr.mxu0 0.0
      %2478 = vmatpush1.msra.mxu0 %v2456
      %2479 = vmatprep.subr.mxu0 0.0
      %2480 = vmatpush1.msra.mxu0 %v2457
      %2481 = vmatprep.subr.mxu0 0.0
      %2482 = vmatpush1.msra.mxu0 %v2458
      %2483 = vmatprep.subr.mxu0 0.0
      %2484 = vmatpush1.msra.mxu0 0.0
      %2485 = vmatprep.subr.mxu0 0.0
      %2486 = vmatpush1.msra.mxu0 0.0
      %2487 = vmatprep.subr.mxu0 0.0
      %2488 = vmatpush1.msra.mxu0 0.0
      %2489 = vmatprep.subr.mxu0 0.0
      %2490 = vmatpush1.msra.mxu0 0.0
      %2491 = vmatprep.subr.mxu0 0.0
      %2492 = vmatpush1.msra.mxu0 0.0
      %2493 = vmatprep.subr.mxu0 0.0
      %2494 = vmatpush1.msra.mxu0 0.0
      %2495 = vmatprep.subr.mxu0 0.0
      %2496 = vmatpush1.msra.mxu0 0.0
      %2497 = vmatprep.subr.mxu0 0.0
      %2498 = vmatpush1.msra.mxu0 0.0
      %2499 = vmatprep.subr.mxu0 0.0
      %2500 = vmatpush1.msra.mxu0 0.0
      %2501 = vmatprep.subr.mxu0 0.0
      %2502 = vmatpush1.msra.mxu0 0.0
      %2503 = vmatprep.subr.mxu0 0.0
      %2504 = vmatpush1.msra.mxu0 0.0
      %2505 = vmatprep.subr.mxu0 0.0
      %2506 = vmatpush1.msra.mxu0 0.0
      %2507 = vmatprep.subr.mxu0 0.0
      %2508 = vmatpush1.msra.mxu0 0.0
      %2509 = vmatprep.subr.mxu0 0.0
      %2510 = vmatpush1.msra.mxu0 0.0
      %2511 = vmatprep.subr.mxu0 0.0
      %2512 = vmatpush1.msra.mxu0 0.0
      %2513 = vmatprep.subr.mxu0 0.0
      %2514 = vmatpush1.msra.mxu0 0.0
      %2515 = vmatprep.subr.mxu0 0.0
      %2516 = vmatpush1.msra.mxu0 0.0
      %2517 = vmatprep.subr.mxu0 0.0
      %2518 = vmatpush1.msra.mxu0 0.0
      %2519 = vmatprep.subr.mxu0 0.0
      %2520 = vmatpush1.msra.mxu0 0.0
      %2521 = vmatprep.subr.mxu0 0.0
      %2522 = vmatpush1.msra.mxu0 0.0
      %2523 = vmatprep.subr.mxu0 0.0
      %2524 = vmatpush1.msra.mxu0 0.0
      %2525 = vmatprep.subr.mxu0 0.0
      %2526 = vmatpush1.msra.mxu0 0.0
      %2527 = vmatprep.subr.mxu0 0.0
      %2528 = vmatpush1.msra.mxu0 0.0
      %2529 = vmatprep.subr.mxu0 0.0
      %2530 = vmatpush1.msra.mxu0 0.0
      %2531 = vmatprep.subr.mxu0 0.0
      %2532 = vmatpush1.msra.mxu0 0.0
      %2533 = vmatprep.subr.mxu0 0.0
      %2534 = vmatpush1.msra.mxu0 0.0
      %2535 = vmatprep.subr.mxu0 0.0
      %2536 = vmatpush1.msra.mxu0 0.0
      %2537 = vmatprep.subr.mxu0 0.0
      %2538 = vmatpush1.msra.mxu0 0.0
      %2539 = vmatprep.mubr.f32.mxu0 0.0
      %2540 = vmatmul.mubr.f32.gmra.mrb[0].mxu0 %v2467
      %v2541 = vpop.f32.mrb[0].mxu0
      %v2542 = vadd.f32 %v2464, %v2541
      %v2543 = vpop.f32.mrb[0].mxu0
      %2544 = vmatprep.mubr.f32.mxu0 0.0
      %2545 = vmatmul.mubr.f32.gmra.mrb[0].mxu0 %v2470
      %v2546 = vpop.f32.mrb[0].mxu0
      %v2547 = vadd.f32 %v2464, %v2546
      %v2548 = vpop.f32.mrb[0].mxu0
      %2549 = vmatprep.mubr.f32.mxu0 0.0
      %2550 = vmatmul.mubr.f32.gmra.mrb[0].mxu0 %v2473
      %v2551 = vpop.f32.mrb[0].mxu0
      %v2552 = vadd.f32 %v2464, %v2551
      %v2553 = vpop.f32.mrb[0].mxu0
      %2554 = vdwg.mxu0
      %vm2555 = vcmask 392192
      %2556 = vst.msk [vmem:[%s548] sm:$0xff] %vm2555, %v2542
      %2557 = vst.msk [vmem:[%s548 + $0x8] sm:$0xff] %vm2555, %v2547
      %vm2558 = vcmask 385024
      %2559 = vst.msk [vmem:[%s548 + $0x10] sm:$0x1] %vm2558, %v2552
      %p2560 = scmp.lt.s32.totalorder %s28, 1
      %s2561 = scalar_select %p2560, %s28, 1
      %s2562 = smul.addr %s2561, 3
      %s2563 = smul.addr %s2562, 8
      %s2564 = scalar_lea.vmem %s17, %s2563
      // Predicated region
      $region89: #{mae_teacher_forward.6} parent=87 // pred_check
        %p2565 = pneg %p408
      $region90: #{mae_teacher_forward.6} parent=87 // pred_check_branch
        %2567 = sbr.rel (%p2565) target = $region92
      $region91: #{mae_teacher_forward.6} parent=87 // pred_region
        _
      $region92: #{mae_teacher_forward.6} parent=87 // pred_fallthru
        _
    $region88: #{mae_teacher_forward.6} parent=5 // pred_fallthru
      _
    %p2568 = scmp.le.s32.totalorder 2, %s23
    // Predicated region
    $region93: #{mae_teacher_forward.6} parent=5 // pred_check
      %p2569 = pneg %p2568
    $region94: #{mae_teacher_forward.6} parent=5 // pred_check_branch
      %2571 = sbr.rel (%p2569) target = $region96
    $region95: #{mae_teacher_forward.6} parent=5 // pred_region
      %s2572 = ssub.s32 %s23, 2
      // Predicated region
      $region97: #{mae_teacher_forward.6} parent=95 // pred_check
        %p2573 = pneg %p414
      $region98: #{mae_teacher_forward.6} parent=95 // pred_check_branch
        %2575 = sbr.rel (%p2573) target = $region100
      $region99: #{mae_teacher_forward.6} parent=95 // pred_region
        %p2576 = scmp.lt.s32.totalorder %s29, 1
        %s2577 = scalar_select %p2576, %s29, 1
        %s2578 = smul.addr %s2577, 3
        %s2579 = smul.addr %s2578, 8
        %s2580 = scalar_lea.vmem %s17, %s2579
      $region100: #{mae_teacher_forward.6} parent=95 // pred_fallthru
        _
    $region96: #{mae_teacher_forward.6} parent=5 // pred_fallthru
      _
  $region6: #{mae_teacher_forward.6} parent=0 // loop_footer
    %s27 = sadd.s32 1, %s23
  $region7: #{mae_teacher_forward.6} parent=0 // loop_footer_branch
    %22 = sbr.rel target = $region3
  $region8: #{mae_teacher_forward.6} parent=0 // loop_exit
    _

</llo_original>
